<compile_context>
chip_gen: v7x
topology: tpu7x:2x2x1
jax: 0.10.0
libtpu: 0.0.40
codegen_flags: <defaults>
</compile_context>

<pallas_src>
import functools

import jax
import jax.numpy as jnp
import numpy as np
from jax import lax
from jax.experimental import pallas as pl
from jax.experimental.pallas import tpu as pltpu

INPUT_FEATURES = 128   # original: 1200
HIDDEN = 128           # original: 1024
NUM_LAYERS = 2         # original: 8
FC_HIDDEN = 256
OUTPUT_DIM = 1
SEQ = 8
BATCH = 8              # padded to a full sublane tile


def _sig_via_tanh(x):
    """sigmoid(x) == 0.5*tanh(0.5*x)+0.5 : one EUP pass instead of exp+div."""
    return 0.5 * jnp.tanh(0.5 * x) + 0.5


# ----------------------------------------------------------------------------
# Fused kernel: whole multi-layer BiLSTM + FC head in one pallas_call.
# ----------------------------------------------------------------------------
def bilstm_fused_kernel(x_ref, h0_ref, c0_ref,
                        w_ih0_ref, w_ihr_ref, w_hh_ref, b_ref,
                        w_eff_ref, b_eff_ref,
                        o_ref,
                        act_scr, gx_scr,
                        *, seq, batch, hidden, num_layers):
    T, B, H = seq, batch, hidden
    G = 4 * H

    # Block-diagonal mask for the interleaved-direction hidden-state layout:
    # rows 0:B carry h_fwd in the left H columns, rows B:2B carry h_bwd in the
    # right H columns.  Computed once, reused by every step of every layer.
    row = lax.broadcasted_iota(jnp.int32, (2 * B, 2 * H), 0)
    col = lax.broadcasted_iota(jnp.int32, (2 * B, 2 * H), 1)
    diag_mask = (row < B) == (col < H)

    def to_blocked(h_cat):
        # (2B, H) f32 -> block-diagonal (2B, 2H) bf16 for the recurrent matmul.
        h_rep = jnp.concatenate([h_cat, h_cat], axis=1)
        return jnp.where(diag_mask, h_rep, 0.0).astype(jnp.bfloat16)

    for layer in range(num_layers):
        # ---- 1) input projection: all timesteps, both directions, one matmul
        if layer == 0:
            xin = x_ref[...].reshape(T * B, -1)                    # bf16 (T*B, In)
            w_ih = w_ih0_ref[...]                                  # bf16 (In, 8H)
        else:
            xin = act_scr[...].reshape(T * B, 2 * H).astype(jnp.bfloat16)
            w_ih = w_ihr_ref[layer - 1]                            # bf16 (2H, 8H)
        gx = jnp.dot(xin, w_ih, preferred_element_type=jnp.float32)  # (T*B, 8H)
        gx = gx + b_ref[layer]                                     # combined b_ih+b_hh

        # Pre-interleave directions along sublanes and pre-reverse the
        # backward direction's time axis, so the step body is ONE load.
        gx_fwd = gx[:, :G].reshape(T, B, G)
        gx_bwd = gx[:, G:].reshape(T, B, G)
        for s in range(T):                                         # static, off crit-path
            gx_scr[s] = jnp.concatenate([gx_fwd[s], gx_bwd[T - 1 - s]], axis=0)

        # ---- 2) recurrence: fwd+bwd interleaved -> one (2B,2H)@(2H,4H) matmul
        w_hh_blk = w_hh_ref[layer]                                 # bf16 (2H, 4H)

        def step(s, carry):
            h_blk, c_cat = carry                                   # bf16 (2B,2H), f32 (2B,H)
            gates = gx_scr[s] + jnp.dot(h_blk, w_hh_blk,
                                        preferred_element_type=jnp.float32)
            i = _sig_via_tanh(gates[:, 0 * H:1 * H])
            f = _sig_via_tanh(gates[:, 1 * H:2 * H])
            g = jnp.tanh(gates[:, 2 * H:3 * H])
            o = _sig_via_tanh(gates[:, 3 * H:4 * H])
            c_new = f * c_cat + i * g
            h_new = o * jnp.tanh(c_new)
            # Layer output -> next layer's input (stays in VMEM scratch).
            act_scr[s, :, pl.ds(0, H)] = h_new[:B]                 # forward dir
            act_scr[T - 1 - s, :, pl.ds(H, H)] = h_new[B:]         # backward dir
            return to_blocked(h_new), c_new

        carry0 = (to_blocked(h0_ref[layer]), c0_ref[layer])
        lax.fori_loop(0, T, step, carry0, unroll=True)

    # ---- 3) fused FC head on the last timestep's (B, 2H) output ----
    head_in = act_scr[T - 1]                                       # f32 (B, 2H)
    z = jnp.sum(head_in * w_eff_ref[...], axis=-1, keepdims=True) + b_eff_ref[...]
    o_ref[...] = jax.nn.sigmoid(jnp.tanh(z))


# ----------------------------------------------------------------------------
# Parameter packing for the fused kernel.
# ----------------------------------------------------------------------------
def pack_params(params):
    L, H = NUM_LAYERS, HIDDEN
    # Layer 0 input weights: directions stacked along N -> (In, 8H)
    w_ih0 = jnp.concatenate([params["lstm"][0][0][0],
                             params["lstm"][0][1][0]], axis=1).astype(jnp.bfloat16)
    # Layers 1..L-1 input weights -> (L-1, 2H, 8H)
    w_ihr = jnp.stack([
        jnp.concatenate([params["lstm"][l][0][0],
                         params["lstm"][l][1][0]], axis=1)
        for l in range(1, L)]).astype(jnp.bfloat16)
    # Recurrent weights, directions vstacked along K -> (L, 2H, 4H)
    w_hh = jnp.stack([
        jnp.concatenate([params["lstm"][l][0][1],
                         params["lstm"][l][1][1]], axis=0)
        for l in range(L)]).astype(jnp.bfloat16)
    # Combined biases (b_ih+b_hh), directions stacked along N -> (L, 1, 8H), f32
    b_all = jnp.stack([
        jnp.concatenate([params["lstm"][l][0][2],
                         params["lstm"][l][1][2]], axis=1)
        for l in range(L)])
    # FC head: no nonlinearity between the two Linears -> fold algebraically.
    w_eff = jnp.dot(params["fc_w1"], params["fc_w2"],
                    precision=lax.Precision.HIGHEST).T             # (1, 2H)
    b_eff = jnp.dot(params["fc_b1"], params["fc_w2"],
                    precision=lax.Precision.HIGHEST) + params["fc_b2"]  # (1, 1)
    return w_ih0, w_ihr, w_hh, b_all, w_eff, b_eff


def pack_states(h0_all, c0_all):
    h0 = jnp.stack([jnp.concatenate([h0_all[2 * l], h0_all[2 * l + 1]], axis=0)
                    for l in range(NUM_LAYERS)])                   # (L, 2B, H)
    c0 = jnp.stack([jnp.concatenate([c0_all[2 * l], c0_all[2 * l + 1]], axis=0)
                    for l in range(NUM_LAYERS)])
    return h0, c0


# ----------------------------------------------------------------------------
# Full forward: one pallas_call.
# ----------------------------------------------------------------------------
def bilstm_forward(params, X, h0_all, c0_all):
    batch, seq, _ = X.shape
    w_ih0, w_ihr, w_hh, b_all, w_eff, b_eff = pack_params(params)
    h0, c0 = pack_states(h0_all, c0_all)
    x = jnp.transpose(X, (1, 0, 2)).astype(jnp.bfloat16)           # (T, B, In)

    out = pl.pallas_call(
        functools.partial(bilstm_fused_kernel, seq=seq, batch=batch,
                          hidden=HIDDEN, num_layers=NUM_LAYERS),
        out_shape=jax.ShapeDtypeStruct((batch, OUTPUT_DIM), jnp.float32),
        scratch_shapes=[
            pltpu.VMEM((seq, batch, 2 * HIDDEN), jnp.float32),     # layer i/o activations
            pltpu.VMEM((seq, 2 * batch, 4 * HIDDEN), jnp.float32), # pre-interleaved x-gates
        ],
        # Harmless headroom at this config; the scaled-up (1024-hidden) config
        # would require a much larger limit plus weight streaming (see TODOs).
        compiler_params=pltpu.CompilerParams(
            vmem_limit_bytes=32 * 1024 * 1024),
    )(x, h0, c0, w_ih0, w_ihr, w_hh, b_all, w_eff, b_eff)

    return out.reshape(batch, -1)[:, -1]                           # (B,)


# ----------------------------------------------------------------------------
# Parameter init (deterministic, PyTorch-like U(-1/sqrt(H), 1/sqrt(H)))
# ----------------------------------------------------------------------------
def init_params(key):
    params = {"lstm": []}
    bound = 1.0 / np.sqrt(HIDDEN)
    for layer in range(NUM_LAYERS):
        in_dim = INPUT_FEATURES if layer == 0 else 2 * HIDDEN
        dirs = []
        for _ in range(2):  # forward, backward
            key, k1, k2, k3 = jax.random.split(key, 4)
            w_ih = jax.random.uniform(k1, (in_dim, 4 * HIDDEN),
                                      jnp.float32, -bound, bound)
            w_hh = jax.random.uniform(k2, (HIDDEN, 4 * HIDDEN),
                                      jnp.float32, -bound, bound)
            # combined bias = b_ih + b_hh (single draw)
            b = jax.random.uniform(k3, (1, 4 * HIDDEN),
                                   jnp.float32, -2 * bound, 2 * bound)
            dirs.append((w_ih, w_hh, b))
        params["lstm"].append(dirs)
    key, k1, k2, k3, k4 = jax.random.split(key, 5)
    b1 = 1.0 / np.sqrt(2 * HIDDEN)
    b2 = 1.0 / np.sqrt(FC_HIDDEN)
    params["fc_w1"] = jax.random.uniform(k1, (2 * HIDDEN, FC_HIDDEN),
                                         jnp.float32, -b1, b1)
    params["fc_b1"] = jax.random.uniform(k2, (1, FC_HIDDEN), jnp.float32, -b1, b1)
    params["fc_w2"] = jax.random.uniform(k3, (FC_HIDDEN, OUTPUT_DIM),
                                         jnp.float32, -b2, b2)
    params["fc_b2"] = jax.random.uniform(k4, (1, OUTPUT_DIM), jnp.float32, -b2, b2)
    return params, key


# ----------------------------------------------------------------------------
# Pure-JAX reference (mirrors the kernel's bf16-matmul / f32-state precision)
# ----------------------------------------------------------------------------
def _lstm_dir_ref(x, h, c, w_ih, w_hh, b, reverse):
    T = x.shape[0]
    H = h.shape[-1]
    w_ih_b = w_ih.astype(jnp.bfloat16)
    w_hh_b = w_hh.astype(jnp.bfloat16)
    order = range(T - 1, -1, -1) if reverse else range(T)
    ys = [None] * T
    for t in order:
        g = (jnp.dot(x[t].astype(jnp.bfloat16), w_ih_b,
                     preferred_element_type=jnp.float32)
             + jnp.dot(h.astype(jnp.bfloat16), w_hh_b,
                       preferred_element_type=jnp.float32)
             + b[0])
        i = jax.nn.sigmoid(g[:, :H])
        f = jax.nn.sigmoid(g[:, H:2 * H])
        gg = jnp.tanh(g[:, 2 * H:3 * H])
        o = jax.nn.sigmoid(g[:, 3 * H:])
        c = f * c + i * gg
        h = o * jnp.tanh(c)
        ys[t] = h
    return jnp.stack(ys, axis=0)


def bilstm_forward_ref(params, X, h0_all, c0_all):
    batch = X.shape[0]
    x = jnp.transpose(X, (1, 0, 2))
    for layer in range(NUM_LAYERS):
        wf_ih, wf_hh, bf = params["lstm"][layer][0]
        wb_ih, wb_hh, bb = params["lstm"][layer][1]
        yf = _lstm_dir_ref(x, h0_all[2 * layer], c0_all[2 * layer],
                           wf_ih, wf_hh, bf, False)
        yb = _lstm_dir_ref(x, h0_all[2 * layer + 1], c0_all[2 * layer + 1],
                           wb_ih, wb_hh, bb, True)
        x = jnp.concatenate([yf, yb], axis=-1)
    last = x[-1]
    h = jnp.dot(last, params["fc_w1"],
                precision=lax.Precision.HIGHEST) + params["fc_b1"]
    z = jnp.dot(h, params["fc_w2"],
                precision=lax.Precision.HIGHEST) + params["fc_b2"]
    out = jax.nn.sigmoid(jnp.tanh(z))
    return out.reshape(batch, -1)[:, -1]


if __name__ == "__main__":
    key = jax.random.PRNGKey(0)
    params, key = init_params(key)

    key, kx, kh, kc = jax.random.split(key, 4)
    X = jax.random.normal(kx, (BATCH, SEQ, INPUT_FEATURES), jnp.float32)
    # torch.randn initial hidden / cell states (deterministic here)
    h0_all = jax.random.normal(kh, (NUM_LAYERS * 2, BATCH, HIDDEN), jnp.float32)
    c0_all = jax.random.normal(kc, (NUM_LAYERS * 2, BATCH, HIDDEN), jnp.float32)

    out = jax.jit(bilstm_forward)(params, X, h0_all, c0_all)
    out = jax.block_until_ready(out)

    ref = jax.block_until_ready(bilstm_forward_ref(params, X, h0_all, c0_all))
    np.testing.assert_allclose(np.asarray(out), np.asarray(ref),
                               rtol=2e-3, atol=2e-3)
    assert out.shape == (BATCH,)

    print("KERNEL_OK")
</pallas_src>

<mosaic_0001>
module attributes {stable_mosaic.version = 11 : i64} {
  func.func @bilstm_fused_kernel(%arg0: memref<8x8x128xbf16, #tpu.memory_space<vmem>>, %arg1: memref<2x16x128xf32, #tpu.memory_space<vmem>>, %arg2: memref<2x16x128xf32, #tpu.memory_space<vmem>>, %arg3: memref<128x1024xbf16, #tpu.memory_space<vmem>>, %arg4: memref<1x256x1024xbf16, #tpu.memory_space<vmem>>, %arg5: memref<2x256x512xbf16, #tpu.memory_space<vmem>>, %arg6: memref<2x1x1024xf32, #tpu.memory_space<vmem>>, %arg7: memref<1x256xf32, #tpu.memory_space<vmem>>, %arg8: memref<1x1xf32, #tpu.memory_space<vmem>>, %arg9: memref<8x1xf32, #tpu.memory_space<vmem>>, %arg10: memref<8x8x256xf32, #tpu.memory_space<vmem>>, %arg11: memref<8x16x512xf32, #tpu.memory_space<vmem>>) attributes {dimension_semantics = [], scalar_prefetch = 0 : i64, scratch_operands = 2 : i64, tpu.core_type = #tpu.core_type<tc>} {
    %0 = tpu.iota {dimensions = array<i32: 0>} : vector<16x256xi32>
    %1 = tpu.iota {dimensions = array<i32: 1>} : vector<16x256xi32>
    %c8_i32 = arith.constant 8 : i32
    %2 = vector.broadcast %c8_i32 : i32 to vector<16x256xi32>
    %3 = arith.cmpi slt, %0, %2 : vector<16x256xi32>
    %c128_i32 = arith.constant 128 : i32
    %4 = vector.broadcast %c128_i32 : i32 to vector<16x256xi32>
    %5 = arith.cmpi slt, %1, %4 : vector<16x256xi32>
    %6 = arith.xori %3, %5 : vector<16x256xi1>
    %cst = arith.constant dense<true> : vector<16x256xi1>
    %7 = arith.xori %6, %cst : vector<16x256xi1>
    %c0 = arith.constant 0 : index
    %c0_0 = arith.constant 0 : index
    %c0_1 = arith.constant 0 : index
    %8 = vector.load %arg0[%c0, %c0_0, %c0_1] : memref<8x8x128xbf16, #tpu.memory_space<vmem>>, vector<8x8x128xbf16>
    %9 = vector.shape_cast %8 : vector<8x8x128xbf16> to vector<64x128xbf16>
    %c0_2 = arith.constant 0 : index
    %c0_3 = arith.constant 0 : index
    %10 = vector.load %arg3[%c0_2, %c0_3] : memref<128x1024xbf16, #tpu.memory_space<vmem>>, vector<128x1024xbf16>
    %cst_4 = arith.constant dense<0.000000e+00> : vector<64x1024xf32>
    %11 = tpu.matmul %9, %10, %cst_4 {dimension_numbers = #tpu.dot_dimension_numbers<[1], [0], [0], [1], [0, 0, 1, 1], [], []>} : vector<64x128xbf16>, vector<128x1024xbf16>, vector<64x1024xf32> -> vector<64x1024xf32>
    %c0_5 = arith.constant 0 : index
    %c0_6 = arith.constant 0 : index
    %c0_7 = arith.constant 0 : index
    %12 = vector.load %arg6[%c0_5, %c0_6, %c0_7] : memref<2x1x1024xf32, #tpu.memory_space<vmem>>, vector<1x1x1024xf32>
    %13 = vector.shape_cast %12 : vector<1x1x1024xf32> to vector<1x1024xf32>
    %14 = vector.broadcast %13 : vector<1x1024xf32> to vector<64x1024xf32>
    %15 = arith.addf %11, %14 : vector<64x1024xf32>
    %16 = vector.extract_strided_slice %15 {offsets = [0, 0], sizes = [64, 512], strides = [1, 1]} : vector<64x1024xf32> to vector<64x512xf32>
    %17 = vector.shape_cast %16 : vector<64x512xf32> to vector<8x8x512xf32>
    %18 = vector.extract_strided_slice %15 {offsets = [0, 512], sizes = [64, 512], strides = [1, 1]} : vector<64x1024xf32> to vector<64x512xf32>
    %19 = vector.shape_cast %18 : vector<64x512xf32> to vector<8x8x512xf32>
    %20 = vector.extract_strided_slice %17 {offsets = [0, 0, 0], sizes = [1, 8, 512], strides = [1, 1, 1]} : vector<8x8x512xf32> to vector<1x8x512xf32>
    %21 = vector.shape_cast %20 : vector<1x8x512xf32> to vector<8x512xf32>
    %22 = vector.extract_strided_slice %19 {offsets = [7, 0, 0], sizes = [1, 8, 512], strides = [1, 1, 1]} : vector<8x8x512xf32> to vector<1x8x512xf32>
    %23 = vector.shape_cast %22 : vector<1x8x512xf32> to vector<8x512xf32>
    %24 = tpu.concatenate %21, %23 in 0 : vector<8x512xf32>, vector<8x512xf32> -> vector<16x512xf32>
    %c0_8 = arith.constant 0 : index
    %c0_9 = arith.constant 0 : index
    %c0_10 = arith.constant 0 : index
    %25 = vector.load %arg11[%c0_8, %c0_9, %c0_10] : memref<8x16x512xf32, #tpu.memory_space<vmem>>, vector<1x16x512xf32>
    %26 = vector.shape_cast %25 : vector<1x16x512xf32> to vector<16x512xf32>
    %27 = vector.shape_cast %24 : vector<16x512xf32> to vector<1x16x512xf32>
    tpu.vector_store %arg11[%c0_8, %c0_9, %c0_10], %27 {strides = array<i32>} : memref<8x16x512xf32, #tpu.memory_space<vmem>>, vector<1x16x512xf32>,
    %28 = vector.extract_strided_slice %17 {offsets = [1, 0, 0], sizes = [1, 8, 512], strides = [1, 1, 1]} : vector<8x8x512xf32> to vector<1x8x512xf32>
    %29 = vector.shape_cast %28 : vector<1x8x512xf32> to vector<8x512xf32>
    %30 = vector.extract_strided_slice %19 {offsets = [6, 0, 0], sizes = [1, 8, 512], strides = [1, 1, 1]} : vector<8x8x512xf32> to vector<1x8x512xf32>
    %31 = vector.shape_cast %30 : vector<1x8x512xf32> to vector<8x512xf32>
    %32 = tpu.concatenate %29, %31 in 0 : vector<8x512xf32>, vector<8x512xf32> -> vector<16x512xf32>
    %c1 = arith.constant 1 : index
    %c0_11 = arith.constant 0 : index
    %c0_12 = arith.constant 0 : index
    %33 = vector.load %arg11[%c1, %c0_11, %c0_12] : memref<8x16x512xf32, #tpu.memory_space<vmem>>, vector<1x16x512xf32>
    %34 = vector.shape_cast %33 : vector<1x16x512xf32> to vector<16x512xf32>
    %35 = vector.shape_cast %32 : vector<16x512xf32> to vector<1x16x512xf32>
    tpu.vector_store %arg11[%c1, %c0_11, %c0_12], %35 {strides = array<i32>} : memref<8x16x512xf32, #tpu.memory_space<vmem>>, vector<1x16x512xf32>,
    %36 = vector.extract_strided_slice %17 {offsets = [2, 0, 0], sizes = [1, 8, 512], strides = [1, 1, 1]} : vector<8x8x512xf32> to vector<1x8x512xf32>
    %37 = vector.shape_cast %36 : vector<1x8x512xf32> to vector<8x512xf32>
    %38 = vector.extract_strided_slice %19 {offsets = [5, 0, 0], sizes = [1, 8, 512], strides = [1, 1, 1]} : vector<8x8x512xf32> to vector<1x8x512xf32>
    %39 = vector.shape_cast %38 : vector<1x8x512xf32> to vector<8x512xf32>
    %40 = tpu.concatenate %37, %39 in 0 : vector<8x512xf32>, vector<8x512xf32> -> vector<16x512xf32>
    %c2 = arith.constant 2 : index
    %c0_13 = arith.constant 0 : index
    %c0_14 = arith.constant 0 : index
    %41 = vector.load %arg11[%c2, %c0_13, %c0_14] : memref<8x16x512xf32, #tpu.memory_space<vmem>>, vector<1x16x512xf32>
    %42 = vector.shape_cast %41 : vector<1x16x512xf32> to vector<16x512xf32>
    %43 = vector.shape_cast %40 : vector<16x512xf32> to vector<1x16x512xf32>
    tpu.vector_store %arg11[%c2, %c0_13, %c0_14], %43 {strides = array<i32>} : memref<8x16x512xf32, #tpu.memory_space<vmem>>, vector<1x16x512xf32>,
    %44 = vector.extract_strided_slice %17 {offsets = [3, 0, 0], sizes = [1, 8, 512], strides = [1, 1, 1]} : vector<8x8x512xf32> to vector<1x8x512xf32>
    %45 = vector.shape_cast %44 : vector<1x8x512xf32> to vector<8x512xf32>
    %46 = vector.extract_strided_slice %19 {offsets = [4, 0, 0], sizes = [1, 8, 512], strides = [1, 1, 1]} : vector<8x8x512xf32> to vector<1x8x512xf32>
    %47 = vector.shape_cast %46 : vector<1x8x512xf32> to vector<8x512xf32>
    %48 = tpu.concatenate %45, %47 in 0 : vector<8x512xf32>, vector<8x512xf32> -> vector<16x512xf32>
    %c3 = arith.constant 3 : index
    %c0_15 = arith.constant 0 : index
    %c0_16 = arith.constant 0 : index
    %49 = vector.load %arg11[%c3, %c0_15, %c0_16] : memref<8x16x512xf32, #tpu.memory_space<vmem>>, vector<1x16x512xf32>
    %50 = vector.shape_cast %49 : vector<1x16x512xf32> to vector<16x512xf32>
    %51 = vector.shape_cast %48 : vector<16x512xf32> to vector<1x16x512xf32>
    tpu.vector_store %arg11[%c3, %c0_15, %c0_16], %51 {strides = array<i32>} : memref<8x16x512xf32, #tpu.memory_space<vmem>>, vector<1x16x512xf32>,
    %52 = vector.extract_strided_slice %17 {offsets = [4, 0, 0], sizes = [1, 8, 512], strides = [1, 1, 1]} : vector<8x8x512xf32> to vector<1x8x512xf32>
    %53 = vector.shape_cast %52 : vector<1x8x512xf32> to vector<8x512xf32>
    %54 = vector.extract_strided_slice %19 {offsets = [3, 0, 0], sizes = [1, 8, 512], strides = [1, 1, 1]} : vector<8x8x512xf32> to vector<1x8x512xf32>
    %55 = vector.shape_cast %54 : vector<1x8x512xf32> to vector<8x512xf32>
    %56 = tpu.concatenate %53, %55 in 0 : vector<8x512xf32>, vector<8x512xf32> -> vector<16x512xf32>
    %c4 = arith.constant 4 : index
    %c0_17 = arith.constant 0 : index
    %c0_18 = arith.constant 0 : index
    %57 = vector.load %arg11[%c4, %c0_17, %c0_18] : memref<8x16x512xf32, #tpu.memory_space<vmem>>, vector<1x16x512xf32>
    %58 = vector.shape_cast %57 : vector<1x16x512xf32> to vector<16x512xf32>
    %59 = vector.shape_cast %56 : vector<16x512xf32> to vector<1x16x512xf32>
    tpu.vector_store %arg11[%c4, %c0_17, %c0_18], %59 {strides = array<i32>} : memref<8x16x512xf32, #tpu.memory_space<vmem>>, vector<1x16x512xf32>,
    %60 = vector.extract_strided_slice %17 {offsets = [5, 0, 0], sizes = [1, 8, 512], strides = [1, 1, 1]} : vector<8x8x512xf32> to vector<1x8x512xf32>
    %61 = vector.shape_cast %60 : vector<1x8x512xf32> to vector<8x512xf32>
    %62 = vector.extract_strided_slice %19 {offsets = [2, 0, 0], sizes = [1, 8, 512], strides = [1, 1, 1]} : vector<8x8x512xf32> to vector<1x8x512xf32>
    %63 = vector.shape_cast %62 : vector<1x8x512xf32> to vector<8x512xf32>
    %64 = tpu.concatenate %61, %63 in 0 : vector<8x512xf32>, vector<8x512xf32> -> vector<16x512xf32>
    %c5 = arith.constant 5 : index
    %c0_19 = arith.constant 0 : index
    %c0_20 = arith.constant 0 : index
    %65 = vector.load %arg11[%c5, %c0_19, %c0_20] : memref<8x16x512xf32, #tpu.memory_space<vmem>>, vector<1x16x512xf32>
    %66 = vector.shape_cast %65 : vector<1x16x512xf32> to vector<16x512xf32>
    %67 = vector.shape_cast %64 : vector<16x512xf32> to vector<1x16x512xf32>
    tpu.vector_store %arg11[%c5, %c0_19, %c0_20], %67 {strides = array<i32>} : memref<8x16x512xf32, #tpu.memory_space<vmem>>, vector<1x16x512xf32>,
    %68 = vector.extract_strided_slice %17 {offsets = [6, 0, 0], sizes = [1, 8, 512], strides = [1, 1, 1]} : vector<8x8x512xf32> to vector<1x8x512xf32>
    %69 = vector.shape_cast %68 : vector<1x8x512xf32> to vector<8x512xf32>
    %70 = vector.extract_strided_slice %19 {offsets = [1, 0, 0], sizes = [1, 8, 512], strides = [1, 1, 1]} : vector<8x8x512xf32> to vector<1x8x512xf32>
    %71 = vector.shape_cast %70 : vector<1x8x512xf32> to vector<8x512xf32>
    %72 = tpu.concatenate %69, %71 in 0 : vector<8x512xf32>, vector<8x512xf32> -> vector<16x512xf32>
    %c6 = arith.constant 6 : index
    %c0_21 = arith.constant 0 : index
    %c0_22 = arith.constant 0 : index
    %73 = vector.load %arg11[%c6, %c0_21, %c0_22] : memref<8x16x512xf32, #tpu.memory_space<vmem>>, vector<1x16x512xf32>
    %74 = vector.shape_cast %73 : vector<1x16x512xf32> to vector<16x512xf32>
    %75 = vector.shape_cast %72 : vector<16x512xf32> to vector<1x16x512xf32>
    tpu.vector_store %arg11[%c6, %c0_21, %c0_22], %75 {strides = array<i32>} : memref<8x16x512xf32, #tpu.memory_space<vmem>>, vector<1x16x512xf32>,
    %76 = vector.extract_strided_slice %17 {offsets = [7, 0, 0], sizes = [1, 8, 512], strides = [1, 1, 1]} : vector<8x8x512xf32> to vector<1x8x512xf32>
    %77 = vector.shape_cast %76 : vector<1x8x512xf32> to vector<8x512xf32>
    %78 = vector.extract_strided_slice %19 {offsets = [0, 0, 0], sizes = [1, 8, 512], strides = [1, 1, 1]} : vector<8x8x512xf32> to vector<1x8x512xf32>
    %79 = vector.shape_cast %78 : vector<1x8x512xf32> to vector<8x512xf32>
    %80 = tpu.concatenate %77, %79 in 0 : vector<8x512xf32>, vector<8x512xf32> -> vector<16x512xf32>
    %c7 = arith.constant 7 : index
    %c0_23 = arith.constant 0 : index
    %c0_24 = arith.constant 0 : index
    %81 = vector.load %arg11[%c7, %c0_23, %c0_24] : memref<8x16x512xf32, #tpu.memory_space<vmem>>, vector<1x16x512xf32>
    %82 = vector.shape_cast %81 : vector<1x16x512xf32> to vector<16x512xf32>
    %83 = vector.shape_cast %80 : vector<16x512xf32> to vector<1x16x512xf32>
    tpu.vector_store %arg11[%c7, %c0_23, %c0_24], %83 {strides = array<i32>} : memref<8x16x512xf32, #tpu.memory_space<vmem>>, vector<1x16x512xf32>,
    %c0_25 = arith.constant 0 : index
    %c0_26 = arith.constant 0 : index
    %c0_27 = arith.constant 0 : index
    %84 = vector.load %arg5[%c0_25, %c0_26, %c0_27] : memref<2x256x512xbf16, #tpu.memory_space<vmem>>, vector<1x256x512xbf16>
    %85 = vector.shape_cast %84 : vector<1x256x512xbf16> to vector<256x512xbf16>
    %c0_28 = arith.constant 0 : index
    %c0_29 = arith.constant 0 : index
    %c0_30 = arith.constant 0 : index
    %86 = vector.load %arg1[%c0_28, %c0_29, %c0_30] : memref<2x16x128xf32, #tpu.memory_space<vmem>>, vector<1x16x128xf32>
    %87 = vector.shape_cast %86 : vector<1x16x128xf32> to vector<16x128xf32>
    %88 = tpu.concatenate %87, %87 in 1 : vector<16x128xf32>, vector<16x128xf32> -> vector<16x256xf32>
    %cst_31 = arith.constant 0.000000e+00 : f32
    %89 = vector.broadcast %cst_31 : f32 to vector<16x256xf32>
    %90 = arith.select %7, %88, %89 : vector<16x256xi1>, vector<16x256xf32>
    %91 = arith.truncf %90 : vector<16x256xf32> to vector<16x256xbf16>
    %c0_32 = arith.constant 0 : index
    %c0_33 = arith.constant 0 : index
    %c0_34 = arith.constant 0 : index
    %92 = vector.load %arg2[%c0_32, %c0_33, %c0_34] : memref<2x16x128xf32, #tpu.memory_space<vmem>>, vector<1x16x128xf32>
    %93 = vector.shape_cast %92 : vector<1x16x128xf32> to vector<16x128xf32>
    %c0_i32 = arith.constant 0 : i32
    %94 = arith.index_cast %c0_i32 : i32 to index
    %c0_35 = arith.constant 0 : index
    %c0_36 = arith.constant 0 : index
    %95 = vector.load %arg11[%94, %c0_35, %c0_36] : memref<8x16x512xf32, #tpu.memory_space<vmem>>, vector<1x16x512xf32>
    %96 = vector.shape_cast %95 : vector<1x16x512xf32> to vector<16x512xf32>
    %cst_37 = arith.constant dense<0.000000e+00> : vector<16x512xf32>
    %97 = tpu.matmul %91, %85, %cst_37 {dimension_numbers = #tpu.dot_dimension_numbers<[1], [0], [0], [1], [0, 0, 1, 1], [], []>} : vector<16x256xbf16>, vector<256x512xbf16>, vector<16x512xf32> -> vector<16x512xf32>
    %98 = arith.addf %96, %97 : vector<16x512xf32>
    %99 = vector.extract_strided_slice %98 {offsets = [0, 0], sizes = [16, 128], strides = [1, 1]} : vector<16x512xf32> to vector<16x128xf32>
    %cst_38 = arith.constant 5.000000e-01 : f32
    %100 = vector.broadcast %cst_38 : f32 to vector<16x128xf32>
    %101 = arith.mulf %100, %99 : vector<16x128xf32>
    %102 = math.tanh %101 : vector<16x128xf32>
    %cst_39 = arith.constant 5.000000e-01 : f32
    %103 = vector.broadcast %cst_39 : f32 to vector<16x128xf32>
    %104 = arith.mulf %103, %102 : vector<16x128xf32>
    %cst_40 = arith.constant 5.000000e-01 : f32
    %105 = vector.broadcast %cst_40 : f32 to vector<16x128xf32>
    %106 = arith.addf %104, %105 : vector<16x128xf32>
    %107 = vector.extract_strided_slice %98 {offsets = [0, 128], sizes = [16, 128], strides = [1, 1]} : vector<16x512xf32> to vector<16x128xf32>
    %cst_41 = arith.constant 5.000000e-01 : f32
    %108 = vector.broadcast %cst_41 : f32 to vector<16x128xf32>
    %109 = arith.mulf %108, %107 : vector<16x128xf32>
    %110 = math.tanh %109 : vector<16x128xf32>
    %cst_42 = arith.constant 5.000000e-01 : f32
    %111 = vector.broadcast %cst_42 : f32 to vector<16x128xf32>
    %112 = arith.mulf %111, %110 : vector<16x128xf32>
    %cst_43 = arith.constant 5.000000e-01 : f32
    %113 = vector.broadcast %cst_43 : f32 to vector<16x128xf32>
    %114 = arith.addf %112, %113 : vector<16x128xf32>
    %115 = vector.extract_strided_slice %98 {offsets = [0, 256], sizes = [16, 128], strides = [1, 1]} : vector<16x512xf32> to vector<16x128xf32>
    %116 = math.tanh %115 : vector<16x128xf32>
    %117 = vector.extract_strided_slice %98 {offsets = [0, 384], sizes = [16, 128], strides = [1, 1]} : vector<16x512xf32> to vector<16x128xf32>
    %cst_44 = arith.constant 5.000000e-01 : f32
    %118 = vector.broadcast %cst_44 : f32 to vector<16x128xf32>
    %119 = arith.mulf %118, %117 : vector<16x128xf32>
    %120 = math.tanh %119 : vector<16x128xf32>
    %cst_45 = arith.constant 5.000000e-01 : f32
    %121 = vector.broadcast %cst_45 : f32 to vector<16x128xf32>
    %122 = arith.mulf %121, %120 : vector<16x128xf32>
    %cst_46 = arith.constant 5.000000e-01 : f32
    %123 = vector.broadcast %cst_46 : f32 to vector<16x128xf32>
    %124 = arith.addf %122, %123 : vector<16x128xf32>
    %125 = arith.mulf %114, %93 : vector<16x128xf32>
    %126 = arith.mulf %106, %116 : vector<16x128xf32>
    %127 = arith.addf %125, %126 : vector<16x128xf32>
    %128 = math.tanh %127 : vector<16x128xf32>
    %129 = arith.mulf %124, %128 : vector<16x128xf32>
    %130 = vector.extract_strided_slice %129 {offsets = [0, 0], sizes = [8, 128], strides = [1, 1]} : vector<16x128xf32> to vector<8x128xf32>
    %131 = arith.index_cast %c0_i32 : i32 to index
    %c0_47 = arith.constant 0 : index
    %c0_48 = arith.constant 0 : index
    %132 = vector.load %arg10[%131, %c0_47, %c0_48] : memref<8x8x256xf32, #tpu.memory_space<vmem>>, vector<1x8x128xf32>
    %133 = vector.shape_cast %132 : vector<1x8x128xf32> to vector<8x128xf32>
    %134 = vector.shape_cast %130 : vector<8x128xf32> to vector<1x8x128xf32>
    tpu.vector_store %arg10[%131, %c0_47, %c0_48], %134 {strides = array<i32>} : memref<8x8x256xf32, #tpu.memory_space<vmem>>, vector<1x8x128xf32>,
    %135 = vector.extract_strided_slice %129 {offsets = [8, 0], sizes = [8, 128], strides = [1, 1]} : vector<16x128xf32> to vector<8x128xf32>
    %c7_i32 = arith.constant 7 : i32
    %136 = arith.subi %c7_i32, %c0_i32 : i32
    %137 = arith.index_cast %136 : i32 to index
    %c0_49 = arith.constant 0 : index
    %c128 = arith.constant 128 : index
    %138 = vector.load %arg10[%137, %c0_49, %c128] : memref<8x8x256xf32, #tpu.memory_space<vmem>>, vector<1x8x128xf32>
    %139 = vector.shape_cast %138 : vector<1x8x128xf32> to vector<8x128xf32>
    %140 = vector.shape_cast %135 : vector<8x128xf32> to vector<1x8x128xf32>
    tpu.vector_store %arg10[%137, %c0_49, %c128], %140 {strides = array<i32>} : memref<8x8x256xf32, #tpu.memory_space<vmem>>, vector<1x8x128xf32>,
    %141 = tpu.concatenate %129, %129 in 1 : vector<16x128xf32>, vector<16x128xf32> -> vector<16x256xf32>
    %cst_50 = arith.constant 0.000000e+00 : f32
    %142 = vector.broadcast %cst_50 : f32 to vector<16x256xf32>
    %143 = arith.select %7, %141, %142 : vector<16x256xi1>, vector<16x256xf32>
    %144 = arith.truncf %143 : vector<16x256xf32> to vector<16x256xbf16>
    %c1_i32 = arith.constant 1 : i32
    %145 = arith.index_cast %c1_i32 : i32 to index
    %c0_51 = arith.constant 0 : index
    %c0_52 = arith.constant 0 : index
    %146 = vector.load %arg11[%145, %c0_51, %c0_52] : memref<8x16x512xf32, #tpu.memory_space<vmem>>, vector<1x16x512xf32>
    %147 = vector.shape_cast %146 : vector<1x16x512xf32> to vector<16x512xf32>
    %cst_53 = arith.constant dense<0.000000e+00> : vector<16x512xf32>
    %148 = tpu.matmul %144, %85, %cst_53 {dimension_numbers = #tpu.dot_dimension_numbers<[1], [0], [0], [1], [0, 0, 1, 1], [], []>} : vector<16x256xbf16>, vector<256x512xbf16>, vector<16x512xf32> -> vector<16x512xf32>
    %149 = arith.addf %147, %148 : vector<16x512xf32>
    %150 = vector.extract_strided_slice %149 {offsets = [0, 0], sizes = [16, 128], strides = [1, 1]} : vector<16x512xf32> to vector<16x128xf32>
    %cst_54 = arith.constant 5.000000e-01 : f32
    %151 = vector.broadcast %cst_54 : f32 to vector<16x128xf32>
    %152 = arith.mulf %151, %150 : vector<16x128xf32>
    %153 = math.tanh %152 : vector<16x128xf32>
    %cst_55 = arith.constant 5.000000e-01 : f32
    %154 = vector.broadcast %cst_55 : f32 to vector<16x128xf32>
    %155 = arith.mulf %154, %153 : vector<16x128xf32>
    %cst_56 = arith.constant 5.000000e-01 : f32
    %156 = vector.broadcast %cst_56 : f32 to vector<16x128xf32>
    %157 = arith.addf %155, %156 : vector<16x128xf32>
    %158 = vector.extract_strided_slice %149 {offsets = [0, 128], sizes = [16, 128], strides = [1, 1]} : vector<16x512xf32> to vector<16x128xf32>
    %cst_57 = arith.constant 5.000000e-01 : f32
    %159 = vector.broadcast %cst_57 : f32 to vector<16x128xf32>
    %160 = arith.mulf %159, %158 : vector<16x128xf32>
    %161 = math.tanh %160 : vector<16x128xf32>
    %cst_58 = arith.constant 5.000000e-01 : f32
    %162 = vector.broadcast %cst_58 : f32 to vector<16x128xf32>
    %163 = arith.mulf %162, %161 : vector<16x128xf32>
    %cst_59 = arith.constant 5.000000e-01 : f32
    %164 = vector.broadcast %cst_59 : f32 to vector<16x128xf32>
    %165 = arith.addf %163, %164 : vector<16x128xf32>
    %166 = vector.extract_strided_slice %149 {offsets = [0, 256], sizes = [16, 128], strides = [1, 1]} : vector<16x512xf32> to vector<16x128xf32>
    %167 = math.tanh %166 : vector<16x128xf32>
    %168 = vector.extract_strided_slice %149 {offsets = [0, 384], sizes = [16, 128], strides = [1, 1]} : vector<16x512xf32> to vector<16x128xf32>
    %cst_60 = arith.constant 5.000000e-01 : f32
    %169 = vector.broadcast %cst_60 : f32 to vector<16x128xf32>
    %170 = arith.mulf %169, %168 : vector<16x128xf32>
    %171 = math.tanh %170 : vector<16x128xf32>
    %cst_61 = arith.constant 5.000000e-01 : f32
    %172 = vector.broadcast %cst_61 : f32 to vector<16x128xf32>
    %173 = arith.mulf %172, %171 : vector<16x128xf32>
    %cst_62 = arith.constant 5.000000e-01 : f32
    %174 = vector.broadcast %cst_62 : f32 to vector<16x128xf32>
    %175 = arith.addf %173, %174 : vector<16x128xf32>
    %176 = arith.mulf %165, %127 : vector<16x128xf32>
    %177 = arith.mulf %157, %167 : vector<16x128xf32>
    %178 = arith.addf %176, %177 : vector<16x128xf32>
    %179 = math.tanh %178 : vector<16x128xf32>
    %180 = arith.mulf %175, %179 : vector<16x128xf32>
    %181 = vector.extract_strided_slice %180 {offsets = [0, 0], sizes = [8, 128], strides = [1, 1]} : vector<16x128xf32> to vector<8x128xf32>
    %182 = arith.index_cast %c1_i32 : i32 to index
    %c0_63 = arith.constant 0 : index
    %c0_64 = arith.constant 0 : index
    %183 = vector.load %arg10[%182, %c0_63, %c0_64] : memref<8x8x256xf32, #tpu.memory_space<vmem>>, vector<1x8x128xf32>
    %184 = vector.shape_cast %183 : vector<1x8x128xf32> to vector<8x128xf32>
    %185 = vector.shape_cast %181 : vector<8x128xf32> to vector<1x8x128xf32>
    tpu.vector_store %arg10[%182, %c0_63, %c0_64], %185 {strides = array<i32>} : memref<8x8x256xf32, #tpu.memory_space<vmem>>, vector<1x8x128xf32>,
    %186 = vector.extract_strided_slice %180 {offsets = [8, 0], sizes = [8, 128], strides = [1, 1]} : vector<16x128xf32> to vector<8x128xf32>
    %c7_i32_65 = arith.constant 7 : i32
    %187 = arith.subi %c7_i32_65, %c1_i32 : i32
    %188 = arith.index_cast %187 : i32 to index
    %c0_66 = arith.constant 0 : index
    %c128_67 = arith.constant 128 : index
    %189 = vector.load %arg10[%188, %c0_66, %c128_67] : memref<8x8x256xf32, #tpu.memory_space<vmem>>, vector<1x8x128xf32>
    %190 = vector.shape_cast %189 : vector<1x8x128xf32> to vector<8x128xf32>
    %191 = vector.shape_cast %186 : vector<8x128xf32> to vector<1x8x128xf32>
    tpu.vector_store %arg10[%188, %c0_66, %c128_67], %191 {strides = array<i32>} : memref<8x8x256xf32, #tpu.memory_space<vmem>>, vector<1x8x128xf32>,
    %192 = tpu.concatenate %180, %180 in 1 : vector<16x128xf32>, vector<16x128xf32> -> vector<16x256xf32>
    %cst_68 = arith.constant 0.000000e+00 : f32
    %193 = vector.broadcast %cst_68 : f32 to vector<16x256xf32>
    %194 = arith.select %7, %192, %193 : vector<16x256xi1>, vector<16x256xf32>
    %195 = arith.truncf %194 : vector<16x256xf32> to vector<16x256xbf16>
    %c2_i32 = arith.constant 2 : i32
    %196 = arith.index_cast %c2_i32 : i32 to index
    %c0_69 = arith.constant 0 : index
    %c0_70 = arith.constant 0 : index
    %197 = vector.load %arg11[%196, %c0_69, %c0_70] : memref<8x16x512xf32, #tpu.memory_space<vmem>>, vector<1x16x512xf32>
    %198 = vector.shape_cast %197 : vector<1x16x512xf32> to vector<16x512xf32>
    %cst_71 = arith.constant dense<0.000000e+00> : vector<16x512xf32>
    %199 = tpu.matmul %195, %85, %cst_71 {dimension_numbers = #tpu.dot_dimension_numbers<[1], [0], [0], [1], [0, 0, 1, 1], [], []>} : vector<16x256xbf16>, vector<256x512xbf16>, vector<16x512xf32> -> vector<16x512xf32>
    %200 = arith.addf %198, %199 : vector<16x512xf32>
    %201 = vector.extract_strided_slice %200 {offsets = [0, 0], sizes = [16, 128], strides = [1, 1]} : vector<16x512xf32> to vector<16x128xf32>
    %cst_72 = arith.constant 5.000000e-01 : f32
    %202 = vector.broadcast %cst_72 : f32 to vector<16x128xf32>
    %203 = arith.mulf %202, %201 : vector<16x128xf32>
    %204 = math.tanh %203 : vector<16x128xf32>
    %cst_73 = arith.constant 5.000000e-01 : f32
    %205 = vector.broadcast %cst_73 : f32 to vector<16x128xf32>
    %206 = arith.mulf %205, %204 : vector<16x128xf32>
    %cst_74 = arith.constant 5.000000e-01 : f32
    %207 = vector.broadcast %cst_74 : f32 to vector<16x128xf32>
    %208 = arith.addf %206, %207 : vector<16x128xf32>
    %209 = vector.extract_strided_slice %200 {offsets = [0, 128], sizes = [16, 128], strides = [1, 1]} : vector<16x512xf32> to vector<16x128xf32>
    %cst_75 = arith.constant 5.000000e-01 : f32
    %210 = vector.broadcast %cst_75 : f32 to vector<16x128xf32>
    %211 = arith.mulf %210, %209 : vector<16x128xf32>
    %212 = math.tanh %211 : vector<16x128xf32>
    %cst_76 = arith.constant 5.000000e-01 : f32
    %213 = vector.broadcast %cst_76 : f32 to vector<16x128xf32>
    %214 = arith.mulf %213, %212 : vector<16x128xf32>
    %cst_77 = arith.constant 5.000000e-01 : f32
    %215 = vector.broadcast %cst_77 : f32 to vector<16x128xf32>
    %216 = arith.addf %214, %215 : vector<16x128xf32>
    %217 = vector.extract_strided_slice %200 {offsets = [0, 256], sizes = [16, 128], strides = [1, 1]} : vector<16x512xf32> to vector<16x128xf32>
    %218 = math.tanh %217 : vector<16x128xf32>
    %219 = vector.extract_strided_slice %200 {offsets = [0, 384], sizes = [16, 128], strides = [1, 1]} : vector<16x512xf32> to vector<16x128xf32>
    %cst_78 = arith.constant 5.000000e-01 : f32
    %220 = vector.broadcast %cst_78 : f32 to vector<16x128xf32>
    %221 = arith.mulf %220, %219 : vector<16x128xf32>
    %222 = math.tanh %221 : vector<16x128xf32>
    %cst_79 = arith.constant 5.000000e-01 : f32
    %223 = vector.broadcast %cst_79 : f32 to vector<16x128xf32>
    %224 = arith.mulf %223, %222 : vector<16x128xf32>
    %cst_80 = arith.constant 5.000000e-01 : f32
    %225 = vector.broadcast %cst_80 : f32 to vector<16x128xf32>
    %226 = arith.addf %224, %225 : vector<16x128xf32>
    %227 = arith.mulf %216, %178 : vector<16x128xf32>
    %228 = arith.mulf %208, %218 : vector<16x128xf32>
    %229 = arith.addf %227, %228 : vector<16x128xf32>
    %230 = math.tanh %229 : vector<16x128xf32>
    %231 = arith.mulf %226, %230 : vector<16x128xf32>
    %232 = vector.extract_strided_slice %231 {offsets = [0, 0], sizes = [8, 128], strides = [1, 1]} : vector<16x128xf32> to vector<8x128xf32>
    %233 = arith.index_cast %c2_i32 : i32 to index
    %c0_81 = arith.constant 0 : index
    %c0_82 = arith.constant 0 : index
    %234 = vector.load %arg10[%233, %c0_81, %c0_82] : memref<8x8x256xf32, #tpu.memory_space<vmem>>, vector<1x8x128xf32>
    %235 = vector.shape_cast %234 : vector<1x8x128xf32> to vector<8x128xf32>
    %236 = vector.shape_cast %232 : vector<8x128xf32> to vector<1x8x128xf32>
    tpu.vector_store %arg10[%233, %c0_81, %c0_82], %236 {strides = array<i32>} : memref<8x8x256xf32, #tpu.memory_space<vmem>>, vector<1x8x128xf32>,
    %237 = vector.extract_strided_slice %231 {offsets = [8, 0], sizes = [8, 128], strides = [1, 1]} : vector<16x128xf32> to vector<8x128xf32>
    %c7_i32_83 = arith.constant 7 : i32
    %238 = arith.subi %c7_i32_83, %c2_i32 : i32
    %239 = arith.index_cast %238 : i32 to index
    %c0_84 = arith.constant 0 : index
    %c128_85 = arith.constant 128 : index
    %240 = vector.load %arg10[%239, %c0_84, %c128_85] : memref<8x8x256xf32, #tpu.memory_space<vmem>>, vector<1x8x128xf32>
    %241 = vector.shape_cast %240 : vector<1x8x128xf32> to vector<8x128xf32>
    %242 = vector.shape_cast %237 : vector<8x128xf32> to vector<1x8x128xf32>
    tpu.vector_store %arg10[%239, %c0_84, %c128_85], %242 {strides = array<i32>} : memref<8x8x256xf32, #tpu.memory_space<vmem>>, vector<1x8x128xf32>,
    %243 = tpu.concatenate %231, %231 in 1 : vector<16x128xf32>, vector<16x128xf32> -> vector<16x256xf32>
    %cst_86 = arith.constant 0.000000e+00 : f32
    %244 = vector.broadcast %cst_86 : f32 to vector<16x256xf32>
    %245 = arith.select %7, %243, %244 : vector<16x256xi1>, vector<16x256xf32>
    %246 = arith.truncf %245 : vector<16x256xf32> to vector<16x256xbf16>
    %c3_i32 = arith.constant 3 : i32
    %247 = arith.index_cast %c3_i32 : i32 to index
    %c0_87 = arith.constant 0 : index
    %c0_88 = arith.constant 0 : index
    %248 = vector.load %arg11[%247, %c0_87, %c0_88] : memref<8x16x512xf32, #tpu.memory_space<vmem>>, vector<1x16x512xf32>
    %249 = vector.shape_cast %248 : vector<1x16x512xf32> to vector<16x512xf32>
    %cst_89 = arith.constant dense<0.000000e+00> : vector<16x512xf32>
    %250 = tpu.matmul %246, %85, %cst_89 {dimension_numbers = #tpu.dot_dimension_numbers<[1], [0], [0], [1], [0, 0, 1, 1], [], []>} : vector<16x256xbf16>, vector<256x512xbf16>, vector<16x512xf32> -> vector<16x512xf32>
    %251 = arith.addf %249, %250 : vector<16x512xf32>
    %252 = vector.extract_strided_slice %251 {offsets = [0, 0], sizes = [16, 128], strides = [1, 1]} : vector<16x512xf32> to vector<16x128xf32>
    %cst_90 = arith.constant 5.000000e-01 : f32
    %253 = vector.broadcast %cst_90 : f32 to vector<16x128xf32>
    %254 = arith.mulf %253, %252 : vector<16x128xf32>
    %255 = math.tanh %254 : vector<16x128xf32>
    %cst_91 = arith.constant 5.000000e-01 : f32
    %256 = vector.broadcast %cst_91 : f32 to vector<16x128xf32>
    %257 = arith.mulf %256, %255 : vector<16x128xf32>
    %cst_92 = arith.constant 5.000000e-01 : f32
    %258 = vector.broadcast %cst_92 : f32 to vector<16x128xf32>
    %259 = arith.addf %257, %258 : vector<16x128xf32>
    %260 = vector.extract_strided_slice %251 {offsets = [0, 128], sizes = [16, 128], strides = [1, 1]} : vector<16x512xf32> to vector<16x128xf32>
    %cst_93 = arith.constant 5.000000e-01 : f32
    %261 = vector.broadcast %cst_93 : f32 to vector<16x128xf32>
    %262 = arith.mulf %261, %260 : vector<16x128xf32>
    %263 = math.tanh %262 : vector<16x128xf32>
    %cst_94 = arith.constant 5.000000e-01 : f32
    %264 = vector.broadcast %cst_94 : f32 to vector<16x128xf32>
    %265 = arith.mulf %264, %263 : vector<16x128xf32>
    %cst_95 = arith.constant 5.000000e-01 : f32
    %266 = vector.broadcast %cst_95 : f32 to vector<16x128xf32>
    %267 = arith.addf %265, %266 : vector<16x128xf32>
    %268 = vector.extract_strided_slice %251 {offsets = [0, 256], sizes = [16, 128], strides = [1, 1]} : vector<16x512xf32> to vector<16x128xf32>
    %269 = math.tanh %268 : vector<16x128xf32>
    %270 = vector.extract_strided_slice %251 {offsets = [0, 384], sizes = [16, 128], strides = [1, 1]} : vector<16x512xf32> to vector<16x128xf32>
    %cst_96 = arith.constant 5.000000e-01 : f32
    %271 = vector.broadcast %cst_96 : f32 to vector<16x128xf32>
    %272 = arith.mulf %271, %270 : vector<16x128xf32>
    %273 = math.tanh %272 : vector<16x128xf32>
    %cst_97 = arith.constant 5.000000e-01 : f32
    %274 = vector.broadcast %cst_97 : f32 to vector<16x128xf32>
    %275 = arith.mulf %274, %273 : vector<16x128xf32>
    %cst_98 = arith.constant 5.000000e-01 : f32
    %276 = vector.broadcast %cst_98 : f32 to vector<16x128xf32>
    %277 = arith.addf %275, %276 : vector<16x128xf32>
    %278 = arith.mulf %267, %229 : vector<16x128xf32>
    %279 = arith.mulf %259, %269 : vector<16x128xf32>
    %280 = arith.addf %278, %279 : vector<16x128xf32>
    %281 = math.tanh %280 : vector<16x128xf32>
    %282 = arith.mulf %277, %281 : vector<16x128xf32>
    %283 = vector.extract_strided_slice %282 {offsets = [0, 0], sizes = [8, 128], strides = [1, 1]} : vector<16x128xf32> to vector<8x128xf32>
    %284 = arith.index_cast %c3_i32 : i32 to index
    %c0_99 = arith.constant 0 : index
    %c0_100 = arith.constant 0 : index
    %285 = vector.load %arg10[%284, %c0_99, %c0_100] : memref<8x8x256xf32, #tpu.memory_space<vmem>>, vector<1x8x128xf32>
    %286 = vector.shape_cast %285 : vector<1x8x128xf32> to vector<8x128xf32>
    %287 = vector.shape_cast %283 : vector<8x128xf32> to vector<1x8x128xf32>
    tpu.vector_store %arg10[%284, %c0_99, %c0_100], %287 {strides = array<i32>} : memref<8x8x256xf32, #tpu.memory_space<vmem>>, vector<1x8x128xf32>,
    %288 = vector.extract_strided_slice %282 {offsets = [8, 0], sizes = [8, 128], strides = [1, 1]} : vector<16x128xf32> to vector<8x128xf32>
    %c7_i32_101 = arith.constant 7 : i32
    %289 = arith.subi %c7_i32_101, %c3_i32 : i32
    %290 = arith.index_cast %289 : i32 to index
    %c0_102 = arith.constant 0 : index
    %c128_103 = arith.constant 128 : index
    %291 = vector.load %arg10[%290, %c0_102, %c128_103] : memref<8x8x256xf32, #tpu.memory_space<vmem>>, vector<1x8x128xf32>
    %292 = vector.shape_cast %291 : vector<1x8x128xf32> to vector<8x128xf32>
    %293 = vector.shape_cast %288 : vector<8x128xf32> to vector<1x8x128xf32>
    tpu.vector_store %arg10[%290, %c0_102, %c128_103], %293 {strides = array<i32>} : memref<8x8x256xf32, #tpu.memory_space<vmem>>, vector<1x8x128xf32>,
    %294 = tpu.concatenate %282, %282 in 1 : vector<16x128xf32>, vector<16x128xf32> -> vector<16x256xf32>
    %cst_104 = arith.constant 0.000000e+00 : f32
    %295 = vector.broadcast %cst_104 : f32 to vector<16x256xf32>
    %296 = arith.select %7, %294, %295 : vector<16x256xi1>, vector<16x256xf32>
    %297 = arith.truncf %296 : vector<16x256xf32> to vector<16x256xbf16>
    %c4_i32 = arith.constant 4 : i32
    %298 = arith.index_cast %c4_i32 : i32 to index
    %c0_105 = arith.constant 0 : index
    %c0_106 = arith.constant 0 : index
    %299 = vector.load %arg11[%298, %c0_105, %c0_106] : memref<8x16x512xf32, #tpu.memory_space<vmem>>, vector<1x16x512xf32>
    %300 = vector.shape_cast %299 : vector<1x16x512xf32> to vector<16x512xf32>
    %cst_107 = arith.constant dense<0.000000e+00> : vector<16x512xf32>
    %301 = tpu.matmul %297, %85, %cst_107 {dimension_numbers = #tpu.dot_dimension_numbers<[1], [0], [0], [1], [0, 0, 1, 1], [], []>} : vector<16x256xbf16>, vector<256x512xbf16>, vector<16x512xf32> -> vector<16x512xf32>
    %302 = arith.addf %300, %301 : vector<16x512xf32>
    %303 = vector.extract_strided_slice %302 {offsets = [0, 0], sizes = [16, 128], strides = [1, 1]} : vector<16x512xf32> to vector<16x128xf32>
    %cst_108 = arith.constant 5.000000e-01 : f32
    %304 = vector.broadcast %cst_108 : f32 to vector<16x128xf32>
    %305 = arith.mulf %304, %303 : vector<16x128xf32>
    %306 = math.tanh %305 : vector<16x128xf32>
    %cst_109 = arith.constant 5.000000e-01 : f32
    %307 = vector.broadcast %cst_109 : f32 to vector<16x128xf32>
    %308 = arith.mulf %307, %306 : vector<16x128xf32>
    %cst_110 = arith.constant 5.000000e-01 : f32
    %309 = vector.broadcast %cst_110 : f32 to vector<16x128xf32>
    %310 = arith.addf %308, %309 : vector<16x128xf32>
    %311 = vector.extract_strided_slice %302 {offsets = [0, 128], sizes = [16, 128], strides = [1, 1]} : vector<16x512xf32> to vector<16x128xf32>
    %cst_111 = arith.constant 5.000000e-01 : f32
    %312 = vector.broadcast %cst_111 : f32 to vector<16x128xf32>
    %313 = arith.mulf %312, %311 : vector<16x128xf32>
    %314 = math.tanh %313 : vector<16x128xf32>
    %cst_112 = arith.constant 5.000000e-01 : f32
    %315 = vector.broadcast %cst_112 : f32 to vector<16x128xf32>
    %316 = arith.mulf %315, %314 : vector<16x128xf32>
    %cst_113 = arith.constant 5.000000e-01 : f32
    %317 = vector.broadcast %cst_113 : f32 to vector<16x128xf32>
    %318 = arith.addf %316, %317 : vector<16x128xf32>
    %319 = vector.extract_strided_slice %302 {offsets = [0, 256], sizes = [16, 128], strides = [1, 1]} : vector<16x512xf32> to vector<16x128xf32>
    %320 = math.tanh %319 : vector<16x128xf32>
    %321 = vector.extract_strided_slice %302 {offsets = [0, 384], sizes = [16, 128], strides = [1, 1]} : vector<16x512xf32> to vector<16x128xf32>
    %cst_114 = arith.constant 5.000000e-01 : f32
    %322 = vector.broadcast %cst_114 : f32 to vector<16x128xf32>
    %323 = arith.mulf %322, %321 : vector<16x128xf32>
    %324 = math.tanh %323 : vector<16x128xf32>
    %cst_115 = arith.constant 5.000000e-01 : f32
    %325 = vector.broadcast %cst_115 : f32 to vector<16x128xf32>
    %326 = arith.mulf %325, %324 : vector<16x128xf32>
    %cst_116 = arith.constant 5.000000e-01 : f32
    %327 = vector.broadcast %cst_116 : f32 to vector<16x128xf32>
    %328 = arith.addf %326, %327 : vector<16x128xf32>
    %329 = arith.mulf %318, %280 : vector<16x128xf32>
    %330 = arith.mulf %310, %320 : vector<16x128xf32>
    %331 = arith.addf %329, %330 : vector<16x128xf32>
    %332 = math.tanh %331 : vector<16x128xf32>
    %333 = arith.mulf %328, %332 : vector<16x128xf32>
    %334 = vector.extract_strided_slice %333 {offsets = [0, 0], sizes = [8, 128], strides = [1, 1]} : vector<16x128xf32> to vector<8x128xf32>
    %335 = arith.index_cast %c4_i32 : i32 to index
    %c0_117 = arith.constant 0 : index
    %c0_118 = arith.constant 0 : index
    %336 = vector.load %arg10[%335, %c0_117, %c0_118] : memref<8x8x256xf32, #tpu.memory_space<vmem>>, vector<1x8x128xf32>
    %337 = vector.shape_cast %336 : vector<1x8x128xf32> to vector<8x128xf32>
    %338 = vector.shape_cast %334 : vector<8x128xf32> to vector<1x8x128xf32>
    tpu.vector_store %arg10[%335, %c0_117, %c0_118], %338 {strides = array<i32>} : memref<8x8x256xf32, #tpu.memory_space<vmem>>, vector<1x8x128xf32>,
    %339 = vector.extract_strided_slice %333 {offsets = [8, 0], sizes = [8, 128], strides = [1, 1]} : vector<16x128xf32> to vector<8x128xf32>
    %c7_i32_119 = arith.constant 7 : i32
    %340 = arith.subi %c7_i32_119, %c4_i32 : i32
    %341 = arith.index_cast %340 : i32 to index
    %c0_120 = arith.constant 0 : index
    %c128_121 = arith.constant 128 : index
    %342 = vector.load %arg10[%341, %c0_120, %c128_121] : memref<8x8x256xf32, #tpu.memory_space<vmem>>, vector<1x8x128xf32>
    %343 = vector.shape_cast %342 : vector<1x8x128xf32> to vector<8x128xf32>
    %344 = vector.shape_cast %339 : vector<8x128xf32> to vector<1x8x128xf32>
    tpu.vector_store %arg10[%341, %c0_120, %c128_121], %344 {strides = array<i32>} : memref<8x8x256xf32, #tpu.memory_space<vmem>>, vector<1x8x128xf32>,
    %345 = tpu.concatenate %333, %333 in 1 : vector<16x128xf32>, vector<16x128xf32> -> vector<16x256xf32>
    %cst_122 = arith.constant 0.000000e+00 : f32
    %346 = vector.broadcast %cst_122 : f32 to vector<16x256xf32>
    %347 = arith.select %7, %345, %346 : vector<16x256xi1>, vector<16x256xf32>
    %348 = arith.truncf %347 : vector<16x256xf32> to vector<16x256xbf16>
    %c5_i32 = arith.constant 5 : i32
    %349 = arith.index_cast %c5_i32 : i32 to index
    %c0_123 = arith.constant 0 : index
    %c0_124 = arith.constant 0 : index
    %350 = vector.load %arg11[%349, %c0_123, %c0_124] : memref<8x16x512xf32, #tpu.memory_space<vmem>>, vector<1x16x512xf32>
    %351 = vector.shape_cast %350 : vector<1x16x512xf32> to vector<16x512xf32>
    %cst_125 = arith.constant dense<0.000000e+00> : vector<16x512xf32>
    %352 = tpu.matmul %348, %85, %cst_125 {dimension_numbers = #tpu.dot_dimension_numbers<[1], [0], [0], [1], [0, 0, 1, 1], [], []>} : vector<16x256xbf16>, vector<256x512xbf16>, vector<16x512xf32> -> vector<16x512xf32>
    %353 = arith.addf %351, %352 : vector<16x512xf32>
    %354 = vector.extract_strided_slice %353 {offsets = [0, 0], sizes = [16, 128], strides = [1, 1]} : vector<16x512xf32> to vector<16x128xf32>
    %cst_126 = arith.constant 5.000000e-01 : f32
    %355 = vector.broadcast %cst_126 : f32 to vector<16x128xf32>
    %356 = arith.mulf %355, %354 : vector<16x128xf32>
    %357 = math.tanh %356 : vector<16x128xf32>
    %cst_127 = arith.constant 5.000000e-01 : f32
    %358 = vector.broadcast %cst_127 : f32 to vector<16x128xf32>
    %359 = arith.mulf %358, %357 : vector<16x128xf32>
    %cst_128 = arith.constant 5.000000e-01 : f32
    %360 = vector.broadcast %cst_128 : f32 to vector<16x128xf32>
    %361 = arith.addf %359, %360 : vector<16x128xf32>
    %362 = vector.extract_strided_slice %353 {offsets = [0, 128], sizes = [16, 128], strides = [1, 1]} : vector<16x512xf32> to vector<16x128xf32>
    %cst_129 = arith.constant 5.000000e-01 : f32
    %363 = vector.broadcast %cst_129 : f32 to vector<16x128xf32>
    %364 = arith.mulf %363, %362 : vector<16x128xf32>
    %365 = math.tanh %364 : vector<16x128xf32>
    %cst_130 = arith.constant 5.000000e-01 : f32
    %366 = vector.broadcast %cst_130 : f32 to vector<16x128xf32>
    %367 = arith.mulf %366, %365 : vector<16x128xf32>
    %cst_131 = arith.constant 5.000000e-01 : f32
    %368 = vector.broadcast %cst_131 : f32 to vector<16x128xf32>
    %369 = arith.addf %367, %368 : vector<16x128xf32>
    %370 = vector.extract_strided_slice %353 {offsets = [0, 256], sizes = [16, 128], strides = [1, 1]} : vector<16x512xf32> to vector<16x128xf32>
    %371 = math.tanh %370 : vector<16x128xf32>
    %372 = vector.extract_strided_slice %353 {offsets = [0, 384], sizes = [16, 128], strides = [1, 1]} : vector<16x512xf32> to vector<16x128xf32>
    %cst_132 = arith.constant 5.000000e-01 : f32
    %373 = vector.broadcast %cst_132 : f32 to vector<16x128xf32>
    %374 = arith.mulf %373, %372 : vector<16x128xf32>
    %375 = math.tanh %374 : vector<16x128xf32>
    %cst_133 = arith.constant 5.000000e-01 : f32
    %376 = vector.broadcast %cst_133 : f32 to vector<16x128xf32>
    %377 = arith.mulf %376, %375 : vector<16x128xf32>
    %cst_134 = arith.constant 5.000000e-01 : f32
    %378 = vector.broadcast %cst_134 : f32 to vector<16x128xf32>
    %379 = arith.addf %377, %378 : vector<16x128xf32>
    %380 = arith.mulf %369, %331 : vector<16x128xf32>
    %381 = arith.mulf %361, %371 : vector<16x128xf32>
    %382 = arith.addf %380, %381 : vector<16x128xf32>
    %383 = math.tanh %382 : vector<16x128xf32>
    %384 = arith.mulf %379, %383 : vector<16x128xf32>
    %385 = vector.extract_strided_slice %384 {offsets = [0, 0], sizes = [8, 128], strides = [1, 1]} : vector<16x128xf32> to vector<8x128xf32>
    %386 = arith.index_cast %c5_i32 : i32 to index
    %c0_135 = arith.constant 0 : index
    %c0_136 = arith.constant 0 : index
    %387 = vector.load %arg10[%386, %c0_135, %c0_136] : memref<8x8x256xf32, #tpu.memory_space<vmem>>, vector<1x8x128xf32>
    %388 = vector.shape_cast %387 : vector<1x8x128xf32> to vector<8x128xf32>
    %389 = vector.shape_cast %385 : vector<8x128xf32> to vector<1x8x128xf32>
    tpu.vector_store %arg10[%386, %c0_135, %c0_136], %389 {strides = array<i32>} : memref<8x8x256xf32, #tpu.memory_space<vmem>>, vector<1x8x128xf32>,
    %390 = vector.extract_strided_slice %384 {offsets = [8, 0], sizes = [8, 128], strides = [1, 1]} : vector<16x128xf32> to vector<8x128xf32>
    %c7_i32_137 = arith.constant 7 : i32
    %391 = arith.subi %c7_i32_137, %c5_i32 : i32
    %392 = arith.index_cast %391 : i32 to index
    %c0_138 = arith.constant 0 : index
    %c128_139 = arith.constant 128 : index
    %393 = vector.load %arg10[%392, %c0_138, %c128_139] : memref<8x8x256xf32, #tpu.memory_space<vmem>>, vector<1x8x128xf32>
    %394 = vector.shape_cast %393 : vector<1x8x128xf32> to vector<8x128xf32>
    %395 = vector.shape_cast %390 : vector<8x128xf32> to vector<1x8x128xf32>
    tpu.vector_store %arg10[%392, %c0_138, %c128_139], %395 {strides = array<i32>} : memref<8x8x256xf32, #tpu.memory_space<vmem>>, vector<1x8x128xf32>,
    %396 = tpu.concatenate %384, %384 in 1 : vector<16x128xf32>, vector<16x128xf32> -> vector<16x256xf32>
    %cst_140 = arith.constant 0.000000e+00 : f32
    %397 = vector.broadcast %cst_140 : f32 to vector<16x256xf32>
    %398 = arith.select %7, %396, %397 : vector<16x256xi1>, vector<16x256xf32>
    %399 = arith.truncf %398 : vector<16x256xf32> to vector<16x256xbf16>
    %c6_i32 = arith.constant 6 : i32
    %400 = arith.index_cast %c6_i32 : i32 to index
    %c0_141 = arith.constant 0 : index
    %c0_142 = arith.constant 0 : index
    %401 = vector.load %arg11[%400, %c0_141, %c0_142] : memref<8x16x512xf32, #tpu.memory_space<vmem>>, vector<1x16x512xf32>
    %402 = vector.shape_cast %401 : vector<1x16x512xf32> to vector<16x512xf32>
    %cst_143 = arith.constant dense<0.000000e+00> : vector<16x512xf32>
    %403 = tpu.matmul %399, %85, %cst_143 {dimension_numbers = #tpu.dot_dimension_numbers<[1], [0], [0], [1], [0, 0, 1, 1], [], []>} : vector<16x256xbf16>, vector<256x512xbf16>, vector<16x512xf32> -> vector<16x512xf32>
    %404 = arith.addf %402, %403 : vector<16x512xf32>
    %405 = vector.extract_strided_slice %404 {offsets = [0, 0], sizes = [16, 128], strides = [1, 1]} : vector<16x512xf32> to vector<16x128xf32>
    %cst_144 = arith.constant 5.000000e-01 : f32
    %406 = vector.broadcast %cst_144 : f32 to vector<16x128xf32>
    %407 = arith.mulf %406, %405 : vector<16x128xf32>
    %408 = math.tanh %407 : vector<16x128xf32>
    %cst_145 = arith.constant 5.000000e-01 : f32
    %409 = vector.broadcast %cst_145 : f32 to vector<16x128xf32>
    %410 = arith.mulf %409, %408 : vector<16x128xf32>
    %cst_146 = arith.constant 5.000000e-01 : f32
    %411 = vector.broadcast %cst_146 : f32 to vector<16x128xf32>
    %412 = arith.addf %410, %411 : vector<16x128xf32>
    %413 = vector.extract_strided_slice %404 {offsets = [0, 128], sizes = [16, 128], strides = [1, 1]} : vector<16x512xf32> to vector<16x128xf32>
    %cst_147 = arith.constant 5.000000e-01 : f32
    %414 = vector.broadcast %cst_147 : f32 to vector<16x128xf32>
    %415 = arith.mulf %414, %413 : vector<16x128xf32>
    %416 = math.tanh %415 : vector<16x128xf32>
    %cst_148 = arith.constant 5.000000e-01 : f32
    %417 = vector.broadcast %cst_148 : f32 to vector<16x128xf32>
    %418 = arith.mulf %417, %416 : vector<16x128xf32>
    %cst_149 = arith.constant 5.000000e-01 : f32
    %419 = vector.broadcast %cst_149 : f32 to vector<16x128xf32>
    %420 = arith.addf %418, %419 : vector<16x128xf32>
    %421 = vector.extract_strided_slice %404 {offsets = [0, 256], sizes = [16, 128], strides = [1, 1]} : vector<16x512xf32> to vector<16x128xf32>
    %422 = math.tanh %421 : vector<16x128xf32>
    %423 = vector.extract_strided_slice %404 {offsets = [0, 384], sizes = [16, 128], strides = [1, 1]} : vector<16x512xf32> to vector<16x128xf32>
    %cst_150 = arith.constant 5.000000e-01 : f32
    %424 = vector.broadcast %cst_150 : f32 to vector<16x128xf32>
    %425 = arith.mulf %424, %423 : vector<16x128xf32>
    %426 = math.tanh %425 : vector<16x128xf32>
    %cst_151 = arith.constant 5.000000e-01 : f32
    %427 = vector.broadcast %cst_151 : f32 to vector<16x128xf32>
    %428 = arith.mulf %427, %426 : vector<16x128xf32>
    %cst_152 = arith.constant 5.000000e-01 : f32
    %429 = vector.broadcast %cst_152 : f32 to vector<16x128xf32>
    %430 = arith.addf %428, %429 : vector<16x128xf32>
    %431 = arith.mulf %420, %382 : vector<16x128xf32>
    %432 = arith.mulf %412, %422 : vector<16x128xf32>
    %433 = arith.addf %431, %432 : vector<16x128xf32>
    %434 = math.tanh %433 : vector<16x128xf32>
    %435 = arith.mulf %430, %434 : vector<16x128xf32>
    %436 = vector.extract_strided_slice %435 {offsets = [0, 0], sizes = [8, 128], strides = [1, 1]} : vector<16x128xf32> to vector<8x128xf32>
    %437 = arith.index_cast %c6_i32 : i32 to index
    %c0_153 = arith.constant 0 : index
    %c0_154 = arith.constant 0 : index
    %438 = vector.load %arg10[%437, %c0_153, %c0_154] : memref<8x8x256xf32, #tpu.memory_space<vmem>>, vector<1x8x128xf32>
    %439 = vector.shape_cast %438 : vector<1x8x128xf32> to vector<8x128xf32>
    %440 = vector.shape_cast %436 : vector<8x128xf32> to vector<1x8x128xf32>
    tpu.vector_store %arg10[%437, %c0_153, %c0_154], %440 {strides = array<i32>} : memref<8x8x256xf32, #tpu.memory_space<vmem>>, vector<1x8x128xf32>,
    %441 = vector.extract_strided_slice %435 {offsets = [8, 0], sizes = [8, 128], strides = [1, 1]} : vector<16x128xf32> to vector<8x128xf32>
    %c7_i32_155 = arith.constant 7 : i32
    %442 = arith.subi %c7_i32_155, %c6_i32 : i32
    %443 = arith.index_cast %442 : i32 to index
    %c0_156 = arith.constant 0 : index
    %c128_157 = arith.constant 128 : index
    %444 = vector.load %arg10[%443, %c0_156, %c128_157] : memref<8x8x256xf32, #tpu.memory_space<vmem>>, vector<1x8x128xf32>
    %445 = vector.shape_cast %444 : vector<1x8x128xf32> to vector<8x128xf32>
    %446 = vector.shape_cast %441 : vector<8x128xf32> to vector<1x8x128xf32>
    tpu.vector_store %arg10[%443, %c0_156, %c128_157], %446 {strides = array<i32>} : memref<8x8x256xf32, #tpu.memory_space<vmem>>, vector<1x8x128xf32>,
    %447 = tpu.concatenate %435, %435 in 1 : vector<16x128xf32>, vector<16x128xf32> -> vector<16x256xf32>
    %cst_158 = arith.constant 0.000000e+00 : f32
    %448 = vector.broadcast %cst_158 : f32 to vector<16x256xf32>
    %449 = arith.select %7, %447, %448 : vector<16x256xi1>, vector<16x256xf32>
    %450 = arith.truncf %449 : vector<16x256xf32> to vector<16x256xbf16>
    %c7_i32_159 = arith.constant 7 : i32
    %451 = arith.index_cast %c7_i32_159 : i32 to index
    %c0_160 = arith.constant 0 : index
    %c0_161 = arith.constant 0 : index
    %452 = vector.load %arg11[%451, %c0_160, %c0_161] : memref<8x16x512xf32, #tpu.memory_space<vmem>>, vector<1x16x512xf32>
    %453 = vector.shape_cast %452 : vector<1x16x512xf32> to vector<16x512xf32>
    %cst_162 = arith.constant dense<0.000000e+00> : vector<16x512xf32>
    %454 = tpu.matmul %450, %85, %cst_162 {dimension_numbers = #tpu.dot_dimension_numbers<[1], [0], [0], [1], [0, 0, 1, 1], [], []>} : vector<16x256xbf16>, vector<256x512xbf16>, vector<16x512xf32> -> vector<16x512xf32>
    %455 = arith.addf %453, %454 : vector<16x512xf32>
    %456 = vector.extract_strided_slice %455 {offsets = [0, 0], sizes = [16, 128], strides = [1, 1]} : vector<16x512xf32> to vector<16x128xf32>
    %cst_163 = arith.constant 5.000000e-01 : f32
    %457 = vector.broadcast %cst_163 : f32 to vector<16x128xf32>
    %458 = arith.mulf %457, %456 : vector<16x128xf32>
    %459 = math.tanh %458 : vector<16x128xf32>
    %cst_164 = arith.constant 5.000000e-01 : f32
    %460 = vector.broadcast %cst_164 : f32 to vector<16x128xf32>
    %461 = arith.mulf %460, %459 : vector<16x128xf32>
    %cst_165 = arith.constant 5.000000e-01 : f32
    %462 = vector.broadcast %cst_165 : f32 to vector<16x128xf32>
    %463 = arith.addf %461, %462 : vector<16x128xf32>
    %464 = vector.extract_strided_slice %455 {offsets = [0, 128], sizes = [16, 128], strides = [1, 1]} : vector<16x512xf32> to vector<16x128xf32>
    %cst_166 = arith.constant 5.000000e-01 : f32
    %465 = vector.broadcast %cst_166 : f32 to vector<16x128xf32>
    %466 = arith.mulf %465, %464 : vector<16x128xf32>
    %467 = math.tanh %466 : vector<16x128xf32>
    %cst_167 = arith.constant 5.000000e-01 : f32
    %468 = vector.broadcast %cst_167 : f32 to vector<16x128xf32>
    %469 = arith.mulf %468, %467 : vector<16x128xf32>
    %cst_168 = arith.constant 5.000000e-01 : f32
    %470 = vector.broadcast %cst_168 : f32 to vector<16x128xf32>
    %471 = arith.addf %469, %470 : vector<16x128xf32>
    %472 = vector.extract_strided_slice %455 {offsets = [0, 256], sizes = [16, 128], strides = [1, 1]} : vector<16x512xf32> to vector<16x128xf32>
    %473 = math.tanh %472 : vector<16x128xf32>
    %474 = vector.extract_strided_slice %455 {offsets = [0, 384], sizes = [16, 128], strides = [1, 1]} : vector<16x512xf32> to vector<16x128xf32>
    %cst_169 = arith.constant 5.000000e-01 : f32
    %475 = vector.broadcast %cst_169 : f32 to vector<16x128xf32>
    %476 = arith.mulf %475, %474 : vector<16x128xf32>
    %477 = math.tanh %476 : vector<16x128xf32>
    %cst_170 = arith.constant 5.000000e-01 : f32
    %478 = vector.broadcast %cst_170 : f32 to vector<16x128xf32>
    %479 = arith.mulf %478, %477 : vector<16x128xf32>
    %cst_171 = arith.constant 5.000000e-01 : f32
    %480 = vector.broadcast %cst_171 : f32 to vector<16x128xf32>
    %481 = arith.addf %479, %480 : vector<16x128xf32>
    %482 = arith.mulf %471, %433 : vector<16x128xf32>
    %483 = arith.mulf %463, %473 : vector<16x128xf32>
    %484 = arith.addf %482, %483 : vector<16x128xf32>
    %485 = math.tanh %484 : vector<16x128xf32>
    %486 = arith.mulf %481, %485 : vector<16x128xf32>
    %487 = vector.extract_strided_slice %486 {offsets = [0, 0], sizes = [8, 128], strides = [1, 1]} : vector<16x128xf32> to vector<8x128xf32>
    %488 = arith.index_cast %c7_i32_159 : i32 to index
    %c0_172 = arith.constant 0 : index
    %c0_173 = arith.constant 0 : index
    %489 = vector.load %arg10[%488, %c0_172, %c0_173] : memref<8x8x256xf32, #tpu.memory_space<vmem>>, vector<1x8x128xf32>
    %490 = vector.shape_cast %489 : vector<1x8x128xf32> to vector<8x128xf32>
    %491 = vector.shape_cast %487 : vector<8x128xf32> to vector<1x8x128xf32>
    tpu.vector_store %arg10[%488, %c0_172, %c0_173], %491 {strides = array<i32>} : memref<8x8x256xf32, #tpu.memory_space<vmem>>, vector<1x8x128xf32>,
    %492 = vector.extract_strided_slice %486 {offsets = [8, 0], sizes = [8, 128], strides = [1, 1]} : vector<16x128xf32> to vector<8x128xf32>
    %c7_i32_174 = arith.constant 7 : i32
    %493 = arith.subi %c7_i32_174, %c7_i32_159 : i32
    %494 = arith.index_cast %493 : i32 to index
    %c0_175 = arith.constant 0 : index
    %c128_176 = arith.constant 128 : index
    %495 = vector.load %arg10[%494, %c0_175, %c128_176] : memref<8x8x256xf32, #tpu.memory_space<vmem>>, vector<1x8x128xf32>
    %496 = vector.shape_cast %495 : vector<1x8x128xf32> to vector<8x128xf32>
    %497 = vector.shape_cast %492 : vector<8x128xf32> to vector<1x8x128xf32>
    tpu.vector_store %arg10[%494, %c0_175, %c128_176], %497 {strides = array<i32>} : memref<8x8x256xf32, #tpu.memory_space<vmem>>, vector<1x8x128xf32>,
    %498 = tpu.concatenate %486, %486 in 1 : vector<16x128xf32>, vector<16x128xf32> -> vector<16x256xf32>
    %cst_177 = arith.constant 0.000000e+00 : f32
    %499 = vector.broadcast %cst_177 : f32 to vector<16x256xf32>
    %500 = arith.select %7, %498, %499 : vector<16x256xi1>, vector<16x256xf32>
    %501 = arith.truncf %500 : vector<16x256xf32> to vector<16x256xbf16>
    %c8_i32_178 = arith.constant 8 : i32
    %c0_179 = arith.constant 0 : index
    %c0_180 = arith.constant 0 : index
    %c0_181 = arith.constant 0 : index
    %502 = vector.load %arg10[%c0_179, %c0_180, %c0_181] : memref<8x8x256xf32, #tpu.memory_space<vmem>>, vector<8x8x256xf32>
    %503 = vector.shape_cast %502 : vector<8x8x256xf32> to vector<64x256xf32>
    %504 = arith.truncf %503 : vector<64x256xf32> to vector<64x256xbf16>
    %c0_182 = arith.constant 0 : index
    %c0_183 = arith.constant 0 : index
    %c0_184 = arith.constant 0 : index
    %505 = vector.load %arg4[%c0_182, %c0_183, %c0_184] : memref<1x256x1024xbf16, #tpu.memory_space<vmem>>, vector<1x256x1024xbf16>
    %506 = vector.shape_cast %505 : vector<1x256x1024xbf16> to vector<256x1024xbf16>
    %cst_185 = arith.constant dense<0.000000e+00> : vector<64x1024xf32>
    %507 = tpu.matmul %504, %506, %cst_185 {dimension_numbers = #tpu.dot_dimension_numbers<[1], [0], [0], [1], [0, 0, 1, 1], [], []>} : vector<64x256xbf16>, vector<256x1024xbf16>, vector<64x1024xf32> -> vector<64x1024xf32>
    %c1_186 = arith.constant 1 : index
    %c0_187 = arith.constant 0 : index
    %c0_188 = arith.constant 0 : index
    %508 = vector.load %arg6[%c1_186, %c0_187, %c0_188] : memref<2x1x1024xf32, #tpu.memory_space<vmem>>, vector<1x1x1024xf32>
    %509 = vector.shape_cast %508 : vector<1x1x1024xf32> to vector<1x1024xf32>
    %510 = vector.broadcast %509 : vector<1x1024xf32> to vector<64x1024xf32>
    %511 = arith.addf %507, %510 : vector<64x1024xf32>
    %512 = vector.extract_strided_slice %511 {offsets = [0, 0], sizes = [64, 512], strides = [1, 1]} : vector<64x1024xf32> to vector<64x512xf32>
    %513 = vector.shape_cast %512 : vector<64x512xf32> to vector<8x8x512xf32>
    %514 = vector.extract_strided_slice %511 {offsets = [0, 512], sizes = [64, 512], strides = [1, 1]} : vector<64x1024xf32> to vector<64x512xf32>
    %515 = vector.shape_cast %514 : vector<64x512xf32> to vector<8x8x512xf32>
    %516 = vector.extract_strided_slice %513 {offsets = [0, 0, 0], sizes = [1, 8, 512], strides = [1, 1, 1]} : vector<8x8x512xf32> to vector<1x8x512xf32>
    %517 = vector.shape_cast %516 : vector<1x8x512xf32> to vector<8x512xf32>
    %518 = vector.extract_strided_slice %515 {offsets = [7, 0, 0], sizes = [1, 8, 512], strides = [1, 1, 1]} : vector<8x8x512xf32> to vector<1x8x512xf32>
    %519 = vector.shape_cast %518 : vector<1x8x512xf32> to vector<8x512xf32>
    %520 = tpu.concatenate %517, %519 in 0 : vector<8x512xf32>, vector<8x512xf32> -> vector<16x512xf32>
    %c0_189 = arith.constant 0 : index
    %c0_190 = arith.constant 0 : index
    %c0_191 = arith.constant 0 : index
    %521 = vector.load %arg11[%c0_189, %c0_190, %c0_191] : memref<8x16x512xf32, #tpu.memory_space<vmem>>, vector<1x16x512xf32>
    %522 = vector.shape_cast %521 : vector<1x16x512xf32> to vector<16x512xf32>
    %523 = vector.shape_cast %520 : vector<16x512xf32> to vector<1x16x512xf32>
    tpu.vector_store %arg11[%c0_189, %c0_190, %c0_191], %523 {strides = array<i32>} : memref<8x16x512xf32, #tpu.memory_space<vmem>>, vector<1x16x512xf32>,
    %524 = vector.extract_strided_slice %513 {offsets = [1, 0, 0], sizes = [1, 8, 512], strides = [1, 1, 1]} : vector<8x8x512xf32> to vector<1x8x512xf32>
    %525 = vector.shape_cast %524 : vector<1x8x512xf32> to vector<8x512xf32>
    %526 = vector.extract_strided_slice %515 {offsets = [6, 0, 0], sizes = [1, 8, 512], strides = [1, 1, 1]} : vector<8x8x512xf32> to vector<1x8x512xf32>
    %527 = vector.shape_cast %526 : vector<1x8x512xf32> to vector<8x512xf32>
    %528 = tpu.concatenate %525, %527 in 0 : vector<8x512xf32>, vector<8x512xf32> -> vector<16x512xf32>
    %c1_192 = arith.constant 1 : index
    %c0_193 = arith.constant 0 : index
    %c0_194 = arith.constant 0 : index
    %529 = vector.load %arg11[%c1_192, %c0_193, %c0_194] : memref<8x16x512xf32, #tpu.memory_space<vmem>>, vector<1x16x512xf32>
    %530 = vector.shape_cast %529 : vector<1x16x512xf32> to vector<16x512xf32>
    %531 = vector.shape_cast %528 : vector<16x512xf32> to vector<1x16x512xf32>
    tpu.vector_store %arg11[%c1_192, %c0_193, %c0_194], %531 {strides = array<i32>} : memref<8x16x512xf32, #tpu.memory_space<vmem>>, vector<1x16x512xf32>,
    %532 = vector.extract_strided_slice %513 {offsets = [2, 0, 0], sizes = [1, 8, 512], strides = [1, 1, 1]} : vector<8x8x512xf32> to vector<1x8x512xf32>
    %533 = vector.shape_cast %532 : vector<1x8x512xf32> to vector<8x512xf32>
    %534 = vector.extract_strided_slice %515 {offsets = [5, 0, 0], sizes = [1, 8, 512], strides = [1, 1, 1]} : vector<8x8x512xf32> to vector<1x8x512xf32>
    %535 = vector.shape_cast %534 : vector<1x8x512xf32> to vector<8x512xf32>
    %536 = tpu.concatenate %533, %535 in 0 : vector<8x512xf32>, vector<8x512xf32> -> vector<16x512xf32>
    %c2_195 = arith.constant 2 : index
    %c0_196 = arith.constant 0 : index
    %c0_197 = arith.constant 0 : index
    %537 = vector.load %arg11[%c2_195, %c0_196, %c0_197] : memref<8x16x512xf32, #tpu.memory_space<vmem>>, vector<1x16x512xf32>
    %538 = vector.shape_cast %537 : vector<1x16x512xf32> to vector<16x512xf32>
    %539 = vector.shape_cast %536 : vector<16x512xf32> to vector<1x16x512xf32>
    tpu.vector_store %arg11[%c2_195, %c0_196, %c0_197], %539 {strides = array<i32>} : memref<8x16x512xf32, #tpu.memory_space<vmem>>, vector<1x16x512xf32>,
    %540 = vector.extract_strided_slice %513 {offsets = [3, 0, 0], sizes = [1, 8, 512], strides = [1, 1, 1]} : vector<8x8x512xf32> to vector<1x8x512xf32>
    %541 = vector.shape_cast %540 : vector<1x8x512xf32> to vector<8x512xf32>
    %542 = vector.extract_strided_slice %515 {offsets = [4, 0, 0], sizes = [1, 8, 512], strides = [1, 1, 1]} : vector<8x8x512xf32> to vector<1x8x512xf32>
    %543 = vector.shape_cast %542 : vector<1x8x512xf32> to vector<8x512xf32>
    %544 = tpu.concatenate %541, %543 in 0 : vector<8x512xf32>, vector<8x512xf32> -> vector<16x512xf32>
    %c3_198 = arith.constant 3 : index
    %c0_199 = arith.constant 0 : index
    %c0_200 = arith.constant 0 : index
    %545 = vector.load %arg11[%c3_198, %c0_199, %c0_200] : memref<8x16x512xf32, #tpu.memory_space<vmem>>, vector<1x16x512xf32>
    %546 = vector.shape_cast %545 : vector<1x16x512xf32> to vector<16x512xf32>
    %547 = vector.shape_cast %544 : vector<16x512xf32> to vector<1x16x512xf32>
    tpu.vector_store %arg11[%c3_198, %c0_199, %c0_200], %547 {strides = array<i32>} : memref<8x16x512xf32, #tpu.memory_space<vmem>>, vector<1x16x512xf32>,
    %548 = vector.extract_strided_slice %513 {offsets = [4, 0, 0], sizes = [1, 8, 512], strides = [1, 1, 1]} : vector<8x8x512xf32> to vector<1x8x512xf32>
    %549 = vector.shape_cast %548 : vector<1x8x512xf32> to vector<8x512xf32>
    %550 = vector.extract_strided_slice %515 {offsets = [3, 0, 0], sizes = [1, 8, 512], strides = [1, 1, 1]} : vector<8x8x512xf32> to vector<1x8x512xf32>
    %551 = vector.shape_cast %550 : vector<1x8x512xf32> to vector<8x512xf32>
    %552 = tpu.concatenate %549, %551 in 0 : vector<8x512xf32>, vector<8x512xf32> -> vector<16x512xf32>
    %c4_201 = arith.constant 4 : index
    %c0_202 = arith.constant 0 : index
    %c0_203 = arith.constant 0 : index
    %553 = vector.load %arg11[%c4_201, %c0_202, %c0_203] : memref<8x16x512xf32, #tpu.memory_space<vmem>>, vector<1x16x512xf32>
    %554 = vector.shape_cast %553 : vector<1x16x512xf32> to vector<16x512xf32>
    %555 = vector.shape_cast %552 : vector<16x512xf32> to vector<1x16x512xf32>
    tpu.vector_store %arg11[%c4_201, %c0_202, %c0_203], %555 {strides = array<i32>} : memref<8x16x512xf32, #tpu.memory_space<vmem>>, vector<1x16x512xf32>,
    %556 = vector.extract_strided_slice %513 {offsets = [5, 0, 0], sizes = [1, 8, 512], strides = [1, 1, 1]} : vector<8x8x512xf32> to vector<1x8x512xf32>
    %557 = vector.shape_cast %556 : vector<1x8x512xf32> to vector<8x512xf32>
    %558 = vector.extract_strided_slice %515 {offsets = [2, 0, 0], sizes = [1, 8, 512], strides = [1, 1, 1]} : vector<8x8x512xf32> to vector<1x8x512xf32>
    %559 = vector.shape_cast %558 : vector<1x8x512xf32> to vector<8x512xf32>
    %560 = tpu.concatenate %557, %559 in 0 : vector<8x512xf32>, vector<8x512xf32> -> vector<16x512xf32>
    %c5_204 = arith.constant 5 : index
    %c0_205 = arith.constant 0 : index
    %c0_206 = arith.constant 0 : index
    %561 = vector.load %arg11[%c5_204, %c0_205, %c0_206] : memref<8x16x512xf32, #tpu.memory_space<vmem>>, vector<1x16x512xf32>
    %562 = vector.shape_cast %561 : vector<1x16x512xf32> to vector<16x512xf32>
    %563 = vector.shape_cast %560 : vector<16x512xf32> to vector<1x16x512xf32>
    tpu.vector_store %arg11[%c5_204, %c0_205, %c0_206], %563 {strides = array<i32>} : memref<8x16x512xf32, #tpu.memory_space<vmem>>, vector<1x16x512xf32>,
    %564 = vector.extract_strided_slice %513 {offsets = [6, 0, 0], sizes = [1, 8, 512], strides = [1, 1, 1]} : vector<8x8x512xf32> to vector<1x8x512xf32>
    %565 = vector.shape_cast %564 : vector<1x8x512xf32> to vector<8x512xf32>
    %566 = vector.extract_strided_slice %515 {offsets = [1, 0, 0], sizes = [1, 8, 512], strides = [1, 1, 1]} : vector<8x8x512xf32> to vector<1x8x512xf32>
    %567 = vector.shape_cast %566 : vector<1x8x512xf32> to vector<8x512xf32>
    %568 = tpu.concatenate %565, %567 in 0 : vector<8x512xf32>, vector<8x512xf32> -> vector<16x512xf32>
    %c6_207 = arith.constant 6 : index
    %c0_208 = arith.constant 0 : index
    %c0_209 = arith.constant 0 : index
    %569 = vector.load %arg11[%c6_207, %c0_208, %c0_209] : memref<8x16x512xf32, #tpu.memory_space<vmem>>, vector<1x16x512xf32>
    %570 = vector.shape_cast %569 : vector<1x16x512xf32> to vector<16x512xf32>
    %571 = vector.shape_cast %568 : vector<16x512xf32> to vector<1x16x512xf32>
    tpu.vector_store %arg11[%c6_207, %c0_208, %c0_209], %571 {strides = array<i32>} : memref<8x16x512xf32, #tpu.memory_space<vmem>>, vector<1x16x512xf32>,
    %572 = vector.extract_strided_slice %513 {offsets = [7, 0, 0], sizes = [1, 8, 512], strides = [1, 1, 1]} : vector<8x8x512xf32> to vector<1x8x512xf32>
    %573 = vector.shape_cast %572 : vector<1x8x512xf32> to vector<8x512xf32>
    %574 = vector.extract_strided_slice %515 {offsets = [0, 0, 0], sizes = [1, 8, 512], strides = [1, 1, 1]} : vector<8x8x512xf32> to vector<1x8x512xf32>
    %575 = vector.shape_cast %574 : vector<1x8x512xf32> to vector<8x512xf32>
    %576 = tpu.concatenate %573, %575 in 0 : vector<8x512xf32>, vector<8x512xf32> -> vector<16x512xf32>
    %c7_210 = arith.constant 7 : index
    %c0_211 = arith.constant 0 : index
    %c0_212 = arith.constant 0 : index
    %577 = vector.load %arg11[%c7_210, %c0_211, %c0_212] : memref<8x16x512xf32, #tpu.memory_space<vmem>>, vector<1x16x512xf32>
    %578 = vector.shape_cast %577 : vector<1x16x512xf32> to vector<16x512xf32>
    %579 = vector.shape_cast %576 : vector<16x512xf32> to vector<1x16x512xf32>
    tpu.vector_store %arg11[%c7_210, %c0_211, %c0_212], %579 {strides = array<i32>} : memref<8x16x512xf32, #tpu.memory_space<vmem>>, vector<1x16x512xf32>,
    %c1_213 = arith.constant 1 : index
    %c0_214 = arith.constant 0 : index
    %c0_215 = arith.constant 0 : index
    %580 = vector.load %arg5[%c1_213, %c0_214, %c0_215] : memref<2x256x512xbf16, #tpu.memory_space<vmem>>, vector<1x256x512xbf16>
    %581 = vector.shape_cast %580 : vector<1x256x512xbf16> to vector<256x512xbf16>
    %c1_216 = arith.constant 1 : index
    %c0_217 = arith.constant 0 : index
    %c0_218 = arith.constant 0 : index
    %582 = vector.load %arg1[%c1_216, %c0_217, %c0_218] : memref<2x16x128xf32, #tpu.memory_space<vmem>>, vector<1x16x128xf32>
    %583 = vector.shape_cast %582 : vector<1x16x128xf32> to vector<16x128xf32>
    %584 = tpu.concatenate %583, %583 in 1 : vector<16x128xf32>, vector<16x128xf32> -> vector<16x256xf32>
    %cst_219 = arith.constant 0.000000e+00 : f32
    %585 = vector.broadcast %cst_219 : f32 to vector<16x256xf32>
    %586 = arith.select %7, %584, %585 : vector<16x256xi1>, vector<16x256xf32>
    %587 = arith.truncf %586 : vector<16x256xf32> to vector<16x256xbf16>
    %c1_220 = arith.constant 1 : index
    %c0_221 = arith.constant 0 : index
    %c0_222 = arith.constant 0 : index
    %588 = vector.load %arg2[%c1_220, %c0_221, %c0_222] : memref<2x16x128xf32, #tpu.memory_space<vmem>>, vector<1x16x128xf32>
    %589 = vector.shape_cast %588 : vector<1x16x128xf32> to vector<16x128xf32>
    %c0_i32_223 = arith.constant 0 : i32
    %590 = arith.index_cast %c0_i32_223 : i32 to index
    %c0_224 = arith.constant 0 : index
    %c0_225 = arith.constant 0 : index
    %591 = vector.load %arg11[%590, %c0_224, %c0_225] : memref<8x16x512xf32, #tpu.memory_space<vmem>>, vector<1x16x512xf32>
    %592 = vector.shape_cast %591 : vector<1x16x512xf32> to vector<16x512xf32>
    %cst_226 = arith.constant dense<0.000000e+00> : vector<16x512xf32>
    %593 = tpu.matmul %587, %581, %cst_226 {dimension_numbers = #tpu.dot_dimension_numbers<[1], [0], [0], [1], [0, 0, 1, 1], [], []>} : vector<16x256xbf16>, vector<256x512xbf16>, vector<16x512xf32> -> vector<16x512xf32>
    %594 = arith.addf %592, %593 : vector<16x512xf32>
    %595 = vector.extract_strided_slice %594 {offsets = [0, 0], sizes = [16, 128], strides = [1, 1]} : vector<16x512xf32> to vector<16x128xf32>
    %cst_227 = arith.constant 5.000000e-01 : f32
    %596 = vector.broadcast %cst_227 : f32 to vector<16x128xf32>
    %597 = arith.mulf %596, %595 : vector<16x128xf32>
    %598 = math.tanh %597 : vector<16x128xf32>
    %cst_228 = arith.constant 5.000000e-01 : f32
    %599 = vector.broadcast %cst_228 : f32 to vector<16x128xf32>
    %600 = arith.mulf %599, %598 : vector<16x128xf32>
    %cst_229 = arith.constant 5.000000e-01 : f32
    %601 = vector.broadcast %cst_229 : f32 to vector<16x128xf32>
    %602 = arith.addf %600, %601 : vector<16x128xf32>
    %603 = vector.extract_strided_slice %594 {offsets = [0, 128], sizes = [16, 128], strides = [1, 1]} : vector<16x512xf32> to vector<16x128xf32>
    %cst_230 = arith.constant 5.000000e-01 : f32
    %604 = vector.broadcast %cst_230 : f32 to vector<16x128xf32>
    %605 = arith.mulf %604, %603 : vector<16x128xf32>
    %606 = math.tanh %605 : vector<16x128xf32>
    %cst_231 = arith.constant 5.000000e-01 : f32
    %607 = vector.broadcast %cst_231 : f32 to vector<16x128xf32>
    %608 = arith.mulf %607, %606 : vector<16x128xf32>
    %cst_232 = arith.constant 5.000000e-01 : f32
    %609 = vector.broadcast %cst_232 : f32 to vector<16x128xf32>
    %610 = arith.addf %608, %609 : vector<16x128xf32>
    %611 = vector.extract_strided_slice %594 {offsets = [0, 256], sizes = [16, 128], strides = [1, 1]} : vector<16x512xf32> to vector<16x128xf32>
    %612 = math.tanh %611 : vector<16x128xf32>
    %613 = vector.extract_strided_slice %594 {offsets = [0, 384], sizes = [16, 128], strides = [1, 1]} : vector<16x512xf32> to vector<16x128xf32>
    %cst_233 = arith.constant 5.000000e-01 : f32
    %614 = vector.broadcast %cst_233 : f32 to vector<16x128xf32>
    %615 = arith.mulf %614, %613 : vector<16x128xf32>
    %616 = math.tanh %615 : vector<16x128xf32>
    %cst_234 = arith.constant 5.000000e-01 : f32
    %617 = vector.broadcast %cst_234 : f32 to vector<16x128xf32>
    %618 = arith.mulf %617, %616 : vector<16x128xf32>
    %cst_235 = arith.constant 5.000000e-01 : f32
    %619 = vector.broadcast %cst_235 : f32 to vector<16x128xf32>
    %620 = arith.addf %618, %619 : vector<16x128xf32>
    %621 = arith.mulf %610, %589 : vector<16x128xf32>
    %622 = arith.mulf %602, %612 : vector<16x128xf32>
    %623 = arith.addf %621, %622 : vector<16x128xf32>
    %624 = math.tanh %623 : vector<16x128xf32>
    %625 = arith.mulf %620, %624 : vector<16x128xf32>
    %626 = vector.extract_strided_slice %625 {offsets = [0, 0], sizes = [8, 128], strides = [1, 1]} : vector<16x128xf32> to vector<8x128xf32>
    %627 = arith.index_cast %c0_i32_223 : i32 to index
    %c0_236 = arith.constant 0 : index
    %c0_237 = arith.constant 0 : index
    %628 = vector.load %arg10[%627, %c0_236, %c0_237] : memref<8x8x256xf32, #tpu.memory_space<vmem>>, vector<1x8x128xf32>
    %629 = vector.shape_cast %628 : vector<1x8x128xf32> to vector<8x128xf32>
    %630 = vector.shape_cast %626 : vector<8x128xf32> to vector<1x8x128xf32>
    tpu.vector_store %arg10[%627, %c0_236, %c0_237], %630 {strides = array<i32>} : memref<8x8x256xf32, #tpu.memory_space<vmem>>, vector<1x8x128xf32>,
    %631 = vector.extract_strided_slice %625 {offsets = [8, 0], sizes = [8, 128], strides = [1, 1]} : vector<16x128xf32> to vector<8x128xf32>
    %c7_i32_238 = arith.constant 7 : i32
    %632 = arith.subi %c7_i32_238, %c0_i32_223 : i32
    %633 = arith.index_cast %632 : i32 to index
    %c0_239 = arith.constant 0 : index
    %c128_240 = arith.constant 128 : index
    %634 = vector.load %arg10[%633, %c0_239, %c128_240] : memref<8x8x256xf32, #tpu.memory_space<vmem>>, vector<1x8x128xf32>
    %635 = vector.shape_cast %634 : vector<1x8x128xf32> to vector<8x128xf32>
    %636 = vector.shape_cast %631 : vector<8x128xf32> to vector<1x8x128xf32>
    tpu.vector_store %arg10[%633, %c0_239, %c128_240], %636 {strides = array<i32>} : memref<8x8x256xf32, #tpu.memory_space<vmem>>, vector<1x8x128xf32>,
    %637 = tpu.concatenate %625, %625 in 1 : vector<16x128xf32>, vector<16x128xf32> -> vector<16x256xf32>
    %cst_241 = arith.constant 0.000000e+00 : f32
    %638 = vector.broadcast %cst_241 : f32 to vector<16x256xf32>
    %639 = arith.select %7, %637, %638 : vector<16x256xi1>, vector<16x256xf32>
    %640 = arith.truncf %639 : vector<16x256xf32> to vector<16x256xbf16>
    %c1_i32_242 = arith.constant 1 : i32
    %641 = arith.index_cast %c1_i32_242 : i32 to index
    %c0_243 = arith.constant 0 : index
    %c0_244 = arith.constant 0 : index
    %642 = vector.load %arg11[%641, %c0_243, %c0_244] : memref<8x16x512xf32, #tpu.memory_space<vmem>>, vector<1x16x512xf32>
    %643 = vector.shape_cast %642 : vector<1x16x512xf32> to vector<16x512xf32>
    %cst_245 = arith.constant dense<0.000000e+00> : vector<16x512xf32>
    %644 = tpu.matmul %640, %581, %cst_245 {dimension_numbers = #tpu.dot_dimension_numbers<[1], [0], [0], [1], [0, 0, 1, 1], [], []>} : vector<16x256xbf16>, vector<256x512xbf16>, vector<16x512xf32> -> vector<16x512xf32>
    %645 = arith.addf %643, %644 : vector<16x512xf32>
    %646 = vector.extract_strided_slice %645 {offsets = [0, 0], sizes = [16, 128], strides = [1, 1]} : vector<16x512xf32> to vector<16x128xf32>
    %cst_246 = arith.constant 5.000000e-01 : f32
    %647 = vector.broadcast %cst_246 : f32 to vector<16x128xf32>
    %648 = arith.mulf %647, %646 : vector<16x128xf32>
    %649 = math.tanh %648 : vector<16x128xf32>
    %cst_247 = arith.constant 5.000000e-01 : f32
    %650 = vector.broadcast %cst_247 : f32 to vector<16x128xf32>
    %651 = arith.mulf %650, %649 : vector<16x128xf32>
    %cst_248 = arith.constant 5.000000e-01 : f32
    %652 = vector.broadcast %cst_248 : f32 to vector<16x128xf32>
    %653 = arith.addf %651, %652 : vector<16x128xf32>
    %654 = vector.extract_strided_slice %645 {offsets = [0, 128], sizes = [16, 128], strides = [1, 1]} : vector<16x512xf32> to vector<16x128xf32>
    %cst_249 = arith.constant 5.000000e-01 : f32
    %655 = vector.broadcast %cst_249 : f32 to vector<16x128xf32>
    %656 = arith.mulf %655, %654 : vector<16x128xf32>
    %657 = math.tanh %656 : vector<16x128xf32>
    %cst_250 = arith.constant 5.000000e-01 : f32
    %658 = vector.broadcast %cst_250 : f32 to vector<16x128xf32>
    %659 = arith.mulf %658, %657 : vector<16x128xf32>
    %cst_251 = arith.constant 5.000000e-01 : f32
    %660 = vector.broadcast %cst_251 : f32 to vector<16x128xf32>
    %661 = arith.addf %659, %660 : vector<16x128xf32>
    %662 = vector.extract_strided_slice %645 {offsets = [0, 256], sizes = [16, 128], strides = [1, 1]} : vector<16x512xf32> to vector<16x128xf32>
    %663 = math.tanh %662 : vector<16x128xf32>
    %664 = vector.extract_strided_slice %645 {offsets = [0, 384], sizes = [16, 128], strides = [1, 1]} : vector<16x512xf32> to vector<16x128xf32>
    %cst_252 = arith.constant 5.000000e-01 : f32
    %665 = vector.broadcast %cst_252 : f32 to vector<16x128xf32>
    %666 = arith.mulf %665, %664 : vector<16x128xf32>
    %667 = math.tanh %666 : vector<16x128xf32>
    %cst_253 = arith.constant 5.000000e-01 : f32
    %668 = vector.broadcast %cst_253 : f32 to vector<16x128xf32>
    %669 = arith.mulf %668, %667 : vector<16x128xf32>
    %cst_254 = arith.constant 5.000000e-01 : f32
    %670 = vector.broadcast %cst_254 : f32 to vector<16x128xf32>
    %671 = arith.addf %669, %670 : vector<16x128xf32>
    %672 = arith.mulf %661, %623 : vector<16x128xf32>
    %673 = arith.mulf %653, %663 : vector<16x128xf32>
    %674 = arith.addf %672, %673 : vector<16x128xf32>
    %675 = math.tanh %674 : vector<16x128xf32>
    %676 = arith.mulf %671, %675 : vector<16x128xf32>
    %677 = vector.extract_strided_slice %676 {offsets = [0, 0], sizes = [8, 128], strides = [1, 1]} : vector<16x128xf32> to vector<8x128xf32>
    %678 = arith.index_cast %c1_i32_242 : i32 to index
    %c0_255 = arith.constant 0 : index
    %c0_256 = arith.constant 0 : index
    %679 = vector.load %arg10[%678, %c0_255, %c0_256] : memref<8x8x256xf32, #tpu.memory_space<vmem>>, vector<1x8x128xf32>
    %680 = vector.shape_cast %679 : vector<1x8x128xf32> to vector<8x128xf32>
    %681 = vector.shape_cast %677 : vector<8x128xf32> to vector<1x8x128xf32>
    tpu.vector_store %arg10[%678, %c0_255, %c0_256], %681 {strides = array<i32>} : memref<8x8x256xf32, #tpu.memory_space<vmem>>, vector<1x8x128xf32>,
    %682 = vector.extract_strided_slice %676 {offsets = [8, 0], sizes = [8, 128], strides = [1, 1]} : vector<16x128xf32> to vector<8x128xf32>
    %c7_i32_257 = arith.constant 7 : i32
    %683 = arith.subi %c7_i32_257, %c1_i32_242 : i32
    %684 = arith.index_cast %683 : i32 to index
    %c0_258 = arith.constant 0 : index
    %c128_259 = arith.constant 128 : index
    %685 = vector.load %arg10[%684, %c0_258, %c128_259] : memref<8x8x256xf32, #tpu.memory_space<vmem>>, vector<1x8x128xf32>
    %686 = vector.shape_cast %685 : vector<1x8x128xf32> to vector<8x128xf32>
    %687 = vector.shape_cast %682 : vector<8x128xf32> to vector<1x8x128xf32>
    tpu.vector_store %arg10[%684, %c0_258, %c128_259], %687 {strides = array<i32>} : memref<8x8x256xf32, #tpu.memory_space<vmem>>, vector<1x8x128xf32>,
    %688 = tpu.concatenate %676, %676 in 1 : vector<16x128xf32>, vector<16x128xf32> -> vector<16x256xf32>
    %cst_260 = arith.constant 0.000000e+00 : f32
    %689 = vector.broadcast %cst_260 : f32 to vector<16x256xf32>
    %690 = arith.select %7, %688, %689 : vector<16x256xi1>, vector<16x256xf32>
    %691 = arith.truncf %690 : vector<16x256xf32> to vector<16x256xbf16>
    %c2_i32_261 = arith.constant 2 : i32
    %692 = arith.index_cast %c2_i32_261 : i32 to index
    %c0_262 = arith.constant 0 : index
    %c0_263 = arith.constant 0 : index
    %693 = vector.load %arg11[%692, %c0_262, %c0_263] : memref<8x16x512xf32, #tpu.memory_space<vmem>>, vector<1x16x512xf32>
    %694 = vector.shape_cast %693 : vector<1x16x512xf32> to vector<16x512xf32>
    %cst_264 = arith.constant dense<0.000000e+00> : vector<16x512xf32>
    %695 = tpu.matmul %691, %581, %cst_264 {dimension_numbers = #tpu.dot_dimension_numbers<[1], [0], [0], [1], [0, 0, 1, 1], [], []>} : vector<16x256xbf16>, vector<256x512xbf16>, vector<16x512xf32> -> vector<16x512xf32>
    %696 = arith.addf %694, %695 : vector<16x512xf32>
    %697 = vector.extract_strided_slice %696 {offsets = [0, 0], sizes = [16, 128], strides = [1, 1]} : vector<16x512xf32> to vector<16x128xf32>
    %cst_265 = arith.constant 5.000000e-01 : f32
    %698 = vector.broadcast %cst_265 : f32 to vector<16x128xf32>
    %699 = arith.mulf %698, %697 : vector<16x128xf32>
    %700 = math.tanh %699 : vector<16x128xf32>
    %cst_266 = arith.constant 5.000000e-01 : f32
    %701 = vector.broadcast %cst_266 : f32 to vector<16x128xf32>
    %702 = arith.mulf %701, %700 : vector<16x128xf32>
    %cst_267 = arith.constant 5.000000e-01 : f32
    %703 = vector.broadcast %cst_267 : f32 to vector<16x128xf32>
    %704 = arith.addf %702, %703 : vector<16x128xf32>
    %705 = vector.extract_strided_slice %696 {offsets = [0, 128], sizes = [16, 128], strides = [1, 1]} : vector<16x512xf32> to vector<16x128xf32>
    %cst_268 = arith.constant 5.000000e-01 : f32
    %706 = vector.broadcast %cst_268 : f32 to vector<16x128xf32>
    %707 = arith.mulf %706, %705 : vector<16x128xf32>
    %708 = math.tanh %707 : vector<16x128xf32>
    %cst_269 = arith.constant 5.000000e-01 : f32
    %709 = vector.broadcast %cst_269 : f32 to vector<16x128xf32>
    %710 = arith.mulf %709, %708 : vector<16x128xf32>
    %cst_270 = arith.constant 5.000000e-01 : f32
    %711 = vector.broadcast %cst_270 : f32 to vector<16x128xf32>
    %712 = arith.addf %710, %711 : vector<16x128xf32>
    %713 = vector.extract_strided_slice %696 {offsets = [0, 256], sizes = [16, 128], strides = [1, 1]} : vector<16x512xf32> to vector<16x128xf32>
    %714 = math.tanh %713 : vector<16x128xf32>
    %715 = vector.extract_strided_slice %696 {offsets = [0, 384], sizes = [16, 128], strides = [1, 1]} : vector<16x512xf32> to vector<16x128xf32>
    %cst_271 = arith.constant 5.000000e-01 : f32
    %716 = vector.broadcast %cst_271 : f32 to vector<16x128xf32>
    %717 = arith.mulf %716, %715 : vector<16x128xf32>
    %718 = math.tanh %717 : vector<16x128xf32>
    %cst_272 = arith.constant 5.000000e-01 : f32
    %719 = vector.broadcast %cst_272 : f32 to vector<16x128xf32>
    %720 = arith.mulf %719, %718 : vector<16x128xf32>
    %cst_273 = arith.constant 5.000000e-01 : f32
    %721 = vector.broadcast %cst_273 : f32 to vector<16x128xf32>
    %722 = arith.addf %720, %721 : vector<16x128xf32>
    %723 = arith.mulf %712, %674 : vector<16x128xf32>
    %724 = arith.mulf %704, %714 : vector<16x128xf32>
    %725 = arith.addf %723, %724 : vector<16x128xf32>
    %726 = math.tanh %725 : vector<16x128xf32>
    %727 = arith.mulf %722, %726 : vector<16x128xf32>
    %728 = vector.extract_strided_slice %727 {offsets = [0, 0], sizes = [8, 128], strides = [1, 1]} : vector<16x128xf32> to vector<8x128xf32>
    %729 = arith.index_cast %c2_i32_261 : i32 to index
    %c0_274 = arith.constant 0 : index
    %c0_275 = arith.constant 0 : index
    %730 = vector.load %arg10[%729, %c0_274, %c0_275] : memref<8x8x256xf32, #tpu.memory_space<vmem>>, vector<1x8x128xf32>
    %731 = vector.shape_cast %730 : vector<1x8x128xf32> to vector<8x128xf32>
    %732 = vector.shape_cast %728 : vector<8x128xf32> to vector<1x8x128xf32>
    tpu.vector_store %arg10[%729, %c0_274, %c0_275], %732 {strides = array<i32>} : memref<8x8x256xf32, #tpu.memory_space<vmem>>, vector<1x8x128xf32>,
    %733 = vector.extract_strided_slice %727 {offsets = [8, 0], sizes = [8, 128], strides = [1, 1]} : vector<16x128xf32> to vector<8x128xf32>
    %c7_i32_276 = arith.constant 7 : i32
    %734 = arith.subi %c7_i32_276, %c2_i32_261 : i32
    %735 = arith.index_cast %734 : i32 to index
    %c0_277 = arith.constant 0 : index
    %c128_278 = arith.constant 128 : index
    %736 = vector.load %arg10[%735, %c0_277, %c128_278] : memref<8x8x256xf32, #tpu.memory_space<vmem>>, vector<1x8x128xf32>
    %737 = vector.shape_cast %736 : vector<1x8x128xf32> to vector<8x128xf32>
    %738 = vector.shape_cast %733 : vector<8x128xf32> to vector<1x8x128xf32>
    tpu.vector_store %arg10[%735, %c0_277, %c128_278], %738 {strides = array<i32>} : memref<8x8x256xf32, #tpu.memory_space<vmem>>, vector<1x8x128xf32>,
    %739 = tpu.concatenate %727, %727 in 1 : vector<16x128xf32>, vector<16x128xf32> -> vector<16x256xf32>
    %cst_279 = arith.constant 0.000000e+00 : f32
    %740 = vector.broadcast %cst_279 : f32 to vector<16x256xf32>
    %741 = arith.select %7, %739, %740 : vector<16x256xi1>, vector<16x256xf32>
    %742 = arith.truncf %741 : vector<16x256xf32> to vector<16x256xbf16>
    %c3_i32_280 = arith.constant 3 : i32
    %743 = arith.index_cast %c3_i32_280 : i32 to index
    %c0_281 = arith.constant 0 : index
    %c0_282 = arith.constant 0 : index
    %744 = vector.load %arg11[%743, %c0_281, %c0_282] : memref<8x16x512xf32, #tpu.memory_space<vmem>>, vector<1x16x512xf32>
    %745 = vector.shape_cast %744 : vector<1x16x512xf32> to vector<16x512xf32>
    %cst_283 = arith.constant dense<0.000000e+00> : vector<16x512xf32>
    %746 = tpu.matmul %742, %581, %cst_283 {dimension_numbers = #tpu.dot_dimension_numbers<[1], [0], [0], [1], [0, 0, 1, 1], [], []>} : vector<16x256xbf16>, vector<256x512xbf16>, vector<16x512xf32> -> vector<16x512xf32>
    %747 = arith.addf %745, %746 : vector<16x512xf32>
    %748 = vector.extract_strided_slice %747 {offsets = [0, 0], sizes = [16, 128], strides = [1, 1]} : vector<16x512xf32> to vector<16x128xf32>
    %cst_284 = arith.constant 5.000000e-01 : f32
    %749 = vector.broadcast %cst_284 : f32 to vector<16x128xf32>
    %750 = arith.mulf %749, %748 : vector<16x128xf32>
    %751 = math.tanh %750 : vector<16x128xf32>
    %cst_285 = arith.constant 5.000000e-01 : f32
    %752 = vector.broadcast %cst_285 : f32 to vector<16x128xf32>
    %753 = arith.mulf %752, %751 : vector<16x128xf32>
    %cst_286 = arith.constant 5.000000e-01 : f32
    %754 = vector.broadcast %cst_286 : f32 to vector<16x128xf32>
    %755 = arith.addf %753, %754 : vector<16x128xf32>
    %756 = vector.extract_strided_slice %747 {offsets = [0, 128], sizes = [16, 128], strides = [1, 1]} : vector<16x512xf32> to vector<16x128xf32>
    %cst_287 = arith.constant 5.000000e-01 : f32
    %757 = vector.broadcast %cst_287 : f32 to vector<16x128xf32>
    %758 = arith.mulf %757, %756 : vector<16x128xf32>
    %759 = math.tanh %758 : vector<16x128xf32>
    %cst_288 = arith.constant 5.000000e-01 : f32
    %760 = vector.broadcast %cst_288 : f32 to vector<16x128xf32>
    %761 = arith.mulf %760, %759 : vector<16x128xf32>
    %cst_289 = arith.constant 5.000000e-01 : f32
    %762 = vector.broadcast %cst_289 : f32 to vector<16x128xf32>
    %763 = arith.addf %761, %762 : vector<16x128xf32>
    %764 = vector.extract_strided_slice %747 {offsets = [0, 256], sizes = [16, 128], strides = [1, 1]} : vector<16x512xf32> to vector<16x128xf32>
    %765 = math.tanh %764 : vector<16x128xf32>
    %766 = vector.extract_strided_slice %747 {offsets = [0, 384], sizes = [16, 128], strides = [1, 1]} : vector<16x512xf32> to vector<16x128xf32>
    %cst_290 = arith.constant 5.000000e-01 : f32
    %767 = vector.broadcast %cst_290 : f32 to vector<16x128xf32>
    %768 = arith.mulf %767, %766 : vector<16x128xf32>
    %769 = math.tanh %768 : vector<16x128xf32>
    %cst_291 = arith.constant 5.000000e-01 : f32
    %770 = vector.broadcast %cst_291 : f32 to vector<16x128xf32>
    %771 = arith.mulf %770, %769 : vector<16x128xf32>
    %cst_292 = arith.constant 5.000000e-01 : f32
    %772 = vector.broadcast %cst_292 : f32 to vector<16x128xf32>
    %773 = arith.addf %771, %772 : vector<16x128xf32>
    %774 = arith.mulf %763, %725 : vector<16x128xf32>
    %775 = arith.mulf %755, %765 : vector<16x128xf32>
    %776 = arith.addf %774, %775 : vector<16x128xf32>
    %777 = math.tanh %776 : vector<16x128xf32>
    %778 = arith.mulf %773, %777 : vector<16x128xf32>
    %779 = vector.extract_strided_slice %778 {offsets = [0, 0], sizes = [8, 128], strides = [1, 1]} : vector<16x128xf32> to vector<8x128xf32>
    %780 = arith.index_cast %c3_i32_280 : i32 to index
    %c0_293 = arith.constant 0 : index
    %c0_294 = arith.constant 0 : index
    %781 = vector.load %arg10[%780, %c0_293, %c0_294] : memref<8x8x256xf32, #tpu.memory_space<vmem>>, vector<1x8x128xf32>
    %782 = vector.shape_cast %781 : vector<1x8x128xf32> to vector<8x128xf32>
    %783 = vector.shape_cast %779 : vector<8x128xf32> to vector<1x8x128xf32>
    tpu.vector_store %arg10[%780, %c0_293, %c0_294], %783 {strides = array<i32>} : memref<8x8x256xf32, #tpu.memory_space<vmem>>, vector<1x8x128xf32>,
    %784 = vector.extract_strided_slice %778 {offsets = [8, 0], sizes = [8, 128], strides = [1, 1]} : vector<16x128xf32> to vector<8x128xf32>
    %c7_i32_295 = arith.constant 7 : i32
    %785 = arith.subi %c7_i32_295, %c3_i32_280 : i32
    %786 = arith.index_cast %785 : i32 to index
    %c0_296 = arith.constant 0 : index
    %c128_297 = arith.constant 128 : index
    %787 = vector.load %arg10[%786, %c0_296, %c128_297] : memref<8x8x256xf32, #tpu.memory_space<vmem>>, vector<1x8x128xf32>
    %788 = vector.shape_cast %787 : vector<1x8x128xf32> to vector<8x128xf32>
    %789 = vector.shape_cast %784 : vector<8x128xf32> to vector<1x8x128xf32>
    tpu.vector_store %arg10[%786, %c0_296, %c128_297], %789 {strides = array<i32>} : memref<8x8x256xf32, #tpu.memory_space<vmem>>, vector<1x8x128xf32>,
    %790 = tpu.concatenate %778, %778 in 1 : vector<16x128xf32>, vector<16x128xf32> -> vector<16x256xf32>
    %cst_298 = arith.constant 0.000000e+00 : f32
    %791 = vector.broadcast %cst_298 : f32 to vector<16x256xf32>
    %792 = arith.select %7, %790, %791 : vector<16x256xi1>, vector<16x256xf32>
    %793 = arith.truncf %792 : vector<16x256xf32> to vector<16x256xbf16>
    %c4_i32_299 = arith.constant 4 : i32
    %794 = arith.index_cast %c4_i32_299 : i32 to index
    %c0_300 = arith.constant 0 : index
    %c0_301 = arith.constant 0 : index
    %795 = vector.load %arg11[%794, %c0_300, %c0_301] : memref<8x16x512xf32, #tpu.memory_space<vmem>>, vector<1x16x512xf32>
    %796 = vector.shape_cast %795 : vector<1x16x512xf32> to vector<16x512xf32>
    %cst_302 = arith.constant dense<0.000000e+00> : vector<16x512xf32>
    %797 = tpu.matmul %793, %581, %cst_302 {dimension_numbers = #tpu.dot_dimension_numbers<[1], [0], [0], [1], [0, 0, 1, 1], [], []>} : vector<16x256xbf16>, vector<256x512xbf16>, vector<16x512xf32> -> vector<16x512xf32>
    %798 = arith.addf %796, %797 : vector<16x512xf32>
    %799 = vector.extract_strided_slice %798 {offsets = [0, 0], sizes = [16, 128], strides = [1, 1]} : vector<16x512xf32> to vector<16x128xf32>
    %cst_303 = arith.constant 5.000000e-01 : f32
    %800 = vector.broadcast %cst_303 : f32 to vector<16x128xf32>
    %801 = arith.mulf %800, %799 : vector<16x128xf32>
    %802 = math.tanh %801 : vector<16x128xf32>
    %cst_304 = arith.constant 5.000000e-01 : f32
    %803 = vector.broadcast %cst_304 : f32 to vector<16x128xf32>
    %804 = arith.mulf %803, %802 : vector<16x128xf32>
    %cst_305 = arith.constant 5.000000e-01 : f32
    %805 = vector.broadcast %cst_305 : f32 to vector<16x128xf32>
    %806 = arith.addf %804, %805 : vector<16x128xf32>
    %807 = vector.extract_strided_slice %798 {offsets = [0, 128], sizes = [16, 128], strides = [1, 1]} : vector<16x512xf32> to vector<16x128xf32>
    %cst_306 = arith.constant 5.000000e-01 : f32
    %808 = vector.broadcast %cst_306 : f32 to vector<16x128xf32>
    %809 = arith.mulf %808, %807 : vector<16x128xf32>
    %810 = math.tanh %809 : vector<16x128xf32>
    %cst_307 = arith.constant 5.000000e-01 : f32
    %811 = vector.broadcast %cst_307 : f32 to vector<16x128xf32>
    %812 = arith.mulf %811, %810 : vector<16x128xf32>
    %cst_308 = arith.constant 5.000000e-01 : f32
    %813 = vector.broadcast %cst_308 : f32 to vector<16x128xf32>
    %814 = arith.addf %812, %813 : vector<16x128xf32>
    %815 = vector.extract_strided_slice %798 {offsets = [0, 256], sizes = [16, 128], strides = [1, 1]} : vector<16x512xf32> to vector<16x128xf32>
    %816 = math.tanh %815 : vector<16x128xf32>
    %817 = vector.extract_strided_slice %798 {offsets = [0, 384], sizes = [16, 128], strides = [1, 1]} : vector<16x512xf32> to vector<16x128xf32>
    %cst_309 = arith.constant 5.000000e-01 : f32
    %818 = vector.broadcast %cst_309 : f32 to vector<16x128xf32>
    %819 = arith.mulf %818, %817 : vector<16x128xf32>
    %820 = math.tanh %819 : vector<16x128xf32>
    %cst_310 = arith.constant 5.000000e-01 : f32
    %821 = vector.broadcast %cst_310 : f32 to vector<16x128xf32>
    %822 = arith.mulf %821, %820 : vector<16x128xf32>
    %cst_311 = arith.constant 5.000000e-01 : f32
    %823 = vector.broadcast %cst_311 : f32 to vector<16x128xf32>
    %824 = arith.addf %822, %823 : vector<16x128xf32>
    %825 = arith.mulf %814, %776 : vector<16x128xf32>
    %826 = arith.mulf %806, %816 : vector<16x128xf32>
    %827 = arith.addf %825, %826 : vector<16x128xf32>
    %828 = math.tanh %827 : vector<16x128xf32>
    %829 = arith.mulf %824, %828 : vector<16x128xf32>
    %830 = vector.extract_strided_slice %829 {offsets = [0, 0], sizes = [8, 128], strides = [1, 1]} : vector<16x128xf32> to vector<8x128xf32>
    %831 = arith.index_cast %c4_i32_299 : i32 to index
    %c0_312 = arith.constant 0 : index
    %c0_313 = arith.constant 0 : index
    %832 = vector.load %arg10[%831, %c0_312, %c0_313] : memref<8x8x256xf32, #tpu.memory_space<vmem>>, vector<1x8x128xf32>
    %833 = vector.shape_cast %832 : vector<1x8x128xf32> to vector<8x128xf32>
    %834 = vector.shape_cast %830 : vector<8x128xf32> to vector<1x8x128xf32>
    tpu.vector_store %arg10[%831, %c0_312, %c0_313], %834 {strides = array<i32>} : memref<8x8x256xf32, #tpu.memory_space<vmem>>, vector<1x8x128xf32>,
    %835 = vector.extract_strided_slice %829 {offsets = [8, 0], sizes = [8, 128], strides = [1, 1]} : vector<16x128xf32> to vector<8x128xf32>
    %c7_i32_314 = arith.constant 7 : i32
    %836 = arith.subi %c7_i32_314, %c4_i32_299 : i32
    %837 = arith.index_cast %836 : i32 to index
    %c0_315 = arith.constant 0 : index
    %c128_316 = arith.constant 128 : index
    %838 = vector.load %arg10[%837, %c0_315, %c128_316] : memref<8x8x256xf32, #tpu.memory_space<vmem>>, vector<1x8x128xf32>
    %839 = vector.shape_cast %838 : vector<1x8x128xf32> to vector<8x128xf32>
    %840 = vector.shape_cast %835 : vector<8x128xf32> to vector<1x8x128xf32>
    tpu.vector_store %arg10[%837, %c0_315, %c128_316], %840 {strides = array<i32>} : memref<8x8x256xf32, #tpu.memory_space<vmem>>, vector<1x8x128xf32>,
    %841 = tpu.concatenate %829, %829 in 1 : vector<16x128xf32>, vector<16x128xf32> -> vector<16x256xf32>
    %cst_317 = arith.constant 0.000000e+00 : f32
    %842 = vector.broadcast %cst_317 : f32 to vector<16x256xf32>
    %843 = arith.select %7, %841, %842 : vector<16x256xi1>, vector<16x256xf32>
    %844 = arith.truncf %843 : vector<16x256xf32> to vector<16x256xbf16>
    %c5_i32_318 = arith.constant 5 : i32
    %845 = arith.index_cast %c5_i32_318 : i32 to index
    %c0_319 = arith.constant 0 : index
    %c0_320 = arith.constant 0 : index
    %846 = vector.load %arg11[%845, %c0_319, %c0_320] : memref<8x16x512xf32, #tpu.memory_space<vmem>>, vector<1x16x512xf32>
    %847 = vector.shape_cast %846 : vector<1x16x512xf32> to vector<16x512xf32>
    %cst_321 = arith.constant dense<0.000000e+00> : vector<16x512xf32>
    %848 = tpu.matmul %844, %581, %cst_321 {dimension_numbers = #tpu.dot_dimension_numbers<[1], [0], [0], [1], [0, 0, 1, 1], [], []>} : vector<16x256xbf16>, vector<256x512xbf16>, vector<16x512xf32> -> vector<16x512xf32>
    %849 = arith.addf %847, %848 : vector<16x512xf32>
    %850 = vector.extract_strided_slice %849 {offsets = [0, 0], sizes = [16, 128], strides = [1, 1]} : vector<16x512xf32> to vector<16x128xf32>
    %cst_322 = arith.constant 5.000000e-01 : f32
    %851 = vector.broadcast %cst_322 : f32 to vector<16x128xf32>
    %852 = arith.mulf %851, %850 : vector<16x128xf32>
    %853 = math.tanh %852 : vector<16x128xf32>
    %cst_323 = arith.constant 5.000000e-01 : f32
    %854 = vector.broadcast %cst_323 : f32 to vector<16x128xf32>
    %855 = arith.mulf %854, %853 : vector<16x128xf32>
    %cst_324 = arith.constant 5.000000e-01 : f32
    %856 = vector.broadcast %cst_324 : f32 to vector<16x128xf32>
    %857 = arith.addf %855, %856 : vector<16x128xf32>
    %858 = vector.extract_strided_slice %849 {offsets = [0, 128], sizes = [16, 128], strides = [1, 1]} : vector<16x512xf32> to vector<16x128xf32>
    %cst_325 = arith.constant 5.000000e-01 : f32
    %859 = vector.broadcast %cst_325 : f32 to vector<16x128xf32>
    %860 = arith.mulf %859, %858 : vector<16x128xf32>
    %861 = math.tanh %860 : vector<16x128xf32>
    %cst_326 = arith.constant 5.000000e-01 : f32
    %862 = vector.broadcast %cst_326 : f32 to vector<16x128xf32>
    %863 = arith.mulf %862, %861 : vector<16x128xf32>
    %cst_327 = arith.constant 5.000000e-01 : f32
    %864 = vector.broadcast %cst_327 : f32 to vector<16x128xf32>
    %865 = arith.addf %863, %864 : vector<16x128xf32>
    %866 = vector.extract_strided_slice %849 {offsets = [0, 256], sizes = [16, 128], strides = [1, 1]} : vector<16x512xf32> to vector<16x128xf32>
    %867 = math.tanh %866 : vector<16x128xf32>
    %868 = vector.extract_strided_slice %849 {offsets = [0, 384], sizes = [16, 128], strides = [1, 1]} : vector<16x512xf32> to vector<16x128xf32>
    %cst_328 = arith.constant 5.000000e-01 : f32
    %869 = vector.broadcast %cst_328 : f32 to vector<16x128xf32>
    %870 = arith.mulf %869, %868 : vector<16x128xf32>
    %871 = math.tanh %870 : vector<16x128xf32>
    %cst_329 = arith.constant 5.000000e-01 : f32
    %872 = vector.broadcast %cst_329 : f32 to vector<16x128xf32>
    %873 = arith.mulf %872, %871 : vector<16x128xf32>
    %cst_330 = arith.constant 5.000000e-01 : f32
    %874 = vector.broadcast %cst_330 : f32 to vector<16x128xf32>
    %875 = arith.addf %873, %874 : vector<16x128xf32>
    %876 = arith.mulf %865, %827 : vector<16x128xf32>
    %877 = arith.mulf %857, %867 : vector<16x128xf32>
    %878 = arith.addf %876, %877 : vector<16x128xf32>
    %879 = math.tanh %878 : vector<16x128xf32>
    %880 = arith.mulf %875, %879 : vector<16x128xf32>
    %881 = vector.extract_strided_slice %880 {offsets = [0, 0], sizes = [8, 128], strides = [1, 1]} : vector<16x128xf32> to vector<8x128xf32>
    %882 = arith.index_cast %c5_i32_318 : i32 to index
    %c0_331 = arith.constant 0 : index
    %c0_332 = arith.constant 0 : index
    %883 = vector.load %arg10[%882, %c0_331, %c0_332] : memref<8x8x256xf32, #tpu.memory_space<vmem>>, vector<1x8x128xf32>
    %884 = vector.shape_cast %883 : vector<1x8x128xf32> to vector<8x128xf32>
    %885 = vector.shape_cast %881 : vector<8x128xf32> to vector<1x8x128xf32>
    tpu.vector_store %arg10[%882, %c0_331, %c0_332], %885 {strides = array<i32>} : memref<8x8x256xf32, #tpu.memory_space<vmem>>, vector<1x8x128xf32>,
    %886 = vector.extract_strided_slice %880 {offsets = [8, 0], sizes = [8, 128], strides = [1, 1]} : vector<16x128xf32> to vector<8x128xf32>
    %c7_i32_333 = arith.constant 7 : i32
    %887 = arith.subi %c7_i32_333, %c5_i32_318 : i32
    %888 = arith.index_cast %887 : i32 to index
    %c0_334 = arith.constant 0 : index
    %c128_335 = arith.constant 128 : index
    %889 = vector.load %arg10[%888, %c0_334, %c128_335] : memref<8x8x256xf32, #tpu.memory_space<vmem>>, vector<1x8x128xf32>
    %890 = vector.shape_cast %889 : vector<1x8x128xf32> to vector<8x128xf32>
    %891 = vector.shape_cast %886 : vector<8x128xf32> to vector<1x8x128xf32>
    tpu.vector_store %arg10[%888, %c0_334, %c128_335], %891 {strides = array<i32>} : memref<8x8x256xf32, #tpu.memory_space<vmem>>, vector<1x8x128xf32>,
    %892 = tpu.concatenate %880, %880 in 1 : vector<16x128xf32>, vector<16x128xf32> -> vector<16x256xf32>
    %cst_336 = arith.constant 0.000000e+00 : f32
    %893 = vector.broadcast %cst_336 : f32 to vector<16x256xf32>
    %894 = arith.select %7, %892, %893 : vector<16x256xi1>, vector<16x256xf32>
    %895 = arith.truncf %894 : vector<16x256xf32> to vector<16x256xbf16>
    %c6_i32_337 = arith.constant 6 : i32
    %896 = arith.index_cast %c6_i32_337 : i32 to index
    %c0_338 = arith.constant 0 : index
    %c0_339 = arith.constant 0 : index
    %897 = vector.load %arg11[%896, %c0_338, %c0_339] : memref<8x16x512xf32, #tpu.memory_space<vmem>>, vector<1x16x512xf32>
    %898 = vector.shape_cast %897 : vector<1x16x512xf32> to vector<16x512xf32>
    %cst_340 = arith.constant dense<0.000000e+00> : vector<16x512xf32>
    %899 = tpu.matmul %895, %581, %cst_340 {dimension_numbers = #tpu.dot_dimension_numbers<[1], [0], [0], [1], [0, 0, 1, 1], [], []>} : vector<16x256xbf16>, vector<256x512xbf16>, vector<16x512xf32> -> vector<16x512xf32>
    %900 = arith.addf %898, %899 : vector<16x512xf32>
    %901 = vector.extract_strided_slice %900 {offsets = [0, 0], sizes = [16, 128], strides = [1, 1]} : vector<16x512xf32> to vector<16x128xf32>
    %cst_341 = arith.constant 5.000000e-01 : f32
    %902 = vector.broadcast %cst_341 : f32 to vector<16x128xf32>
    %903 = arith.mulf %902, %901 : vector<16x128xf32>
    %904 = math.tanh %903 : vector<16x128xf32>
    %cst_342 = arith.constant 5.000000e-01 : f32
    %905 = vector.broadcast %cst_342 : f32 to vector<16x128xf32>
    %906 = arith.mulf %905, %904 : vector<16x128xf32>
    %cst_343 = arith.constant 5.000000e-01 : f32
    %907 = vector.broadcast %cst_343 : f32 to vector<16x128xf32>
    %908 = arith.addf %906, %907 : vector<16x128xf32>
    %909 = vector.extract_strided_slice %900 {offsets = [0, 128], sizes = [16, 128], strides = [1, 1]} : vector<16x512xf32> to vector<16x128xf32>
    %cst_344 = arith.constant 5.000000e-01 : f32
    %910 = vector.broadcast %cst_344 : f32 to vector<16x128xf32>
    %911 = arith.mulf %910, %909 : vector<16x128xf32>
    %912 = math.tanh %911 : vector<16x128xf32>
    %cst_345 = arith.constant 5.000000e-01 : f32
    %913 = vector.broadcast %cst_345 : f32 to vector<16x128xf32>
    %914 = arith.mulf %913, %912 : vector<16x128xf32>
    %cst_346 = arith.constant 5.000000e-01 : f32
    %915 = vector.broadcast %cst_346 : f32 to vector<16x128xf32>
    %916 = arith.addf %914, %915 : vector<16x128xf32>
    %917 = vector.extract_strided_slice %900 {offsets = [0, 256], sizes = [16, 128], strides = [1, 1]} : vector<16x512xf32> to vector<16x128xf32>
    %918 = math.tanh %917 : vector<16x128xf32>
    %919 = vector.extract_strided_slice %900 {offsets = [0, 384], sizes = [16, 128], strides = [1, 1]} : vector<16x512xf32> to vector<16x128xf32>
    %cst_347 = arith.constant 5.000000e-01 : f32
    %920 = vector.broadcast %cst_347 : f32 to vector<16x128xf32>
    %921 = arith.mulf %920, %919 : vector<16x128xf32>
    %922 = math.tanh %921 : vector<16x128xf32>
    %cst_348 = arith.constant 5.000000e-01 : f32
    %923 = vector.broadcast %cst_348 : f32 to vector<16x128xf32>
    %924 = arith.mulf %923, %922 : vector<16x128xf32>
    %cst_349 = arith.constant 5.000000e-01 : f32
    %925 = vector.broadcast %cst_349 : f32 to vector<16x128xf32>
    %926 = arith.addf %924, %925 : vector<16x128xf32>
    %927 = arith.mulf %916, %878 : vector<16x128xf32>
    %928 = arith.mulf %908, %918 : vector<16x128xf32>
    %929 = arith.addf %927, %928 : vector<16x128xf32>
    %930 = math.tanh %929 : vector<16x128xf32>
    %931 = arith.mulf %926, %930 : vector<16x128xf32>
    %932 = vector.extract_strided_slice %931 {offsets = [0, 0], sizes = [8, 128], strides = [1, 1]} : vector<16x128xf32> to vector<8x128xf32>
    %933 = arith.index_cast %c6_i32_337 : i32 to index
    %c0_350 = arith.constant 0 : index
    %c0_351 = arith.constant 0 : index
    %934 = vector.load %arg10[%933, %c0_350, %c0_351] : memref<8x8x256xf32, #tpu.memory_space<vmem>>, vector<1x8x128xf32>
    %935 = vector.shape_cast %934 : vector<1x8x128xf32> to vector<8x128xf32>
    %936 = vector.shape_cast %932 : vector<8x128xf32> to vector<1x8x128xf32>
    tpu.vector_store %arg10[%933, %c0_350, %c0_351], %936 {strides = array<i32>} : memref<8x8x256xf32, #tpu.memory_space<vmem>>, vector<1x8x128xf32>,
    %937 = vector.extract_strided_slice %931 {offsets = [8, 0], sizes = [8, 128], strides = [1, 1]} : vector<16x128xf32> to vector<8x128xf32>
    %c7_i32_352 = arith.constant 7 : i32
    %938 = arith.subi %c7_i32_352, %c6_i32_337 : i32
    %939 = arith.index_cast %938 : i32 to index
    %c0_353 = arith.constant 0 : index
    %c128_354 = arith.constant 128 : index
    %940 = vector.load %arg10[%939, %c0_353, %c128_354] : memref<8x8x256xf32, #tpu.memory_space<vmem>>, vector<1x8x128xf32>
    %941 = vector.shape_cast %940 : vector<1x8x128xf32> to vector<8x128xf32>
    %942 = vector.shape_cast %937 : vector<8x128xf32> to vector<1x8x128xf32>
    tpu.vector_store %arg10[%939, %c0_353, %c128_354], %942 {strides = array<i32>} : memref<8x8x256xf32, #tpu.memory_space<vmem>>, vector<1x8x128xf32>,
    %943 = tpu.concatenate %931, %931 in 1 : vector<16x128xf32>, vector<16x128xf32> -> vector<16x256xf32>
    %cst_355 = arith.constant 0.000000e+00 : f32
    %944 = vector.broadcast %cst_355 : f32 to vector<16x256xf32>
    %945 = arith.select %7, %943, %944 : vector<16x256xi1>, vector<16x256xf32>
    %946 = arith.truncf %945 : vector<16x256xf32> to vector<16x256xbf16>
    %c7_i32_356 = arith.constant 7 : i32
    %947 = arith.index_cast %c7_i32_356 : i32 to index
    %c0_357 = arith.constant 0 : index
    %c0_358 = arith.constant 0 : index
    %948 = vector.load %arg11[%947, %c0_357, %c0_358] : memref<8x16x512xf32, #tpu.memory_space<vmem>>, vector<1x16x512xf32>
    %949 = vector.shape_cast %948 : vector<1x16x512xf32> to vector<16x512xf32>
    %cst_359 = arith.constant dense<0.000000e+00> : vector<16x512xf32>
    %950 = tpu.matmul %946, %581, %cst_359 {dimension_numbers = #tpu.dot_dimension_numbers<[1], [0], [0], [1], [0, 0, 1, 1], [], []>} : vector<16x256xbf16>, vector<256x512xbf16>, vector<16x512xf32> -> vector<16x512xf32>
    %951 = arith.addf %949, %950 : vector<16x512xf32>
    %952 = vector.extract_strided_slice %951 {offsets = [0, 0], sizes = [16, 128], strides = [1, 1]} : vector<16x512xf32> to vector<16x128xf32>
    %cst_360 = arith.constant 5.000000e-01 : f32
    %953 = vector.broadcast %cst_360 : f32 to vector<16x128xf32>
    %954 = arith.mulf %953, %952 : vector<16x128xf32>
    %955 = math.tanh %954 : vector<16x128xf32>
    %cst_361 = arith.constant 5.000000e-01 : f32
    %956 = vector.broadcast %cst_361 : f32 to vector<16x128xf32>
    %957 = arith.mulf %956, %955 : vector<16x128xf32>
    %cst_362 = arith.constant 5.000000e-01 : f32
    %958 = vector.broadcast %cst_362 : f32 to vector<16x128xf32>
    %959 = arith.addf %957, %958 : vector<16x128xf32>
    %960 = vector.extract_strided_slice %951 {offsets = [0, 128], sizes = [16, 128], strides = [1, 1]} : vector<16x512xf32> to vector<16x128xf32>
    %cst_363 = arith.constant 5.000000e-01 : f32
    %961 = vector.broadcast %cst_363 : f32 to vector<16x128xf32>
    %962 = arith.mulf %961, %960 : vector<16x128xf32>
    %963 = math.tanh %962 : vector<16x128xf32>
    %cst_364 = arith.constant 5.000000e-01 : f32
    %964 = vector.broadcast %cst_364 : f32 to vector<16x128xf32>
    %965 = arith.mulf %964, %963 : vector<16x128xf32>
    %cst_365 = arith.constant 5.000000e-01 : f32
    %966 = vector.broadcast %cst_365 : f32 to vector<16x128xf32>
    %967 = arith.addf %965, %966 : vector<16x128xf32>
    %968 = vector.extract_strided_slice %951 {offsets = [0, 256], sizes = [16, 128], strides = [1, 1]} : vector<16x512xf32> to vector<16x128xf32>
    %969 = math.tanh %968 : vector<16x128xf32>
    %970 = vector.extract_strided_slice %951 {offsets = [0, 384], sizes = [16, 128], strides = [1, 1]} : vector<16x512xf32> to vector<16x128xf32>
    %cst_366 = arith.constant 5.000000e-01 : f32
    %971 = vector.broadcast %cst_366 : f32 to vector<16x128xf32>
    %972 = arith.mulf %971, %970 : vector<16x128xf32>
    %973 = math.tanh %972 : vector<16x128xf32>
    %cst_367 = arith.constant 5.000000e-01 : f32
    %974 = vector.broadcast %cst_367 : f32 to vector<16x128xf32>
    %975 = arith.mulf %974, %973 : vector<16x128xf32>
    %cst_368 = arith.constant 5.000000e-01 : f32
    %976 = vector.broadcast %cst_368 : f32 to vector<16x128xf32>
    %977 = arith.addf %975, %976 : vector<16x128xf32>
    %978 = arith.mulf %967, %929 : vector<16x128xf32>
    %979 = arith.mulf %959, %969 : vector<16x128xf32>
    %980 = arith.addf %978, %979 : vector<16x128xf32>
    %981 = math.tanh %980 : vector<16x128xf32>
    %982 = arith.mulf %977, %981 : vector<16x128xf32>
    %983 = vector.extract_strided_slice %982 {offsets = [0, 0], sizes = [8, 128], strides = [1, 1]} : vector<16x128xf32> to vector<8x128xf32>
    %984 = arith.index_cast %c7_i32_356 : i32 to index
    %c0_369 = arith.constant 0 : index
    %c0_370 = arith.constant 0 : index
    %985 = vector.load %arg10[%984, %c0_369, %c0_370] : memref<8x8x256xf32, #tpu.memory_space<vmem>>, vector<1x8x128xf32>
    %986 = vector.shape_cast %985 : vector<1x8x128xf32> to vector<8x128xf32>
    %987 = vector.shape_cast %983 : vector<8x128xf32> to vector<1x8x128xf32>
    tpu.vector_store %arg10[%984, %c0_369, %c0_370], %987 {strides = array<i32>} : memref<8x8x256xf32, #tpu.memory_space<vmem>>, vector<1x8x128xf32>,
    %988 = vector.extract_strided_slice %982 {offsets = [8, 0], sizes = [8, 128], strides = [1, 1]} : vector<16x128xf32> to vector<8x128xf32>
    %c7_i32_371 = arith.constant 7 : i32
    %989 = arith.subi %c7_i32_371, %c7_i32_356 : i32
    %990 = arith.index_cast %989 : i32 to index
    %c0_372 = arith.constant 0 : index
    %c128_373 = arith.constant 128 : index
    %991 = vector.load %arg10[%990, %c0_372, %c128_373] : memref<8x8x256xf32, #tpu.memory_space<vmem>>, vector<1x8x128xf32>
    %992 = vector.shape_cast %991 : vector<1x8x128xf32> to vector<8x128xf32>
    %993 = vector.shape_cast %988 : vector<8x128xf32> to vector<1x8x128xf32>
    tpu.vector_store %arg10[%990, %c0_372, %c128_373], %993 {strides = array<i32>} : memref<8x8x256xf32, #tpu.memory_space<vmem>>, vector<1x8x128xf32>,
    %994 = tpu.concatenate %982, %982 in 1 : vector<16x128xf32>, vector<16x128xf32> -> vector<16x256xf32>
    %cst_374 = arith.constant 0.000000e+00 : f32
    %995 = vector.broadcast %cst_374 : f32 to vector<16x256xf32>
    %996 = arith.select %7, %994, %995 : vector<16x256xi1>, vector<16x256xf32>
    %997 = arith.truncf %996 : vector<16x256xf32> to vector<16x256xbf16>
    %c8_i32_375 = arith.constant 8 : i32
    %c7_376 = arith.constant 7 : index
    %c0_377 = arith.constant 0 : index
    %c0_378 = arith.constant 0 : index
    %998 = vector.load %arg10[%c7_376, %c0_377, %c0_378] : memref<8x8x256xf32, #tpu.memory_space<vmem>>, vector<1x8x256xf32>
    %999 = vector.shape_cast %998 : vector<1x8x256xf32> to vector<8x256xf32>
    %c0_379 = arith.constant 0 : index
    %c0_380 = arith.constant 0 : index
    %1000 = vector.load %arg7[%c0_379, %c0_380] : memref<1x256xf32, #tpu.memory_space<vmem>>, vector<1x256xf32>
    %1001 = vector.broadcast %1000 : vector<1x256xf32> to vector<8x256xf32>
    %1002 = arith.mulf %999, %1001 : vector<8x256xf32>
    %cst_381 = arith.constant dense<0.000000e+00> : vector<8xf32>
    %1003 = vector.multi_reduction <add>, %1002, %cst_381 [1] : vector<8x256xf32> to vector<8xf32>
    %1004 = vector.shape_cast %1003 : vector<8xf32> to vector<8x1xf32>
    %c0_382 = arith.constant 0 : index
    %c0_383 = arith.constant 0 : index
    %1005 = vector.load %arg8[%c0_382, %c0_383] : memref<1x1xf32, #tpu.memory_space<vmem>>, vector<1x1xf32>
    %1006 = vector.broadcast %1005 : vector<1x1xf32> to vector<8x1xf32>
    %1007 = arith.addf %1004, %1006 : vector<8x1xf32>
    %1008 = math.tanh %1007 : vector<8x1xf32>
    %1009 = arith.negf %1008 : vector<8x1xf32>
    %1010 = math.exp %1009 : vector<8x1xf32>
    %cst_384 = arith.constant 1.000000e+00 : f32
    %1011 = vector.broadcast %cst_384 : f32 to vector<8x1xf32>
    %1012 = arith.addf %1011, %1010 : vector<8x1xf32>
    %1013 = arith.divf %1011, %1012 : vector<8x1xf32>
    %c0_385 = arith.constant 0 : index
    %c0_386 = arith.constant 0 : index
    %1014 = vector.load %arg9[%c0_385, %c0_386] : memref<8x1xf32, #tpu.memory_space<vmem>>, vector<8x1xf32>
    tpu.vector_store %arg9[%c0_385, %c0_386], %1013 {strides = array<i32>} : memref<8x1xf32, #tpu.memory_space<vmem>>, vector<8x1xf32>,
    return
  }
}

</mosaic_0001>

<llo_original>
// kernel: bilstm_forward.1
$region0: #{bilstm_forward.1}
  #allocation0 [shape = 'u32[]', space=smem, size = 0x4, offset = 0x4, fixed_abs, tag = 'smem constant byte address 0x4 - core index']
  #allocation1 [shape = 'u32[144,128]{1,0:T(1,128)}', space=vmem, size = 0x12000, scoped, tag = 'internal scratch']
  #allocation2 [shape = 'f32[8,8,256]{2,1,0:T(8,128)}', space=vmem, size = 0x10000, scoped, tag = 'scratch operand']
  #allocation3 [shape = 'f32[8,16,512]{2,1,0:T(8,128)}', space=vmem, size = 0x40000, scoped, tag = 'scratch operand']
  #allocation4 [shape = 'f32[1,1]{1,0:T(1,128)S(1)}', space=vmem, size = 0x200, scoped, tag = 'scoped memory for bilstm_forward.1']
  %s0 = inlined_call_operand.vmem [shape: bf16[8,8,128], index: 0, kind: input, shape index: {}]
  %s1 = inlined_call_operand.vmem [shape: f32[2,16,128], index: 1, kind: input, shape index: {}]
  %s2 = inlined_call_operand.vmem [shape: f32[2,16,128], index: 2, kind: input, shape index: {}]
  %s3 = inlined_call_operand.vmem [shape: bf16[128,1024], index: 3, kind: input, shape index: {}]
  %s4 = inlined_call_operand.vmem [shape: bf16[1,256,1024], index: 4, kind: input, shape index: {}]
  %s5 = inlined_call_operand.vmem [shape: bf16[2,256,512], index: 5, kind: input, shape index: {}]
  %s6 = inlined_call_operand.vmem [shape: f32[2,1,1024], index: 6, kind: input, shape index: {}]
  %s7 = inlined_call_operand.vmem [shape: f32[1,256], index: 7, kind: input, shape index: {}]
  %s8 = inlined_call_operand.<no memory space> [shape: f32[1,1], index: 8, kind: input, shape index: {}]
  %s9 = inlined_call_operand.vmem [shape: f32[8,1], index: 9, kind: output, shape index: {}]
  %s10 = sld [smem:[#allocation0]]
  $region46: #{bilstm_forward.1} parent=0
    _
  %s12 = ssub.s32 1, %s10
  %s13 = scalar_select 0, %s12, %s10
  %v14 = vstv %s8
  %15 = vst [vmem:[#allocation4] sm:$0x1] %v14
  // Predicated region
  $region2: #{bilstm_forward.1} parent=0 // pred_check
    _
  $region3: #{bilstm_forward.1} parent=0 // pred_check_branch
    %17 = sbr.rel (0) target = $region5
  $region4: #{bilstm_forward.1} parent=0 // pred_region
    _
  $region5: #{bilstm_forward.1} parent=0 // pred_fallthru
    _
  // Predicated region
  $region6: #{bilstm_forward.1} parent=0 // pred_check
    _
  $region7: #{bilstm_forward.1} parent=0 // pred_check_branch
    %19 = sbr.rel (0) target = $region9
  $region8: #{bilstm_forward.1} parent=0 // pred_region
    _
  $region9: #{bilstm_forward.1} parent=0 // pred_fallthru
    _
  // Predicated region
  $region10: #{bilstm_forward.1} parent=0 // pred_check
    _
  $region11: #{bilstm_forward.1} parent=0 // pred_check_branch
    %21 = sbr.rel (0) target = $region13
  $region12: #{bilstm_forward.1} parent=0 // pred_region
    _
  $region13: #{bilstm_forward.1} parent=0 // pred_fallthru
    _
  // Predicated region
  $region14: #{bilstm_forward.1} parent=0 // pred_check
    _
  $region15: #{bilstm_forward.1} parent=0 // pred_check_branch
    %23 = sbr.rel (0) target = $region17
  $region16: #{bilstm_forward.1} parent=0 // pred_region
    _
  $region17: #{bilstm_forward.1} parent=0 // pred_fallthru
    _
  // Predicated region
  $region18: #{bilstm_forward.1} parent=0 // pred_check
    _
  $region19: #{bilstm_forward.1} parent=0 // pred_check_branch
    %25 = sbr.rel (0) target = $region21
  $region20: #{bilstm_forward.1} parent=0 // pred_region
    _
  $region21: #{bilstm_forward.1} parent=0 // pred_fallthru
    _
  // Predicated region
  $region22: #{bilstm_forward.1} parent=0 // pred_check
    _
  $region23: #{bilstm_forward.1} parent=0 // pred_check_branch
    %27 = sbr.rel (0) target = $region25
  $region24: #{bilstm_forward.1} parent=0 // pred_region
    _
  $region25: #{bilstm_forward.1} parent=0 // pred_fallthru
    _
  // Predicated region
  $region26: #{bilstm_forward.1} parent=0 // pred_check
    _
  $region27: #{bilstm_forward.1} parent=0 // pred_check_branch
    %29 = sbr.rel (0) target = $region29
  $region28: #{bilstm_forward.1} parent=0 // pred_region
    _
  $region29: #{bilstm_forward.1} parent=0 // pred_fallthru
    _
  // Predicated region
  $region30: #{bilstm_forward.1} parent=0 // pred_check
    _
  $region31: #{bilstm_forward.1} parent=0 // pred_check_branch
    %31 = sbr.rel (0) target = $region33
  $region32: #{bilstm_forward.1} parent=0 // pred_region
    _
  $region33: #{bilstm_forward.1} parent=0 // pred_fallthru
    _
  // Predicated region
  $region34: #{bilstm_forward.1} parent=0 // pred_check
    _
  $region35: #{bilstm_forward.1} parent=0 // pred_check_branch
    %33 = sbr.rel (0) target = $region37
  $region36: #{bilstm_forward.1} parent=0 // pred_region
    _
  $region37: #{bilstm_forward.1} parent=0 // pred_fallthru
    _
  %v35 = vlaneseq
  %v36 = vshrl.u32 %v35, 7
  %v37 = vadd.s32 %v36, 8
  %v38 = vlaneseq
  %v39 = vand.u32 %v38, 127
  %v40 = vadd.s32 %v39, 128
  %vm41 = vcmp.lt.s32.totalorder %v36, 8
  %vm42 = vcmp.lt.s32.totalorder %v37, 8
  %vm43 = vcmp.lt.s32.totalorder %v39, 128
  %vm44 = vcmp.lt.s32.totalorder %v40, 128
  %vm45 = vmxor %vm41, %vm43
  %vm46 = vmxor %vm41, %vm44
  %vm47 = vmxor %vm42, %vm43
  %vm48 = vmxor %vm42, %vm44
  %vm49 = vmxor %vm45, 1
  %vm50 = vmxor %vm46, 1
  %vm51 = vmxor %vm47, 1
  %vm52 = vmxor %vm48, 1
  %v53 = vld [vmem:[%s0] sm:$0xf]
  %v54 = vld [vmem:[%s0 + $0x4] sm:$0xf]
  %v55 = vld [vmem:[%s0 + $0x8] sm:$0xf]
  %v56 = vld [vmem:[%s0 + $0xc] sm:$0xf]
  %v57 = vld [vmem:[%s0 + $0x10] sm:$0xf]
  %v58 = vld [vmem:[%s0 + $0x14] sm:$0xf]
  %v59 = vld [vmem:[%s0 + $0x18] sm:$0xf]
  %v60 = vld [vmem:[%s0 + $0x1c] sm:$0xf]
  %v61 = vld [vmem:[%s3] sm:$0xff]
  %v62 = vld [vmem:[%s3 + $0x8] sm:$0xff]
  %v63 = vld [vmem:[%s3 + $0x10] sm:$0xff]
  %v64 = vld [vmem:[%s3 + $0x18] sm:$0xff]
  %v65 = vld [vmem:[%s3 + $0x20] sm:$0xff]
  %v66 = vld [vmem:[%s3 + $0x28] sm:$0xff]
  %v67 = vld [vmem:[%s3 + $0x30] sm:$0xff]
  %v68 = vld [vmem:[%s3 + $0x38] sm:$0xff]
  %v69 = vld [vmem:[%s3 + $0x40] sm:$0xff]
  %v70 = vld [vmem:[%s3 + $0x48] sm:$0xff]
  %v71 = vld [vmem:[%s3 + $0x50] sm:$0xff]
  %v72 = vld [vmem:[%s3 + $0x58] sm:$0xff]
  %v73 = vld [vmem:[%s3 + $0x60] sm:$0xff]
  %v74 = vld [vmem:[%s3 + $0x68] sm:$0xff]
  %v75 = vld [vmem:[%s3 + $0x70] sm:$0xff]
  %v76 = vld [vmem:[%s3 + $0x78] sm:$0xff]
  %v77 = vld [vmem:[%s3 + $0x80] sm:$0xff]
  %v78 = vld [vmem:[%s3 + $0x88] sm:$0xff]
  %v79 = vld [vmem:[%s3 + $0x90] sm:$0xff]
  %v80 = vld [vmem:[%s3 + $0x98] sm:$0xff]
  %v81 = vld [vmem:[%s3 + $0xa0] sm:$0xff]
  %v82 = vld [vmem:[%s3 + $0xa8] sm:$0xff]
  %v83 = vld [vmem:[%s3 + $0xb0] sm:$0xff]
  %v84 = vld [vmem:[%s3 + $0xb8] sm:$0xff]
  %v85 = vld [vmem:[%s3 + $0xc0] sm:$0xff]
  %v86 = vld [vmem:[%s3 + $0xc8] sm:$0xff]
  %v87 = vld [vmem:[%s3 + $0xd0] sm:$0xff]
  %v88 = vld [vmem:[%s3 + $0xd8] sm:$0xff]
  %v89 = vld [vmem:[%s3 + $0xe0] sm:$0xff]
  %v90 = vld [vmem:[%s3 + $0xe8] sm:$0xff]
  %v91 = vld [vmem:[%s3 + $0xf0] sm:$0xff]
  %v92 = vld [vmem:[%s3 + $0xf8] sm:$0xff]
  %v93 = vld [vmem:[%s3 + $0x100] sm:$0xff]
  %v94 = vld [vmem:[%s3 + $0x108] sm:$0xff]
  %v95 = vld [vmem:[%s3 + $0x110] sm:$0xff]
  %v96 = vld [vmem:[%s3 + $0x118] sm:$0xff]
  %v97 = vld [vmem:[%s3 + $0x120] sm:$0xff]
  %v98 = vld [vmem:[%s3 + $0x128] sm:$0xff]
  %v99 = vld [vmem:[%s3 + $0x130] sm:$0xff]
  %v100 = vld [vmem:[%s3 + $0x138] sm:$0xff]
  %v101 = vld [vmem:[%s3 + $0x140] sm:$0xff]
  %v102 = vld [vmem:[%s3 + $0x148] sm:$0xff]
  %v103 = vld [vmem:[%s3 + $0x150] sm:$0xff]
  %v104 = vld [vmem:[%s3 + $0x158] sm:$0xff]
  %v105 = vld [vmem:[%s3 + $0x160] sm:$0xff]
  %v106 = vld [vmem:[%s3 + $0x168] sm:$0xff]
  %v107 = vld [vmem:[%s3 + $0x170] sm:$0xff]
  %v108 = vld [vmem:[%s3 + $0x178] sm:$0xff]
  %v109 = vld [vmem:[%s3 + $0x180] sm:$0xff]
  %v110 = vld [vmem:[%s3 + $0x188] sm:$0xff]
  %v111 = vld [vmem:[%s3 + $0x190] sm:$0xff]
  %v112 = vld [vmem:[%s3 + $0x198] sm:$0xff]
  %v113 = vld [vmem:[%s3 + $0x1a0] sm:$0xff]
  %v114 = vld [vmem:[%s3 + $0x1a8] sm:$0xff]
  %v115 = vld [vmem:[%s3 + $0x1b0] sm:$0xff]
  %v116 = vld [vmem:[%s3 + $0x1b8] sm:$0xff]
  %v117 = vld [vmem:[%s3 + $0x1c0] sm:$0xff]
  %v118 = vld [vmem:[%s3 + $0x1c8] sm:$0xff]
  %v119 = vld [vmem:[%s3 + $0x1d0] sm:$0xff]
  %v120 = vld [vmem:[%s3 + $0x1d8] sm:$0xff]
  %v121 = vld [vmem:[%s3 + $0x1e0] sm:$0xff]
  %v122 = vld [vmem:[%s3 + $0x1e8] sm:$0xff]
  %v123 = vld [vmem:[%s3 + $0x1f0] sm:$0xff]
  %v124 = vld [vmem:[%s3 + $0x1f8] sm:$0xff]
  %v125 = vld [vmem:[%s6] sm:$0xff]
  %v127 = vlaneseq
  %v128 = vshrl.u32 %v127, 7
  %v129 = vsub.s32 0, %v128
  %v130 = vrot.slane %v125, %v129
  %v131 = vlaneseq
  %v132 = vshrl.u32 %v131, 7
  %v133 = vsub.s32 1, %v132
  %v134 = vrot.slane %v125, %v133
  %v135 = vlaneseq
  %v136 = vshrl.u32 %v135, 7
  %v137 = vsub.s32 2, %v136
  %v138 = vrot.slane %v125, %v137
  %v139 = vlaneseq
  %v140 = vshrl.u32 %v139, 7
  %v141 = vsub.s32 3, %v140
  %v142 = vrot.slane %v125, %v141
  %v143 = vlaneseq
  %v144 = vshrl.u32 %v143, 7
  %v145 = vsub.s32 4, %v144
  %v146 = vrot.slane %v125, %v145
  %v147 = vlaneseq
  %v148 = vshrl.u32 %v147, 7
  %v149 = vsub.s32 5, %v148
  %v150 = vrot.slane %v125, %v149
  %v151 = vlaneseq
  %v152 = vshrl.u32 %v151, 7
  %v153 = vsub.s32 6, %v152
  %v154 = vrot.slane %v125, %v153
  %v155 = vlaneseq
  %v156 = vshrl.u32 %v155, 7
  %v157 = vsub.s32 7, %v156
  %v158 = vrot.slane %v125, %v157
  %v175 = vunpack.c.l.b16 %v53
  %v176 = vunpack.c.l.b16 %v54
  %v177 = vunpack.c.l.b16 %v55
  %v178 = vunpack.c.l.b16 %v56
  %v179 = vunpack.c.l.b16 %v57
  %v180 = vunpack.c.l.b16 %v58
  %v181 = vunpack.c.l.b16 %v59
  %v182 = vunpack.c.l.b16 %v60
  %v183 = vpack.c.b16 %v176, %v175
  %v184 = vpack.c.b16 %v178, %v177
  %v185 = vpack.c.b16 %v180, %v179
  %v186 = vpack.c.b16 %v182, %v181
  %v255 = vunpack.c.l.b16 %v61
  %v256 = vunpack.c.h.b16 %v61
  %v257 = vunpack.c.l.b16 %v62
  %v258 = vunpack.c.h.b16 %v62
  %v259 = vunpack.c.l.b16 %v63
  %v260 = vunpack.c.h.b16 %v63
  %v261 = vunpack.c.l.b16 %v64
  %v262 = vunpack.c.h.b16 %v64
  %v263 = vunpack.c.l.b16 %v65
  %v264 = vunpack.c.h.b16 %v65
  %v265 = vunpack.c.l.b16 %v66
  %v266 = vunpack.c.h.b16 %v66
  %v267 = vunpack.c.l.b16 %v67
  %v268 = vunpack.c.h.b16 %v67
  %v269 = vunpack.c.l.b16 %v68
  %v270 = vunpack.c.h.b16 %v68
  %v271 = vunpack.c.l.b16 %v69
  %v272 = vunpack.c.h.b16 %v69
  %v273 = vunpack.c.l.b16 %v70
  %v274 = vunpack.c.h.b16 %v70
  %v275 = vunpack.c.l.b16 %v71
  %v276 = vunpack.c.h.b16 %v71
  %v277 = vunpack.c.l.b16 %v72
  %v278 = vunpack.c.h.b16 %v72
  %v279 = vunpack.c.l.b16 %v73
  %v280 = vunpack.c.h.b16 %v73
  %v281 = vunpack.c.l.b16 %v74
  %v282 = vunpack.c.h.b16 %v74
  %v283 = vunpack.c.l.b16 %v75
  %v284 = vunpack.c.h.b16 %v75
  %v285 = vunpack.c.l.b16 %v76
  %v286 = vunpack.c.h.b16 %v76
  %v287 = vunpack.c.l.b16 %v77
  %v288 = vunpack.c.h.b16 %v77
  %v289 = vunpack.c.l.b16 %v78
  %v290 = vunpack.c.h.b16 %v78
  %v291 = vunpack.c.l.b16 %v79
  %v292 = vunpack.c.h.b16 %v79
  %v293 = vunpack.c.l.b16 %v80
  %v294 = vunpack.c.h.b16 %v80
  %v295 = vunpack.c.l.b16 %v81
  %v296 = vunpack.c.h.b16 %v81
  %v297 = vunpack.c.l.b16 %v82
  %v298 = vunpack.c.h.b16 %v82
  %v299 = vunpack.c.l.b16 %v83
  %v300 = vunpack.c.h.b16 %v83
  %v301 = vunpack.c.l.b16 %v84
  %v302 = vunpack.c.h.b16 %v84
  %v303 = vunpack.c.l.b16 %v85
  %v304 = vunpack.c.h.b16 %v85
  %v305 = vunpack.c.l.b16 %v86
  %v306 = vunpack.c.h.b16 %v86
  %v307 = vunpack.c.l.b16 %v87
  %v308 = vunpack.c.h.b16 %v87
  %v309 = vunpack.c.l.b16 %v88
  %v310 = vunpack.c.h.b16 %v88
  %v311 = vunpack.c.l.b16 %v89
  %v312 = vunpack.c.h.b16 %v89
  %v313 = vunpack.c.l.b16 %v90
  %v314 = vunpack.c.h.b16 %v90
  %v315 = vunpack.c.l.b16 %v91
  %v316 = vunpack.c.h.b16 %v91
  %v317 = vunpack.c.l.b16 %v92
  %v318 = vunpack.c.h.b16 %v92
  %v319 = vunpack.c.l.b16 %v93
  %v320 = vunpack.c.h.b16 %v93
  %v321 = vunpack.c.l.b16 %v94
  %v322 = vunpack.c.h.b16 %v94
  %v323 = vunpack.c.l.b16 %v95
  %v324 = vunpack.c.h.b16 %v95
  %v325 = vunpack.c.l.b16 %v96
  %v326 = vunpack.c.h.b16 %v96
  %v327 = vunpack.c.l.b16 %v97
  %v328 = vunpack.c.h.b16 %v97
  %v329 = vunpack.c.l.b16 %v98
  %v330 = vunpack.c.h.b16 %v98
  %v331 = vunpack.c.l.b16 %v99
  %v332 = vunpack.c.h.b16 %v99
  %v333 = vunpack.c.l.b16 %v100
  %v334 = vunpack.c.h.b16 %v100
  %v335 = vunpack.c.l.b16 %v101
  %v336 = vunpack.c.h.b16 %v101
  %v337 = vunpack.c.l.b16 %v102
  %v338 = vunpack.c.h.b16 %v102
  %v339 = vunpack.c.l.b16 %v103
  %v340 = vunpack.c.h.b16 %v103
  %v341 = vunpack.c.l.b16 %v104
  %v342 = vunpack.c.h.b16 %v104
  %v343 = vunpack.c.l.b16 %v105
  %v344 = vunpack.c.h.b16 %v105
  %v345 = vunpack.c.l.b16 %v106
  %v346 = vunpack.c.h.b16 %v106
  %v347 = vunpack.c.l.b16 %v107
  %v348 = vunpack.c.h.b16 %v107
  %v349 = vunpack.c.l.b16 %v108
  %v350 = vunpack.c.h.b16 %v108
  %v351 = vunpack.c.l.b16 %v109
  %v352 = vunpack.c.h.b16 %v109
  %v353 = vunpack.c.l.b16 %v110
  %v354 = vunpack.c.h.b16 %v110
  %v355 = vunpack.c.l.b16 %v111
  %v356 = vunpack.c.h.b16 %v111
  %v357 = vunpack.c.l.b16 %v112
  %v358 = vunpack.c.h.b16 %v112
  %v359 = vunpack.c.l.b16 %v113
  %v360 = vunpack.c.h.b16 %v113
  %v361 = vunpack.c.l.b16 %v114
  %v362 = vunpack.c.h.b16 %v114
  %v363 = vunpack.c.l.b16 %v115
  %v364 = vunpack.c.h.b16 %v115
  %v365 = vunpack.c.l.b16 %v116
  %v366 = vunpack.c.h.b16 %v116
  %v367 = vunpack.c.l.b16 %v117
  %v368 = vunpack.c.h.b16 %v117
  %v369 = vunpack.c.l.b16 %v118
  %v370 = vunpack.c.h.b16 %v118
  %v371 = vunpack.c.l.b16 %v119
  %v372 = vunpack.c.h.b16 %v119
  %v373 = vunpack.c.l.b16 %v120
  %v374 = vunpack.c.h.b16 %v120
  %v375 = vunpack.c.l.b16 %v121
  %v376 = vunpack.c.h.b16 %v121
  %v377 = vunpack.c.l.b16 %v122
  %v378 = vunpack.c.h.b16 %v122
  %v379 = vunpack.c.l.b16 %v123
  %v380 = vunpack.c.h.b16 %v123
  %v381 = vunpack.c.l.b16 %v124
  %v382 = vunpack.c.h.b16 %v124
  %v383 = vpack.c.b16 %v263, %v255
  %v384 = vpack.c.b16 %v264, %v256
  %v385 = vpack.c.b16 %v265, %v257
  %v386 = vpack.c.b16 %v266, %v258
  %v387 = vpack.c.b16 %v267, %v259
  %v388 = vpack.c.b16 %v268, %v260
  %v389 = vpack.c.b16 %v269, %v261
  %v390 = vpack.c.b16 %v270, %v262
  %v391 = vpack.c.b16 %v279, %v271
  %v392 = vpack.c.b16 %v280, %v272
  %v393 = vpack.c.b16 %v281, %v273
  %v394 = vpack.c.b16 %v282, %v274
  %v395 = vpack.c.b16 %v283, %v275
  %v396 = vpack.c.b16 %v284, %v276
  %v397 = vpack.c.b16 %v285, %v277
  %v398 = vpack.c.b16 %v286, %v278
  %v399 = vpack.c.b16 %v295, %v287
  %v400 = vpack.c.b16 %v296, %v288
  %v401 = vpack.c.b16 %v297, %v289
  %v402 = vpack.c.b16 %v298, %v290
  %v403 = vpack.c.b16 %v299, %v291
  %v404 = vpack.c.b16 %v300, %v292
  %v405 = vpack.c.b16 %v301, %v293
  %v406 = vpack.c.b16 %v302, %v294
  %v407 = vpack.c.b16 %v311, %v303
  %v408 = vpack.c.b16 %v312, %v304
  %v409 = vpack.c.b16 %v313, %v305
  %v410 = vpack.c.b16 %v314, %v306
  %v411 = vpack.c.b16 %v315, %v307
  %v412 = vpack.c.b16 %v316, %v308
  %v413 = vpack.c.b16 %v317, %v309
  %v414 = vpack.c.b16 %v318, %v310
  %v415 = vpack.c.b16 %v327, %v319
  %v416 = vpack.c.b16 %v328, %v320
  %v417 = vpack.c.b16 %v329, %v321
  %v418 = vpack.c.b16 %v330, %v322
  %v419 = vpack.c.b16 %v331, %v323
  %v420 = vpack.c.b16 %v332, %v324
  %v421 = vpack.c.b16 %v333, %v325
  %v422 = vpack.c.b16 %v334, %v326
  %v423 = vpack.c.b16 %v343, %v335
  %v424 = vpack.c.b16 %v344, %v336
  %v425 = vpack.c.b16 %v345, %v337
  %v426 = vpack.c.b16 %v346, %v338
  %v427 = vpack.c.b16 %v347, %v339
  %v428 = vpack.c.b16 %v348, %v340
  %v429 = vpack.c.b16 %v349, %v341
  %v430 = vpack.c.b16 %v350, %v342
  %v431 = vpack.c.b16 %v359, %v351
  %v432 = vpack.c.b16 %v360, %v352
  %v433 = vpack.c.b16 %v361, %v353
  %v434 = vpack.c.b16 %v362, %v354
  %v435 = vpack.c.b16 %v363, %v355
  %v436 = vpack.c.b16 %v364, %v356
  %v437 = vpack.c.b16 %v365, %v357
  %v438 = vpack.c.b16 %v366, %v358
  %v439 = vpack.c.b16 %v375, %v367
  %v440 = vpack.c.b16 %v376, %v368
  %v441 = vpack.c.b16 %v377, %v369
  %v442 = vpack.c.b16 %v378, %v370
  %v443 = vpack.c.b16 %v379, %v371
  %v444 = vpack.c.b16 %v380, %v372
  %v445 = vpack.c.b16 %v381, %v373
  %v446 = vpack.c.b16 %v382, %v374
  %511 = vmatprep.subr.bf16.mxu0 %v384
  %512 = vmatpush1.bf16.msra.mxu0 %v383
  %513 = vmatprep.subr.bf16.mxu0 %v392
  %514 = vmatpush1.bf16.msra.mxu0 %v391
  %515 = vmatprep.subr.bf16.mxu0 %v400
  %516 = vmatpush1.bf16.msra.mxu0 %v399
  %517 = vmatprep.subr.bf16.mxu0 %v408
  %518 = vmatpush1.bf16.msra.mxu0 %v407
  %519 = vmatprep.subr.bf16.mxu0 %v416
  %520 = vmatpush1.bf16.msra.mxu0 %v415
  %521 = vmatprep.subr.bf16.mxu0 %v424
  %522 = vmatpush1.bf16.msra.mxu0 %v423
  %523 = vmatprep.subr.bf16.mxu0 %v432
  %524 = vmatpush1.bf16.msra.mxu0 %v431
  %525 = vmatprep.subr.bf16.mxu0 %v440
  %526 = vmatpush1.bf16.msra.mxu0 %v439
  %527 = vmatprep.subr.bf16.mxu0 0
  %528 = vmatpush1.bf16.msra.mxu0 0
  %529 = vmatprep.subr.bf16.mxu0 0
  %530 = vmatpush1.bf16.msra.mxu0 0
  %531 = vmatprep.subr.bf16.mxu0 0
  %532 = vmatpush1.bf16.msra.mxu0 0
  %533 = vmatprep.subr.bf16.mxu0 0
  %534 = vmatpush1.bf16.msra.mxu0 0
  %535 = vmatprep.subr.bf16.mxu0 0
  %536 = vmatpush1.bf16.msra.mxu0 0
  %537 = vmatprep.subr.bf16.mxu0 0
  %538 = vmatpush1.bf16.msra.mxu0 0
  %539 = vmatprep.subr.bf16.mxu0 0
  %540 = vmatpush1.bf16.msra.mxu0 0
  %541 = vmatprep.subr.bf16.mxu0 0
  %542 = vmatpush1.bf16.msra.mxu0 0
  %543 = vmatprep.mubr.bf16.mxu0 0
  %544 = vmatmul.mubr.bf16.gmra.mrb[0].mxu0 %v183
  %v545 = vpop.f32.mrb[0].mxu0
  %v546 = vadd.f32 %v130, %v545
  %v547 = vpop.f32.mrb[0].mxu0
  %v548 = vadd.f32 %v134, %v547
  %v549 = vpop.f32.mrb[0].mxu0
  %v550 = vadd.f32 %v130, %v549
  %v551 = vpop.f32.mrb[0].mxu0
  %v552 = vadd.f32 %v134, %v551
  %553 = vmatprep.mubr.bf16.mxu0 0
  %554 = vmatmul.mubr.bf16.gmra.mrb[0].mxu0 %v184
  %v555 = vpop.f32.mrb[0].mxu0
  %v556 = vadd.f32 %v130, %v555
  %v557 = vpop.f32.mrb[0].mxu0
  %v558 = vadd.f32 %v134, %v557
  %v559 = vpop.f32.mrb[0].mxu0
  %v560 = vadd.f32 %v130, %v559
  %v561 = vpop.f32.mrb[0].mxu0
  %v562 = vadd.f32 %v134, %v561
  %563 = vmatprep.mubr.bf16.mxu0 0
  %564 = vmatmul.mubr.bf16.gmra.mrb[0].mxu0 %v185
  %v565 = vpop.f32.mrb[0].mxu0
  %v566 = vadd.f32 %v130, %v565
  %v567 = vpop.f32.mrb[0].mxu0
  %v568 = vadd.f32 %v134, %v567
  %v569 = vpop.f32.mrb[0].mxu0
  %v570 = vadd.f32 %v130, %v569
  %v571 = vpop.f32.mrb[0].mxu0
  %v572 = vadd.f32 %v134, %v571
  %573 = vmatprep.mubr.bf16.mxu0 0
  %574 = vmatmul.mubr.bf16.gmra.mrb[0].mxu0 %v186
  %v575 = vpop.f32.mrb[0].mxu0
  %v576 = vadd.f32 %v130, %v575
  %v577 = vpop.f32.mrb[0].mxu0
  %v578 = vadd.f32 %v134, %v577
  %v579 = vpop.f32.mrb[0].mxu0
  %v580 = vadd.f32 %v130, %v579
  %v581 = vpop.f32.mrb[0].mxu0
  %v582 = vadd.f32 %v134, %v581
  %583 = vdwg.mxu0
  %584 = vmatprep.subr.bf16.mxu0 %v386
  %585 = vmatpush1.bf16.msra.mxu0 %v385
  %586 = vmatprep.subr.bf16.mxu0 %v394
  %587 = vmatpush1.bf16.msra.mxu0 %v393
  %588 = vmatprep.subr.bf16.mxu0 %v402
  %589 = vmatpush1.bf16.msra.mxu0 %v401
  %590 = vmatprep.subr.bf16.mxu0 %v410
  %591 = vmatpush1.bf16.msra.mxu0 %v409
  %592 = vmatprep.subr.bf16.mxu0 %v418
  %593 = vmatpush1.bf16.msra.mxu0 %v417
  %594 = vmatprep.subr.bf16.mxu0 %v426
  %595 = vmatpush1.bf16.msra.mxu0 %v425
  %596 = vmatprep.subr.bf16.mxu0 %v434
  %597 = vmatpush1.bf16.msra.mxu0 %v433
  %598 = vmatprep.subr.bf16.mxu0 %v442
  %599 = vmatpush1.bf16.msra.mxu0 %v441
  %600 = vmatprep.subr.bf16.mxu0 0
  %601 = vmatpush1.bf16.msra.mxu0 0
  %602 = vmatprep.subr.bf16.mxu0 0
  %603 = vmatpush1.bf16.msra.mxu0 0
  %604 = vmatprep.subr.bf16.mxu0 0
  %605 = vmatpush1.bf16.msra.mxu0 0
  %606 = vmatprep.subr.bf16.mxu0 0
  %607 = vmatpush1.bf16.msra.mxu0 0
  %608 = vmatprep.subr.bf16.mxu0 0
  %609 = vmatpush1.bf16.msra.mxu0 0
  %610 = vmatprep.subr.bf16.mxu0 0
  %611 = vmatpush1.bf16.msra.mxu0 0
  %612 = vmatprep.subr.bf16.mxu0 0
  %613 = vmatpush1.bf16.msra.mxu0 0
  %614 = vmatprep.subr.bf16.mxu0 0
  %615 = vmatpush1.bf16.msra.mxu0 0
  %616 = vmatprep.mubr.bf16.mxu0 0
  %617 = vmatmul.mubr.bf16.gmra.mrb[0].mxu0 %v183
  %v618 = vpop.f32.mrb[0].mxu0
  %v619 = vadd.f32 %v138, %v618
  %v620 = vpop.f32.mrb[0].mxu0
  %v621 = vadd.f32 %v142, %v620
  %v622 = vpop.f32.mrb[0].mxu0
  %v623 = vadd.f32 %v138, %v622
  %v624 = vpop.f32.mrb[0].mxu0
  %v625 = vadd.f32 %v142, %v624
  %626 = vmatprep.mubr.bf16.mxu0 0
  %627 = vmatmul.mubr.bf16.gmra.mrb[0].mxu0 %v184
  %v628 = vpop.f32.mrb[0].mxu0
  %v629 = vadd.f32 %v138, %v628
  %v630 = vpop.f32.mrb[0].mxu0
  %v631 = vadd.f32 %v142, %v630
  %v632 = vpop.f32.mrb[0].mxu0
  %v633 = vadd.f32 %v138, %v632
  %v634 = vpop.f32.mrb[0].mxu0
  %v635 = vadd.f32 %v142, %v634
  %636 = vmatprep.mubr.bf16.mxu0 0
  %637 = vmatmul.mubr.bf16.gmra.mrb[0].mxu0 %v185
  %v638 = vpop.f32.mrb[0].mxu0
  %v639 = vadd.f32 %v138, %v638
  %v640 = vpop.f32.mrb[0].mxu0
  %v641 = vadd.f32 %v142, %v640
  %v642 = vpop.f32.mrb[0].mxu0
  %v643 = vadd.f32 %v138, %v642
  %v644 = vpop.f32.mrb[0].mxu0
  %v645 = vadd.f32 %v142, %v644
  %646 = vmatprep.mubr.bf16.mxu0 0
  %647 = vmatmul.mubr.bf16.gmra.mrb[0].mxu0 %v186
  %v648 = vpop.f32.mrb[0].mxu0
  %v649 = vadd.f32 %v138, %v648
  %v650 = vpop.f32.mrb[0].mxu0
  %v651 = vadd.f32 %v142, %v650
  %v652 = vpop.f32.mrb[0].mxu0
  %v653 = vadd.f32 %v138, %v652
  %v654 = vpop.f32.mrb[0].mxu0
  %v655 = vadd.f32 %v142, %v654
  %656 = vdwg.mxu0
  %657 = vmatprep.subr.bf16.mxu0 %v388
  %658 = vmatpush1.bf16.msra.mxu0 %v387
  %659 = vmatprep.subr.bf16.mxu0 %v396
  %660 = vmatpush1.bf16.msra.mxu0 %v395
  %661 = vmatprep.subr.bf16.mxu0 %v404
  %662 = vmatpush1.bf16.msra.mxu0 %v403
  %663 = vmatprep.subr.bf16.mxu0 %v412
  %664 = vmatpush1.bf16.msra.mxu0 %v411
  %665 = vmatprep.subr.bf16.mxu0 %v420
  %666 = vmatpush1.bf16.msra.mxu0 %v419
  %667 = vmatprep.subr.bf16.mxu0 %v428
  %668 = vmatpush1.bf16.msra.mxu0 %v427
  %669 = vmatprep.subr.bf16.mxu0 %v436
  %670 = vmatpush1.bf16.msra.mxu0 %v435
  %671 = vmatprep.subr.bf16.mxu0 %v444
  %672 = vmatpush1.bf16.msra.mxu0 %v443
  %673 = vmatprep.subr.bf16.mxu0 0
  %674 = vmatpush1.bf16.msra.mxu0 0
  %675 = vmatprep.subr.bf16.mxu0 0
  %676 = vmatpush1.bf16.msra.mxu0 0
  %677 = vmatprep.subr.bf16.mxu0 0
  %678 = vmatpush1.bf16.msra.mxu0 0
  %679 = vmatprep.subr.bf16.mxu0 0
  %680 = vmatpush1.bf16.msra.mxu0 0
  %681 = vmatprep.subr.bf16.mxu0 0
  %682 = vmatpush1.bf16.msra.mxu0 0
  %683 = vmatprep.subr.bf16.mxu0 0
  %684 = vmatpush1.bf16.msra.mxu0 0
  %685 = vmatprep.subr.bf16.mxu0 0
  %686 = vmatpush1.bf16.msra.mxu0 0
  %687 = vmatprep.subr.bf16.mxu0 0
  %688 = vmatpush1.bf16.msra.mxu0 0
  %689 = vmatprep.mubr.bf16.mxu0 0
  %690 = vmatmul.mubr.bf16.gmra.mrb[0].mxu0 %v183
  %v691 = vpop.f32.mrb[0].mxu0
  %v692 = vadd.f32 %v146, %v691
  %v693 = vpop.f32.mrb[0].mxu0
  %v694 = vadd.f32 %v150, %v693
  %v695 = vpop.f32.mrb[0].mxu0
  %v696 = vadd.f32 %v146, %v695
  %v697 = vpop.f32.mrb[0].mxu0
  %v698 = vadd.f32 %v150, %v697
  %699 = vmatprep.mubr.bf16.mxu0 0
  %700 = vmatmul.mubr.bf16.gmra.mrb[0].mxu0 %v184
  %v701 = vpop.f32.mrb[0].mxu0
  %v702 = vadd.f32 %v146, %v701
  %v703 = vpop.f32.mrb[0].mxu0
  %v704 = vadd.f32 %v150, %v703
  %v705 = vpop.f32.mrb[0].mxu0
  %v706 = vadd.f32 %v146, %v705
  %v707 = vpop.f32.mrb[0].mxu0
  %v708 = vadd.f32 %v150, %v707
  %709 = vmatprep.mubr.bf16.mxu0 0
  %710 = vmatmul.mubr.bf16.gmra.mrb[0].mxu0 %v185
  %v711 = vpop.f32.mrb[0].mxu0
  %v712 = vadd.f32 %v146, %v711
  %v713 = vpop.f32.mrb[0].mxu0
  %v714 = vadd.f32 %v150, %v713
  %v715 = vpop.f32.mrb[0].mxu0
  %v716 = vadd.f32 %v146, %v715
  %v717 = vpop.f32.mrb[0].mxu0
  %v718 = vadd.f32 %v150, %v717
  %719 = vmatprep.mubr.bf16.mxu0 0
  %720 = vmatmul.mubr.bf16.gmra.mrb[0].mxu0 %v186
  %v721 = vpop.f32.mrb[0].mxu0
  %v722 = vadd.f32 %v146, %v721
  %v723 = vpop.f32.mrb[0].mxu0
  %v724 = vadd.f32 %v150, %v723
  %v725 = vpop.f32.mrb[0].mxu0
  %v726 = vadd.f32 %v146, %v725
  %v727 = vpop.f32.mrb[0].mxu0
  %v728 = vadd.f32 %v150, %v727
  %729 = vdwg.mxu0
  %730 = vmatprep.subr.bf16.mxu0 %v390
  %731 = vmatpush1.bf16.msra.mxu0 %v389
  %732 = vmatprep.subr.bf16.mxu0 %v398
  %733 = vmatpush1.bf16.msra.mxu0 %v397
  %734 = vmatprep.subr.bf16.mxu0 %v406
  %735 = vmatpush1.bf16.msra.mxu0 %v405
  %736 = vmatprep.subr.bf16.mxu0 %v414
  %737 = vmatpush1.bf16.msra.mxu0 %v413
  %738 = vmatprep.subr.bf16.mxu0 %v422
  %739 = vmatpush1.bf16.msra.mxu0 %v421
  %740 = vmatprep.subr.bf16.mxu0 %v430
  %741 = vmatpush1.bf16.msra.mxu0 %v429
  %742 = vmatprep.subr.bf16.mxu0 %v438
  %743 = vmatpush1.bf16.msra.mxu0 %v437
  %744 = vmatprep.subr.bf16.mxu0 %v446
  %745 = vmatpush1.bf16.msra.mxu0 %v445
  %746 = vmatprep.subr.bf16.mxu0 0
  %747 = vmatpush1.bf16.msra.mxu0 0
  %748 = vmatprep.subr.bf16.mxu0 0
  %749 = vmatpush1.bf16.msra.mxu0 0
  %750 = vmatprep.subr.bf16.mxu0 0
  %751 = vmatpush1.bf16.msra.mxu0 0
  %752 = vmatprep.subr.bf16.mxu0 0
  %753 = vmatpush1.bf16.msra.mxu0 0
  %754 = vmatprep.subr.bf16.mxu0 0
  %755 = vmatpush1.bf16.msra.mxu0 0
  %756 = vmatprep.subr.bf16.mxu0 0
  %757 = vmatpush1.bf16.msra.mxu0 0
  %758 = vmatprep.subr.bf16.mxu0 0
  %759 = vmatpush1.bf16.msra.mxu0 0
  %760 = vmatprep.subr.bf16.mxu0 0
  %761 = vmatpush1.bf16.msra.mxu0 0
  %762 = vmatprep.mubr.bf16.mxu0 0
  %763 = vmatmul.mubr.bf16.gmra.mrb[0].mxu0 %v183
  %v764 = vpop.f32.mrb[0].mxu0
  %v765 = vadd.f32 %v154, %v764
  %v766 = vpop.f32.mrb[0].mxu0
  %v767 = vadd.f32 %v158, %v766
  %v768 = vpop.f32.mrb[0].mxu0
  %v769 = vadd.f32 %v154, %v768
  %v770 = vpop.f32.mrb[0].mxu0
  %v771 = vadd.f32 %v158, %v770
  %772 = vmatprep.mubr.bf16.mxu0 0
  %773 = vmatmul.mubr.bf16.gmra.mrb[0].mxu0 %v184
  %v774 = vpop.f32.mrb[0].mxu0
  %v775 = vadd.f32 %v154, %v774
  %v776 = vpop.f32.mrb[0].mxu0
  %v777 = vadd.f32 %v158, %v776
  %v778 = vpop.f32.mrb[0].mxu0
  %v779 = vadd.f32 %v154, %v778
  %v780 = vpop.f32.mrb[0].mxu0
  %v781 = vadd.f32 %v158, %v780
  %782 = vmatprep.mubr.bf16.mxu0 0
  %783 = vmatmul.mubr.bf16.gmra.mrb[0].mxu0 %v185
  %v784 = vpop.f32.mrb[0].mxu0
  %v785 = vadd.f32 %v154, %v784
  %v786 = vpop.f32.mrb[0].mxu0
  %v787 = vadd.f32 %v158, %v786
  %v788 = vpop.f32.mrb[0].mxu0
  %v789 = vadd.f32 %v154, %v788
  %v790 = vpop.f32.mrb[0].mxu0
  %v791 = vadd.f32 %v158, %v790
  %792 = vmatprep.mubr.bf16.mxu0 0
  %793 = vmatmul.mubr.bf16.gmra.mrb[0].mxu0 %v186
  %v794 = vpop.f32.mrb[0].mxu0
  %v795 = vadd.f32 %v154, %v794
  %v796 = vpop.f32.mrb[0].mxu0
  %v797 = vadd.f32 %v158, %v796
  %v798 = vpop.f32.mrb[0].mxu0
  %v799 = vadd.f32 %v154, %v798
  %v800 = vpop.f32.mrb[0].mxu0
  %v801 = vadd.f32 %v158, %v800
  %802 = vdwg.mxu0
  %803 = vst [vmem:[#allocation3] sm:$0xff] %v546
  %804 = vst [vmem:[#allocation3 + $0x8] sm:$0xff] %v548
  %805 = vst [vmem:[#allocation3 + $0x10] sm:$0xff] %v619
  %806 = vst [vmem:[#allocation3 + $0x18] sm:$0xff] %v621
  %807 = vst [vmem:[#allocation3 + $0x20] sm:$0xff] %v726
  %808 = vst [vmem:[#allocation3 + $0x28] sm:$0xff] %v728
  %809 = vst [vmem:[#allocation3 + $0x30] sm:$0xff] %v799
  %810 = vst [vmem:[#allocation3 + $0x38] sm:$0xff] %v801
  %s811 = scalar_lea.vmem [#allocation3], 64
  %812 = vst [vmem:[%s811] sm:$0xff] %v550
  %813 = vst [vmem:[%s811 + $0x8] sm:$0xff] %v552
  %814 = vst [vmem:[%s811 + $0x10] sm:$0xff] %v623
  %815 = vst [vmem:[%s811 + $0x18] sm:$0xff] %v625
  %816 = vst [vmem:[%s811 + $0x20] sm:$0xff] %v722
  %817 = vst [vmem:[%s811 + $0x28] sm:$0xff] %v724
  %818 = vst [vmem:[%s811 + $0x30] sm:$0xff] %v795
  %819 = vst [vmem:[%s811 + $0x38] sm:$0xff] %v797
  %s820 = scalar_lea.vmem [#allocation3], 128
  %821 = vst [vmem:[%s820] sm:$0xff] %v556
  %822 = vst [vmem:[%s820 + $0x8] sm:$0xff] %v558
  %823 = vst [vmem:[%s820 + $0x10] sm:$0xff] %v629
  %824 = vst [vmem:[%s820 + $0x18] sm:$0xff] %v631
  %825 = vst [vmem:[%s820 + $0x20] sm:$0xff] %v716
  %826 = vst [vmem:[%s820 + $0x28] sm:$0xff] %v718
  %827 = vst [vmem:[%s820 + $0x30] sm:$0xff] %v789
  %828 = vst [vmem:[%s820 + $0x38] sm:$0xff] %v791
  %s829 = scalar_lea.vmem [#allocation3], 192
  %830 = vst [vmem:[%s829] sm:$0xff] %v560
  %831 = vst [vmem:[%s829 + $0x8] sm:$0xff] %v562
  %832 = vst [vmem:[%s829 + $0x10] sm:$0xff] %v633
  %833 = vst [vmem:[%s829 + $0x18] sm:$0xff] %v635
  %834 = vst [vmem:[%s829 + $0x20] sm:$0xff] %v712
  %835 = vst [vmem:[%s829 + $0x28] sm:$0xff] %v714
  %836 = vst [vmem:[%s829 + $0x30] sm:$0xff] %v785
  %837 = vst [vmem:[%s829 + $0x38] sm:$0xff] %v787
  %s838 = scalar_lea.vmem [#allocation3], 256
  %839 = vst [vmem:[%s838] sm:$0xff] %v566
  %840 = vst [vmem:[%s838 + $0x8] sm:$0xff] %v568
  %841 = vst [vmem:[%s838 + $0x10] sm:$0xff] %v639
  %842 = vst [vmem:[%s838 + $0x18] sm:$0xff] %v641
  %843 = vst [vmem:[%s838 + $0x20] sm:$0xff] %v706
  %844 = vst [vmem:[%s838 + $0x28] sm:$0xff] %v708
  %845 = vst [vmem:[%s838 + $0x30] sm:$0xff] %v779
  %846 = vst [vmem:[%s838 + $0x38] sm:$0xff] %v781
  %s847 = scalar_lea.vmem [#allocation3], 320
  %848 = vst [vmem:[%s847] sm:$0xff] %v570
  %849 = vst [vmem:[%s847 + $0x8] sm:$0xff] %v572
  %850 = vst [vmem:[%s847 + $0x10] sm:$0xff] %v643
  %851 = vst [vmem:[%s847 + $0x18] sm:$0xff] %v645
  %852 = vst [vmem:[%s847 + $0x20] sm:$0xff] %v702
  %853 = vst [vmem:[%s847 + $0x28] sm:$0xff] %v704
  %854 = vst [vmem:[%s847 + $0x30] sm:$0xff] %v775
  %855 = vst [vmem:[%s847 + $0x38] sm:$0xff] %v777
  %s856 = scalar_lea.vmem [#allocation3], 384
  %857 = vst [vmem:[%s856] sm:$0xff] %v576
  %858 = vst [vmem:[%s856 + $0x8] sm:$0xff] %v578
  %859 = vst [vmem:[%s856 + $0x10] sm:$0xff] %v649
  %860 = vst [vmem:[%s856 + $0x18] sm:$0xff] %v651
  %861 = vst [vmem:[%s856 + $0x20] sm:$0xff] %v696
  %862 = vst [vmem:[%s856 + $0x28] sm:$0xff] %v698
  %863 = vst [vmem:[%s856 + $0x30] sm:$0xff] %v769
  %864 = vst [vmem:[%s856 + $0x38] sm:$0xff] %v771
  %s865 = scalar_lea.vmem [#allocation3], 448
  %866 = vst [vmem:[%s865] sm:$0xff] %v580
  %867 = vst [vmem:[%s865 + $0x8] sm:$0xff] %v582
  %868 = vst [vmem:[%s865 + $0x10] sm:$0xff] %v653
  %869 = vst [vmem:[%s865 + $0x18] sm:$0xff] %v655
  %870 = vst [vmem:[%s865 + $0x20] sm:$0xff] %v692
  %871 = vst [vmem:[%s865 + $0x28] sm:$0xff] %v694
  %872 = vst [vmem:[%s865 + $0x30] sm:$0xff] %v765
  %873 = vst [vmem:[%s865 + $0x38] sm:$0xff] %v767
  %v874 = vld [vmem:[%s5] sm:$0xff]
  %v875 = vld [vmem:[%s5 + $0x8] sm:$0xff]
  %v876 = vld [vmem:[%s5 + $0x10] sm:$0xff]
  %v877 = vld [vmem:[%s5 + $0x18] sm:$0xff]
  %v878 = vld [vmem:[%s5 + $0x20] sm:$0xff]
  %v879 = vld [vmem:[%s5 + $0x28] sm:$0xff]
  %v880 = vld [vmem:[%s5 + $0x30] sm:$0xff]
  %v881 = vld [vmem:[%s5 + $0x38] sm:$0xff]
  %v882 = vld [vmem:[%s5 + $0x40] sm:$0xff]
  %v883 = vld [vmem:[%s5 + $0x48] sm:$0xff]
  %v884 = vld [vmem:[%s5 + $0x50] sm:$0xff]
  %v885 = vld [vmem:[%s5 + $0x58] sm:$0xff]
  %v886 = vld [vmem:[%s5 + $0x60] sm:$0xff]
  %v887 = vld [vmem:[%s5 + $0x68] sm:$0xff]
  %v888 = vld [vmem:[%s5 + $0x70] sm:$0xff]
  %v889 = vld [vmem:[%s5 + $0x78] sm:$0xff]
  %v890 = vld [vmem:[%s5 + $0x80] sm:$0xff]
  %v891 = vld [vmem:[%s5 + $0x88] sm:$0xff]
  %v892 = vld [vmem:[%s5 + $0x90] sm:$0xff]
  %v893 = vld [vmem:[%s5 + $0x98] sm:$0xff]
  %v894 = vld [vmem:[%s5 + $0xa0] sm:$0xff]
  %v895 = vld [vmem:[%s5 + $0xa8] sm:$0xff]
  %v896 = vld [vmem:[%s5 + $0xb0] sm:$0xff]
  %v897 = vld [vmem:[%s5 + $0xb8] sm:$0xff]
  %v898 = vld [vmem:[%s5 + $0xc0] sm:$0xff]
  %v899 = vld [vmem:[%s5 + $0xc8] sm:$0xff]
  %v900 = vld [vmem:[%s5 + $0xd0] sm:$0xff]
  %v901 = vld [vmem:[%s5 + $0xd8] sm:$0xff]
  %v902 = vld [vmem:[%s5 + $0xe0] sm:$0xff]
  %v903 = vld [vmem:[%s5 + $0xe8] sm:$0xff]
  %v904 = vld [vmem:[%s5 + $0xf0] sm:$0xff]
  %v905 = vld [vmem:[%s5 + $0xf8] sm:$0xff]
  %v906 = vld [vmem:[%s5 + $0x100] sm:$0xff]
  %v907 = vld [vmem:[%s5 + $0x108] sm:$0xff]
  %v908 = vld [vmem:[%s5 + $0x110] sm:$0xff]
  %v909 = vld [vmem:[%s5 + $0x118] sm:$0xff]
  %v910 = vld [vmem:[%s5 + $0x120] sm:$0xff]
  %v911 = vld [vmem:[%s5 + $0x128] sm:$0xff]
  %v912 = vld [vmem:[%s5 + $0x130] sm:$0xff]
  %v913 = vld [vmem:[%s5 + $0x138] sm:$0xff]
  %v914 = vld [vmem:[%s5 + $0x140] sm:$0xff]
  %v915 = vld [vmem:[%s5 + $0x148] sm:$0xff]
  %v916 = vld [vmem:[%s5 + $0x150] sm:$0xff]
  %v917 = vld [vmem:[%s5 + $0x158] sm:$0xff]
  %v918 = vld [vmem:[%s5 + $0x160] sm:$0xff]
  %v919 = vld [vmem:[%s5 + $0x168] sm:$0xff]
  %v920 = vld [vmem:[%s5 + $0x170] sm:$0xff]
  %v921 = vld [vmem:[%s5 + $0x178] sm:$0xff]
  %v922 = vld [vmem:[%s5 + $0x180] sm:$0xff]
  %v923 = vld [vmem:[%s5 + $0x188] sm:$0xff]
  %v924 = vld [vmem:[%s5 + $0x190] sm:$0xff]
  %v925 = vld [vmem:[%s5 + $0x198] sm:$0xff]
  %v926 = vld [vmem:[%s5 + $0x1a0] sm:$0xff]
  %v927 = vld [vmem:[%s5 + $0x1a8] sm:$0xff]
  %v928 = vld [vmem:[%s5 + $0x1b0] sm:$0xff]
  %v929 = vld [vmem:[%s5 + $0x1b8] sm:$0xff]
  %v930 = vld [vmem:[%s5 + $0x1c0] sm:$0xff]
  %v931 = vld [vmem:[%s5 + $0x1c8] sm:$0xff]
  %v932 = vld [vmem:[%s5 + $0x1d0] sm:$0xff]
  %v933 = vld [vmem:[%s5 + $0x1d8] sm:$0xff]
  %v934 = vld [vmem:[%s5 + $0x1e0] sm:$0xff]
  %v935 = vld [vmem:[%s5 + $0x1e8] sm:$0xff]
  %v936 = vld [vmem:[%s5 + $0x1f0] sm:$0xff]
  %v937 = vld [vmem:[%s5 + $0x1f8] sm:$0xff]
  %v938 = vld [vmem:[%s1] sm:$0xff]
  %v939 = vld [vmem:[%s1 + $0x8] sm:$0xff]
  %v940 = vsel %vm49, %v938, 0.0
  %v941 = vsel %vm50, %v938, 0.0
  %v942 = vsel %vm51, %v939, 0.0
  %v943 = vsel %vm52, %v939, 0.0
  %v944 = vpack.c.bf16 %v942, %v940
  %v945 = vpack.c.bf16 %v943, %v941
  %v946 = vld [vmem:[%s2] sm:$0xff]
  %v947 = vld [vmem:[%s2 + $0x8] sm:$0xff]
  %v948 = vld [vmem:[#allocation3] sm:$0xff]
  %v949 = vld [vmem:[#allocation3 + $0x8] sm:$0xff]
  %v950 = vld [vmem:[#allocation3 + $0x10] sm:$0xff]
  %v951 = vld [vmem:[#allocation3 + $0x18] sm:$0xff]
  %v952 = vld [vmem:[#allocation3 + $0x20] sm:$0xff]
  %v953 = vld [vmem:[#allocation3 + $0x28] sm:$0xff]
  %v954 = vld [vmem:[#allocation3 + $0x30] sm:$0xff]
  %v955 = vld [vmem:[#allocation3 + $0x38] sm:$0xff]
  %v1020 = vunpack.c.l.b16 %v874
  %v1021 = vunpack.c.h.b16 %v874
  %v1022 = vunpack.c.l.b16 %v875
  %v1023 = vunpack.c.h.b16 %v875
  %v1024 = vunpack.c.l.b16 %v876
  %v1025 = vunpack.c.h.b16 %v876
  %v1026 = vunpack.c.l.b16 %v877
  %v1027 = vunpack.c.h.b16 %v877
  %v1028 = vunpack.c.l.b16 %v878
  %v1029 = vunpack.c.h.b16 %v878
  %v1030 = vunpack.c.l.b16 %v879
  %v1031 = vunpack.c.h.b16 %v879
  %v1032 = vunpack.c.l.b16 %v880
  %v1033 = vunpack.c.h.b16 %v880
  %v1034 = vunpack.c.l.b16 %v881
  %v1035 = vunpack.c.h.b16 %v881
  %v1036 = vunpack.c.l.b16 %v882
  %v1037 = vunpack.c.h.b16 %v882
  %v1038 = vunpack.c.l.b16 %v883
  %v1039 = vunpack.c.h.b16 %v883
  %v1040 = vunpack.c.l.b16 %v884
  %v1041 = vunpack.c.h.b16 %v884
  %v1042 = vunpack.c.l.b16 %v885
  %v1043 = vunpack.c.h.b16 %v885
  %v1044 = vunpack.c.l.b16 %v886
  %v1045 = vunpack.c.h.b16 %v886
  %v1046 = vunpack.c.l.b16 %v887
  %v1047 = vunpack.c.h.b16 %v887
  %v1048 = vunpack.c.l.b16 %v888
  %v1049 = vunpack.c.h.b16 %v888
  %v1050 = vunpack.c.l.b16 %v889
  %v1051 = vunpack.c.h.b16 %v889
  %v1052 = vunpack.c.l.b16 %v890
  %v1053 = vunpack.c.h.b16 %v890
  %v1054 = vunpack.c.l.b16 %v891
  %v1055 = vunpack.c.h.b16 %v891
  %v1056 = vunpack.c.l.b16 %v892
  %v1057 = vunpack.c.h.b16 %v892
  %v1058 = vunpack.c.l.b16 %v893
  %v1059 = vunpack.c.h.b16 %v893
  %v1060 = vunpack.c.l.b16 %v894
  %v1061 = vunpack.c.h.b16 %v894
  %v1062 = vunpack.c.l.b16 %v895
  %v1063 = vunpack.c.h.b16 %v895
  %v1064 = vunpack.c.l.b16 %v896
  %v1065 = vunpack.c.h.b16 %v896
  %v1066 = vunpack.c.l.b16 %v897
  %v1067 = vunpack.c.h.b16 %v897
  %v1068 = vunpack.c.l.b16 %v898
  %v1069 = vunpack.c.h.b16 %v898
  %v1070 = vunpack.c.l.b16 %v899
  %v1071 = vunpack.c.h.b16 %v899
  %v1072 = vunpack.c.l.b16 %v900
  %v1073 = vunpack.c.h.b16 %v900
  %v1074 = vunpack.c.l.b16 %v901
  %v1075 = vunpack.c.h.b16 %v901
  %v1076 = vunpack.c.l.b16 %v902
  %v1077 = vunpack.c.h.b16 %v902
  %v1078 = vunpack.c.l.b16 %v903
  %v1079 = vunpack.c.h.b16 %v903
  %v1080 = vunpack.c.l.b16 %v904
  %v1081 = vunpack.c.h.b16 %v904
  %v1082 = vunpack.c.l.b16 %v905
  %v1083 = vunpack.c.h.b16 %v905
  %v1084 = vunpack.c.l.b16 %v906
  %v1085 = vunpack.c.h.b16 %v906
  %v1086 = vunpack.c.l.b16 %v907
  %v1087 = vunpack.c.h.b16 %v907
  %v1088 = vunpack.c.l.b16 %v908
  %v1089 = vunpack.c.h.b16 %v908
  %v1090 = vunpack.c.l.b16 %v909
  %v1091 = vunpack.c.h.b16 %v909
  %v1092 = vunpack.c.l.b16 %v910
  %v1093 = vunpack.c.h.b16 %v910
  %v1094 = vunpack.c.l.b16 %v911
  %v1095 = vunpack.c.h.b16 %v911
  %v1096 = vunpack.c.l.b16 %v912
  %v1097 = vunpack.c.h.b16 %v912
  %v1098 = vunpack.c.l.b16 %v913
  %v1099 = vunpack.c.h.b16 %v913
  %v1100 = vunpack.c.l.b16 %v914
  %v1101 = vunpack.c.h.b16 %v914
  %v1102 = vunpack.c.l.b16 %v915
  %v1103 = vunpack.c.h.b16 %v915
  %v1104 = vunpack.c.l.b16 %v916
  %v1105 = vunpack.c.h.b16 %v916
  %v1106 = vunpack.c.l.b16 %v917
  %v1107 = vunpack.c.h.b16 %v917
  %v1108 = vunpack.c.l.b16 %v918
  %v1109 = vunpack.c.h.b16 %v918
  %v1110 = vunpack.c.l.b16 %v919
  %v1111 = vunpack.c.h.b16 %v919
  %v1112 = vunpack.c.l.b16 %v920
  %v1113 = vunpack.c.h.b16 %v920
  %v1114 = vunpack.c.l.b16 %v921
  %v1115 = vunpack.c.h.b16 %v921
  %v1116 = vunpack.c.l.b16 %v922
  %v1117 = vunpack.c.h.b16 %v922
  %v1118 = vunpack.c.l.b16 %v923
  %v1119 = vunpack.c.h.b16 %v923
  %v1120 = vunpack.c.l.b16 %v924
  %v1121 = vunpack.c.h.b16 %v924
  %v1122 = vunpack.c.l.b16 %v925
  %v1123 = vunpack.c.h.b16 %v925
  %v1124 = vunpack.c.l.b16 %v926
  %v1125 = vunpack.c.h.b16 %v926
  %v1126 = vunpack.c.l.b16 %v927
  %v1127 = vunpack.c.h.b16 %v927
  %v1128 = vunpack.c.l.b16 %v928
  %v1129 = vunpack.c.h.b16 %v928
  %v1130 = vunpack.c.l.b16 %v929
  %v1131 = vunpack.c.h.b16 %v929
  %v1132 = vunpack.c.l.b16 %v930
  %v1133 = vunpack.c.h.b16 %v930
  %v1134 = vunpack.c.l.b16 %v931
  %v1135 = vunpack.c.h.b16 %v931
  %v1136 = vunpack.c.l.b16 %v932
  %v1137 = vunpack.c.h.b16 %v932
  %v1138 = vunpack.c.l.b16 %v933
  %v1139 = vunpack.c.h.b16 %v933
  %v1140 = vunpack.c.l.b16 %v934
  %v1141 = vunpack.c.h.b16 %v934
  %v1142 = vunpack.c.l.b16 %v935
  %v1143 = vunpack.c.h.b16 %v935
  %v1144 = vunpack.c.l.b16 %v936
  %v1145 = vunpack.c.h.b16 %v936
  %v1146 = vunpack.c.l.b16 %v937
  %v1147 = vunpack.c.h.b16 %v937
  %v1148 = vpack.c.b16 %v1024, %v1020
  %v1149 = vpack.c.b16 %v1025, %v1021
  %v1150 = vpack.c.b16 %v1026, %v1022
  %v1151 = vpack.c.b16 %v1027, %v1023
  %v1152 = vpack.c.b16 %v1032, %v1028
  %v1153 = vpack.c.b16 %v1033, %v1029
  %v1154 = vpack.c.b16 %v1034, %v1030
  %v1155 = vpack.c.b16 %v1035, %v1031
  %v1156 = vpack.c.b16 %v1040, %v1036
  %v1157 = vpack.c.b16 %v1041, %v1037
  %v1158 = vpack.c.b16 %v1042, %v1038
  %v1159 = vpack.c.b16 %v1043, %v1039
  %v1160 = vpack.c.b16 %v1048, %v1044
  %v1161 = vpack.c.b16 %v1049, %v1045
  %v1162 = vpack.c.b16 %v1050, %v1046
  %v1163 = vpack.c.b16 %v1051, %v1047
  %v1164 = vpack.c.b16 %v1056, %v1052
  %v1165 = vpack.c.b16 %v1057, %v1053
  %v1166 = vpack.c.b16 %v1058, %v1054
  %v1167 = vpack.c.b16 %v1059, %v1055
  %v1168 = vpack.c.b16 %v1064, %v1060
  %v1169 = vpack.c.b16 %v1065, %v1061
  %v1170 = vpack.c.b16 %v1066, %v1062
  %v1171 = vpack.c.b16 %v1067, %v1063
  %v1172 = vpack.c.b16 %v1072, %v1068
  %v1173 = vpack.c.b16 %v1073, %v1069
  %v1174 = vpack.c.b16 %v1074, %v1070
  %v1175 = vpack.c.b16 %v1075, %v1071
  %v1176 = vpack.c.b16 %v1080, %v1076
  %v1177 = vpack.c.b16 %v1081, %v1077
  %v1178 = vpack.c.b16 %v1082, %v1078
  %v1179 = vpack.c.b16 %v1083, %v1079
  %v1180 = vpack.c.b16 %v1088, %v1084
  %v1181 = vpack.c.b16 %v1089, %v1085
  %v1182 = vpack.c.b16 %v1090, %v1086
  %v1183 = vpack.c.b16 %v1091, %v1087
  %v1184 = vpack.c.b16 %v1096, %v1092
  %v1185 = vpack.c.b16 %v1097, %v1093
  %v1186 = vpack.c.b16 %v1098, %v1094
  %v1187 = vpack.c.b16 %v1099, %v1095
  %v1188 = vpack.c.b16 %v1104, %v1100
  %v1189 = vpack.c.b16 %v1105, %v1101
  %v1190 = vpack.c.b16 %v1106, %v1102
  %v1191 = vpack.c.b16 %v1107, %v1103
  %v1192 = vpack.c.b16 %v1112, %v1108
  %v1193 = vpack.c.b16 %v1113, %v1109
  %v1194 = vpack.c.b16 %v1114, %v1110
  %v1195 = vpack.c.b16 %v1115, %v1111
  %v1196 = vpack.c.b16 %v1120, %v1116
  %v1197 = vpack.c.b16 %v1121, %v1117
  %v1198 = vpack.c.b16 %v1122, %v1118
  %v1199 = vpack.c.b16 %v1123, %v1119
  %v1200 = vpack.c.b16 %v1128, %v1124
  %v1201 = vpack.c.b16 %v1129, %v1125
  %v1202 = vpack.c.b16 %v1130, %v1126
  %v1203 = vpack.c.b16 %v1131, %v1127
  %v1204 = vpack.c.b16 %v1136, %v1132
  %v1205 = vpack.c.b16 %v1137, %v1133
  %v1206 = vpack.c.b16 %v1138, %v1134
  %v1207 = vpack.c.b16 %v1139, %v1135
  %v1208 = vpack.c.b16 %v1144, %v1140
  %v1209 = vpack.c.b16 %v1145, %v1141
  %v1210 = vpack.c.b16 %v1146, %v1142
  %v1211 = vpack.c.b16 %v1147, %v1143
  %1276 = vmatprep.subr.bf16.mxu0 %v1149
  %1277 = vmatpush1.bf16.msra.mxu0 %v1148
  %1278 = vmatprep.subr.bf16.mxu0 %v1153
  %1279 = vmatpush1.bf16.msra.mxu0 %v1152
  %1280 = vmatprep.subr.bf16.mxu0 %v1157
  %1281 = vmatpush1.bf16.msra.mxu0 %v1156
  %1282 = vmatprep.subr.bf16.mxu0 %v1161
  %1283 = vmatpush1.bf16.msra.mxu0 %v1160
  %1284 = vmatprep.subr.bf16.mxu0 %v1165
  %1285 = vmatpush1.bf16.msra.mxu0 %v1164
  %1286 = vmatprep.subr.bf16.mxu0 %v1169
  %1287 = vmatpush1.bf16.msra.mxu0 %v1168
  %1288 = vmatprep.subr.bf16.mxu0 %v1173
  %1289 = vmatpush1.bf16.msra.mxu0 %v1172
  %1290 = vmatprep.subr.bf16.mxu0 %v1177
  %1291 = vmatpush1.bf16.msra.mxu0 %v1176
  %1292 = vmatprep.subr.bf16.mxu0 %v1181
  %1293 = vmatpush1.bf16.msra.mxu0 %v1180
  %1294 = vmatprep.subr.bf16.mxu0 %v1185
  %1295 = vmatpush1.bf16.msra.mxu0 %v1184
  %1296 = vmatprep.subr.bf16.mxu0 %v1189
  %1297 = vmatpush1.bf16.msra.mxu0 %v1188
  %1298 = vmatprep.subr.bf16.mxu0 %v1193
  %1299 = vmatpush1.bf16.msra.mxu0 %v1192
  %1300 = vmatprep.subr.bf16.mxu0 %v1197
  %1301 = vmatpush1.bf16.msra.mxu0 %v1196
  %1302 = vmatprep.subr.bf16.mxu0 %v1201
  %1303 = vmatpush1.bf16.msra.mxu0 %v1200
  %1304 = vmatprep.subr.bf16.mxu0 %v1205
  %1305 = vmatpush1.bf16.msra.mxu0 %v1204
  %1306 = vmatprep.subr.bf16.mxu0 %v1209
  %1307 = vmatpush1.bf16.msra.mxu0 %v1208
  %1308 = vmatprep.mubr.bf16.mxu0 %v945
  %1309 = vmatmul.mubr.bf16.gmra.mrb[0].mxu0 %v944
  %v1310 = vpop.f32.mrb[0].mxu0
  %v1311 = vadd.f32 0.0, %v1310
  %v1312 = vpop.f32.mrb[0].mxu0
  %v1313 = vadd.f32 0.0, %v1312
  %v1314 = vpop.f32.mrb[0].mxu0
  %v1315 = vadd.f32 0.0, %v1314
  %v1316 = vpop.f32.mrb[0].mxu0
  %v1317 = vadd.f32 0.0, %v1316
  %1318 = vdwg.mxu0
  %1319 = vmatprep.subr.bf16.mxu0 %v1151
  %1320 = vmatpush1.bf16.msra.mxu0 %v1150
  %1321 = vmatprep.subr.bf16.mxu0 %v1155
  %1322 = vmatpush1.bf16.msra.mxu0 %v1154
  %1323 = vmatprep.subr.bf16.mxu0 %v1159
  %1324 = vmatpush1.bf16.msra.mxu0 %v1158
  %1325 = vmatprep.subr.bf16.mxu0 %v1163
  %1326 = vmatpush1.bf16.msra.mxu0 %v1162
  %1327 = vmatprep.subr.bf16.mxu0 %v1167
  %1328 = vmatpush1.bf16.msra.mxu0 %v1166
  %1329 = vmatprep.subr.bf16.mxu0 %v1171
  %1330 = vmatpush1.bf16.msra.mxu0 %v1170
  %1331 = vmatprep.subr.bf16.mxu0 %v1175
  %1332 = vmatpush1.bf16.msra.mxu0 %v1174
  %1333 = vmatprep.subr.bf16.mxu0 %v1179
  %1334 = vmatpush1.bf16.msra.mxu0 %v1178
  %1335 = vmatprep.subr.bf16.mxu0 %v1183
  %1336 = vmatpush1.bf16.msra.mxu0 %v1182
  %1337 = vmatprep.subr.bf16.mxu0 %v1187
  %1338 = vmatpush1.bf16.msra.mxu0 %v1186
  %1339 = vmatprep.subr.bf16.mxu0 %v1191
  %1340 = vmatpush1.bf16.msra.mxu0 %v1190
  %1341 = vmatprep.subr.bf16.mxu0 %v1195
  %1342 = vmatpush1.bf16.msra.mxu0 %v1194
  %1343 = vmatprep.subr.bf16.mxu0 %v1199
  %1344 = vmatpush1.bf16.msra.mxu0 %v1198
  %1345 = vmatprep.subr.bf16.mxu0 %v1203
  %1346 = vmatpush1.bf16.msra.mxu0 %v1202
  %1347 = vmatprep.subr.bf16.mxu0 %v1207
  %1348 = vmatpush1.bf16.msra.mxu0 %v1206
  %1349 = vmatprep.subr.bf16.mxu0 %v1211
  %1350 = vmatpush1.bf16.msra.mxu0 %v1210
  %1351 = vmatprep.mubr.bf16.mxu0 %v945
  %1352 = vmatmul.mubr.bf16.gmra.mrb[0].mxu0 %v944
  %v1353 = vpop.f32.mrb[0].mxu0
  %v1354 = vadd.f32 0.0, %v1353
  %v1355 = vpop.f32.mrb[0].mxu0
  %v1356 = vadd.f32 0.0, %v1355
  %v1357 = vpop.f32.mrb[0].mxu0
  %v1358 = vadd.f32 0.0, %v1357
  %v1359 = vpop.f32.mrb[0].mxu0
  %v1360 = vadd.f32 0.0, %v1359
  %1361 = vdwg.mxu0
  %v1362 = vadd.f32 %v948, %v1311
  %v1363 = vadd.f32 %v949, %v1313
  %v1364 = vadd.f32 %v950, %v1354
  %v1365 = vadd.f32 %v951, %v1356
  %v1366 = vadd.f32 %v952, %v1315
  %v1367 = vadd.f32 %v953, %v1317
  %v1368 = vadd.f32 %v954, %v1358
  %v1369 = vadd.f32 %v955, %v1360
  %v1370 = vmul.f32 %v1362, 0.5
  %v1371 = vmul.f32 %v1366, 0.5
  %v1372 = vtanh.pop %v1370
  %v1373 = vtanh.pop %v1371
  %v1374 = vmul.f32 %v1372, 0.5
  %v1375 = vmul.f32 %v1373, 0.5
  %v1376 = vadd.f32 %v1374, 0.5
  %v1377 = vadd.f32 %v1375, 0.5
  %v1378 = vmul.f32 %v1363, 0.5
  %v1379 = vmul.f32 %v1367, 0.5
  %v1380 = vtanh.pop %v1378
  %v1381 = vtanh.pop %v1379
  %v1382 = vmul.f32 %v1380, 0.5
  %v1383 = vmul.f32 %v1381, 0.5
  %v1384 = vadd.f32 %v1382, 0.5
  %v1385 = vadd.f32 %v1383, 0.5
  %v1386 = vtanh.pop %v1364
  %v1387 = vtanh.pop %v1368
  %v1388 = vmul.f32 %v1365, 0.5
  %v1389 = vmul.f32 %v1369, 0.5
  %v1390 = vtanh.pop %v1388
  %v1391 = vtanh.pop %v1389
  %v1392 = vmul.f32 %v1390, 0.5
  %v1393 = vmul.f32 %v1391, 0.5
  %v1394 = vadd.f32 %v1392, 0.5
  %v1395 = vadd.f32 %v1393, 0.5
  %v1396 = vmul.f32 %v1384, %v946
  %v1397 = vmul.f32 %v1385, %v947
  %v1398 = vmul.f32 %v1376, %v1386
  %v1399 = vmul.f32 %v1377, %v1387
  %v1400 = vadd.f32 %v1396, %v1398
  %v1401 = vadd.f32 %v1397, %v1399
  %v1402 = vtanh.pop %v1400
  %v1403 = vtanh.pop %v1401
  %v1404 = vmul.f32 %v1394, %v1402
  %v1405 = vmul.f32 %v1395, %v1403
  %1406 = vst [vmem:[#allocation2] sm:$0xff] %v1404
  %s1407 = scalar_lea.vmem [#allocation2], 112
  %1408 = vst [vmem:[%s1407 + $0x8] sm:$0xff] %v1405
  %v1409 = vsel %vm49, %v1404, 0.0
  %v1410 = vsel %vm50, %v1404, 0.0
  %v1411 = vsel %vm51, %v1405, 0.0
  %v1412 = vsel %vm52, %v1405, 0.0
  %v1413 = vpack.c.bf16 %v1411, %v1409
  %v1414 = vpack.c.bf16 %v1412, %v1410
  %v1415 = vld [vmem:[%s811] sm:$0xff]
  %v1416 = vld [vmem:[%s811 + $0x8] sm:$0xff]
  %v1417 = vld [vmem:[%s811 + $0x10] sm:$0xff]
  %v1418 = vld [vmem:[%s811 + $0x18] sm:$0xff]
  %v1419 = vld [vmem:[%s811 + $0x20] sm:$0xff]
  %v1420 = vld [vmem:[%s811 + $0x28] sm:$0xff]
  %v1421 = vld [vmem:[%s811 + $0x30] sm:$0xff]
  %v1422 = vld [vmem:[%s811 + $0x38] sm:$0xff]
  %1423 = vmatprep.subr.bf16.mxu0 %v1149
  %1424 = vmatpush1.bf16.msra.mxu0 %v1148
  %1425 = vmatprep.subr.bf16.mxu0 %v1153
  %1426 = vmatpush1.bf16.msra.mxu0 %v1152
  %1427 = vmatprep.subr.bf16.mxu0 %v1157
  %1428 = vmatpush1.bf16.msra.mxu0 %v1156
  %1429 = vmatprep.subr.bf16.mxu0 %v1161
  %1430 = vmatpush1.bf16.msra.mxu0 %v1160
  %1431 = vmatprep.subr.bf16.mxu0 %v1165
  %1432 = vmatpush1.bf16.msra.mxu0 %v1164
  %1433 = vmatprep.subr.bf16.mxu0 %v1169
  %1434 = vmatpush1.bf16.msra.mxu0 %v1168
  %1435 = vmatprep.subr.bf16.mxu0 %v1173
  %1436 = vmatpush1.bf16.msra.mxu0 %v1172
  %1437 = vmatprep.subr.bf16.mxu0 %v1177
  %1438 = vmatpush1.bf16.msra.mxu0 %v1176
  %1439 = vmatprep.subr.bf16.mxu0 %v1181
  %1440 = vmatpush1.bf16.msra.mxu0 %v1180
  %1441 = vmatprep.subr.bf16.mxu0 %v1185
  %1442 = vmatpush1.bf16.msra.mxu0 %v1184
  %1443 = vmatprep.subr.bf16.mxu0 %v1189
  %1444 = vmatpush1.bf16.msra.mxu0 %v1188
  %1445 = vmatprep.subr.bf16.mxu0 %v1193
  %1446 = vmatpush1.bf16.msra.mxu0 %v1192
  %1447 = vmatprep.subr.bf16.mxu0 %v1197
  %1448 = vmatpush1.bf16.msra.mxu0 %v1196
  %1449 = vmatprep.subr.bf16.mxu0 %v1201
  %1450 = vmatpush1.bf16.msra.mxu0 %v1200
  %1451 = vmatprep.subr.bf16.mxu0 %v1205
  %1452 = vmatpush1.bf16.msra.mxu0 %v1204
  %1453 = vmatprep.subr.bf16.mxu0 %v1209
  %1454 = vmatpush1.bf16.msra.mxu0 %v1208
  %1455 = vmatprep.mubr.bf16.mxu0 %v1414
  %1456 = vmatmul.mubr.bf16.gmra.mrb[0].mxu0 %v1413
  %v1457 = vpop.f32.mrb[0].mxu0
  %v1458 = vadd.f32 0.0, %v1457
  %v1459 = vpop.f32.mrb[0].mxu0
  %v1460 = vadd.f32 0.0, %v1459
  %v1461 = vpop.f32.mrb[0].mxu0
  %v1462 = vadd.f32 0.0, %v1461
  %v1463 = vpop.f32.mrb[0].mxu0
  %v1464 = vadd.f32 0.0, %v1463
  %1465 = vdwg.mxu0
  %1466 = vmatprep.subr.bf16.mxu0 %v1151
  %1467 = vmatpush1.bf16.msra.mxu0 %v1150
  %1468 = vmatprep.subr.bf16.mxu0 %v1155
  %1469 = vmatpush1.bf16.msra.mxu0 %v1154
  %1470 = vmatprep.subr.bf16.mxu0 %v1159
  %1471 = vmatpush1.bf16.msra.mxu0 %v1158
  %1472 = vmatprep.subr.bf16.mxu0 %v1163
  %1473 = vmatpush1.bf16.msra.mxu0 %v1162
  %1474 = vmatprep.subr.bf16.mxu0 %v1167
  %1475 = vmatpush1.bf16.msra.mxu0 %v1166
  %1476 = vmatprep.subr.bf16.mxu0 %v1171
  %1477 = vmatpush1.bf16.msra.mxu0 %v1170
  %1478 = vmatprep.subr.bf16.mxu0 %v1175
  %1479 = vmatpush1.bf16.msra.mxu0 %v1174
  %1480 = vmatprep.subr.bf16.mxu0 %v1179
  %1481 = vmatpush1.bf16.msra.mxu0 %v1178
  %1482 = vmatprep.subr.bf16.mxu0 %v1183
  %1483 = vmatpush1.bf16.msra.mxu0 %v1182
  %1484 = vmatprep.subr.bf16.mxu0 %v1187
  %1485 = vmatpush1.bf16.msra.mxu0 %v1186
  %1486 = vmatprep.subr.bf16.mxu0 %v1191
  %1487 = vmatpush1.bf16.msra.mxu0 %v1190
  %1488 = vmatprep.subr.bf16.mxu0 %v1195
  %1489 = vmatpush1.bf16.msra.mxu0 %v1194
  %1490 = vmatprep.subr.bf16.mxu0 %v1199
  %1491 = vmatpush1.bf16.msra.mxu0 %v1198
  %1492 = vmatprep.subr.bf16.mxu0 %v1203
  %1493 = vmatpush1.bf16.msra.mxu0 %v1202
  %1494 = vmatprep.subr.bf16.mxu0 %v1207
  %1495 = vmatpush1.bf16.msra.mxu0 %v1206
  %1496 = vmatprep.subr.bf16.mxu0 %v1211
  %1497 = vmatpush1.bf16.msra.mxu0 %v1210
  %1498 = vmatprep.mubr.bf16.mxu0 %v1414
  %1499 = vmatmul.mubr.bf16.gmra.mrb[0].mxu0 %v1413
  %v1500 = vpop.f32.mrb[0].mxu0
  %v1501 = vadd.f32 0.0, %v1500
  %v1502 = vpop.f32.mrb[0].mxu0
  %v1503 = vadd.f32 0.0, %v1502
  %v1504 = vpop.f32.mrb[0].mxu0
  %v1505 = vadd.f32 0.0, %v1504
  %v1506 = vpop.f32.mrb[0].mxu0
  %v1507 = vadd.f32 0.0, %v1506
  %1508 = vdwg.mxu0
  %v1509 = vadd.f32 %v1415, %v1458
  %v1510 = vadd.f32 %v1416, %v1460
  %v1511 = vadd.f32 %v1417, %v1501
  %v1512 = vadd.f32 %v1418, %v1503
  %v1513 = vadd.f32 %v1419, %v1462
  %v1514 = vadd.f32 %v1420, %v1464
  %v1515 = vadd.f32 %v1421, %v1505
  %v1516 = vadd.f32 %v1422, %v1507
  %v1517 = vmul.f32 %v1509, 0.5
  %v1518 = vmul.f32 %v1513, 0.5
  %v1519 = vtanh.pop %v1517
  %v1520 = vtanh.pop %v1518
  %v1521 = vmul.f32 %v1519, 0.5
  %v1522 = vmul.f32 %v1520, 0.5
  %v1523 = vadd.f32 %v1521, 0.5
  %v1524 = vadd.f32 %v1522, 0.5
  %v1525 = vmul.f32 %v1510, 0.5
  %v1526 = vmul.f32 %v1514, 0.5
  %v1527 = vtanh.pop %v1525
  %v1528 = vtanh.pop %v1526
  %v1529 = vmul.f32 %v1527, 0.5
  %v1530 = vmul.f32 %v1528, 0.5
  %v1531 = vadd.f32 %v1529, 0.5
  %v1532 = vadd.f32 %v1530, 0.5
  %v1533 = vtanh.pop %v1511
  %v1534 = vtanh.pop %v1515
  %v1535 = vmul.f32 %v1512, 0.5
  %v1536 = vmul.f32 %v1516, 0.5
  %v1537 = vtanh.pop %v1535
  %v1538 = vtanh.pop %v1536
  %v1539 = vmul.f32 %v1537, 0.5
  %v1540 = vmul.f32 %v1538, 0.5
  %v1541 = vadd.f32 %v1539, 0.5
  %v1542 = vadd.f32 %v1540, 0.5
  %v1543 = vmul.f32 %v1531, %v1400
  %v1544 = vmul.f32 %v1532, %v1401
  %v1545 = vmul.f32 %v1523, %v1533
  %v1546 = vmul.f32 %v1524, %v1534
  %v1547 = vadd.f32 %v1543, %v1545
  %v1548 = vadd.f32 %v1544, %v1546
  %v1549 = vtanh.pop %v1547
  %v1550 = vtanh.pop %v1548
  %v1551 = vmul.f32 %v1541, %v1549
  %v1552 = vmul.f32 %v1542, %v1550
  %s1553 = scalar_lea.vmem [#allocation2], 16
  %1554 = vst [vmem:[%s1553] sm:$0xff] %v1551
  %s1555 = scalar_lea.vmem [#allocation2], 96
  %1556 = vst [vmem:[%s1555 + $0x8] sm:$0xff] %v1552
  %v1557 = vsel %vm49, %v1551, 0.0
  %v1558 = vsel %vm50, %v1551, 0.0
  %v1559 = vsel %vm51, %v1552, 0.0
  %v1560 = vsel %vm52, %v1552, 0.0
  %v1561 = vpack.c.bf16 %v1559, %v1557
  %v1562 = vpack.c.bf16 %v1560, %v1558
  %v1563 = vld [vmem:[%s820] sm:$0xff]
  %v1564 = vld [vmem:[%s820 + $0x8] sm:$0xff]
  %v1565 = vld [vmem:[%s820 + $0x10] sm:$0xff]
  %v1566 = vld [vmem:[%s820 + $0x18] sm:$0xff]
  %v1567 = vld [vmem:[%s820 + $0x20] sm:$0xff]
  %v1568 = vld [vmem:[%s820 + $0x28] sm:$0xff]
  %v1569 = vld [vmem:[%s820 + $0x30] sm:$0xff]
  %v1570 = vld [vmem:[%s820 + $0x38] sm:$0xff]
  %1571 = vmatprep.subr.bf16.mxu0 %v1149
  %1572 = vmatpush1.bf16.msra.mxu0 %v1148
  %1573 = vmatprep.subr.bf16.mxu0 %v1153
  %1574 = vmatpush1.bf16.msra.mxu0 %v1152
  %1575 = vmatprep.subr.bf16.mxu0 %v1157
  %1576 = vmatpush1.bf16.msra.mxu0 %v1156
  %1577 = vmatprep.subr.bf16.mxu0 %v1161
  %1578 = vmatpush1.bf16.msra.mxu0 %v1160
  %1579 = vmatprep.subr.bf16.mxu0 %v1165
  %1580 = vmatpush1.bf16.msra.mxu0 %v1164
  %1581 = vmatprep.subr.bf16.mxu0 %v1169
  %1582 = vmatpush1.bf16.msra.mxu0 %v1168
  %1583 = vmatprep.subr.bf16.mxu0 %v1173
  %1584 = vmatpush1.bf16.msra.mxu0 %v1172
  %1585 = vmatprep.subr.bf16.mxu0 %v1177
  %1586 = vmatpush1.bf16.msra.mxu0 %v1176
  %1587 = vmatprep.subr.bf16.mxu0 %v1181
  %1588 = vmatpush1.bf16.msra.mxu0 %v1180
  %1589 = vmatprep.subr.bf16.mxu0 %v1185
  %1590 = vmatpush1.bf16.msra.mxu0 %v1184
  %1591 = vmatprep.subr.bf16.mxu0 %v1189
  %1592 = vmatpush1.bf16.msra.mxu0 %v1188
  %1593 = vmatprep.subr.bf16.mxu0 %v1193
  %1594 = vmatpush1.bf16.msra.mxu0 %v1192
  %1595 = vmatprep.subr.bf16.mxu0 %v1197
  %1596 = vmatpush1.bf16.msra.mxu0 %v1196
  %1597 = vmatprep.subr.bf16.mxu0 %v1201
  %1598 = vmatpush1.bf16.msra.mxu0 %v1200
  %1599 = vmatprep.subr.bf16.mxu0 %v1205
  %1600 = vmatpush1.bf16.msra.mxu0 %v1204
  %1601 = vmatprep.subr.bf16.mxu0 %v1209
  %1602 = vmatpush1.bf16.msra.mxu0 %v1208
  %1603 = vmatprep.mubr.bf16.mxu0 %v1562
  %1604 = vmatmul.mubr.bf16.gmra.mrb[0].mxu0 %v1561
  %v1605 = vpop.f32.mrb[0].mxu0
  %v1606 = vadd.f32 0.0, %v1605
  %v1607 = vpop.f32.mrb[0].mxu0
  %v1608 = vadd.f32 0.0, %v1607
  %v1609 = vpop.f32.mrb[0].mxu0
  %v1610 = vadd.f32 0.0, %v1609
  %v1611 = vpop.f32.mrb[0].mxu0
  %v1612 = vadd.f32 0.0, %v1611
  %1613 = vdwg.mxu0
  %1614 = vmatprep.subr.bf16.mxu0 %v1151
  %1615 = vmatpush1.bf16.msra.mxu0 %v1150
  %1616 = vmatprep.subr.bf16.mxu0 %v1155
  %1617 = vmatpush1.bf16.msra.mxu0 %v1154
  %1618 = vmatprep.subr.bf16.mxu0 %v1159
  %1619 = vmatpush1.bf16.msra.mxu0 %v1158
  %1620 = vmatprep.subr.bf16.mxu0 %v1163
  %1621 = vmatpush1.bf16.msra.mxu0 %v1162
  %1622 = vmatprep.subr.bf16.mxu0 %v1167
  %1623 = vmatpush1.bf16.msra.mxu0 %v1166
  %1624 = vmatprep.subr.bf16.mxu0 %v1171
  %1625 = vmatpush1.bf16.msra.mxu0 %v1170
  %1626 = vmatprep.subr.bf16.mxu0 %v1175
  %1627 = vmatpush1.bf16.msra.mxu0 %v1174
  %1628 = vmatprep.subr.bf16.mxu0 %v1179
  %1629 = vmatpush1.bf16.msra.mxu0 %v1178
  %1630 = vmatprep.subr.bf16.mxu0 %v1183
  %1631 = vmatpush1.bf16.msra.mxu0 %v1182
  %1632 = vmatprep.subr.bf16.mxu0 %v1187
  %1633 = vmatpush1.bf16.msra.mxu0 %v1186
  %1634 = vmatprep.subr.bf16.mxu0 %v1191
  %1635 = vmatpush1.bf16.msra.mxu0 %v1190
  %1636 = vmatprep.subr.bf16.mxu0 %v1195
  %1637 = vmatpush1.bf16.msra.mxu0 %v1194
  %1638 = vmatprep.subr.bf16.mxu0 %v1199
  %1639 = vmatpush1.bf16.msra.mxu0 %v1198
  %1640 = vmatprep.subr.bf16.mxu0 %v1203
  %1641 = vmatpush1.bf16.msra.mxu0 %v1202
  %1642 = vmatprep.subr.bf16.mxu0 %v1207
  %1643 = vmatpush1.bf16.msra.mxu0 %v1206
  %1644 = vmatprep.subr.bf16.mxu0 %v1211
  %1645 = vmatpush1.bf16.msra.mxu0 %v1210
  %1646 = vmatprep.mubr.bf16.mxu0 %v1562
  %1647 = vmatmul.mubr.bf16.gmra.mrb[0].mxu0 %v1561
  %v1648 = vpop.f32.mrb[0].mxu0
  %v1649 = vadd.f32 0.0, %v1648
  %v1650 = vpop.f32.mrb[0].mxu0
  %v1651 = vadd.f32 0.0, %v1650
  %v1652 = vpop.f32.mrb[0].mxu0
  %v1653 = vadd.f32 0.0, %v1652
  %v1654 = vpop.f32.mrb[0].mxu0
  %v1655 = vadd.f32 0.0, %v1654
  %1656 = vdwg.mxu0
  %v1657 = vadd.f32 %v1563, %v1606
  %v1658 = vadd.f32 %v1564, %v1608
  %v1659 = vadd.f32 %v1565, %v1649
  %v1660 = vadd.f32 %v1566, %v1651
  %v1661 = vadd.f32 %v1567, %v1610
  %v1662 = vadd.f32 %v1568, %v1612
  %v1663 = vadd.f32 %v1569, %v1653
  %v1664 = vadd.f32 %v1570, %v1655
  %v1665 = vmul.f32 %v1657, 0.5
  %v1666 = vmul.f32 %v1661, 0.5
  %v1667 = vtanh.pop %v1665
  %v1668 = vtanh.pop %v1666
  %v1669 = vmul.f32 %v1667, 0.5
  %v1670 = vmul.f32 %v1668, 0.5
  %v1671 = vadd.f32 %v1669, 0.5
  %v1672 = vadd.f32 %v1670, 0.5
  %v1673 = vmul.f32 %v1658, 0.5
  %v1674 = vmul.f32 %v1662, 0.5
  %v1675 = vtanh.pop %v1673
  %v1676 = vtanh.pop %v1674
  %v1677 = vmul.f32 %v1675, 0.5
  %v1678 = vmul.f32 %v1676, 0.5
  %v1679 = vadd.f32 %v1677, 0.5
  %v1680 = vadd.f32 %v1678, 0.5
  %v1681 = vtanh.pop %v1659
  %v1682 = vtanh.pop %v1663
  %v1683 = vmul.f32 %v1660, 0.5
  %v1684 = vmul.f32 %v1664, 0.5
  %v1685 = vtanh.pop %v1683
  %v1686 = vtanh.pop %v1684
  %v1687 = vmul.f32 %v1685, 0.5
  %v1688 = vmul.f32 %v1686, 0.5
  %v1689 = vadd.f32 %v1687, 0.5
  %v1690 = vadd.f32 %v1688, 0.5
  %v1691 = vmul.f32 %v1679, %v1547
  %v1692 = vmul.f32 %v1680, %v1548
  %v1693 = vmul.f32 %v1671, %v1681
  %v1694 = vmul.f32 %v1672, %v1682
  %v1695 = vadd.f32 %v1691, %v1693
  %v1696 = vadd.f32 %v1692, %v1694
  %v1697 = vtanh.pop %v1695
  %v1698 = vtanh.pop %v1696
  %v1699 = vmul.f32 %v1689, %v1697
  %v1700 = vmul.f32 %v1690, %v1698
  %s1701 = scalar_lea.vmem [#allocation2], 32
  %1702 = vst [vmem:[%s1701] sm:$0xff] %v1699
  %s1703 = scalar_lea.vmem [#allocation2], 80
  %1704 = vst [vmem:[%s1703 + $0x8] sm:$0xff] %v1700
  %v1705 = vsel %vm49, %v1699, 0.0
  %v1706 = vsel %vm50, %v1699, 0.0
  %v1707 = vsel %vm51, %v1700, 0.0
  %v1708 = vsel %vm52, %v1700, 0.0
  %v1709 = vpack.c.bf16 %v1707, %v1705
  %v1710 = vpack.c.bf16 %v1708, %v1706
  %v1711 = vld [vmem:[%s829] sm:$0xff]
  %v1712 = vld [vmem:[%s829 + $0x8] sm:$0xff]
  %v1713 = vld [vmem:[%s829 + $0x10] sm:$0xff]
  %v1714 = vld [vmem:[%s829 + $0x18] sm:$0xff]
  %v1715 = vld [vmem:[%s829 + $0x20] sm:$0xff]
  %v1716 = vld [vmem:[%s829 + $0x28] sm:$0xff]
  %v1717 = vld [vmem:[%s829 + $0x30] sm:$0xff]
  %v1718 = vld [vmem:[%s829 + $0x38] sm:$0xff]
  %1719 = vmatprep.subr.bf16.mxu0 %v1149
  %1720 = vmatpush1.bf16.msra.mxu0 %v1148
  %1721 = vmatprep.subr.bf16.mxu0 %v1153
  %1722 = vmatpush1.bf16.msra.mxu0 %v1152
  %1723 = vmatprep.subr.bf16.mxu0 %v1157
  %1724 = vmatpush1.bf16.msra.mxu0 %v1156
  %1725 = vmatprep.subr.bf16.mxu0 %v1161
  %1726 = vmatpush1.bf16.msra.mxu0 %v1160
  %1727 = vmatprep.subr.bf16.mxu0 %v1165
  %1728 = vmatpush1.bf16.msra.mxu0 %v1164
  %1729 = vmatprep.subr.bf16.mxu0 %v1169
  %1730 = vmatpush1.bf16.msra.mxu0 %v1168
  %1731 = vmatprep.subr.bf16.mxu0 %v1173
  %1732 = vmatpush1.bf16.msra.mxu0 %v1172
  %1733 = vmatprep.subr.bf16.mxu0 %v1177
  %1734 = vmatpush1.bf16.msra.mxu0 %v1176
  %1735 = vmatprep.subr.bf16.mxu0 %v1181
  %1736 = vmatpush1.bf16.msra.mxu0 %v1180
  %1737 = vmatprep.subr.bf16.mxu0 %v1185
  %1738 = vmatpush1.bf16.msra.mxu0 %v1184
  %1739 = vmatprep.subr.bf16.mxu0 %v1189
  %1740 = vmatpush1.bf16.msra.mxu0 %v1188
  %1741 = vmatprep.subr.bf16.mxu0 %v1193
  %1742 = vmatpush1.bf16.msra.mxu0 %v1192
  %1743 = vmatprep.subr.bf16.mxu0 %v1197
  %1744 = vmatpush1.bf16.msra.mxu0 %v1196
  %1745 = vmatprep.subr.bf16.mxu0 %v1201
  %1746 = vmatpush1.bf16.msra.mxu0 %v1200
  %1747 = vmatprep.subr.bf16.mxu0 %v1205
  %1748 = vmatpush1.bf16.msra.mxu0 %v1204
  %1749 = vmatprep.subr.bf16.mxu0 %v1209
  %1750 = vmatpush1.bf16.msra.mxu0 %v1208
  %1751 = vmatprep.mubr.bf16.mxu0 %v1710
  %1752 = vmatmul.mubr.bf16.gmra.mrb[0].mxu0 %v1709
  %v1753 = vpop.f32.mrb[0].mxu0
  %v1754 = vadd.f32 0.0, %v1753
  %v1755 = vpop.f32.mrb[0].mxu0
  %v1756 = vadd.f32 0.0, %v1755
  %v1757 = vpop.f32.mrb[0].mxu0
  %v1758 = vadd.f32 0.0, %v1757
  %v1759 = vpop.f32.mrb[0].mxu0
  %v1760 = vadd.f32 0.0, %v1759
  %1761 = vdwg.mxu0
  %1762 = vmatprep.subr.bf16.mxu0 %v1151
  %1763 = vmatpush1.bf16.msra.mxu0 %v1150
  %1764 = vmatprep.subr.bf16.mxu0 %v1155
  %1765 = vmatpush1.bf16.msra.mxu0 %v1154
  %1766 = vmatprep.subr.bf16.mxu0 %v1159
  %1767 = vmatpush1.bf16.msra.mxu0 %v1158
  %1768 = vmatprep.subr.bf16.mxu0 %v1163
  %1769 = vmatpush1.bf16.msra.mxu0 %v1162
  %1770 = vmatprep.subr.bf16.mxu0 %v1167
  %1771 = vmatpush1.bf16.msra.mxu0 %v1166
  %1772 = vmatprep.subr.bf16.mxu0 %v1171
  %1773 = vmatpush1.bf16.msra.mxu0 %v1170
  %1774 = vmatprep.subr.bf16.mxu0 %v1175
  %1775 = vmatpush1.bf16.msra.mxu0 %v1174
  %1776 = vmatprep.subr.bf16.mxu0 %v1179
  %1777 = vmatpush1.bf16.msra.mxu0 %v1178
  %1778 = vmatprep.subr.bf16.mxu0 %v1183
  %1779 = vmatpush1.bf16.msra.mxu0 %v1182
  %1780 = vmatprep.subr.bf16.mxu0 %v1187
  %1781 = vmatpush1.bf16.msra.mxu0 %v1186
  %1782 = vmatprep.subr.bf16.mxu0 %v1191
  %1783 = vmatpush1.bf16.msra.mxu0 %v1190
  %1784 = vmatprep.subr.bf16.mxu0 %v1195
  %1785 = vmatpush1.bf16.msra.mxu0 %v1194
  %1786 = vmatprep.subr.bf16.mxu0 %v1199
  %1787 = vmatpush1.bf16.msra.mxu0 %v1198
  %1788 = vmatprep.subr.bf16.mxu0 %v1203
  %1789 = vmatpush1.bf16.msra.mxu0 %v1202
  %1790 = vmatprep.subr.bf16.mxu0 %v1207
  %1791 = vmatpush1.bf16.msra.mxu0 %v1206
  %1792 = vmatprep.subr.bf16.mxu0 %v1211
  %1793 = vmatpush1.bf16.msra.mxu0 %v1210
  %1794 = vmatprep.mubr.bf16.mxu0 %v1710
  %1795 = vmatmul.mubr.bf16.gmra.mrb[0].mxu0 %v1709
  %v1796 = vpop.f32.mrb[0].mxu0
  %v1797 = vadd.f32 0.0, %v1796
  %v1798 = vpop.f32.mrb[0].mxu0
  %v1799 = vadd.f32 0.0, %v1798
  %v1800 = vpop.f32.mrb[0].mxu0
  %v1801 = vadd.f32 0.0, %v1800
  %v1802 = vpop.f32.mrb[0].mxu0
  %v1803 = vadd.f32 0.0, %v1802
  %1804 = vdwg.mxu0
  %v1805 = vadd.f32 %v1711, %v1754
  %v1806 = vadd.f32 %v1712, %v1756
  %v1807 = vadd.f32 %v1713, %v1797
  %v1808 = vadd.f32 %v1714, %v1799
  %v1809 = vadd.f32 %v1715, %v1758
  %v1810 = vadd.f32 %v1716, %v1760
  %v1811 = vadd.f32 %v1717, %v1801
  %v1812 = vadd.f32 %v1718, %v1803
  %v1813 = vmul.f32 %v1805, 0.5
  %v1814 = vmul.f32 %v1809, 0.5
  %v1815 = vtanh.pop %v1813
  %v1816 = vtanh.pop %v1814
  %v1817 = vmul.f32 %v1815, 0.5
  %v1818 = vmul.f32 %v1816, 0.5
  %v1819 = vadd.f32 %v1817, 0.5
  %v1820 = vadd.f32 %v1818, 0.5
  %v1821 = vmul.f32 %v1806, 0.5
  %v1822 = vmul.f32 %v1810, 0.5
  %v1823 = vtanh.pop %v1821
  %v1824 = vtanh.pop %v1822
  %v1825 = vmul.f32 %v1823, 0.5
  %v1826 = vmul.f32 %v1824, 0.5
  %v1827 = vadd.f32 %v1825, 0.5
  %v1828 = vadd.f32 %v1826, 0.5
  %v1829 = vtanh.pop %v1807
  %v1830 = vtanh.pop %v1811
  %v1831 = vmul.f32 %v1808, 0.5
  %v1832 = vmul.f32 %v1812, 0.5
  %v1833 = vtanh.pop %v1831
  %v1834 = vtanh.pop %v1832
  %v1835 = vmul.f32 %v1833, 0.5
  %v1836 = vmul.f32 %v1834, 0.5
  %v1837 = vadd.f32 %v1835, 0.5
  %v1838 = vadd.f32 %v1836, 0.5
  %v1839 = vmul.f32 %v1827, %v1695
  %v1840 = vmul.f32 %v1828, %v1696
  %v1841 = vmul.f32 %v1819, %v1829
  %v1842 = vmul.f32 %v1820, %v1830
  %v1843 = vadd.f32 %v1839, %v1841
  %v1844 = vadd.f32 %v1840, %v1842
  %v1845 = vtanh.pop %v1843
  %v1846 = vtanh.pop %v1844
  %v1847 = vmul.f32 %v1837, %v1845
  %v1848 = vmul.f32 %v1838, %v1846
  %s1849 = scalar_lea.vmem [#allocation2], 48
  %1850 = vst [vmem:[%s1849] sm:$0xff] %v1847
  %s1851 = scalar_lea.vmem [#allocation2], 64
  %1852 = vst [vmem:[%s1851 + $0x8] sm:$0xff] %v1848
  %v1853 = vsel %vm49, %v1847, 0.0
  %v1854 = vsel %vm50, %v1847, 0.0
  %v1855 = vsel %vm51, %v1848, 0.0
  %v1856 = vsel %vm52, %v1848, 0.0
  %v1857 = vpack.c.bf16 %v1855, %v1853
  %v1858 = vpack.c.bf16 %v1856, %v1854
  %v1859 = vld [vmem:[%s838] sm:$0xff]
  %v1860 = vld [vmem:[%s838 + $0x8] sm:$0xff]
  %v1861 = vld [vmem:[%s838 + $0x10] sm:$0xff]
  %v1862 = vld [vmem:[%s838 + $0x18] sm:$0xff]
  %v1863 = vld [vmem:[%s838 + $0x20] sm:$0xff]
  %v1864 = vld [vmem:[%s838 + $0x28] sm:$0xff]
  %v1865 = vld [vmem:[%s838 + $0x30] sm:$0xff]
  %v1866 = vld [vmem:[%s838 + $0x38] sm:$0xff]
  %1867 = vmatprep.subr.bf16.mxu0 %v1149
  %1868 = vmatpush1.bf16.msra.mxu0 %v1148
  %1869 = vmatprep.subr.bf16.mxu0 %v1153
  %1870 = vmatpush1.bf16.msra.mxu0 %v1152
  %1871 = vmatprep.subr.bf16.mxu0 %v1157
  %1872 = vmatpush1.bf16.msra.mxu0 %v1156
  %1873 = vmatprep.subr.bf16.mxu0 %v1161
  %1874 = vmatpush1.bf16.msra.mxu0 %v1160
  %1875 = vmatprep.subr.bf16.mxu0 %v1165
  %1876 = vmatpush1.bf16.msra.mxu0 %v1164
  %1877 = vmatprep.subr.bf16.mxu0 %v1169
  %1878 = vmatpush1.bf16.msra.mxu0 %v1168
  %1879 = vmatprep.subr.bf16.mxu0 %v1173
  %1880 = vmatpush1.bf16.msra.mxu0 %v1172
  %1881 = vmatprep.subr.bf16.mxu0 %v1177
  %1882 = vmatpush1.bf16.msra.mxu0 %v1176
  %1883 = vmatprep.subr.bf16.mxu0 %v1181
  %1884 = vmatpush1.bf16.msra.mxu0 %v1180
  %1885 = vmatprep.subr.bf16.mxu0 %v1185
  %1886 = vmatpush1.bf16.msra.mxu0 %v1184
  %1887 = vmatprep.subr.bf16.mxu0 %v1189
  %1888 = vmatpush1.bf16.msra.mxu0 %v1188
  %1889 = vmatprep.subr.bf16.mxu0 %v1193
  %1890 = vmatpush1.bf16.msra.mxu0 %v1192
  %1891 = vmatprep.subr.bf16.mxu0 %v1197
  %1892 = vmatpush1.bf16.msra.mxu0 %v1196
  %1893 = vmatprep.subr.bf16.mxu0 %v1201
  %1894 = vmatpush1.bf16.msra.mxu0 %v1200
  %1895 = vmatprep.subr.bf16.mxu0 %v1205
  %1896 = vmatpush1.bf16.msra.mxu0 %v1204
  %1897 = vmatprep.subr.bf16.mxu0 %v1209
  %1898 = vmatpush1.bf16.msra.mxu0 %v1208
  %1899 = vmatprep.mubr.bf16.mxu0 %v1858
  %1900 = vmatmul.mubr.bf16.gmra.mrb[0].mxu0 %v1857
  %v1901 = vpop.f32.mrb[0].mxu0
  %v1902 = vadd.f32 0.0, %v1901
  %v1903 = vpop.f32.mrb[0].mxu0
  %v1904 = vadd.f32 0.0, %v1903
  %v1905 = vpop.f32.mrb[0].mxu0
  %v1906 = vadd.f32 0.0, %v1905
  %v1907 = vpop.f32.mrb[0].mxu0
  %v1908 = vadd.f32 0.0, %v1907
  %1909 = vdwg.mxu0
  %1910 = vmatprep.subr.bf16.mxu0 %v1151
  %1911 = vmatpush1.bf16.msra.mxu0 %v1150
  %1912 = vmatprep.subr.bf16.mxu0 %v1155
  %1913 = vmatpush1.bf16.msra.mxu0 %v1154
  %1914 = vmatprep.subr.bf16.mxu0 %v1159
  %1915 = vmatpush1.bf16.msra.mxu0 %v1158
  %1916 = vmatprep.subr.bf16.mxu0 %v1163
  %1917 = vmatpush1.bf16.msra.mxu0 %v1162
  %1918 = vmatprep.subr.bf16.mxu0 %v1167
  %1919 = vmatpush1.bf16.msra.mxu0 %v1166
  %1920 = vmatprep.subr.bf16.mxu0 %v1171
  %1921 = vmatpush1.bf16.msra.mxu0 %v1170
  %1922 = vmatprep.subr.bf16.mxu0 %v1175
  %1923 = vmatpush1.bf16.msra.mxu0 %v1174
  %1924 = vmatprep.subr.bf16.mxu0 %v1179
  %1925 = vmatpush1.bf16.msra.mxu0 %v1178
  %1926 = vmatprep.subr.bf16.mxu0 %v1183
  %1927 = vmatpush1.bf16.msra.mxu0 %v1182
  %1928 = vmatprep.subr.bf16.mxu0 %v1187
  %1929 = vmatpush1.bf16.msra.mxu0 %v1186
  %1930 = vmatprep.subr.bf16.mxu0 %v1191
  %1931 = vmatpush1.bf16.msra.mxu0 %v1190
  %1932 = vmatprep.subr.bf16.mxu0 %v1195
  %1933 = vmatpush1.bf16.msra.mxu0 %v1194
  %1934 = vmatprep.subr.bf16.mxu0 %v1199
  %1935 = vmatpush1.bf16.msra.mxu0 %v1198
  %1936 = vmatprep.subr.bf16.mxu0 %v1203
  %1937 = vmatpush1.bf16.msra.mxu0 %v1202
  %1938 = vmatprep.subr.bf16.mxu0 %v1207
  %1939 = vmatpush1.bf16.msra.mxu0 %v1206
  %1940 = vmatprep.subr.bf16.mxu0 %v1211
  %1941 = vmatpush1.bf16.msra.mxu0 %v1210
  %1942 = vmatprep.mubr.bf16.mxu0 %v1858
  %1943 = vmatmul.mubr.bf16.gmra.mrb[0].mxu0 %v1857
  %v1944 = vpop.f32.mrb[0].mxu0
  %v1945 = vadd.f32 0.0, %v1944
  %v1946 = vpop.f32.mrb[0].mxu0
  %v1947 = vadd.f32 0.0, %v1946
  %v1948 = vpop.f32.mrb[0].mxu0
  %v1949 = vadd.f32 0.0, %v1948
  %v1950 = vpop.f32.mrb[0].mxu0
  %v1951 = vadd.f32 0.0, %v1950
  %1952 = vdwg.mxu0
  %v1953 = vadd.f32 %v1859, %v1902
  %v1954 = vadd.f32 %v1860, %v1904
  %v1955 = vadd.f32 %v1861, %v1945
  %v1956 = vadd.f32 %v1862, %v1947
  %v1957 = vadd.f32 %v1863, %v1906
  %v1958 = vadd.f32 %v1864, %v1908
  %v1959 = vadd.f32 %v1865, %v1949
  %v1960 = vadd.f32 %v1866, %v1951
  %v1961 = vmul.f32 %v1953, 0.5
  %v1962 = vmul.f32 %v1957, 0.5
  %v1963 = vtanh.pop %v1961
  %v1964 = vtanh.pop %v1962
  %v1965 = vmul.f32 %v1963, 0.5
  %v1966 = vmul.f32 %v1964, 0.5
  %v1967 = vadd.f32 %v1965, 0.5
  %v1968 = vadd.f32 %v1966, 0.5
  %v1969 = vmul.f32 %v1954, 0.5
  %v1970 = vmul.f32 %v1958, 0.5
  %v1971 = vtanh.pop %v1969
  %v1972 = vtanh.pop %v1970
  %v1973 = vmul.f32 %v1971, 0.5
  %v1974 = vmul.f32 %v1972, 0.5
  %v1975 = vadd.f32 %v1973, 0.5
  %v1976 = vadd.f32 %v1974, 0.5
  %v1977 = vtanh.pop %v1955
  %v1978 = vtanh.pop %v1959
  %v1979 = vmul.f32 %v1956, 0.5
  %v1980 = vmul.f32 %v1960, 0.5
  %v1981 = vtanh.pop %v1979
  %v1982 = vtanh.pop %v1980
  %v1983 = vmul.f32 %v1981, 0.5
  %v1984 = vmul.f32 %v1982, 0.5
  %v1985 = vadd.f32 %v1983, 0.5
  %v1986 = vadd.f32 %v1984, 0.5
  %v1987 = vmul.f32 %v1975, %v1843
  %v1988 = vmul.f32 %v1976, %v1844
  %v1989 = vmul.f32 %v1967, %v1977
  %v1990 = vmul.f32 %v1968, %v1978
  %v1991 = vadd.f32 %v1987, %v1989
  %v1992 = vadd.f32 %v1988, %v1990
  %v1993 = vtanh.pop %v1991
  %v1994 = vtanh.pop %v1992
  %v1995 = vmul.f32 %v1985, %v1993
  %v1996 = vmul.f32 %v1986, %v1994
  %1997 = vst [vmem:[%s1851] sm:$0xff] %v1995
  %1998 = vst [vmem:[%s1849 + $0x8] sm:$0xff] %v1996
  %v1999 = vsel %vm49, %v1995, 0.0
  %v2000 = vsel %vm50, %v1995, 0.0
  %v2001 = vsel %vm51, %v1996, 0.0
  %v2002 = vsel %vm52, %v1996, 0.0
  %v2003 = vpack.c.bf16 %v2001, %v1999
  %v2004 = vpack.c.bf16 %v2002, %v2000
  %v2005 = vld [vmem:[%s847] sm:$0xff]
  %v2006 = vld [vmem:[%s847 + $0x8] sm:$0xff]
  %v2007 = vld [vmem:[%s847 + $0x10] sm:$0xff]
  %v2008 = vld [vmem:[%s847 + $0x18] sm:$0xff]
  %v2009 = vld [vmem:[%s847 + $0x20] sm:$0xff]
  %v2010 = vld [vmem:[%s847 + $0x28] sm:$0xff]
  %v2011 = vld [vmem:[%s847 + $0x30] sm:$0xff]
  %v2012 = vld [vmem:[%s847 + $0x38] sm:$0xff]
  %2013 = vmatprep.subr.bf16.mxu0 %v1149
  %2014 = vmatpush1.bf16.msra.mxu0 %v1148
  %2015 = vmatprep.subr.bf16.mxu0 %v1153
  %2016 = vmatpush1.bf16.msra.mxu0 %v1152
  %2017 = vmatprep.subr.bf16.mxu0 %v1157
  %2018 = vmatpush1.bf16.msra.mxu0 %v1156
  %2019 = vmatprep.subr.bf16.mxu0 %v1161
  %2020 = vmatpush1.bf16.msra.mxu0 %v1160
  %2021 = vmatprep.subr.bf16.mxu0 %v1165
  %2022 = vmatpush1.bf16.msra.mxu0 %v1164
  %2023 = vmatprep.subr.bf16.mxu0 %v1169
  %2024 = vmatpush1.bf16.msra.mxu0 %v1168
  %2025 = vmatprep.subr.bf16.mxu0 %v1173
  %2026 = vmatpush1.bf16.msra.mxu0 %v1172
  %2027 = vmatprep.subr.bf16.mxu0 %v1177
  %2028 = vmatpush1.bf16.msra.mxu0 %v1176
  %2029 = vmatprep.subr.bf16.mxu0 %v1181
  %2030 = vmatpush1.bf16.msra.mxu0 %v1180
  %2031 = vmatprep.subr.bf16.mxu0 %v1185
  %2032 = vmatpush1.bf16.msra.mxu0 %v1184
  %2033 = vmatprep.subr.bf16.mxu0 %v1189
  %2034 = vmatpush1.bf16.msra.mxu0 %v1188
  %2035 = vmatprep.subr.bf16.mxu0 %v1193
  %2036 = vmatpush1.bf16.msra.mxu0 %v1192
  %2037 = vmatprep.subr.bf16.mxu0 %v1197
  %2038 = vmatpush1.bf16.msra.mxu0 %v1196
  %2039 = vmatprep.subr.bf16.mxu0 %v1201
  %2040 = vmatpush1.bf16.msra.mxu0 %v1200
  %2041 = vmatprep.subr.bf16.mxu0 %v1205
  %2042 = vmatpush1.bf16.msra.mxu0 %v1204
  %2043 = vmatprep.subr.bf16.mxu0 %v1209
  %2044 = vmatpush1.bf16.msra.mxu0 %v1208
  %2045 = vmatprep.mubr.bf16.mxu0 %v2004
  %2046 = vmatmul.mubr.bf16.gmra.mrb[0].mxu0 %v2003
  %v2047 = vpop.f32.mrb[0].mxu0
  %v2048 = vadd.f32 0.0, %v2047
  %v2049 = vpop.f32.mrb[0].mxu0
  %v2050 = vadd.f32 0.0, %v2049
  %v2051 = vpop.f32.mrb[0].mxu0
  %v2052 = vadd.f32 0.0, %v2051
  %v2053 = vpop.f32.mrb[0].mxu0
  %v2054 = vadd.f32 0.0, %v2053
  %2055 = vdwg.mxu0
  %2056 = vmatprep.subr.bf16.mxu0 %v1151
  %2057 = vmatpush1.bf16.msra.mxu0 %v1150
  %2058 = vmatprep.subr.bf16.mxu0 %v1155
  %2059 = vmatpush1.bf16.msra.mxu0 %v1154
  %2060 = vmatprep.subr.bf16.mxu0 %v1159
  %2061 = vmatpush1.bf16.msra.mxu0 %v1158
  %2062 = vmatprep.subr.bf16.mxu0 %v1163
  %2063 = vmatpush1.bf16.msra.mxu0 %v1162
  %2064 = vmatprep.subr.bf16.mxu0 %v1167
  %2065 = vmatpush1.bf16.msra.mxu0 %v1166
  %2066 = vmatprep.subr.bf16.mxu0 %v1171
  %2067 = vmatpush1.bf16.msra.mxu0 %v1170
  %2068 = vmatprep.subr.bf16.mxu0 %v1175
  %2069 = vmatpush1.bf16.msra.mxu0 %v1174
  %2070 = vmatprep.subr.bf16.mxu0 %v1179
  %2071 = vmatpush1.bf16.msra.mxu0 %v1178
  %2072 = vmatprep.subr.bf16.mxu0 %v1183
  %2073 = vmatpush1.bf16.msra.mxu0 %v1182
  %2074 = vmatprep.subr.bf16.mxu0 %v1187
  %2075 = vmatpush1.bf16.msra.mxu0 %v1186
  %2076 = vmatprep.subr.bf16.mxu0 %v1191
  %2077 = vmatpush1.bf16.msra.mxu0 %v1190
  %2078 = vmatprep.subr.bf16.mxu0 %v1195
  %2079 = vmatpush1.bf16.msra.mxu0 %v1194
  %2080 = vmatprep.subr.bf16.mxu0 %v1199
  %2081 = vmatpush1.bf16.msra.mxu0 %v1198
  %2082 = vmatprep.subr.bf16.mxu0 %v1203
  %2083 = vmatpush1.bf16.msra.mxu0 %v1202
  %2084 = vmatprep.subr.bf16.mxu0 %v1207
  %2085 = vmatpush1.bf16.msra.mxu0 %v1206
  %2086 = vmatprep.subr.bf16.mxu0 %v1211
  %2087 = vmatpush1.bf16.msra.mxu0 %v1210
  %2088 = vmatprep.mubr.bf16.mxu0 %v2004
  %2089 = vmatmul.mubr.bf16.gmra.mrb[0].mxu0 %v2003
  %v2090 = vpop.f32.mrb[0].mxu0
  %v2091 = vadd.f32 0.0, %v2090
  %v2092 = vpop.f32.mrb[0].mxu0
  %v2093 = vadd.f32 0.0, %v2092
  %v2094 = vpop.f32.mrb[0].mxu0
  %v2095 = vadd.f32 0.0, %v2094
  %v2096 = vpop.f32.mrb[0].mxu0
  %v2097 = vadd.f32 0.0, %v2096
  %2098 = vdwg.mxu0
  %v2099 = vadd.f32 %v2005, %v2048
  %v2100 = vadd.f32 %v2006, %v2050
  %v2101 = vadd.f32 %v2007, %v2091
  %v2102 = vadd.f32 %v2008, %v2093
  %v2103 = vadd.f32 %v2009, %v2052
  %v2104 = vadd.f32 %v2010, %v2054
  %v2105 = vadd.f32 %v2011, %v2095
  %v2106 = vadd.f32 %v2012, %v2097
  %v2107 = vmul.f32 %v2099, 0.5
  %v2108 = vmul.f32 %v2103, 0.5
  %v2109 = vtanh.pop %v2107
  %v2110 = vtanh.pop %v2108
  %v2111 = vmul.f32 %v2109, 0.5
  %v2112 = vmul.f32 %v2110, 0.5
  %v2113 = vadd.f32 %v2111, 0.5
  %v2114 = vadd.f32 %v2112, 0.5
  %v2115 = vmul.f32 %v2100, 0.5
  %v2116 = vmul.f32 %v2104, 0.5
  %v2117 = vtanh.pop %v2115
  %v2118 = vtanh.pop %v2116
  %v2119 = vmul.f32 %v2117, 0.5
  %v2120 = vmul.f32 %v2118, 0.5
  %v2121 = vadd.f32 %v2119, 0.5
  %v2122 = vadd.f32 %v2120, 0.5
  %v2123 = vtanh.pop %v2101
  %v2124 = vtanh.pop %v2105
  %v2125 = vmul.f32 %v2102, 0.5
  %v2126 = vmul.f32 %v2106, 0.5
  %v2127 = vtanh.pop %v2125
  %v2128 = vtanh.pop %v2126
  %v2129 = vmul.f32 %v2127, 0.5
  %v2130 = vmul.f32 %v2128, 0.5
  %v2131 = vadd.f32 %v2129, 0.5
  %v2132 = vadd.f32 %v2130, 0.5
  %v2133 = vmul.f32 %v2121, %v1991
  %v2134 = vmul.f32 %v2122, %v1992
  %v2135 = vmul.f32 %v2113, %v2123
  %v2136 = vmul.f32 %v2114, %v2124
  %v2137 = vadd.f32 %v2133, %v2135
  %v2138 = vadd.f32 %v2134, %v2136
  %v2139 = vtanh.pop %v2137
  %v2140 = vtanh.pop %v2138
  %v2141 = vmul.f32 %v2131, %v2139
  %v2142 = vmul.f32 %v2132, %v2140
  %2143 = vst [vmem:[%s1703] sm:$0xff] %v2141
  %2144 = vst [vmem:[%s1701 + $0x8] sm:$0xff] %v2142
  %v2145 = vsel %vm49, %v2141, 0.0
  %v2146 = vsel %vm50, %v2141, 0.0
  %v2147 = vsel %vm51, %v2142, 0.0
  %v2148 = vsel %vm52, %v2142, 0.0
  %v2149 = vpack.c.bf16 %v2147, %v2145
  %v2150 = vpack.c.bf16 %v2148, %v2146
  %v2151 = vld [vmem:[%s856] sm:$0xff]
  %v2152 = vld [vmem:[%s856 + $0x8] sm:$0xff]
  %v2153 = vld [vmem:[%s856 + $0x10] sm:$0xff]
  %v2154 = vld [vmem:[%s856 + $0x18] sm:$0xff]
  %v2155 = vld [vmem:[%s856 + $0x20] sm:$0xff]
  %v2156 = vld [vmem:[%s856 + $0x28] sm:$0xff]
  %v2157 = vld [vmem:[%s856 + $0x30] sm:$0xff]
  %v2158 = vld [vmem:[%s856 + $0x38] sm:$0xff]
  %2159 = vmatprep.subr.bf16.mxu0 %v1149
  %2160 = vmatpush1.bf16.msra.mxu0 %v1148
  %2161 = vmatprep.subr.bf16.mxu0 %v1153
  %2162 = vmatpush1.bf16.msra.mxu0 %v1152
  %2163 = vmatprep.subr.bf16.mxu0 %v1157
  %2164 = vmatpush1.bf16.msra.mxu0 %v1156
  %2165 = vmatprep.subr.bf16.mxu0 %v1161
  %2166 = vmatpush1.bf16.msra.mxu0 %v1160
  %2167 = vmatprep.subr.bf16.mxu0 %v1165
  %2168 = vmatpush1.bf16.msra.mxu0 %v1164
  %2169 = vmatprep.subr.bf16.mxu0 %v1169
  %2170 = vmatpush1.bf16.msra.mxu0 %v1168
  %2171 = vmatprep.subr.bf16.mxu0 %v1173
  %2172 = vmatpush1.bf16.msra.mxu0 %v1172
  %2173 = vmatprep.subr.bf16.mxu0 %v1177
  %2174 = vmatpush1.bf16.msra.mxu0 %v1176
  %2175 = vmatprep.subr.bf16.mxu0 %v1181
  %2176 = vmatpush1.bf16.msra.mxu0 %v1180
  %2177 = vmatprep.subr.bf16.mxu0 %v1185
  %2178 = vmatpush1.bf16.msra.mxu0 %v1184
  %2179 = vmatprep.subr.bf16.mxu0 %v1189
  %2180 = vmatpush1.bf16.msra.mxu0 %v1188
  %2181 = vmatprep.subr.bf16.mxu0 %v1193
  %2182 = vmatpush1.bf16.msra.mxu0 %v1192
  %2183 = vmatprep.subr.bf16.mxu0 %v1197
  %2184 = vmatpush1.bf16.msra.mxu0 %v1196
  %2185 = vmatprep.subr.bf16.mxu0 %v1201
  %2186 = vmatpush1.bf16.msra.mxu0 %v1200
  %2187 = vmatprep.subr.bf16.mxu0 %v1205
  %2188 = vmatpush1.bf16.msra.mxu0 %v1204
  %2189 = vmatprep.subr.bf16.mxu0 %v1209
  %2190 = vmatpush1.bf16.msra.mxu0 %v1208
  %2191 = vmatprep.mubr.bf16.mxu0 %v2150
  %2192 = vmatmul.mubr.bf16.gmra.mrb[0].mxu0 %v2149
  %v2193 = vpop.f32.mrb[0].mxu0
  %v2194 = vadd.f32 0.0, %v2193
  %v2195 = vpop.f32.mrb[0].mxu0
  %v2196 = vadd.f32 0.0, %v2195
  %v2197 = vpop.f32.mrb[0].mxu0
  %v2198 = vadd.f32 0.0, %v2197
  %v2199 = vpop.f32.mrb[0].mxu0
  %v2200 = vadd.f32 0.0, %v2199
  %2201 = vdwg.mxu0
  %2202 = vmatprep.subr.bf16.mxu0 %v1151
  %2203 = vmatpush1.bf16.msra.mxu0 %v1150
  %2204 = vmatprep.subr.bf16.mxu0 %v1155
  %2205 = vmatpush1.bf16.msra.mxu0 %v1154
  %2206 = vmatprep.subr.bf16.mxu0 %v1159
  %2207 = vmatpush1.bf16.msra.mxu0 %v1158
  %2208 = vmatprep.subr.bf16.mxu0 %v1163
  %2209 = vmatpush1.bf16.msra.mxu0 %v1162
  %2210 = vmatprep.subr.bf16.mxu0 %v1167
  %2211 = vmatpush1.bf16.msra.mxu0 %v1166
  %2212 = vmatprep.subr.bf16.mxu0 %v1171
  %2213 = vmatpush1.bf16.msra.mxu0 %v1170
  %2214 = vmatprep.subr.bf16.mxu0 %v1175
  %2215 = vmatpush1.bf16.msra.mxu0 %v1174
  %2216 = vmatprep.subr.bf16.mxu0 %v1179
  %2217 = vmatpush1.bf16.msra.mxu0 %v1178
  %2218 = vmatprep.subr.bf16.mxu0 %v1183
  %2219 = vmatpush1.bf16.msra.mxu0 %v1182
  %2220 = vmatprep.subr.bf16.mxu0 %v1187
  %2221 = vmatpush1.bf16.msra.mxu0 %v1186
  %2222 = vmatprep.subr.bf16.mxu0 %v1191
  %2223 = vmatpush1.bf16.msra.mxu0 %v1190
  %2224 = vmatprep.subr.bf16.mxu0 %v1195
  %2225 = vmatpush1.bf16.msra.mxu0 %v1194
  %2226 = vmatprep.subr.bf16.mxu0 %v1199
  %2227 = vmatpush1.bf16.msra.mxu0 %v1198
  %2228 = vmatprep.subr.bf16.mxu0 %v1203
  %2229 = vmatpush1.bf16.msra.mxu0 %v1202
  %2230 = vmatprep.subr.bf16.mxu0 %v1207
  %2231 = vmatpush1.bf16.msra.mxu0 %v1206
  %2232 = vmatprep.subr.bf16.mxu0 %v1211
  %2233 = vmatpush1.bf16.msra.mxu0 %v1210
  %2234 = vmatprep.mubr.bf16.mxu0 %v2150
  %2235 = vmatmul.mubr.bf16.gmra.mrb[0].mxu0 %v2149
  %v2236 = vpop.f32.mrb[0].mxu0
  %v2237 = vadd.f32 0.0, %v2236
  %v2238 = vpop.f32.mrb[0].mxu0
  %v2239 = vadd.f32 0.0, %v2238
  %v2240 = vpop.f32.mrb[0].mxu0
  %v2241 = vadd.f32 0.0, %v2240
  %v2242 = vpop.f32.mrb[0].mxu0
  %v2243 = vadd.f32 0.0, %v2242
  %2244 = vdwg.mxu0
  %v2245 = vadd.f32 %v2151, %v2194
  %v2246 = vadd.f32 %v2152, %v2196
  %v2247 = vadd.f32 %v2153, %v2237
  %v2248 = vadd.f32 %v2154, %v2239
  %v2249 = vadd.f32 %v2155, %v2198
  %v2250 = vadd.f32 %v2156, %v2200
  %v2251 = vadd.f32 %v2157, %v2241
  %v2252 = vadd.f32 %v2158, %v2243
  %v2253 = vmul.f32 %v2245, 0.5
  %v2254 = vmul.f32 %v2249, 0.5
  %v2255 = vtanh.pop %v2253
  %v2256 = vtanh.pop %v2254
  %v2257 = vmul.f32 %v2255, 0.5
  %v2258 = vmul.f32 %v2256, 0.5
  %v2259 = vadd.f32 %v2257, 0.5
  %v2260 = vadd.f32 %v2258, 0.5
  %v2261 = vmul.f32 %v2246, 0.5
  %v2262 = vmul.f32 %v2250, 0.5
  %v2263 = vtanh.pop %v2261
  %v2264 = vtanh.pop %v2262
  %v2265 = vmul.f32 %v2263, 0.5
  %v2266 = vmul.f32 %v2264, 0.5
  %v2267 = vadd.f32 %v2265, 0.5
  %v2268 = vadd.f32 %v2266, 0.5
  %v2269 = vtanh.pop %v2247
  %v2270 = vtanh.pop %v2251
  %v2271 = vmul.f32 %v2248, 0.5
  %v2272 = vmul.f32 %v2252, 0.5
  %v2273 = vtanh.pop %v2271
  %v2274 = vtanh.pop %v2272
  %v2275 = vmul.f32 %v2273, 0.5
  %v2276 = vmul.f32 %v2274, 0.5
  %v2277 = vadd.f32 %v2275, 0.5
  %v2278 = vadd.f32 %v2276, 0.5
  %v2279 = vmul.f32 %v2267, %v2137
  %v2280 = vmul.f32 %v2268, %v2138
  %v2281 = vmul.f32 %v2259, %v2269
  %v2282 = vmul.f32 %v2260, %v2270
  %v2283 = vadd.f32 %v2279, %v2281
  %v2284 = vadd.f32 %v2280, %v2282
  %v2285 = vtanh.pop %v2283
  %v2286 = vtanh.pop %v2284
  %v2287 = vmul.f32 %v2277, %v2285
  %v2288 = vmul.f32 %v2278, %v2286
  %2289 = vst [vmem:[%s1555] sm:$0xff] %v2287
  %2290 = vst [vmem:[%s1553 + $0x8] sm:$0xff] %v2288
  %v2291 = vsel %vm49, %v2287, 0.0
  %v2292 = vsel %vm50, %v2287, 0.0
  %v2293 = vsel %vm51, %v2288, 0.0
  %v2294 = vsel %vm52, %v2288, 0.0
  %v2295 = vpack.c.bf16 %v2293, %v2291
  %v2296 = vpack.c.bf16 %v2294, %v2292
  %v2297 = vld [vmem:[%s865] sm:$0xff]
  %v2298 = vld [vmem:[%s865 + $0x8] sm:$0xff]
  %v2299 = vld [vmem:[%s865 + $0x10] sm:$0xff]
  %v2300 = vld [vmem:[%s865 + $0x18] sm:$0xff]
  %v2301 = vld [vmem:[%s865 + $0x20] sm:$0xff]
  %v2302 = vld [vmem:[%s865 + $0x28] sm:$0xff]
  %v2303 = vld [vmem:[%s865 + $0x30] sm:$0xff]
  %v2304 = vld [vmem:[%s865 + $0x38] sm:$0xff]
  %2305 = vmatprep.subr.bf16.mxu0 %v1149
  %2306 = vmatpush1.bf16.msra.mxu0 %v1148
  %2307 = vmatprep.subr.bf16.mxu0 %v1153
  %2308 = vmatpush1.bf16.msra.mxu0 %v1152
  %2309 = vmatprep.subr.bf16.mxu0 %v1157
  %2310 = vmatpush1.bf16.msra.mxu0 %v1156
  %2311 = vmatprep.subr.bf16.mxu0 %v1161
  %2312 = vmatpush1.bf16.msra.mxu0 %v1160
  %2313 = vmatprep.subr.bf16.mxu0 %v1165
  %2314 = vmatpush1.bf16.msra.mxu0 %v1164
  %2315 = vmatprep.subr.bf16.mxu0 %v1169
  %2316 = vmatpush1.bf16.msra.mxu0 %v1168
  %2317 = vmatprep.subr.bf16.mxu0 %v1173
  %2318 = vmatpush1.bf16.msra.mxu0 %v1172
  %2319 = vmatprep.subr.bf16.mxu0 %v1177
  %2320 = vmatpush1.bf16.msra.mxu0 %v1176
  %2321 = vmatprep.subr.bf16.mxu0 %v1181
  %2322 = vmatpush1.bf16.msra.mxu0 %v1180
  %2323 = vmatprep.subr.bf16.mxu0 %v1185
  %2324 = vmatpush1.bf16.msra.mxu0 %v1184
  %2325 = vmatprep.subr.bf16.mxu0 %v1189
  %2326 = vmatpush1.bf16.msra.mxu0 %v1188
  %2327 = vmatprep.subr.bf16.mxu0 %v1193
  %2328 = vmatpush1.bf16.msra.mxu0 %v1192
  %2329 = vmatprep.subr.bf16.mxu0 %v1197
  %2330 = vmatpush1.bf16.msra.mxu0 %v1196
  %2331 = vmatprep.subr.bf16.mxu0 %v1201
  %2332 = vmatpush1.bf16.msra.mxu0 %v1200
  %2333 = vmatprep.subr.bf16.mxu0 %v1205
  %2334 = vmatpush1.bf16.msra.mxu0 %v1204
  %2335 = vmatprep.subr.bf16.mxu0 %v1209
  %2336 = vmatpush1.bf16.msra.mxu0 %v1208
  %2337 = vmatprep.mubr.bf16.mxu0 %v2296
  %2338 = vmatmul.mubr.bf16.gmra.mrb[0].mxu0 %v2295
  %v2339 = vpop.f32.mrb[0].mxu0
  %v2340 = vadd.f32 0.0, %v2339
  %v2341 = vpop.f32.mrb[0].mxu0
  %v2342 = vadd.f32 0.0, %v2341
  %v2343 = vpop.f32.mrb[0].mxu0
  %v2344 = vadd.f32 0.0, %v2343
  %v2345 = vpop.f32.mrb[0].mxu0
  %v2346 = vadd.f32 0.0, %v2345
  %2347 = vdwg.mxu0
  %2348 = vmatprep.subr.bf16.mxu0 %v1151
  %2349 = vmatpush1.bf16.msra.mxu0 %v1150
  %2350 = vmatprep.subr.bf16.mxu0 %v1155
  %2351 = vmatpush1.bf16.msra.mxu0 %v1154
  %2352 = vmatprep.subr.bf16.mxu0 %v1159
  %2353 = vmatpush1.bf16.msra.mxu0 %v1158
  %2354 = vmatprep.subr.bf16.mxu0 %v1163
  %2355 = vmatpush1.bf16.msra.mxu0 %v1162
  %2356 = vmatprep.subr.bf16.mxu0 %v1167
  %2357 = vmatpush1.bf16.msra.mxu0 %v1166
  %2358 = vmatprep.subr.bf16.mxu0 %v1171
  %2359 = vmatpush1.bf16.msra.mxu0 %v1170
  %2360 = vmatprep.subr.bf16.mxu0 %v1175
  %2361 = vmatpush1.bf16.msra.mxu0 %v1174
  %2362 = vmatprep.subr.bf16.mxu0 %v1179
  %2363 = vmatpush1.bf16.msra.mxu0 %v1178
  %2364 = vmatprep.subr.bf16.mxu0 %v1183
  %2365 = vmatpush1.bf16.msra.mxu0 %v1182
  %2366 = vmatprep.subr.bf16.mxu0 %v1187
  %2367 = vmatpush1.bf16.msra.mxu0 %v1186
  %2368 = vmatprep.subr.bf16.mxu0 %v1191
  %2369 = vmatpush1.bf16.msra.mxu0 %v1190
  %2370 = vmatprep.subr.bf16.mxu0 %v1195
  %2371 = vmatpush1.bf16.msra.mxu0 %v1194
  %2372 = vmatprep.subr.bf16.mxu0 %v1199
  %2373 = vmatpush1.bf16.msra.mxu0 %v1198
  %2374 = vmatprep.subr.bf16.mxu0 %v1203
  %2375 = vmatpush1.bf16.msra.mxu0 %v1202
  %2376 = vmatprep.subr.bf16.mxu0 %v1207
  %2377 = vmatpush1.bf16.msra.mxu0 %v1206
  %2378 = vmatprep.subr.bf16.mxu0 %v1211
  %2379 = vmatpush1.bf16.msra.mxu0 %v1210
  %2380 = vmatprep.mubr.bf16.mxu0 %v2296
  %2381 = vmatmul.mubr.bf16.gmra.mrb[0].mxu0 %v2295
  %v2382 = vpop.f32.mrb[0].mxu0
  %v2383 = vadd.f32 0.0, %v2382
  %v2384 = vpop.f32.mrb[0].mxu0
  %v2385 = vadd.f32 0.0, %v2384
  %v2386 = vpop.f32.mrb[0].mxu0
  %v2387 = vadd.f32 0.0, %v2386
  %v2388 = vpop.f32.mrb[0].mxu0
  %v2389 = vadd.f32 0.0, %v2388
  %2390 = vdwg.mxu0
  %v2391 = vadd.f32 %v2297, %v2340
  %v2392 = vadd.f32 %v2298, %v2342
  %v2393 = vadd.f32 %v2299, %v2383
  %v2394 = vadd.f32 %v2300, %v2385
  %v2395 = vadd.f32 %v2301, %v2344
  %v2396 = vadd.f32 %v2302, %v2346
  %v2397 = vadd.f32 %v2303, %v2387
  %v2398 = vadd.f32 %v2304, %v2389
  %v2399 = vmul.f32 %v2391, 0.5
  %v2400 = vmul.f32 %v2395, 0.5
  %v2401 = vtanh.pop %v2399
  %v2402 = vtanh.pop %v2400
  %v2403 = vmul.f32 %v2401, 0.5
  %v2404 = vmul.f32 %v2402, 0.5
  %v2405 = vadd.f32 %v2403, 0.5
  %v2406 = vadd.f32 %v2404, 0.5
  %v2407 = vmul.f32 %v2392, 0.5
  %v2408 = vmul.f32 %v2396, 0.5
  %v2409 = vtanh.pop %v2407
  %v2410 = vtanh.pop %v2408
  %v2411 = vmul.f32 %v2409, 0.5
  %v2412 = vmul.f32 %v2410, 0.5
  %v2413 = vadd.f32 %v2411, 0.5
  %v2414 = vadd.f32 %v2412, 0.5
  %v2415 = vtanh.pop %v2393
  %v2416 = vtanh.pop %v2397
  %v2417 = vmul.f32 %v2394, 0.5
  %v2418 = vmul.f32 %v2398, 0.5
  %v2419 = vtanh.pop %v2417
  %v2420 = vtanh.pop %v2418
  %v2421 = vmul.f32 %v2419, 0.5
  %v2422 = vmul.f32 %v2420, 0.5
  %v2423 = vadd.f32 %v2421, 0.5
  %v2424 = vadd.f32 %v2422, 0.5
  %v2425 = vmul.f32 %v2413, %v2283
  %v2426 = vmul.f32 %v2414, %v2284
  %v2427 = vmul.f32 %v2405, %v2415
  %v2428 = vmul.f32 %v2406, %v2416
  %v2429 = vadd.f32 %v2425, %v2427
  %v2430 = vadd.f32 %v2426, %v2428
  %v2431 = vtanh.pop %v2429
  %v2432 = vtanh.pop %v2430
  %v2433 = vmul.f32 %v2423, %v2431
  %v2434 = vmul.f32 %v2424, %v2432
  %2435 = vst [vmem:[%s1407] sm:$0xff] %v2433
  %2436 = vst [vmem:[#allocation2 + $0x8] sm:$0xff] %v2434
  %v2437 = vld [vmem:[#allocation2] sm:$0xff]
  %v2438 = vld [vmem:[#allocation2 + $0x8] sm:$0xff]
  %v2439 = vld [vmem:[#allocation2 + $0x10] sm:$0xff]
  %v2440 = vld [vmem:[#allocation2 + $0x18] sm:$0xff]
  %v2441 = vld [vmem:[#allocation2 + $0x20] sm:$0xff]
  %v2442 = vld [vmem:[#allocation2 + $0x28] sm:$0xff]
  %v2443 = vld [vmem:[#allocation2 + $0x30] sm:$0xff]
  %v2444 = vld [vmem:[#allocation2 + $0x38] sm:$0xff]
  %v2445 = vld [vmem:[#allocation2 + $0x40] sm:$0xff]
  %v2446 = vld [vmem:[#allocation2 + $0x48] sm:$0xff]
  %v2447 = vld [vmem:[#allocation2 + $0x50] sm:$0xff]
  %v2448 = vld [vmem:[#allocation2 + $0x58] sm:$0xff]
  %v2449 = vld [vmem:[#allocation2 + $0x60] sm:$0xff]
  %v2450 = vld [vmem:[#allocation2 + $0x68] sm:$0xff]
  %v2451 = vld [vmem:[#allocation2 + $0x70] sm:$0xff]
  %v2452 = vld [vmem:[#allocation2 + $0x78] sm:$0xff]
  %v2453 = vpack.c.bf16 %v2439, %v2437
  %v2454 = vpack.c.bf16 %v2440, %v2438
  %v2455 = vpack.c.bf16 %v2443, %v2441
  %v2456 = vpack.c.bf16 %v2444, %v2442
  %v2457 = vpack.c.bf16 %v2447, %v2445
  %v2458 = vpack.c.bf16 %v2448, %v2446
  %v2459 = vpack.c.bf16 %v2451, %v2449
  %v2460 = vpack.c.bf16 %v2452, %v2450
  %v2461 = vld [vmem:[%s4] sm:$0xff]
  %v2462 = vld [vmem:[%s4 + $0x8] sm:$0xff]
  %v2463 = vld [vmem:[%s4 + $0x10] sm:$0xff]
  %v2464 = vld [vmem:[%s4 + $0x18] sm:$0xff]
  %v2465 = vld [vmem:[%s4 + $0x20] sm:$0xff]
  %v2466 = vld [vmem:[%s4 + $0x28] sm:$0xff]
  %v2467 = vld [vmem:[%s4 + $0x30] sm:$0xff]
  %v2468 = vld [vmem:[%s4 + $0x38] sm:$0xff]
  %v2469 = vld [vmem:[%s4 + $0x40] sm:$0xff]
  %v2470 = vld [vmem:[%s4 + $0x48] sm:$0xff]
  %v2471 = vld [vmem:[%s4 + $0x50] sm:$0xff]
  %v2472 = vld [vmem:[%s4 + $0x58] sm:$0xff]
  %v2473 = vld [vmem:[%s4 + $0x60] sm:$0xff]
  %v2474 = vld [vmem:[%s4 + $0x68] sm:$0xff]
  %v2475 = vld [vmem:[%s4 + $0x70] sm:$0xff]
  %v2476 = vld [vmem:[%s4 + $0x78] sm:$0xff]
  %v2477 = vld [vmem:[%s4 + $0x80] sm:$0xff]
  %v2478 = vld [vmem:[%s4 + $0x88] sm:$0xff]
  %v2479 = vld [vmem:[%s4 + $0x90] sm:$0xff]
  %v2480 = vld [vmem:[%s4 + $0x98] sm:$0xff]
  %v2481 = vld [vmem:[%s4 + $0xa0] sm:$0xff]
  %v2482 = vld [vmem:[%s4 + $0xa8] sm:$0xff]
  %v2483 = vld [vmem:[%s4 + $0xb0] sm:$0xff]
  %v2484 = vld [vmem:[%s4 + $0xb8] sm:$0xff]
  %v2485 = vld [vmem:[%s4 + $0xc0] sm:$0xff]
  %v2486 = vld [vmem:[%s4 + $0xc8] sm:$0xff]
  %v2487 = vld [vmem:[%s4 + $0xd0] sm:$0xff]
  %v2488 = vld [vmem:[%s4 + $0xd8] sm:$0xff]
  %v2489 = vld [vmem:[%s4 + $0xe0] sm:$0xff]
  %v2490 = vld [vmem:[%s4 + $0xe8] sm:$0xff]
  %v2491 = vld [vmem:[%s4 + $0xf0] sm:$0xff]
  %v2492 = vld [vmem:[%s4 + $0xf8] sm:$0xff]
  %v2493 = vld [vmem:[%s4 + $0x100] sm:$0xff]
  %v2494 = vld [vmem:[%s4 + $0x108] sm:$0xff]
  %v2495 = vld [vmem:[%s4 + $0x110] sm:$0xff]
  %v2496 = vld [vmem:[%s4 + $0x118] sm:$0xff]
  %v2497 = vld [vmem:[%s4 + $0x120] sm:$0xff]
  %v2498 = vld [vmem:[%s4 + $0x128] sm:$0xff]
  %v2499 = vld [vmem:[%s4 + $0x130] sm:$0xff]
  %v2500 = vld [vmem:[%s4 + $0x138] sm:$0xff]
  %v2501 = vld [vmem:[%s4 + $0x140] sm:$0xff]
  %v2502 = vld [vmem:[%s4 + $0x148] sm:$0xff]
  %v2503 = vld [vmem:[%s4 + $0x150] sm:$0xff]
  %v2504 = vld [vmem:[%s4 + $0x158] sm:$0xff]
  %v2505 = vld [vmem:[%s4 + $0x160] sm:$0xff]
  %v2506 = vld [vmem:[%s4 + $0x168] sm:$0xff]
  %v2507 = vld [vmem:[%s4 + $0x170] sm:$0xff]
  %v2508 = vld [vmem:[%s4 + $0x178] sm:$0xff]
  %v2509 = vld [vmem:[%s4 + $0x180] sm:$0xff]
  %v2510 = vld [vmem:[%s4 + $0x188] sm:$0xff]
  %v2511 = vld [vmem:[%s4 + $0x190] sm:$0xff]
  %v2512 = vld [vmem:[%s4 + $0x198] sm:$0xff]
  %v2513 = vld [vmem:[%s4 + $0x1a0] sm:$0xff]
  %v2514 = vld [vmem:[%s4 + $0x1a8] sm:$0xff]
  %v2515 = vld [vmem:[%s4 + $0x1b0] sm:$0xff]
  %v2516 = vld [vmem:[%s4 + $0x1b8] sm:$0xff]
  %v2517 = vld [vmem:[%s4 + $0x1c0] sm:$0xff]
  %v2518 = vld [vmem:[%s4 + $0x1c8] sm:$0xff]
  %v2519 = vld [vmem:[%s4 + $0x1d0] sm:$0xff]
  %v2520 = vld [vmem:[%s4 + $0x1d8] sm:$0xff]
  %v2521 = vld [vmem:[%s4 + $0x1e0] sm:$0xff]
  %v2522 = vld [vmem:[%s4 + $0x1e8] sm:$0xff]
  %v2523 = vld [vmem:[%s4 + $0x1f0] sm:$0xff]
  %v2524 = vld [vmem:[%s4 + $0x1f8] sm:$0xff]
  %v2525 = vld [vmem:[%s4 + $0x200] sm:$0xff]
  %v2526 = vld [vmem:[%s4 + $0x208] sm:$0xff]
  %v2527 = vld [vmem:[%s4 + $0x210] sm:$0xff]
  %v2528 = vld [vmem:[%s4 + $0x218] sm:$0xff]
  %v2529 = vld [vmem:[%s4 + $0x220] sm:$0xff]
  %v2530 = vld [vmem:[%s4 + $0x228] sm:$0xff]
  %v2531 = vld [vmem:[%s4 + $0x230] sm:$0xff]
  %v2532 = vld [vmem:[%s4 + $0x238] sm:$0xff]
  %v2533 = vld [vmem:[%s4 + $0x240] sm:$0xff]
  %v2534 = vld [vmem:[%s4 + $0x248] sm:$0xff]
  %v2535 = vld [vmem:[%s4 + $0x250] sm:$0xff]
  %v2536 = vld [vmem:[%s4 + $0x258] sm:$0xff]
  %v2537 = vld [vmem:[%s4 + $0x260] sm:$0xff]
  %v2538 = vld [vmem:[%s4 + $0x268] sm:$0xff]
  %v2539 = vld [vmem:[%s4 + $0x270] sm:$0xff]
  %v2540 = vld [vmem:[%s4 + $0x278] sm:$0xff]
  %v2541 = vld [vmem:[%s4 + $0x280] sm:$0xff]
  %v2542 = vld [vmem:[%s4 + $0x288] sm:$0xff]
  %v2543 = vld [vmem:[%s4 + $0x290] sm:$0xff]
  %v2544 = vld [vmem:[%s4 + $0x298] sm:$0xff]
  %v2545 = vld [vmem:[%s4 + $0x2a0] sm:$0xff]
  %v2546 = vld [vmem:[%s4 + $0x2a8] sm:$0xff]
  %v2547 = vld [vmem:[%s4 + $0x2b0] sm:$0xff]
  %v2548 = vld [vmem:[%s4 + $0x2b8] sm:$0xff]
  %v2549 = vld [vmem:[%s4 + $0x2c0] sm:$0xff]
  %v2550 = vld [vmem:[%s4 + $0x2c8] sm:$0xff]
  %v2551 = vld [vmem:[%s4 + $0x2d0] sm:$0xff]
  %v2552 = vld [vmem:[%s4 + $0x2d8] sm:$0xff]
  %v2553 = vld [vmem:[%s4 + $0x2e0] sm:$0xff]
  %v2554 = vld [vmem:[%s4 + $0x2e8] sm:$0xff]
  %v2555 = vld [vmem:[%s4 + $0x2f0] sm:$0xff]
  %v2556 = vld [vmem:[%s4 + $0x2f8] sm:$0xff]
  %v2557 = vld [vmem:[%s4 + $0x300] sm:$0xff]
  %v2558 = vld [vmem:[%s4 + $0x308] sm:$0xff]
  %v2559 = vld [vmem:[%s4 + $0x310] sm:$0xff]
  %v2560 = vld [vmem:[%s4 + $0x318] sm:$0xff]
  %v2561 = vld [vmem:[%s4 + $0x320] sm:$0xff]
  %v2562 = vld [vmem:[%s4 + $0x328] sm:$0xff]
  %v2563 = vld [vmem:[%s4 + $0x330] sm:$0xff]
  %v2564 = vld [vmem:[%s4 + $0x338] sm:$0xff]
  %v2565 = vld [vmem:[%s4 + $0x340] sm:$0xff]
  %v2566 = vld [vmem:[%s4 + $0x348] sm:$0xff]
  %v2567 = vld [vmem:[%s4 + $0x350] sm:$0xff]
  %v2568 = vld [vmem:[%s4 + $0x358] sm:$0xff]
  %v2569 = vld [vmem:[%s4 + $0x360] sm:$0xff]
  %v2570 = vld [vmem:[%s4 + $0x368] sm:$0xff]
  %v2571 = vld [vmem:[%s4 + $0x370] sm:$0xff]
  %v2572 = vld [vmem:[%s4 + $0x378] sm:$0xff]
  %v2573 = vld [vmem:[%s4 + $0x380] sm:$0xff]
  %v2574 = vld [vmem:[%s4 + $0x388] sm:$0xff]
  %v2575 = vld [vmem:[%s4 + $0x390] sm:$0xff]
  %v2576 = vld [vmem:[%s4 + $0x398] sm:$0xff]
  %v2577 = vld [vmem:[%s4 + $0x3a0] sm:$0xff]
  %v2578 = vld [vmem:[%s4 + $0x3a8] sm:$0xff]
  %v2579 = vld [vmem:[%s4 + $0x3b0] sm:$0xff]
  %v2580 = vld [vmem:[%s4 + $0x3b8] sm:$0xff]
  %v2581 = vld [vmem:[%s4 + $0x3c0] sm:$0xff]
  %v2582 = vld [vmem:[%s4 + $0x3c8] sm:$0xff]
  %v2583 = vld [vmem:[%s4 + $0x3d0] sm:$0xff]
  %v2584 = vld [vmem:[%s4 + $0x3d8] sm:$0xff]
  %v2585 = vld [vmem:[%s4 + $0x3e0] sm:$0xff]
  %v2586 = vld [vmem:[%s4 + $0x3e8] sm:$0xff]
  %v2587 = vld [vmem:[%s4 + $0x3f0] sm:$0xff]
  %v2588 = vld [vmem:[%s4 + $0x3f8] sm:$0xff]
  %s2589 = scalar_lea.vmem %s6, 8
  %v2590 = vld [vmem:[%s2589] sm:$0xff]
  %v2592 = vlaneseq
  %v2593 = vshrl.u32 %v2592, 7
  %v2594 = vsub.s32 0, %v2593
  %v2595 = vrot.slane %v2590, %v2594
  %v2596 = vlaneseq
  %v2597 = vshrl.u32 %v2596, 7
  %v2598 = vsub.s32 1, %v2597
  %v2599 = vrot.slane %v2590, %v2598
  %v2600 = vlaneseq
  %v2601 = vshrl.u32 %v2600, 7
  %v2602 = vsub.s32 2, %v2601
  %v2603 = vrot.slane %v2590, %v2602
  %v2604 = vlaneseq
  %v2605 = vshrl.u32 %v2604, 7
  %v2606 = vsub.s32 3, %v2605
  %v2607 = vrot.slane %v2590, %v2606
  %v2608 = vlaneseq
  %v2609 = vshrl.u32 %v2608, 7
  %v2610 = vsub.s32 4, %v2609
  %v2611 = vrot.slane %v2590, %v2610
  %v2612 = vlaneseq
  %v2613 = vshrl.u32 %v2612, 7
  %v2614 = vsub.s32 5, %v2613
  %v2615 = vrot.slane %v2590, %v2614
  %v2616 = vlaneseq
  %v2617 = vshrl.u32 %v2616, 7
  %v2618 = vsub.s32 6, %v2617
  %v2619 = vrot.slane %v2590, %v2618
  %v2620 = vlaneseq
  %v2621 = vshrl.u32 %v2620, 7
  %v2622 = vsub.s32 7, %v2621
  %v2623 = vrot.slane %v2590, %v2622
  %v2760 = vunpack.c.l.b16 %v2461
  %v2761 = vunpack.c.h.b16 %v2461
  %v2762 = vunpack.c.l.b16 %v2462
  %v2763 = vunpack.c.h.b16 %v2462
  %v2764 = vunpack.c.l.b16 %v2463
  %v2765 = vunpack.c.h.b16 %v2463
  %v2766 = vunpack.c.l.b16 %v2464
  %v2767 = vunpack.c.h.b16 %v2464
  %v2768 = vunpack.c.l.b16 %v2465
  %v2769 = vunpack.c.h.b16 %v2465
  %v2770 = vunpack.c.l.b16 %v2466
  %v2771 = vunpack.c.h.b16 %v2466
  %v2772 = vunpack.c.l.b16 %v2467
  %v2773 = vunpack.c.h.b16 %v2467
  %v2774 = vunpack.c.l.b16 %v2468
  %v2775 = vunpack.c.h.b16 %v2468
  %v2776 = vunpack.c.l.b16 %v2469
  %v2777 = vunpack.c.h.b16 %v2469
  %v2778 = vunpack.c.l.b16 %v2470
  %v2779 = vunpack.c.h.b16 %v2470
  %v2780 = vunpack.c.l.b16 %v2471
  %v2781 = vunpack.c.h.b16 %v2471
  %v2782 = vunpack.c.l.b16 %v2472
  %v2783 = vunpack.c.h.b16 %v2472
  %v2784 = vunpack.c.l.b16 %v2473
  %v2785 = vunpack.c.h.b16 %v2473
  %v2786 = vunpack.c.l.b16 %v2474
  %v2787 = vunpack.c.h.b16 %v2474
  %v2788 = vunpack.c.l.b16 %v2475
  %v2789 = vunpack.c.h.b16 %v2475
  %v2790 = vunpack.c.l.b16 %v2476
  %v2791 = vunpack.c.h.b16 %v2476
  %v2792 = vunpack.c.l.b16 %v2477
  %v2793 = vunpack.c.h.b16 %v2477
  %v2794 = vunpack.c.l.b16 %v2478
  %v2795 = vunpack.c.h.b16 %v2478
  %v2796 = vunpack.c.l.b16 %v2479
  %v2797 = vunpack.c.h.b16 %v2479
  %v2798 = vunpack.c.l.b16 %v2480
  %v2799 = vunpack.c.h.b16 %v2480
  %v2800 = vunpack.c.l.b16 %v2481
  %v2801 = vunpack.c.h.b16 %v2481
  %v2802 = vunpack.c.l.b16 %v2482
  %v2803 = vunpack.c.h.b16 %v2482
  %v2804 = vunpack.c.l.b16 %v2483
  %v2805 = vunpack.c.h.b16 %v2483
  %v2806 = vunpack.c.l.b16 %v2484
  %v2807 = vunpack.c.h.b16 %v2484
  %v2808 = vunpack.c.l.b16 %v2485
  %v2809 = vunpack.c.h.b16 %v2485
  %v2810 = vunpack.c.l.b16 %v2486
  %v2811 = vunpack.c.h.b16 %v2486
  %v2812 = vunpack.c.l.b16 %v2487
  %v2813 = vunpack.c.h.b16 %v2487
  %v2814 = vunpack.c.l.b16 %v2488
  %v2815 = vunpack.c.h.b16 %v2488
  %v2816 = vunpack.c.l.b16 %v2489
  %v2817 = vunpack.c.h.b16 %v2489
  %v2818 = vunpack.c.l.b16 %v2490
  %v2819 = vunpack.c.h.b16 %v2490
  %v2820 = vunpack.c.l.b16 %v2491
  %v2821 = vunpack.c.h.b16 %v2491
  %v2822 = vunpack.c.l.b16 %v2492
  %v2823 = vunpack.c.h.b16 %v2492
  %v2824 = vunpack.c.l.b16 %v2493
  %v2825 = vunpack.c.h.b16 %v2493
  %v2826 = vunpack.c.l.b16 %v2494
  %v2827 = vunpack.c.h.b16 %v2494
  %v2828 = vunpack.c.l.b16 %v2495
  %v2829 = vunpack.c.h.b16 %v2495
  %v2830 = vunpack.c.l.b16 %v2496
  %v2831 = vunpack.c.h.b16 %v2496
  %v2832 = vunpack.c.l.b16 %v2497
  %v2833 = vunpack.c.h.b16 %v2497
  %v2834 = vunpack.c.l.b16 %v2498
  %v2835 = vunpack.c.h.b16 %v2498
  %v2836 = vunpack.c.l.b16 %v2499
  %v2837 = vunpack.c.h.b16 %v2499
  %v2838 = vunpack.c.l.b16 %v2500
  %v2839 = vunpack.c.h.b16 %v2500
  %v2840 = vunpack.c.l.b16 %v2501
  %v2841 = vunpack.c.h.b16 %v2501
  %v2842 = vunpack.c.l.b16 %v2502
  %v2843 = vunpack.c.h.b16 %v2502
  %v2844 = vunpack.c.l.b16 %v2503
  %v2845 = vunpack.c.h.b16 %v2503
  %v2846 = vunpack.c.l.b16 %v2504
  %v2847 = vunpack.c.h.b16 %v2504
  %v2848 = vunpack.c.l.b16 %v2505
  %v2849 = vunpack.c.h.b16 %v2505
  %v2850 = vunpack.c.l.b16 %v2506
  %v2851 = vunpack.c.h.b16 %v2506
  %v2852 = vunpack.c.l.b16 %v2507
  %v2853 = vunpack.c.h.b16 %v2507
  %v2854 = vunpack.c.l.b16 %v2508
  %v2855 = vunpack.c.h.b16 %v2508
  %v2856 = vunpack.c.l.b16 %v2509
  %v2857 = vunpack.c.h.b16 %v2509
  %v2858 = vunpack.c.l.b16 %v2510
  %v2859 = vunpack.c.h.b16 %v2510
  %v2860 = vunpack.c.l.b16 %v2511
  %v2861 = vunpack.c.h.b16 %v2511
  %v2862 = vunpack.c.l.b16 %v2512
  %v2863 = vunpack.c.h.b16 %v2512
  %v2864 = vunpack.c.l.b16 %v2513
  %v2865 = vunpack.c.h.b16 %v2513
  %v2866 = vunpack.c.l.b16 %v2514
  %v2867 = vunpack.c.h.b16 %v2514
  %v2868 = vunpack.c.l.b16 %v2515
  %v2869 = vunpack.c.h.b16 %v2515
  %v2870 = vunpack.c.l.b16 %v2516
  %v2871 = vunpack.c.h.b16 %v2516
  %v2872 = vunpack.c.l.b16 %v2517
  %v2873 = vunpack.c.h.b16 %v2517
  %v2874 = vunpack.c.l.b16 %v2518
  %v2875 = vunpack.c.h.b16 %v2518
  %v2876 = vunpack.c.l.b16 %v2519
  %v2877 = vunpack.c.h.b16 %v2519
  %v2878 = vunpack.c.l.b16 %v2520
  %v2879 = vunpack.c.h.b16 %v2520
  %v2880 = vunpack.c.l.b16 %v2521
  %v2881 = vunpack.c.h.b16 %v2521
  %v2882 = vunpack.c.l.b16 %v2522
  %v2883 = vunpack.c.h.b16 %v2522
  %v2884 = vunpack.c.l.b16 %v2523
  %v2885 = vunpack.c.h.b16 %v2523
  %v2886 = vunpack.c.l.b16 %v2524
  %v2887 = vunpack.c.h.b16 %v2524
  %v2888 = vunpack.c.l.b16 %v2525
  %v2889 = vunpack.c.h.b16 %v2525
  %v2890 = vunpack.c.l.b16 %v2526
  %v2891 = vunpack.c.h.b16 %v2526
  %v2892 = vunpack.c.l.b16 %v2527
  %v2893 = vunpack.c.h.b16 %v2527
  %v2894 = vunpack.c.l.b16 %v2528
  %v2895 = vunpack.c.h.b16 %v2528
  %v2896 = vunpack.c.l.b16 %v2529
  %v2897 = vunpack.c.h.b16 %v2529
  %v2898 = vunpack.c.l.b16 %v2530
  %v2899 = vunpack.c.h.b16 %v2530
  %v2900 = vunpack.c.l.b16 %v2531
  %v2901 = vunpack.c.h.b16 %v2531
  %v2902 = vunpack.c.l.b16 %v2532
  %v2903 = vunpack.c.h.b16 %v2532
  %v2904 = vunpack.c.l.b16 %v2533
  %v2905 = vunpack.c.h.b16 %v2533
  %v2906 = vunpack.c.l.b16 %v2534
  %v2907 = vunpack.c.h.b16 %v2534
  %v2908 = vunpack.c.l.b16 %v2535
  %v2909 = vunpack.c.h.b16 %v2535
  %v2910 = vunpack.c.l.b16 %v2536
  %v2911 = vunpack.c.h.b16 %v2536
  %v2912 = vunpack.c.l.b16 %v2537
  %v2913 = vunpack.c.h.b16 %v2537
  %v2914 = vunpack.c.l.b16 %v2538
  %v2915 = vunpack.c.h.b16 %v2538
  %v2916 = vunpack.c.l.b16 %v2539
  %v2917 = vunpack.c.h.b16 %v2539
  %v2918 = vunpack.c.l.b16 %v2540
  %v2919 = vunpack.c.h.b16 %v2540
  %v2920 = vunpack.c.l.b16 %v2541
  %v2921 = vunpack.c.h.b16 %v2541
  %v2922 = vunpack.c.l.b16 %v2542
  %v2923 = vunpack.c.h.b16 %v2542
  %v2924 = vunpack.c.l.b16 %v2543
  %v2925 = vunpack.c.h.b16 %v2543
  %v2926 = vunpack.c.l.b16 %v2544
  %v2927 = vunpack.c.h.b16 %v2544
  %v2928 = vunpack.c.l.b16 %v2545
  %v2929 = vunpack.c.h.b16 %v2545
  %v2930 = vunpack.c.l.b16 %v2546
  %v2931 = vunpack.c.h.b16 %v2546
  %v2932 = vunpack.c.l.b16 %v2547
  %v2933 = vunpack.c.h.b16 %v2547
  %v2934 = vunpack.c.l.b16 %v2548
  %v2935 = vunpack.c.h.b16 %v2548
  %v2936 = vunpack.c.l.b16 %v2549
  %v2937 = vunpack.c.h.b16 %v2549
  %v2938 = vunpack.c.l.b16 %v2550
  %v2939 = vunpack.c.h.b16 %v2550
  %v2940 = vunpack.c.l.b16 %v2551
  %v2941 = vunpack.c.h.b16 %v2551
  %v2942 = vunpack.c.l.b16 %v2552
  %v2943 = vunpack.c.h.b16 %v2552
  %v2944 = vunpack.c.l.b16 %v2553
  %v2945 = vunpack.c.h.b16 %v2553
  %v2946 = vunpack.c.l.b16 %v2554
  %v2947 = vunpack.c.h.b16 %v2554
  %v2948 = vunpack.c.l.b16 %v2555
  %v2949 = vunpack.c.h.b16 %v2555
  %v2950 = vunpack.c.l.b16 %v2556
  %v2951 = vunpack.c.h.b16 %v2556
  %v2952 = vunpack.c.l.b16 %v2557
  %v2953 = vunpack.c.h.b16 %v2557
  %v2954 = vunpack.c.l.b16 %v2558
  %v2955 = vunpack.c.h.b16 %v2558
  %v2956 = vunpack.c.l.b16 %v2559
  %v2957 = vunpack.c.h.b16 %v2559
  %v2958 = vunpack.c.l.b16 %v2560
  %v2959 = vunpack.c.h.b16 %v2560
  %v2960 = vunpack.c.l.b16 %v2561
  %v2961 = vunpack.c.h.b16 %v2561
  %v2962 = vunpack.c.l.b16 %v2562
  %v2963 = vunpack.c.h.b16 %v2562
  %v2964 = vunpack.c.l.b16 %v2563
  %v2965 = vunpack.c.h.b16 %v2563
  %v2966 = vunpack.c.l.b16 %v2564
  %v2967 = vunpack.c.h.b16 %v2564
  %v2968 = vunpack.c.l.b16 %v2565
  %v2969 = vunpack.c.h.b16 %v2565
  %v2970 = vunpack.c.l.b16 %v2566
  %v2971 = vunpack.c.h.b16 %v2566
  %v2972 = vunpack.c.l.b16 %v2567
  %v2973 = vunpack.c.h.b16 %v2567
  %v2974 = vunpack.c.l.b16 %v2568
  %v2975 = vunpack.c.h.b16 %v2568
  %v2976 = vunpack.c.l.b16 %v2569
  %v2977 = vunpack.c.h.b16 %v2569
  %v2978 = vunpack.c.l.b16 %v2570
  %v2979 = vunpack.c.h.b16 %v2570
  %v2980 = vunpack.c.l.b16 %v2571
  %v2981 = vunpack.c.h.b16 %v2571
  %v2982 = vunpack.c.l.b16 %v2572
  %v2983 = vunpack.c.h.b16 %v2572
  %v2984 = vunpack.c.l.b16 %v2573
  %v2985 = vunpack.c.h.b16 %v2573
  %v2986 = vunpack.c.l.b16 %v2574
  %v2987 = vunpack.c.h.b16 %v2574
  %v2988 = vunpack.c.l.b16 %v2575
  %v2989 = vunpack.c.h.b16 %v2575
  %v2990 = vunpack.c.l.b16 %v2576
  %v2991 = vunpack.c.h.b16 %v2576
  %v2992 = vunpack.c.l.b16 %v2577
  %v2993 = vunpack.c.h.b16 %v2577
  %v2994 = vunpack.c.l.b16 %v2578
  %v2995 = vunpack.c.h.b16 %v2578
  %v2996 = vunpack.c.l.b16 %v2579
  %v2997 = vunpack.c.h.b16 %v2579
  %v2998 = vunpack.c.l.b16 %v2580
  %v2999 = vunpack.c.h.b16 %v2580
  %v3000 = vunpack.c.l.b16 %v2581
  %v3001 = vunpack.c.h.b16 %v2581
  %v3002 = vunpack.c.l.b16 %v2582
  %v3003 = vunpack.c.h.b16 %v2582
  %v3004 = vunpack.c.l.b16 %v2583
  %v3005 = vunpack.c.h.b16 %v2583
  %v3006 = vunpack.c.l.b16 %v2584
  %v3007 = vunpack.c.h.b16 %v2584
  %v3008 = vunpack.c.l.b16 %v2585
  %v3009 = vunpack.c.h.b16 %v2585
  %v3010 = vunpack.c.l.b16 %v2586
  %v3011 = vunpack.c.h.b16 %v2586
  %v3012 = vunpack.c.l.b16 %v2587
  %v3013 = vunpack.c.h.b16 %v2587
  %v3014 = vunpack.c.l.b16 %v2588
  %v3015 = vunpack.c.h.b16 %v2588
  %v3016 = vpack.c.b16 %v2768, %v2760
  %v3017 = vpack.c.b16 %v2769, %v2761
  %v3018 = vpack.c.b16 %v2770, %v2762
  %v3019 = vpack.c.b16 %v2771, %v2763
  %v3020 = vpack.c.b16 %v2772, %v2764
  %v3021 = vpack.c.b16 %v2773, %v2765
  %v3022 = vpack.c.b16 %v2774, %v2766
  %v3023 = vpack.c.b16 %v2775, %v2767
  %v3024 = vpack.c.b16 %v2784, %v2776
  %v3025 = vpack.c.b16 %v2785, %v2777
  %v3026 = vpack.c.b16 %v2786, %v2778
  %v3027 = vpack.c.b16 %v2787, %v2779
  %v3028 = vpack.c.b16 %v2788, %v2780
  %v3029 = vpack.c.b16 %v2789, %v2781
  %v3030 = vpack.c.b16 %v2790, %v2782
  %v3031 = vpack.c.b16 %v2791, %v2783
  %v3032 = vpack.c.b16 %v2800, %v2792
  %v3033 = vpack.c.b16 %v2801, %v2793
  %v3034 = vpack.c.b16 %v2802, %v2794
  %v3035 = vpack.c.b16 %v2803, %v2795
  %v3036 = vpack.c.b16 %v2804, %v2796
  %v3037 = vpack.c.b16 %v2805, %v2797
  %v3038 = vpack.c.b16 %v2806, %v2798
  %v3039 = vpack.c.b16 %v2807, %v2799
  %v3040 = vpack.c.b16 %v2816, %v2808
  %v3041 = vpack.c.b16 %v2817, %v2809
  %v3042 = vpack.c.b16 %v2818, %v2810
  %v3043 = vpack.c.b16 %v2819, %v2811
  %v3044 = vpack.c.b16 %v2820, %v2812
  %v3045 = vpack.c.b16 %v2821, %v2813
  %v3046 = vpack.c.b16 %v2822, %v2814
  %v3047 = vpack.c.b16 %v2823, %v2815
  %v3048 = vpack.c.b16 %v2832, %v2824
  %v3049 = vpack.c.b16 %v2833, %v2825
  %v3050 = vpack.c.b16 %v2834, %v2826
  %v3051 = vpack.c.b16 %v2835, %v2827
  %v3052 = vpack.c.b16 %v2836, %v2828
  %v3053 = vpack.c.b16 %v2837, %v2829
  %v3054 = vpack.c.b16 %v2838, %v2830
  %v3055 = vpack.c.b16 %v2839, %v2831
  %v3056 = vpack.c.b16 %v2848, %v2840
  %v3057 = vpack.c.b16 %v2849, %v2841
  %v3058 = vpack.c.b16 %v2850, %v2842
  %v3059 = vpack.c.b16 %v2851, %v2843
  %v3060 = vpack.c.b16 %v2852, %v2844
  %v3061 = vpack.c.b16 %v2853, %v2845
  %v3062 = vpack.c.b16 %v2854, %v2846
  %v3063 = vpack.c.b16 %v2855, %v2847
  %v3064 = vpack.c.b16 %v2864, %v2856
  %v3065 = vpack.c.b16 %v2865, %v2857
  %v3066 = vpack.c.b16 %v2866, %v2858
  %v3067 = vpack.c.b16 %v2867, %v2859
  %v3068 = vpack.c.b16 %v2868, %v2860
  %v3069 = vpack.c.b16 %v2869, %v2861
  %v3070 = vpack.c.b16 %v2870, %v2862
  %v3071 = vpack.c.b16 %v2871, %v2863
  %v3072 = vpack.c.b16 %v2880, %v2872
  %v3073 = vpack.c.b16 %v2881, %v2873
  %v3074 = vpack.c.b16 %v2882, %v2874
  %v3075 = vpack.c.b16 %v2883, %v2875
  %v3076 = vpack.c.b16 %v2884, %v2876
  %v3077 = vpack.c.b16 %v2885, %v2877
  %v3078 = vpack.c.b16 %v2886, %v2878
  %v3079 = vpack.c.b16 %v2887, %v2879
  %v3080 = vpack.c.b16 %v2896, %v2888
  %v3081 = vpack.c.b16 %v2897, %v2889
  %v3082 = vpack.c.b16 %v2898, %v2890
  %v3083 = vpack.c.b16 %v2899, %v2891
  %v3084 = vpack.c.b16 %v2900, %v2892
  %v3085 = vpack.c.b16 %v2901, %v2893
  %v3086 = vpack.c.b16 %v2902, %v2894
  %v3087 = vpack.c.b16 %v2903, %v2895
  %v3088 = vpack.c.b16 %v2912, %v2904
  %v3089 = vpack.c.b16 %v2913, %v2905
  %v3090 = vpack.c.b16 %v2914, %v2906
  %v3091 = vpack.c.b16 %v2915, %v2907
  %v3092 = vpack.c.b16 %v2916, %v2908
  %v3093 = vpack.c.b16 %v2917, %v2909
  %v3094 = vpack.c.b16 %v2918, %v2910
  %v3095 = vpack.c.b16 %v2919, %v2911
  %v3096 = vpack.c.b16 %v2928, %v2920
  %v3097 = vpack.c.b16 %v2929, %v2921
  %v3098 = vpack.c.b16 %v2930, %v2922
  %v3099 = vpack.c.b16 %v2931, %v2923
  %v3100 = vpack.c.b16 %v2932, %v2924
  %v3101 = vpack.c.b16 %v2933, %v2925
  %v3102 = vpack.c.b16 %v2934, %v2926
  %v3103 = vpack.c.b16 %v2935, %v2927
  %v3104 = vpack.c.b16 %v2944, %v2936
  %v3105 = vpack.c.b16 %v2945, %v2937
  %v3106 = vpack.c.b16 %v2946, %v2938
  %v3107 = vpack.c.b16 %v2947, %v2939
  %v3108 = vpack.c.b16 %v2948, %v2940
  %v3109 = vpack.c.b16 %v2949, %v2941
  %v3110 = vpack.c.b16 %v2950, %v2942
  %v3111 = vpack.c.b16 %v2951, %v2943
  %v3112 = vpack.c.b16 %v2960, %v2952
  %v3113 = vpack.c.b16 %v2961, %v2953
  %v3114 = vpack.c.b16 %v2962, %v2954
  %v3115 = vpack.c.b16 %v2963, %v2955
  %v3116 = vpack.c.b16 %v2964, %v2956
  %v3117 = vpack.c.b16 %v2965, %v2957
  %v3118 = vpack.c.b16 %v2966, %v2958
  %v3119 = vpack.c.b16 %v2967, %v2959
  %v3120 = vpack.c.b16 %v2976, %v2968
  %v3121 = vpack.c.b16 %v2977, %v2969
  %v3122 = vpack.c.b16 %v2978, %v2970
  %v3123 = vpack.c.b16 %v2979, %v2971
  %v3124 = vpack.c.b16 %v2980, %v2972
  %v3125 = vpack.c.b16 %v2981, %v2973
  %v3126 = vpack.c.b16 %v2982, %v2974
  %v3127 = vpack.c.b16 %v2983, %v2975
  %v3128 = vpack.c.b16 %v2992, %v2984
  %v3129 = vpack.c.b16 %v2993, %v2985
  %v3130 = vpack.c.b16 %v2994, %v2986
  %v3131 = vpack.c.b16 %v2995, %v2987
  %v3132 = vpack.c.b16 %v2996, %v2988
  %v3133 = vpack.c.b16 %v2997, %v2989
  %v3134 = vpack.c.b16 %v2998, %v2990
  %v3135 = vpack.c.b16 %v2999, %v2991
  %v3136 = vpack.c.b16 %v3008, %v3000
  %v3137 = vpack.c.b16 %v3009, %v3001
  %v3138 = vpack.c.b16 %v3010, %v3002
  %v3139 = vpack.c.b16 %v3011, %v3003
  %v3140 = vpack.c.b16 %v3012, %v3004
  %v3141 = vpack.c.b16 %v3013, %v3005
  %v3142 = vpack.c.b16 %v3014, %v3006
  %v3143 = vpack.c.b16 %v3015, %v3007
  %3272 = vmatprep.subr.bf16.mxu0 %v3017
  %3273 = vmatpush1.bf16.msra.mxu0 %v3016
  %3274 = vmatprep.subr.bf16.mxu0 %v3025
  %3275 = vmatpush1.bf16.msra.mxu0 %v3024
  %3276 = vmatprep.subr.bf16.mxu0 %v3033
  %3277 = vmatpush1.bf16.msra.mxu0 %v3032
  %3278 = vmatprep.subr.bf16.mxu0 %v3041
  %3279 = vmatpush1.bf16.msra.mxu0 %v3040
  %3280 = vmatprep.subr.bf16.mxu0 %v3049
  %3281 = vmatpush1.bf16.msra.mxu0 %v3048
  %3282 = vmatprep.subr.bf16.mxu0 %v3057
  %3283 = vmatpush1.bf16.msra.mxu0 %v3056
  %3284 = vmatprep.subr.bf16.mxu0 %v3065
  %3285 = vmatpush1.bf16.msra.mxu0 %v3064
  %3286 = vmatprep.subr.bf16.mxu0 %v3073
  %3287 = vmatpush1.bf16.msra.mxu0 %v3072
  %3288 = vmatprep.subr.bf16.mxu0 %v3081
  %3289 = vmatpush1.bf16.msra.mxu0 %v3080
  %3290 = vmatprep.subr.bf16.mxu0 %v3089
  %3291 = vmatpush1.bf16.msra.mxu0 %v3088
  %3292 = vmatprep.subr.bf16.mxu0 %v3097
  %3293 = vmatpush1.bf16.msra.mxu0 %v3096
  %3294 = vmatprep.subr.bf16.mxu0 %v3105
  %3295 = vmatpush1.bf16.msra.mxu0 %v3104
  %3296 = vmatprep.subr.bf16.mxu0 %v3113
  %3297 = vmatpush1.bf16.msra.mxu0 %v3112
  %3298 = vmatprep.subr.bf16.mxu0 %v3121
  %3299 = vmatpush1.bf16.msra.mxu0 %v3120
  %3300 = vmatprep.subr.bf16.mxu0 %v3129
  %3301 = vmatpush1.bf16.msra.mxu0 %v3128
  %3302 = vmatprep.subr.bf16.mxu0 %v3137
  %3303 = vmatpush1.bf16.msra.mxu0 %v3136
  %3304 = vmatprep.mubr.bf16.mxu0 %v2454
  %3305 = vmatmul.mubr.bf16.gmra.mrb[0].mxu0 %v2453
  %v3306 = vpop.f32.mrb[0].mxu0
  %v3307 = vadd.f32 %v2595, %v3306
  %v3308 = vpop.f32.mrb[0].mxu0
  %v3309 = vadd.f32 %v2599, %v3308
  %v3310 = vpop.f32.mrb[0].mxu0
  %v3311 = vadd.f32 %v2595, %v3310
  %v3312 = vpop.f32.mrb[0].mxu0
  %v3313 = vadd.f32 %v2599, %v3312
  %3314 = vmatprep.mubr.bf16.mxu0 %v2456
  %3315 = vmatmul.mubr.bf16.gmra.mrb[0].mxu0 %v2455
  %v3316 = vpop.f32.mrb[0].mxu0
  %v3317 = vadd.f32 %v2595, %v3316
  %v3318 = vpop.f32.mrb[0].mxu0
  %v3319 = vadd.f32 %v2599, %v3318
  %v3320 = vpop.f32.mrb[0].mxu0
  %v3321 = vadd.f32 %v2595, %v3320
  %v3322 = vpop.f32.mrb[0].mxu0
  %v3323 = vadd.f32 %v2599, %v3322
  %3324 = vmatprep.mubr.bf16.mxu0 %v2458
  %3325 = vmatmul.mubr.bf16.gmra.mrb[0].mxu0 %v2457
  %v3326 = vpop.f32.mrb[0].mxu0
  %v3327 = vadd.f32 %v2595, %v3326
  %v3328 = vpop.f32.mrb[0].mxu0
  %v3329 = vadd.f32 %v2599, %v3328
  %v3330 = vpop.f32.mrb[0].mxu0
  %v3331 = vadd.f32 %v2595, %v3330
  %v3332 = vpop.f32.mrb[0].mxu0
  %v3333 = vadd.f32 %v2599, %v3332
  %3334 = vmatprep.mubr.bf16.mxu0 %v2460
  %3335 = vmatmul.mubr.bf16.gmra.mrb[0].mxu0 %v2459
  %v3336 = vpop.f32.mrb[0].mxu0
  %v3337 = vadd.f32 %v2595, %v3336
  %v3338 = vpop.f32.mrb[0].mxu0
  %v3339 = vadd.f32 %v2599, %v3338
  %v3340 = vpop.f32.mrb[0].mxu0
  %v3341 = vadd.f32 %v2595, %v3340
  %v3342 = vpop.f32.mrb[0].mxu0
  %v3343 = vadd.f32 %v2599, %v3342
  %3344 = vdwg.mxu0
  %3345 = vmatprep.subr.bf16.mxu0 %v3019
  %3346 = vmatpush1.bf16.msra.mxu0 %v3018
  %3347 = vmatprep.subr.bf16.mxu0 %v3027
  %3348 = vmatpush1.bf16.msra.mxu0 %v3026
  %3349 = vmatprep.subr.bf16.mxu0 %v3035
  %3350 = vmatpush1.bf16.msra.mxu0 %v3034
  %3351 = vmatprep.subr.bf16.mxu0 %v3043
  %3352 = vmatpush1.bf16.msra.mxu0 %v3042
  %3353 = vmatprep.subr.bf16.mxu0 %v3051
  %3354 = vmatpush1.bf16.msra.mxu0 %v3050
  %3355 = vmatprep.subr.bf16.mxu0 %v3059
  %3356 = vmatpush1.bf16.msra.mxu0 %v3058
  %3357 = vmatprep.subr.bf16.mxu0 %v3067
  %3358 = vmatpush1.bf16.msra.mxu0 %v3066
  %3359 = vmatprep.subr.bf16.mxu0 %v3075
  %3360 = vmatpush1.bf16.msra.mxu0 %v3074
  %3361 = vmatprep.subr.bf16.mxu0 %v3083
  %3362 = vmatpush1.bf16.msra.mxu0 %v3082
  %3363 = vmatprep.subr.bf16.mxu0 %v3091
  %3364 = vmatpush1.bf16.msra.mxu0 %v3090
  %3365 = vmatprep.subr.bf16.mxu0 %v3099
  %3366 = vmatpush1.bf16.msra.mxu0 %v3098
  %3367 = vmatprep.subr.bf16.mxu0 %v3107
  %3368 = vmatpush1.bf16.msra.mxu0 %v3106
  %3369 = vmatprep.subr.bf16.mxu0 %v3115
  %3370 = vmatpush1.bf16.msra.mxu0 %v3114
  %3371 = vmatprep.subr.bf16.mxu0 %v3123
  %3372 = vmatpush1.bf16.msra.mxu0 %v3122
  %3373 = vmatprep.subr.bf16.mxu0 %v3131
  %3374 = vmatpush1.bf16.msra.mxu0 %v3130
  %3375 = vmatprep.subr.bf16.mxu0 %v3139
  %3376 = vmatpush1.bf16.msra.mxu0 %v3138
  %3377 = vmatprep.mubr.bf16.mxu0 %v2454
  %3378 = vmatmul.mubr.bf16.gmra.mrb[0].mxu0 %v2453
  %v3379 = vpop.f32.mrb[0].mxu0
  %v3380 = vadd.f32 %v2603, %v3379
  %v3381 = vpop.f32.mrb[0].mxu0
  %v3382 = vadd.f32 %v2607, %v3381
  %v3383 = vpop.f32.mrb[0].mxu0
  %v3384 = vadd.f32 %v2603, %v3383
  %v3385 = vpop.f32.mrb[0].mxu0
  %v3386 = vadd.f32 %v2607, %v3385
  %3387 = vmatprep.mubr.bf16.mxu0 %v2456
  %3388 = vmatmul.mubr.bf16.gmra.mrb[0].mxu0 %v2455
  %v3389 = vpop.f32.mrb[0].mxu0
  %v3390 = vadd.f32 %v2603, %v3389
  %v3391 = vpop.f32.mrb[0].mxu0
  %v3392 = vadd.f32 %v2607, %v3391
  %v3393 = vpop.f32.mrb[0].mxu0
  %v3394 = vadd.f32 %v2603, %v3393
  %v3395 = vpop.f32.mrb[0].mxu0
  %v3396 = vadd.f32 %v2607, %v3395
  %3397 = vmatprep.mubr.bf16.mxu0 %v2458
  %3398 = vmatmul.mubr.bf16.gmra.mrb[0].mxu0 %v2457
  %v3399 = vpop.f32.mrb[0].mxu0
  %v3400 = vadd.f32 %v2603, %v3399
  %v3401 = vpop.f32.mrb[0].mxu0
  %v3402 = vadd.f32 %v2607, %v3401
  %v3403 = vpop.f32.mrb[0].mxu0
  %v3404 = vadd.f32 %v2603, %v3403
  %v3405 = vpop.f32.mrb[0].mxu0
  %v3406 = vadd.f32 %v2607, %v3405
  %3407 = vmatprep.mubr.bf16.mxu0 %v2460
  %3408 = vmatmul.mubr.bf16.gmra.mrb[0].mxu0 %v2459
  %v3409 = vpop.f32.mrb[0].mxu0
  %v3410 = vadd.f32 %v2603, %v3409
  %v3411 = vpop.f32.mrb[0].mxu0
  %v3412 = vadd.f32 %v2607, %v3411
  %v3413 = vpop.f32.mrb[0].mxu0
  %v3414 = vadd.f32 %v2603, %v3413
  %v3415 = vpop.f32.mrb[0].mxu0
  %v3416 = vadd.f32 %v2607, %v3415
  %3417 = vdwg.mxu0
  %3418 = vmatprep.subr.bf16.mxu0 %v3021
  %3419 = vmatpush1.bf16.msra.mxu0 %v3020
  %3420 = vmatprep.subr.bf16.mxu0 %v3029
  %3421 = vmatpush1.bf16.msra.mxu0 %v3028
  %3422 = vmatprep.subr.bf16.mxu0 %v3037
  %3423 = vmatpush1.bf16.msra.mxu0 %v3036
  %3424 = vmatprep.subr.bf16.mxu0 %v3045
  %3425 = vmatpush1.bf16.msra.mxu0 %v3044
  %3426 = vmatprep.subr.bf16.mxu0 %v3053
  %3427 = vmatpush1.bf16.msra.mxu0 %v3052
  %3428 = vmatprep.subr.bf16.mxu0 %v3061
  %3429 = vmatpush1.bf16.msra.mxu0 %v3060
  %3430 = vmatprep.subr.bf16.mxu0 %v3069
  %3431 = vmatpush1.bf16.msra.mxu0 %v3068
  %3432 = vmatprep.subr.bf16.mxu0 %v3077
  %3433 = vmatpush1.bf16.msra.mxu0 %v3076
  %3434 = vmatprep.subr.bf16.mxu0 %v3085
  %3435 = vmatpush1.bf16.msra.mxu0 %v3084
  %3436 = vmatprep.subr.bf16.mxu0 %v3093
  %3437 = vmatpush1.bf16.msra.mxu0 %v3092
  %3438 = vmatprep.subr.bf16.mxu0 %v3101
  %3439 = vmatpush1.bf16.msra.mxu0 %v3100
  %3440 = vmatprep.subr.bf16.mxu0 %v3109
  %3441 = vmatpush1.bf16.msra.mxu0 %v3108
  %3442 = vmatprep.subr.bf16.mxu0 %v3117
  %3443 = vmatpush1.bf16.msra.mxu0 %v3116
  %3444 = vmatprep.subr.bf16.mxu0 %v3125
  %3445 = vmatpush1.bf16.msra.mxu0 %v3124
  %3446 = vmatprep.subr.bf16.mxu0 %v3133
  %3447 = vmatpush1.bf16.msra.mxu0 %v3132
  %3448 = vmatprep.subr.bf16.mxu0 %v3141
  %3449 = vmatpush1.bf16.msra.mxu0 %v3140
  %3450 = vmatprep.mubr.bf16.mxu0 %v2454
  %3451 = vmatmul.mubr.bf16.gmra.mrb[0].mxu0 %v2453
  %v3452 = vpop.f32.mrb[0].mxu0
  %v3453 = vadd.f32 %v2611, %v3452
  %v3454 = vpop.f32.mrb[0].mxu0
  %v3455 = vadd.f32 %v2615, %v3454
  %v3456 = vpop.f32.mrb[0].mxu0
  %v3457 = vadd.f32 %v2611, %v3456
  %v3458 = vpop.f32.mrb[0].mxu0
  %v3459 = vadd.f32 %v2615, %v3458
  %3460 = vmatprep.mubr.bf16.mxu0 %v2456
  %3461 = vmatmul.mubr.bf16.gmra.mrb[0].mxu0 %v2455
  %v3462 = vpop.f32.mrb[0].mxu0
  %v3463 = vadd.f32 %v2611, %v3462
  %v3464 = vpop.f32.mrb[0].mxu0
  %v3465 = vadd.f32 %v2615, %v3464
  %v3466 = vpop.f32.mrb[0].mxu0
  %v3467 = vadd.f32 %v2611, %v3466
  %v3468 = vpop.f32.mrb[0].mxu0
  %v3469 = vadd.f32 %v2615, %v3468
  %3470 = vmatprep.mubr.bf16.mxu0 %v2458
  %3471 = vmatmul.mubr.bf16.gmra.mrb[0].mxu0 %v2457
  %v3472 = vpop.f32.mrb[0].mxu0
  %v3473 = vadd.f32 %v2611, %v3472
  %v3474 = vpop.f32.mrb[0].mxu0
  %v3475 = vadd.f32 %v2615, %v3474
  %v3476 = vpop.f32.mrb[0].mxu0
  %v3477 = vadd.f32 %v2611, %v3476
  %v3478 = vpop.f32.mrb[0].mxu0
  %v3479 = vadd.f32 %v2615, %v3478
  %3480 = vmatprep.mubr.bf16.mxu0 %v2460
  %3481 = vmatmul.mubr.bf16.gmra.mrb[0].mxu0 %v2459
  %v3482 = vpop.f32.mrb[0].mxu0
  %v3483 = vadd.f32 %v2611, %v3482
  %v3484 = vpop.f32.mrb[0].mxu0
  %v3485 = vadd.f32 %v2615, %v3484
  %v3486 = vpop.f32.mrb[0].mxu0
  %v3487 = vadd.f32 %v2611, %v3486
  %v3488 = vpop.f32.mrb[0].mxu0
  %v3489 = vadd.f32 %v2615, %v3488
  %3490 = vdwg.mxu0
  %3491 = vmatprep.subr.bf16.mxu0 %v3023
  %3492 = vmatpush1.bf16.msra.mxu0 %v3022
  %3493 = vmatprep.subr.bf16.mxu0 %v3031
  %3494 = vmatpush1.bf16.msra.mxu0 %v3030
  %3495 = vmatprep.subr.bf16.mxu0 %v3039
  %3496 = vmatpush1.bf16.msra.mxu0 %v3038
  %3497 = vmatprep.subr.bf16.mxu0 %v3047
  %3498 = vmatpush1.bf16.msra.mxu0 %v3046
  %3499 = vmatprep.subr.bf16.mxu0 %v3055
  %3500 = vmatpush1.bf16.msra.mxu0 %v3054
  %3501 = vmatprep.subr.bf16.mxu0 %v3063
  %3502 = vmatpush1.bf16.msra.mxu0 %v3062
  %3503 = vmatprep.subr.bf16.mxu0 %v3071
  %3504 = vmatpush1.bf16.msra.mxu0 %v3070
  %3505 = vmatprep.subr.bf16.mxu0 %v3079
  %3506 = vmatpush1.bf16.msra.mxu0 %v3078
  %3507 = vmatprep.subr.bf16.mxu0 %v3087
  %3508 = vmatpush1.bf16.msra.mxu0 %v3086
  %3509 = vmatprep.subr.bf16.mxu0 %v3095
  %3510 = vmatpush1.bf16.msra.mxu0 %v3094
  %3511 = vmatprep.subr.bf16.mxu0 %v3103
  %3512 = vmatpush1.bf16.msra.mxu0 %v3102
  %3513 = vmatprep.subr.bf16.mxu0 %v3111
  %3514 = vmatpush1.bf16.msra.mxu0 %v3110
  %3515 = vmatprep.subr.bf16.mxu0 %v3119
  %3516 = vmatpush1.bf16.msra.mxu0 %v3118
  %3517 = vmatprep.subr.bf16.mxu0 %v3127
  %3518 = vmatpush1.bf16.msra.mxu0 %v3126
  %3519 = vmatprep.subr.bf16.mxu0 %v3135
  %3520 = vmatpush1.bf16.msra.mxu0 %v3134
  %3521 = vmatprep.subr.bf16.mxu0 %v3143
  %3522 = vmatpush1.bf16.msra.mxu0 %v3142
  %3523 = vmatprep.mubr.bf16.mxu0 %v2454
  %3524 = vmatmul.mubr.bf16.gmra.mrb[0].mxu0 %v2453
  %v3525 = vpop.f32.mrb[0].mxu0
  %v3526 = vadd.f32 %v2619, %v3525
  %v3527 = vpop.f32.mrb[0].mxu0
  %v3528 = vadd.f32 %v2623, %v3527
  %v3529 = vpop.f32.mrb[0].mxu0
  %v3530 = vadd.f32 %v2619, %v3529
  %v3531 = vpop.f32.mrb[0].mxu0
  %v3532 = vadd.f32 %v2623, %v3531
  %3533 = vmatprep.mubr.bf16.mxu0 %v2456
  %3534 = vmatmul.mubr.bf16.gmra.mrb[0].mxu0 %v2455
  %v3535 = vpop.f32.mrb[0].mxu0
  %v3536 = vadd.f32 %v2619, %v3535
  %v3537 = vpop.f32.mrb[0].mxu0
  %v3538 = vadd.f32 %v2623, %v3537
  %v3539 = vpop.f32.mrb[0].mxu0
  %v3540 = vadd.f32 %v2619, %v3539
  %v3541 = vpop.f32.mrb[0].mxu0
  %v3542 = vadd.f32 %v2623, %v3541
  %3543 = vmatprep.mubr.bf16.mxu0 %v2458
  %3544 = vmatmul.mubr.bf16.gmra.mrb[0].mxu0 %v2457
  %v3545 = vpop.f32.mrb[0].mxu0
  %v3546 = vadd.f32 %v2619, %v3545
  %v3547 = vpop.f32.mrb[0].mxu0
  %v3548 = vadd.f32 %v2623, %v3547
  %v3549 = vpop.f32.mrb[0].mxu0
  %v3550 = vadd.f32 %v2619, %v3549
  %v3551 = vpop.f32.mrb[0].mxu0
  %v3552 = vadd.f32 %v2623, %v3551
  %3553 = vmatprep.mubr.bf16.mxu0 %v2460
  %3554 = vmatmul.mubr.bf16.gmra.mrb[0].mxu0 %v2459
  %v3555 = vpop.f32.mrb[0].mxu0
  %v3556 = vadd.f32 %v2619, %v3555
  %v3557 = vpop.f32.mrb[0].mxu0
  %v3558 = vadd.f32 %v2623, %v3557
  %v3559 = vpop.f32.mrb[0].mxu0
  %v3560 = vadd.f32 %v2619, %v3559
  %v3561 = vpop.f32.mrb[0].mxu0
  %v3562 = vadd.f32 %v2623, %v3561
  %3563 = vdwg.mxu0
  %3564 = vst [vmem:[#allocation3] sm:$0xff] %v3307
  %3565 = vst [vmem:[#allocation3 + $0x8] sm:$0xff] %v3309
  %3566 = vst [vmem:[#allocation3 + $0x10] sm:$0xff] %v3380
  %3567 = vst [vmem:[#allocation3 + $0x18] sm:$0xff] %v3382
  %3568 = vst [vmem:[#allocation3 + $0x20] sm:$0xff] %v3487
  %3569 = vst [vmem:[#allocation3 + $0x28] sm:$0xff] %v3489
  %3570 = vst [vmem:[#allocation3 + $0x30] sm:$0xff] %v3560
  %3571 = vst [vmem:[#allocation3 + $0x38] sm:$0xff] %v3562
  %3572 = vst [vmem:[%s811] sm:$0xff] %v3311
  %3573 = vst [vmem:[%s811 + $0x8] sm:$0xff] %v3313
  %3574 = vst [vmem:[%s811 + $0x10] sm:$0xff] %v3384
  %3575 = vst [vmem:[%s811 + $0x18] sm:$0xff] %v3386
  %3576 = vst [vmem:[%s811 + $0x20] sm:$0xff] %v3483
  %3577 = vst [vmem:[%s811 + $0x28] sm:$0xff] %v3485
  %3578 = vst [vmem:[%s811 + $0x30] sm:$0xff] %v3556
  %3579 = vst [vmem:[%s811 + $0x38] sm:$0xff] %v3558
  %3580 = vst [vmem:[%s820] sm:$0xff] %v3317
  %3581 = vst [vmem:[%s820 + $0x8] sm:$0xff] %v3319
  %3582 = vst [vmem:[%s820 + $0x10] sm:$0xff] %v3390
  %3583 = vst [vmem:[%s820 + $0x18] sm:$0xff] %v3392
  %3584 = vst [vmem:[%s820 + $0x20] sm:$0xff] %v3477
  %3585 = vst [vmem:[%s820 + $0x28] sm:$0xff] %v3479
  %3586 = vst [vmem:[%s820 + $0x30] sm:$0xff] %v3550
  %3587 = vst [vmem:[%s820 + $0x38] sm:$0xff] %v3552
  %3588 = vst [vmem:[%s829] sm:$0xff] %v3321
  %3589 = vst [vmem:[%s829 + $0x8] sm:$0xff] %v3323
  %3590 = vst [vmem:[%s829 + $0x10] sm:$0xff] %v3394
  %3591 = vst [vmem:[%s829 + $0x18] sm:$0xff] %v3396
  %3592 = vst [vmem:[%s829 + $0x20] sm:$0xff] %v3473
  %3593 = vst [vmem:[%s829 + $0x28] sm:$0xff] %v3475
  %3594 = vst [vmem:[%s829 + $0x30] sm:$0xff] %v3546
  %3595 = vst [vmem:[%s829 + $0x38] sm:$0xff] %v3548
  %3596 = vst [vmem:[%s838] sm:$0xff] %v3327
  %3597 = vst [vmem:[%s838 + $0x8] sm:$0xff] %v3329
  %3598 = vst [vmem:[%s838 + $0x10] sm:$0xff] %v3400
  %3599 = vst [vmem:[%s838 + $0x18] sm:$0xff] %v3402
  %3600 = vst [vmem:[%s838 + $0x20] sm:$0xff] %v3467
  %3601 = vst [vmem:[%s838 + $0x28] sm:$0xff] %v3469
  %3602 = vst [vmem:[%s838 + $0x30] sm:$0xff] %v3540
  %3603 = vst [vmem:[%s838 + $0x38] sm:$0xff] %v3542
  %3604 = vst [vmem:[%s847] sm:$0xff] %v3331
  %3605 = vst [vmem:[%s847 + $0x8] sm:$0xff] %v3333
  %3606 = vst [vmem:[%s847 + $0x10] sm:$0xff] %v3404
  %3607 = vst [vmem:[%s847 + $0x18] sm:$0xff] %v3406
  %3608 = vst [vmem:[%s847 + $0x20] sm:$0xff] %v3463
  %3609 = vst [vmem:[%s847 + $0x28] sm:$0xff] %v3465
  %3610 = vst [vmem:[%s847 + $0x30] sm:$0xff] %v3536
  %3611 = vst [vmem:[%s847 + $0x38] sm:$0xff] %v3538
  %3612 = vst [vmem:[%s856] sm:$0xff] %v3337
  %3613 = vst [vmem:[%s856 + $0x8] sm:$0xff] %v3339
  %3614 = vst [vmem:[%s856 + $0x10] sm:$0xff] %v3410
  %3615 = vst [vmem:[%s856 + $0x18] sm:$0xff] %v3412
  %3616 = vst [vmem:[%s856 + $0x20] sm:$0xff] %v3457
  %3617 = vst [vmem:[%s856 + $0x28] sm:$0xff] %v3459
  %3618 = vst [vmem:[%s856 + $0x30] sm:$0xff] %v3530
  %3619 = vst [vmem:[%s856 + $0x38] sm:$0xff] %v3532
  %3620 = vst [vmem:[%s865] sm:$0xff] %v3341
  %3621 = vst [vmem:[%s865 + $0x8] sm:$0xff] %v3343
  %3622 = vst [vmem:[%s865 + $0x10] sm:$0xff] %v3414
  %3623 = vst [vmem:[%s865 + $0x18] sm:$0xff] %v3416
  %3624 = vst [vmem:[%s865 + $0x20] sm:$0xff] %v3453
  %3625 = vst [vmem:[%s865 + $0x28] sm:$0xff] %v3455
  %3626 = vst [vmem:[%s865 + $0x30] sm:$0xff] %v3526
  %3627 = vst [vmem:[%s865 + $0x38] sm:$0xff] %v3528
  %s3628 = scalar_lea.vmem %s5, 512
  %v3629 = vld [vmem:[%s3628] sm:$0xff]
  %v3630 = vld [vmem:[%s3628 + $0x8] sm:$0xff]
  %v3631 = vld [vmem:[%s3628 + $0x10] sm:$0xff]
  %v3632 = vld [vmem:[%s3628 + $0x18] sm:$0xff]
  %v3633 = vld [vmem:[%s3628 + $0x20] sm:$0xff]
  %v3634 = vld [vmem:[%s3628 + $0x28] sm:$0xff]
  %v3635 = vld [vmem:[%s3628 + $0x30] sm:$0xff]
  %v3636 = vld [vmem:[%s3628 + $0x38] sm:$0xff]
  %v3637 = vld [vmem:[%s3628 + $0x40] sm:$0xff]
  %v3638 = vld [vmem:[%s3628 + $0x48] sm:$0xff]
  %v3639 = vld [vmem:[%s3628 + $0x50] sm:$0xff]
  %v3640 = vld [vmem:[%s3628 + $0x58] sm:$0xff]
  %v3641 = vld [vmem:[%s3628 + $0x60] sm:$0xff]
  %v3642 = vld [vmem:[%s3628 + $0x68] sm:$0xff]
  %v3643 = vld [vmem:[%s3628 + $0x70] sm:$0xff]
  %v3644 = vld [vmem:[%s3628 + $0x78] sm:$0xff]
  %v3645 = vld [vmem:[%s3628 + $0x80] sm:$0xff]
  %v3646 = vld [vmem:[%s3628 + $0x88] sm:$0xff]
  %v3647 = vld [vmem:[%s3628 + $0x90] sm:$0xff]
  %v3648 = vld [vmem:[%s3628 + $0x98] sm:$0xff]
  %v3649 = vld [vmem:[%s3628 + $0xa0] sm:$0xff]
  %v3650 = vld [vmem:[%s3628 + $0xa8] sm:$0xff]
  %v3651 = vld [vmem:[%s3628 + $0xb0] sm:$0xff]
  %v3652 = vld [vmem:[%s3628 + $0xb8] sm:$0xff]
  %v3653 = vld [vmem:[%s3628 + $0xc0] sm:$0xff]
  %v3654 = vld [vmem:[%s3628 + $0xc8] sm:$0xff]
  %v3655 = vld [vmem:[%s3628 + $0xd0] sm:$0xff]
  %v3656 = vld [vmem:[%s3628 + $0xd8] sm:$0xff]
  %v3657 = vld [vmem:[%s3628 + $0xe0] sm:$0xff]
  %v3658 = vld [vmem:[%s3628 + $0xe8] sm:$0xff]
  %v3659 = vld [vmem:[%s3628 + $0xf0] sm:$0xff]
  %v3660 = vld [vmem:[%s3628 + $0xf8] sm:$0xff]
  %v3661 = vld [vmem:[%s3628 + $0x100] sm:$0xff]
  %v3662 = vld [vmem:[%s3628 + $0x108] sm:$0xff]
  %v3663 = vld [vmem:[%s3628 + $0x110] sm:$0xff]
  %v3664 = vld [vmem:[%s3628 + $0x118] sm:$0xff]
  %v3665 = vld [vmem:[%s3628 + $0x120] sm:$0xff]
  %v3666 = vld [vmem:[%s3628 + $0x128] sm:$0xff]
  %v3667 = vld [vmem:[%s3628 + $0x130] sm:$0xff]
  %v3668 = vld [vmem:[%s3628 + $0x138] sm:$0xff]
  %v3669 = vld [vmem:[%s3628 + $0x140] sm:$0xff]
  %v3670 = vld [vmem:[%s3628 + $0x148] sm:$0xff]
  %v3671 = vld [vmem:[%s3628 + $0x150] sm:$0xff]
  %v3672 = vld [vmem:[%s3628 + $0x158] sm:$0xff]
  %v3673 = vld [vmem:[%s3628 + $0x160] sm:$0xff]
  %v3674 = vld [vmem:[%s3628 + $0x168] sm:$0xff]
  %v3675 = vld [vmem:[%s3628 + $0x170] sm:$0xff]
  %v3676 = vld [vmem:[%s3628 + $0x178] sm:$0xff]
  %v3677 = vld [vmem:[%s3628 + $0x180] sm:$0xff]
  %v3678 = vld [vmem:[%s3628 + $0x188] sm:$0xff]
  %v3679 = vld [vmem:[%s3628 + $0x190] sm:$0xff]
  %v3680 = vld [vmem:[%s3628 + $0x198] sm:$0xff]
  %v3681 = vld [vmem:[%s3628 + $0x1a0] sm:$0xff]
  %v3682 = vld [vmem:[%s3628 + $0x1a8] sm:$0xff]
  %v3683 = vld [vmem:[%s3628 + $0x1b0] sm:$0xff]
  %v3684 = vld [vmem:[%s3628 + $0x1b8] sm:$0xff]
  %v3685 = vld [vmem:[%s3628 + $0x1c0] sm:$0xff]
  %v3686 = vld [vmem:[%s3628 + $0x1c8] sm:$0xff]
  %v3687 = vld [vmem:[%s3628 + $0x1d0] sm:$0xff]
  %v3688 = vld [vmem:[%s3628 + $0x1d8] sm:$0xff]
  %v3689 = vld [vmem:[%s3628 + $0x1e0] sm:$0xff]
  %v3690 = vld [vmem:[%s3628 + $0x1e8] sm:$0xff]
  %v3691 = vld [vmem:[%s3628 + $0x1f0] sm:$0xff]
  %v3692 = vld [vmem:[%s3628 + $0x1f8] sm:$0xff]
  %s3693 = scalar_lea.vmem %s1, 16
  %v3694 = vld [vmem:[%s3693] sm:$0xff]
  %v3695 = vld [vmem:[%s3693 + $0x8] sm:$0xff]
  %v3696 = vsel %vm49, %v3694, 0.0
  %v3697 = vsel %vm50, %v3694, 0.0
  %v3698 = vsel %vm51, %v3695, 0.0
  %v3699 = vsel %vm52, %v3695, 0.0
  %v3700 = vpack.c.bf16 %v3698, %v3696
  %v3701 = vpack.c.bf16 %v3699, %v3697
  %s3702 = scalar_lea.vmem %s2, 16
  %v3703 = vld [vmem:[%s3702] sm:$0xff]
  %v3704 = vld [vmem:[%s3702 + $0x8] sm:$0xff]
  %v3705 = vld [vmem:[#allocation3] sm:$0xff]
  %v3706 = vld [vmem:[#allocation3 + $0x8] sm:$0xff]
  %v3707 = vld [vmem:[#allocation3 + $0x10] sm:$0xff]
  %v3708 = vld [vmem:[#allocation3 + $0x18] sm:$0xff]
  %v3709 = vld [vmem:[#allocation3 + $0x20] sm:$0xff]
  %v3710 = vld [vmem:[#allocation3 + $0x28] sm:$0xff]
  %v3711 = vld [vmem:[#allocation3 + $0x30] sm:$0xff]
  %v3712 = vld [vmem:[#allocation3 + $0x38] sm:$0xff]
  %v3777 = vunpack.c.l.b16 %v3629
  %v3778 = vunpack.c.h.b16 %v3629
  %v3779 = vunpack.c.l.b16 %v3630
  %v3780 = vunpack.c.h.b16 %v3630
  %v3781 = vunpack.c.l.b16 %v3631
  %v3782 = vunpack.c.h.b16 %v3631
  %v3783 = vunpack.c.l.b16 %v3632
  %v3784 = vunpack.c.h.b16 %v3632
  %v3785 = vunpack.c.l.b16 %v3633
  %v3786 = vunpack.c.h.b16 %v3633
  %v3787 = vunpack.c.l.b16 %v3634
  %v3788 = vunpack.c.h.b16 %v3634
  %v3789 = vunpack.c.l.b16 %v3635
  %v3790 = vunpack.c.h.b16 %v3635
  %v3791 = vunpack.c.l.b16 %v3636
  %v3792 = vunpack.c.h.b16 %v3636
  %v3793 = vunpack.c.l.b16 %v3637
  %v3794 = vunpack.c.h.b16 %v3637
  %v3795 = vunpack.c.l.b16 %v3638
  %v3796 = vunpack.c.h.b16 %v3638
  %v3797 = vunpack.c.l.b16 %v3639
  %v3798 = vunpack.c.h.b16 %v3639
  %v3799 = vunpack.c.l.b16 %v3640
  %v3800 = vunpack.c.h.b16 %v3640
  %v3801 = vunpack.c.l.b16 %v3641
  %v3802 = vunpack.c.h.b16 %v3641
  %v3803 = vunpack.c.l.b16 %v3642
  %v3804 = vunpack.c.h.b16 %v3642
  %v3805 = vunpack.c.l.b16 %v3643
  %v3806 = vunpack.c.h.b16 %v3643
  %v3807 = vunpack.c.l.b16 %v3644
  %v3808 = vunpack.c.h.b16 %v3644
  %v3809 = vunpack.c.l.b16 %v3645
  %v3810 = vunpack.c.h.b16 %v3645
  %v3811 = vunpack.c.l.b16 %v3646
  %v3812 = vunpack.c.h.b16 %v3646
  %v3813 = vunpack.c.l.b16 %v3647
  %v3814 = vunpack.c.h.b16 %v3647
  %v3815 = vunpack.c.l.b16 %v3648
  %v3816 = vunpack.c.h.b16 %v3648
  %v3817 = vunpack.c.l.b16 %v3649
  %v3818 = vunpack.c.h.b16 %v3649
  %v3819 = vunpack.c.l.b16 %v3650
  %v3820 = vunpack.c.h.b16 %v3650
  %v3821 = vunpack.c.l.b16 %v3651
  %v3822 = vunpack.c.h.b16 %v3651
  %v3823 = vunpack.c.l.b16 %v3652
  %v3824 = vunpack.c.h.b16 %v3652
  %v3825 = vunpack.c.l.b16 %v3653
  %v3826 = vunpack.c.h.b16 %v3653
  %v3827 = vunpack.c.l.b16 %v3654
  %v3828 = vunpack.c.h.b16 %v3654
  %v3829 = vunpack.c.l.b16 %v3655
  %v3830 = vunpack.c.h.b16 %v3655
  %v3831 = vunpack.c.l.b16 %v3656
  %v3832 = vunpack.c.h.b16 %v3656
  %v3833 = vunpack.c.l.b16 %v3657
  %v3834 = vunpack.c.h.b16 %v3657
  %v3835 = vunpack.c.l.b16 %v3658
  %v3836 = vunpack.c.h.b16 %v3658
  %v3837 = vunpack.c.l.b16 %v3659
  %v3838 = vunpack.c.h.b16 %v3659
  %v3839 = vunpack.c.l.b16 %v3660
  %v3840 = vunpack.c.h.b16 %v3660
  %v3841 = vunpack.c.l.b16 %v3661
  %v3842 = vunpack.c.h.b16 %v3661
  %v3843 = vunpack.c.l.b16 %v3662
  %v3844 = vunpack.c.h.b16 %v3662
  %v3845 = vunpack.c.l.b16 %v3663
  %v3846 = vunpack.c.h.b16 %v3663
  %v3847 = vunpack.c.l.b16 %v3664
  %v3848 = vunpack.c.h.b16 %v3664
  %v3849 = vunpack.c.l.b16 %v3665
  %v3850 = vunpack.c.h.b16 %v3665
  %v3851 = vunpack.c.l.b16 %v3666
  %v3852 = vunpack.c.h.b16 %v3666
  %v3853 = vunpack.c.l.b16 %v3667
  %v3854 = vunpack.c.h.b16 %v3667
  %v3855 = vunpack.c.l.b16 %v3668
  %v3856 = vunpack.c.h.b16 %v3668
  %v3857 = vunpack.c.l.b16 %v3669
  %v3858 = vunpack.c.h.b16 %v3669
  %v3859 = vunpack.c.l.b16 %v3670
  %v3860 = vunpack.c.h.b16 %v3670
  %v3861 = vunpack.c.l.b16 %v3671
  %v3862 = vunpack.c.h.b16 %v3671
  %v3863 = vunpack.c.l.b16 %v3672
  %v3864 = vunpack.c.h.b16 %v3672
  %v3865 = vunpack.c.l.b16 %v3673
  %v3866 = vunpack.c.h.b16 %v3673
  %v3867 = vunpack.c.l.b16 %v3674
  %v3868 = vunpack.c.h.b16 %v3674
  %v3869 = vunpack.c.l.b16 %v3675
  %v3870 = vunpack.c.h.b16 %v3675
  %v3871 = vunpack.c.l.b16 %v3676
  %v3872 = vunpack.c.h.b16 %v3676
  %v3873 = vunpack.c.l.b16 %v3677
  %v3874 = vunpack.c.h.b16 %v3677
  %v3875 = vunpack.c.l.b16 %v3678
  %v3876 = vunpack.c.h.b16 %v3678
  %v3877 = vunpack.c.l.b16 %v3679
  %v3878 = vunpack.c.h.b16 %v3679
  %v3879 = vunpack.c.l.b16 %v3680
  %v3880 = vunpack.c.h.b16 %v3680
  %v3881 = vunpack.c.l.b16 %v3681
  %v3882 = vunpack.c.h.b16 %v3681
  %v3883 = vunpack.c.l.b16 %v3682
  %v3884 = vunpack.c.h.b16 %v3682
  %v3885 = vunpack.c.l.b16 %v3683
  %v3886 = vunpack.c.h.b16 %v3683
  %v3887 = vunpack.c.l.b16 %v3684
  %v3888 = vunpack.c.h.b16 %v3684
  %v3889 = vunpack.c.l.b16 %v3685
  %v3890 = vunpack.c.h.b16 %v3685
  %v3891 = vunpack.c.l.b16 %v3686
  %v3892 = vunpack.c.h.b16 %v3686
  %v3893 = vunpack.c.l.b16 %v3687
  %v3894 = vunpack.c.h.b16 %v3687
  %v3895 = vunpack.c.l.b16 %v3688
  %v3896 = vunpack.c.h.b16 %v3688
  %v3897 = vunpack.c.l.b16 %v3689
  %v3898 = vunpack.c.h.b16 %v3689
  %v3899 = vunpack.c.l.b16 %v3690
  %v3900 = vunpack.c.h.b16 %v3690
  %v3901 = vunpack.c.l.b16 %v3691
  %v3902 = vunpack.c.h.b16 %v3691
  %v3903 = vunpack.c.l.b16 %v3692
  %v3904 = vunpack.c.h.b16 %v3692
  %v3905 = vpack.c.b16 %v3781, %v3777
  %v3906 = vpack.c.b16 %v3782, %v3778
  %v3907 = vpack.c.b16 %v3783, %v3779
  %v3908 = vpack.c.b16 %v3784, %v3780
  %v3909 = vpack.c.b16 %v3789, %v3785
  %v3910 = vpack.c.b16 %v3790, %v3786
  %v3911 = vpack.c.b16 %v3791, %v3787
  %v3912 = vpack.c.b16 %v3792, %v3788
  %v3913 = vpack.c.b16 %v3797, %v3793
  %v3914 = vpack.c.b16 %v3798, %v3794
  %v3915 = vpack.c.b16 %v3799, %v3795
  %v3916 = vpack.c.b16 %v3800, %v3796
  %v3917 = vpack.c.b16 %v3805, %v3801
  %v3918 = vpack.c.b16 %v3806, %v3802
  %v3919 = vpack.c.b16 %v3807, %v3803
  %v3920 = vpack.c.b16 %v3808, %v3804
  %v3921 = vpack.c.b16 %v3813, %v3809
  %v3922 = vpack.c.b16 %v3814, %v3810
  %v3923 = vpack.c.b16 %v3815, %v3811
  %v3924 = vpack.c.b16 %v3816, %v3812
  %v3925 = vpack.c.b16 %v3821, %v3817
  %v3926 = vpack.c.b16 %v3822, %v3818
  %v3927 = vpack.c.b16 %v3823, %v3819
  %v3928 = vpack.c.b16 %v3824, %v3820
  %v3929 = vpack.c.b16 %v3829, %v3825
  %v3930 = vpack.c.b16 %v3830, %v3826
  %v3931 = vpack.c.b16 %v3831, %v3827
  %v3932 = vpack.c.b16 %v3832, %v3828
  %v3933 = vpack.c.b16 %v3837, %v3833
  %v3934 = vpack.c.b16 %v3838, %v3834
  %v3935 = vpack.c.b16 %v3839, %v3835
  %v3936 = vpack.c.b16 %v3840, %v3836
  %v3937 = vpack.c.b16 %v3845, %v3841
  %v3938 = vpack.c.b16 %v3846, %v3842
  %v3939 = vpack.c.b16 %v3847, %v3843
  %v3940 = vpack.c.b16 %v3848, %v3844
  %v3941 = vpack.c.b16 %v3853, %v3849
  %v3942 = vpack.c.b16 %v3854, %v3850
  %v3943 = vpack.c.b16 %v3855, %v3851
  %v3944 = vpack.c.b16 %v3856, %v3852
  %v3945 = vpack.c.b16 %v3861, %v3857
  %v3946 = vpack.c.b16 %v3862, %v3858
  %v3947 = vpack.c.b16 %v3863, %v3859
  %v3948 = vpack.c.b16 %v3864, %v3860
  %v3949 = vpack.c.b16 %v3869, %v3865
  %v3950 = vpack.c.b16 %v3870, %v3866
  %v3951 = vpack.c.b16 %v3871, %v3867
  %v3952 = vpack.c.b16 %v3872, %v3868
  %v3953 = vpack.c.b16 %v3877, %v3873
  %v3954 = vpack.c.b16 %v3878, %v3874
  %v3955 = vpack.c.b16 %v3879, %v3875
  %v3956 = vpack.c.b16 %v3880, %v3876
  %v3957 = vpack.c.b16 %v3885, %v3881
  %v3958 = vpack.c.b16 %v3886, %v3882
  %v3959 = vpack.c.b16 %v3887, %v3883
  %v3960 = vpack.c.b16 %v3888, %v3884
  %v3961 = vpack.c.b16 %v3893, %v3889
  %v3962 = vpack.c.b16 %v3894, %v3890
  %v3963 = vpack.c.b16 %v3895, %v3891
  %v3964 = vpack.c.b16 %v3896, %v3892
  %v3965 = vpack.c.b16 %v3901, %v3897
  %v3966 = vpack.c.b16 %v3902, %v3898
  %v3967 = vpack.c.b16 %v3903, %v3899
  %v3968 = vpack.c.b16 %v3904, %v3900
  %4033 = vmatprep.subr.bf16.mxu0 %v3906
  %4034 = vmatpush1.bf16.msra.mxu0 %v3905
  %4035 = vmatprep.subr.bf16.mxu0 %v3910
  %4036 = vmatpush1.bf16.msra.mxu0 %v3909
  %4037 = vmatprep.subr.bf16.mxu0 %v3914
  %4038 = vmatpush1.bf16.msra.mxu0 %v3913
  %4039 = vmatprep.subr.bf16.mxu0 %v3918
  %4040 = vmatpush1.bf16.msra.mxu0 %v3917
  %4041 = vmatprep.subr.bf16.mxu0 %v3922
  %4042 = vmatpush1.bf16.msra.mxu0 %v3921
  %4043 = vmatprep.subr.bf16.mxu0 %v3926
  %4044 = vmatpush1.bf16.msra.mxu0 %v3925
  %4045 = vmatprep.subr.bf16.mxu0 %v3930
  %4046 = vmatpush1.bf16.msra.mxu0 %v3929
  %4047 = vmatprep.subr.bf16.mxu0 %v3934
  %4048 = vmatpush1.bf16.msra.mxu0 %v3933
  %4049 = vmatprep.subr.bf16.mxu0 %v3938
  %4050 = vmatpush1.bf16.msra.mxu0 %v3937
  %4051 = vmatprep.subr.bf16.mxu0 %v3942
  %4052 = vmatpush1.bf16.msra.mxu0 %v3941
  %4053 = vmatprep.subr.bf16.mxu0 %v3946
  %4054 = vmatpush1.bf16.msra.mxu0 %v3945
  %4055 = vmatprep.subr.bf16.mxu0 %v3950
  %4056 = vmatpush1.bf16.msra.mxu0 %v3949
  %4057 = vmatprep.subr.bf16.mxu0 %v3954
  %4058 = vmatpush1.bf16.msra.mxu0 %v3953
  %4059 = vmatprep.subr.bf16.mxu0 %v3958
  %4060 = vmatpush1.bf16.msra.mxu0 %v3957
  %4061 = vmatprep.subr.bf16.mxu0 %v3962
  %4062 = vmatpush1.bf16.msra.mxu0 %v3961
  %4063 = vmatprep.subr.bf16.mxu0 %v3966
  %4064 = vmatpush1.bf16.msra.mxu0 %v3965
  %4065 = vmatprep.mubr.bf16.mxu0 %v3701
  %4066 = vmatmul.mubr.bf16.gmra.mrb[0].mxu0 %v3700
  %v4067 = vpop.f32.mrb[0].mxu0
  %v4068 = vadd.f32 0.0, %v4067
  %v4069 = vpop.f32.mrb[0].mxu0
  %v4070 = vadd.f32 0.0, %v4069
  %v4071 = vpop.f32.mrb[0].mxu0
  %v4072 = vadd.f32 0.0, %v4071
  %v4073 = vpop.f32.mrb[0].mxu0
  %v4074 = vadd.f32 0.0, %v4073
  %4075 = vdwg.mxu0
  %4076 = vmatprep.subr.bf16.mxu0 %v3908
  %4077 = vmatpush1.bf16.msra.mxu0 %v3907
  %4078 = vmatprep.subr.bf16.mxu0 %v3912
  %4079 = vmatpush1.bf16.msra.mxu0 %v3911
  %4080 = vmatprep.subr.bf16.mxu0 %v3916
  %4081 = vmatpush1.bf16.msra.mxu0 %v3915
  %4082 = vmatprep.subr.bf16.mxu0 %v3920
  %4083 = vmatpush1.bf16.msra.mxu0 %v3919
  %4084 = vmatprep.subr.bf16.mxu0 %v3924
  %4085 = vmatpush1.bf16.msra.mxu0 %v3923
  %4086 = vmatprep.subr.bf16.mxu0 %v3928
  %4087 = vmatpush1.bf16.msra.mxu0 %v3927
  %4088 = vmatprep.subr.bf16.mxu0 %v3932
  %4089 = vmatpush1.bf16.msra.mxu0 %v3931
  %4090 = vmatprep.subr.bf16.mxu0 %v3936
  %4091 = vmatpush1.bf16.msra.mxu0 %v3935
  %4092 = vmatprep.subr.bf16.mxu0 %v3940
  %4093 = vmatpush1.bf16.msra.mxu0 %v3939
  %4094 = vmatprep.subr.bf16.mxu0 %v3944
  %4095 = vmatpush1.bf16.msra.mxu0 %v3943
  %4096 = vmatprep.subr.bf16.mxu0 %v3948
  %4097 = vmatpush1.bf16.msra.mxu0 %v3947
  %4098 = vmatprep.subr.bf16.mxu0 %v3952
  %4099 = vmatpush1.bf16.msra.mxu0 %v3951
  %4100 = vmatprep.subr.bf16.mxu0 %v3956
  %4101 = vmatpush1.bf16.msra.mxu0 %v3955
  %4102 = vmatprep.subr.bf16.mxu0 %v3960
  %4103 = vmatpush1.bf16.msra.mxu0 %v3959
  %4104 = vmatprep.subr.bf16.mxu0 %v3964
  %4105 = vmatpush1.bf16.msra.mxu0 %v3963
  %4106 = vmatprep.subr.bf16.mxu0 %v3968
  %4107 = vmatpush1.bf16.msra.mxu0 %v3967
  %4108 = vmatprep.mubr.bf16.mxu0 %v3701
  %4109 = vmatmul.mubr.bf16.gmra.mrb[0].mxu0 %v3700
  %v4110 = vpop.f32.mrb[0].mxu0
  %v4111 = vadd.f32 0.0, %v4110
  %v4112 = vpop.f32.mrb[0].mxu0
  %v4113 = vadd.f32 0.0, %v4112
  %v4114 = vpop.f32.mrb[0].mxu0
  %v4115 = vadd.f32 0.0, %v4114
  %v4116 = vpop.f32.mrb[0].mxu0
  %v4117 = vadd.f32 0.0, %v4116
  %4118 = vdwg.mxu0
  %v4119 = vadd.f32 %v3705, %v4068
  %v4120 = vadd.f32 %v3706, %v4070
  %v4121 = vadd.f32 %v3707, %v4111
  %v4122 = vadd.f32 %v3708, %v4113
  %v4123 = vadd.f32 %v3709, %v4072
  %v4124 = vadd.f32 %v3710, %v4074
  %v4125 = vadd.f32 %v3711, %v4115
  %v4126 = vadd.f32 %v3712, %v4117
  %v4127 = vmul.f32 %v4119, 0.5
  %v4128 = vmul.f32 %v4123, 0.5
  %v4129 = vtanh.pop %v4127
  %v4130 = vtanh.pop %v4128
  %v4131 = vmul.f32 %v4129, 0.5
  %v4132 = vmul.f32 %v4130, 0.5
  %v4133 = vadd.f32 %v4131, 0.5
  %v4134 = vadd.f32 %v4132, 0.5
  %v4135 = vmul.f32 %v4120, 0.5
  %v4136 = vmul.f32 %v4124, 0.5
  %v4137 = vtanh.pop %v4135
  %v4138 = vtanh.pop %v4136
  %v4139 = vmul.f32 %v4137, 0.5
  %v4140 = vmul.f32 %v4138, 0.5
  %v4141 = vadd.f32 %v4139, 0.5
  %v4142 = vadd.f32 %v4140, 0.5
  %v4143 = vtanh.pop %v4121
  %v4144 = vtanh.pop %v4125
  %v4145 = vmul.f32 %v4122, 0.5
  %v4146 = vmul.f32 %v4126, 0.5
  %v4147 = vtanh.pop %v4145
  %v4148 = vtanh.pop %v4146
  %v4149 = vmul.f32 %v4147, 0.5
  %v4150 = vmul.f32 %v4148, 0.5
  %v4151 = vadd.f32 %v4149, 0.5
  %v4152 = vadd.f32 %v4150, 0.5
  %v4153 = vmul.f32 %v4141, %v3703
  %v4154 = vmul.f32 %v4142, %v3704
  %v4155 = vmul.f32 %v4133, %v4143
  %v4156 = vmul.f32 %v4134, %v4144
  %v4157 = vadd.f32 %v4153, %v4155
  %v4158 = vadd.f32 %v4154, %v4156
  %v4159 = vtanh.pop %v4157
  %v4160 = vtanh.pop %v4158
  %v4161 = vmul.f32 %v4151, %v4159
  %v4162 = vmul.f32 %v4152, %v4160
  %4163 = vst [vmem:[#allocation2] sm:$0xff] %v4161
  %4164 = vst [vmem:[%s1407 + $0x8] sm:$0xff] %v4162
  %v4165 = vsel %vm49, %v4161, 0.0
  %v4166 = vsel %vm50, %v4161, 0.0
  %v4167 = vsel %vm51, %v4162, 0.0
  %v4168 = vsel %vm52, %v4162, 0.0
  %v4169 = vpack.c.bf16 %v4167, %v4165
  %v4170 = vpack.c.bf16 %v4168, %v4166
  %v4171 = vld [vmem:[%s811] sm:$0xff]
  %v4172 = vld [vmem:[%s811 + $0x8] sm:$0xff]
  %v4173 = vld [vmem:[%s811 + $0x10] sm:$0xff]
  %v4174 = vld [vmem:[%s811 + $0x18] sm:$0xff]
  %v4175 = vld [vmem:[%s811 + $0x20] sm:$0xff]
  %v4176 = vld [vmem:[%s811 + $0x28] sm:$0xff]
  %v4177 = vld [vmem:[%s811 + $0x30] sm:$0xff]
  %v4178 = vld [vmem:[%s811 + $0x38] sm:$0xff]
  %4179 = vmatprep.subr.bf16.mxu0 %v3906
  %4180 = vmatpush1.bf16.msra.mxu0 %v3905
  %4181 = vmatprep.subr.bf16.mxu0 %v3910
  %4182 = vmatpush1.bf16.msra.mxu0 %v3909
  %4183 = vmatprep.subr.bf16.mxu0 %v3914
  %4184 = vmatpush1.bf16.msra.mxu0 %v3913
  %4185 = vmatprep.subr.bf16.mxu0 %v3918
  %4186 = vmatpush1.bf16.msra.mxu0 %v3917
  %4187 = vmatprep.subr.bf16.mxu0 %v3922
  %4188 = vmatpush1.bf16.msra.mxu0 %v3921
  %4189 = vmatprep.subr.bf16.mxu0 %v3926
  %4190 = vmatpush1.bf16.msra.mxu0 %v3925
  %4191 = vmatprep.subr.bf16.mxu0 %v3930
  %4192 = vmatpush1.bf16.msra.mxu0 %v3929
  %4193 = vmatprep.subr.bf16.mxu0 %v3934
  %4194 = vmatpush1.bf16.msra.mxu0 %v3933
  %4195 = vmatprep.subr.bf16.mxu0 %v3938
  %4196 = vmatpush1.bf16.msra.mxu0 %v3937
  %4197 = vmatprep.subr.bf16.mxu0 %v3942
  %4198 = vmatpush1.bf16.msra.mxu0 %v3941
  %4199 = vmatprep.subr.bf16.mxu0 %v3946
  %4200 = vmatpush1.bf16.msra.mxu0 %v3945
  %4201 = vmatprep.subr.bf16.mxu0 %v3950
  %4202 = vmatpush1.bf16.msra.mxu0 %v3949
  %4203 = vmatprep.subr.bf16.mxu0 %v3954
  %4204 = vmatpush1.bf16.msra.mxu0 %v3953
  %4205 = vmatprep.subr.bf16.mxu0 %v3958
  %4206 = vmatpush1.bf16.msra.mxu0 %v3957
  %4207 = vmatprep.subr.bf16.mxu0 %v3962
  %4208 = vmatpush1.bf16.msra.mxu0 %v3961
  %4209 = vmatprep.subr.bf16.mxu0 %v3966
  %4210 = vmatpush1.bf16.msra.mxu0 %v3965
  %4211 = vmatprep.mubr.bf16.mxu0 %v4170
  %4212 = vmatmul.mubr.bf16.gmra.mrb[0].mxu0 %v4169
  %v4213 = vpop.f32.mrb[0].mxu0
  %v4214 = vadd.f32 0.0, %v4213
  %v4215 = vpop.f32.mrb[0].mxu0
  %v4216 = vadd.f32 0.0, %v4215
  %v4217 = vpop.f32.mrb[0].mxu0
  %v4218 = vadd.f32 0.0, %v4217
  %v4219 = vpop.f32.mrb[0].mxu0
  %v4220 = vadd.f32 0.0, %v4219
  %4221 = vdwg.mxu0
  %4222 = vmatprep.subr.bf16.mxu0 %v3908
  %4223 = vmatpush1.bf16.msra.mxu0 %v3907
  %4224 = vmatprep.subr.bf16.mxu0 %v3912
  %4225 = vmatpush1.bf16.msra.mxu0 %v3911
  %4226 = vmatprep.subr.bf16.mxu0 %v3916
  %4227 = vmatpush1.bf16.msra.mxu0 %v3915
  %4228 = vmatprep.subr.bf16.mxu0 %v3920
  %4229 = vmatpush1.bf16.msra.mxu0 %v3919
  %4230 = vmatprep.subr.bf16.mxu0 %v3924
  %4231 = vmatpush1.bf16.msra.mxu0 %v3923
  %4232 = vmatprep.subr.bf16.mxu0 %v3928
  %4233 = vmatpush1.bf16.msra.mxu0 %v3927
  %4234 = vmatprep.subr.bf16.mxu0 %v3932
  %4235 = vmatpush1.bf16.msra.mxu0 %v3931
  %4236 = vmatprep.subr.bf16.mxu0 %v3936
  %4237 = vmatpush1.bf16.msra.mxu0 %v3935
  %4238 = vmatprep.subr.bf16.mxu0 %v3940
  %4239 = vmatpush1.bf16.msra.mxu0 %v3939
  %4240 = vmatprep.subr.bf16.mxu0 %v3944
  %4241 = vmatpush1.bf16.msra.mxu0 %v3943
  %4242 = vmatprep.subr.bf16.mxu0 %v3948
  %4243 = vmatpush1.bf16.msra.mxu0 %v3947
  %4244 = vmatprep.subr.bf16.mxu0 %v3952
  %4245 = vmatpush1.bf16.msra.mxu0 %v3951
  %4246 = vmatprep.subr.bf16.mxu0 %v3956
  %4247 = vmatpush1.bf16.msra.mxu0 %v3955
  %4248 = vmatprep.subr.bf16.mxu0 %v3960
  %4249 = vmatpush1.bf16.msra.mxu0 %v3959
  %4250 = vmatprep.subr.bf16.mxu0 %v3964
  %4251 = vmatpush1.bf16.msra.mxu0 %v3963
  %4252 = vmatprep.subr.bf16.mxu0 %v3968
  %4253 = vmatpush1.bf16.msra.mxu0 %v3967
  %4254 = vmatprep.mubr.bf16.mxu0 %v4170
  %4255 = vmatmul.mubr.bf16.gmra.mrb[0].mxu0 %v4169
  %v4256 = vpop.f32.mrb[0].mxu0
  %v4257 = vadd.f32 0.0, %v4256
  %v4258 = vpop.f32.mrb[0].mxu0
  %v4259 = vadd.f32 0.0, %v4258
  %v4260 = vpop.f32.mrb[0].mxu0
  %v4261 = vadd.f32 0.0, %v4260
  %v4262 = vpop.f32.mrb[0].mxu0
  %v4263 = vadd.f32 0.0, %v4262
  %4264 = vdwg.mxu0
  %v4265 = vadd.f32 %v4171, %v4214
  %v4266 = vadd.f32 %v4172, %v4216
  %v4267 = vadd.f32 %v4173, %v4257
  %v4268 = vadd.f32 %v4174, %v4259
  %v4269 = vadd.f32 %v4175, %v4218
  %v4270 = vadd.f32 %v4176, %v4220
  %v4271 = vadd.f32 %v4177, %v4261
  %v4272 = vadd.f32 %v4178, %v4263
  %v4273 = vmul.f32 %v4265, 0.5
  %v4274 = vmul.f32 %v4269, 0.5
  %v4275 = vtanh.pop %v4273
  %v4276 = vtanh.pop %v4274
  %v4277 = vmul.f32 %v4275, 0.5
  %v4278 = vmul.f32 %v4276, 0.5
  %v4279 = vadd.f32 %v4277, 0.5
  %v4280 = vadd.f32 %v4278, 0.5
  %v4281 = vmul.f32 %v4266, 0.5
  %v4282 = vmul.f32 %v4270, 0.5
  %v4283 = vtanh.pop %v4281
  %v4284 = vtanh.pop %v4282
  %v4285 = vmul.f32 %v4283, 0.5
  %v4286 = vmul.f32 %v4284, 0.5
  %v4287 = vadd.f32 %v4285, 0.5
  %v4288 = vadd.f32 %v4286, 0.5
  %v4289 = vtanh.pop %v4267
  %v4290 = vtanh.pop %v4271
  %v4291 = vmul.f32 %v4268, 0.5
  %v4292 = vmul.f32 %v4272, 0.5
  %v4293 = vtanh.pop %v4291
  %v4294 = vtanh.pop %v4292
  %v4295 = vmul.f32 %v4293, 0.5
  %v4296 = vmul.f32 %v4294, 0.5
  %v4297 = vadd.f32 %v4295, 0.5
  %v4298 = vadd.f32 %v4296, 0.5
  %v4299 = vmul.f32 %v4287, %v4157
  %v4300 = vmul.f32 %v4288, %v4158
  %v4301 = vmul.f32 %v4279, %v4289
  %v4302 = vmul.f32 %v4280, %v4290
  %v4303 = vadd.f32 %v4299, %v4301
  %v4304 = vadd.f32 %v4300, %v4302
  %v4305 = vtanh.pop %v4303
  %v4306 = vtanh.pop %v4304
  %v4307 = vmul.f32 %v4297, %v4305
  %v4308 = vmul.f32 %v4298, %v4306
  %4309 = vst [vmem:[%s1553] sm:$0xff] %v4307
  %4310 = vst [vmem:[%s1555 + $0x8] sm:$0xff] %v4308
  %v4311 = vsel %vm49, %v4307, 0.0
  %v4312 = vsel %vm50, %v4307, 0.0
  %v4313 = vsel %vm51, %v4308, 0.0
  %v4314 = vsel %vm52, %v4308, 0.0
  %v4315 = vpack.c.bf16 %v4313, %v4311
  %v4316 = vpack.c.bf16 %v4314, %v4312
  %v4317 = vld [vmem:[%s820] sm:$0xff]
  %v4318 = vld [vmem:[%s820 + $0x8] sm:$0xff]
  %v4319 = vld [vmem:[%s820 + $0x10] sm:$0xff]
  %v4320 = vld [vmem:[%s820 + $0x18] sm:$0xff]
  %v4321 = vld [vmem:[%s820 + $0x20] sm:$0xff]
  %v4322 = vld [vmem:[%s820 + $0x28] sm:$0xff]
  %v4323 = vld [vmem:[%s820 + $0x30] sm:$0xff]
  %v4324 = vld [vmem:[%s820 + $0x38] sm:$0xff]
  %4325 = vmatprep.subr.bf16.mxu0 %v3906
  %4326 = vmatpush1.bf16.msra.mxu0 %v3905
  %4327 = vmatprep.subr.bf16.mxu0 %v3910
  %4328 = vmatpush1.bf16.msra.mxu0 %v3909
  %4329 = vmatprep.subr.bf16.mxu0 %v3914
  %4330 = vmatpush1.bf16.msra.mxu0 %v3913
  %4331 = vmatprep.subr.bf16.mxu0 %v3918
  %4332 = vmatpush1.bf16.msra.mxu0 %v3917
  %4333 = vmatprep.subr.bf16.mxu0 %v3922
  %4334 = vmatpush1.bf16.msra.mxu0 %v3921
  %4335 = vmatprep.subr.bf16.mxu0 %v3926
  %4336 = vmatpush1.bf16.msra.mxu0 %v3925
  %4337 = vmatprep.subr.bf16.mxu0 %v3930
  %4338 = vmatpush1.bf16.msra.mxu0 %v3929
  %4339 = vmatprep.subr.bf16.mxu0 %v3934
  %4340 = vmatpush1.bf16.msra.mxu0 %v3933
  %4341 = vmatprep.subr.bf16.mxu0 %v3938
  %4342 = vmatpush1.bf16.msra.mxu0 %v3937
  %4343 = vmatprep.subr.bf16.mxu0 %v3942
  %4344 = vmatpush1.bf16.msra.mxu0 %v3941
  %4345 = vmatprep.subr.bf16.mxu0 %v3946
  %4346 = vmatpush1.bf16.msra.mxu0 %v3945
  %4347 = vmatprep.subr.bf16.mxu0 %v3950
  %4348 = vmatpush1.bf16.msra.mxu0 %v3949
  %4349 = vmatprep.subr.bf16.mxu0 %v3954
  %4350 = vmatpush1.bf16.msra.mxu0 %v3953
  %4351 = vmatprep.subr.bf16.mxu0 %v3958
  %4352 = vmatpush1.bf16.msra.mxu0 %v3957
  %4353 = vmatprep.subr.bf16.mxu0 %v3962
  %4354 = vmatpush1.bf16.msra.mxu0 %v3961
  %4355 = vmatprep.subr.bf16.mxu0 %v3966
  %4356 = vmatpush1.bf16.msra.mxu0 %v3965
  %4357 = vmatprep.mubr.bf16.mxu0 %v4316
  %4358 = vmatmul.mubr.bf16.gmra.mrb[0].mxu0 %v4315
  %v4359 = vpop.f32.mrb[0].mxu0
  %v4360 = vadd.f32 0.0, %v4359
  %v4361 = vpop.f32.mrb[0].mxu0
  %v4362 = vadd.f32 0.0, %v4361
  %v4363 = vpop.f32.mrb[0].mxu0
  %v4364 = vadd.f32 0.0, %v4363
  %v4365 = vpop.f32.mrb[0].mxu0
  %v4366 = vadd.f32 0.0, %v4365
  %4367 = vdwg.mxu0
  %4368 = vmatprep.subr.bf16.mxu0 %v3908
  %4369 = vmatpush1.bf16.msra.mxu0 %v3907
  %4370 = vmatprep.subr.bf16.mxu0 %v3912
  %4371 = vmatpush1.bf16.msra.mxu0 %v3911
  %4372 = vmatprep.subr.bf16.mxu0 %v3916
  %4373 = vmatpush1.bf16.msra.mxu0 %v3915
  %4374 = vmatprep.subr.bf16.mxu0 %v3920
  %4375 = vmatpush1.bf16.msra.mxu0 %v3919
  %4376 = vmatprep.subr.bf16.mxu0 %v3924
  %4377 = vmatpush1.bf16.msra.mxu0 %v3923
  %4378 = vmatprep.subr.bf16.mxu0 %v3928
  %4379 = vmatpush1.bf16.msra.mxu0 %v3927
  %4380 = vmatprep.subr.bf16.mxu0 %v3932
  %4381 = vmatpush1.bf16.msra.mxu0 %v3931
  %4382 = vmatprep.subr.bf16.mxu0 %v3936
  %4383 = vmatpush1.bf16.msra.mxu0 %v3935
  %4384 = vmatprep.subr.bf16.mxu0 %v3940
  %4385 = vmatpush1.bf16.msra.mxu0 %v3939
  %4386 = vmatprep.subr.bf16.mxu0 %v3944
  %4387 = vmatpush1.bf16.msra.mxu0 %v3943
  %4388 = vmatprep.subr.bf16.mxu0 %v3948
  %4389 = vmatpush1.bf16.msra.mxu0 %v3947
  %4390 = vmatprep.subr.bf16.mxu0 %v3952
  %4391 = vmatpush1.bf16.msra.mxu0 %v3951
  %4392 = vmatprep.subr.bf16.mxu0 %v3956
  %4393 = vmatpush1.bf16.msra.mxu0 %v3955
  %4394 = vmatprep.subr.bf16.mxu0 %v3960
  %4395 = vmatpush1.bf16.msra.mxu0 %v3959
  %4396 = vmatprep.subr.bf16.mxu0 %v3964
  %4397 = vmatpush1.bf16.msra.mxu0 %v3963
  %4398 = vmatprep.subr.bf16.mxu0 %v3968
  %4399 = vmatpush1.bf16.msra.mxu0 %v3967
  %4400 = vmatprep.mubr.bf16.mxu0 %v4316
  %4401 = vmatmul.mubr.bf16.gmra.mrb[0].mxu0 %v4315
  %v4402 = vpop.f32.mrb[0].mxu0
  %v4403 = vadd.f32 0.0, %v4402
  %v4404 = vpop.f32.mrb[0].mxu0
  %v4405 = vadd.f32 0.0, %v4404
  %v4406 = vpop.f32.mrb[0].mxu0
  %v4407 = vadd.f32 0.0, %v4406
  %v4408 = vpop.f32.mrb[0].mxu0
  %v4409 = vadd.f32 0.0, %v4408
  %4410 = vdwg.mxu0
  %v4411 = vadd.f32 %v4317, %v4360
  %v4412 = vadd.f32 %v4318, %v4362
  %v4413 = vadd.f32 %v4319, %v4403
  %v4414 = vadd.f32 %v4320, %v4405
  %v4415 = vadd.f32 %v4321, %v4364
  %v4416 = vadd.f32 %v4322, %v4366
  %v4417 = vadd.f32 %v4323, %v4407
  %v4418 = vadd.f32 %v4324, %v4409
  %v4419 = vmul.f32 %v4411, 0.5
  %v4420 = vmul.f32 %v4415, 0.5
  %v4421 = vtanh.pop %v4419
  %v4422 = vtanh.pop %v4420
  %v4423 = vmul.f32 %v4421, 0.5
  %v4424 = vmul.f32 %v4422, 0.5
  %v4425 = vadd.f32 %v4423, 0.5
  %v4426 = vadd.f32 %v4424, 0.5
  %v4427 = vmul.f32 %v4412, 0.5
  %v4428 = vmul.f32 %v4416, 0.5
  %v4429 = vtanh.pop %v4427
  %v4430 = vtanh.pop %v4428
  %v4431 = vmul.f32 %v4429, 0.5
  %v4432 = vmul.f32 %v4430, 0.5
  %v4433 = vadd.f32 %v4431, 0.5
  %v4434 = vadd.f32 %v4432, 0.5
  %v4435 = vtanh.pop %v4413
  %v4436 = vtanh.pop %v4417
  %v4437 = vmul.f32 %v4414, 0.5
  %v4438 = vmul.f32 %v4418, 0.5
  %v4439 = vtanh.pop %v4437
  %v4440 = vtanh.pop %v4438
  %v4441 = vmul.f32 %v4439, 0.5
  %v4442 = vmul.f32 %v4440, 0.5
  %v4443 = vadd.f32 %v4441, 0.5
  %v4444 = vadd.f32 %v4442, 0.5
  %v4445 = vmul.f32 %v4433, %v4303
  %v4446 = vmul.f32 %v4434, %v4304
  %v4447 = vmul.f32 %v4425, %v4435
  %v4448 = vmul.f32 %v4426, %v4436
  %v4449 = vadd.f32 %v4445, %v4447
  %v4450 = vadd.f32 %v4446, %v4448
  %v4451 = vtanh.pop %v4449
  %v4452 = vtanh.pop %v4450
  %v4453 = vmul.f32 %v4443, %v4451
  %v4454 = vmul.f32 %v4444, %v4452
  %4455 = vst [vmem:[%s1701] sm:$0xff] %v4453
  %4456 = vst [vmem:[%s1703 + $0x8] sm:$0xff] %v4454
  %v4457 = vsel %vm49, %v4453, 0.0
  %v4458 = vsel %vm50, %v4453, 0.0
  %v4459 = vsel %vm51, %v4454, 0.0
  %v4460 = vsel %vm52, %v4454, 0.0
  %v4461 = vpack.c.bf16 %v4459, %v4457
  %v4462 = vpack.c.bf16 %v4460, %v4458
  %v4463 = vld [vmem:[%s829] sm:$0xff]
  %v4464 = vld [vmem:[%s829 + $0x8] sm:$0xff]
  %v4465 = vld [vmem:[%s829 + $0x10] sm:$0xff]
  %v4466 = vld [vmem:[%s829 + $0x18] sm:$0xff]
  %v4467 = vld [vmem:[%s829 + $0x20] sm:$0xff]
  %v4468 = vld [vmem:[%s829 + $0x28] sm:$0xff]
  %v4469 = vld [vmem:[%s829 + $0x30] sm:$0xff]
  %v4470 = vld [vmem:[%s829 + $0x38] sm:$0xff]
  %4471 = vmatprep.subr.bf16.mxu0 %v3906
  %4472 = vmatpush1.bf16.msra.mxu0 %v3905
  %4473 = vmatprep.subr.bf16.mxu0 %v3910
  %4474 = vmatpush1.bf16.msra.mxu0 %v3909
  %4475 = vmatprep.subr.bf16.mxu0 %v3914
  %4476 = vmatpush1.bf16.msra.mxu0 %v3913
  %4477 = vmatprep.subr.bf16.mxu0 %v3918
  %4478 = vmatpush1.bf16.msra.mxu0 %v3917
  %4479 = vmatprep.subr.bf16.mxu0 %v3922
  %4480 = vmatpush1.bf16.msra.mxu0 %v3921
  %4481 = vmatprep.subr.bf16.mxu0 %v3926
  %4482 = vmatpush1.bf16.msra.mxu0 %v3925
  %4483 = vmatprep.subr.bf16.mxu0 %v3930
  %4484 = vmatpush1.bf16.msra.mxu0 %v3929
  %4485 = vmatprep.subr.bf16.mxu0 %v3934
  %4486 = vmatpush1.bf16.msra.mxu0 %v3933
  %4487 = vmatprep.subr.bf16.mxu0 %v3938
  %4488 = vmatpush1.bf16.msra.mxu0 %v3937
  %4489 = vmatprep.subr.bf16.mxu0 %v3942
  %4490 = vmatpush1.bf16.msra.mxu0 %v3941
  %4491 = vmatprep.subr.bf16.mxu0 %v3946
  %4492 = vmatpush1.bf16.msra.mxu0 %v3945
  %4493 = vmatprep.subr.bf16.mxu0 %v3950
  %4494 = vmatpush1.bf16.msra.mxu0 %v3949
  %4495 = vmatprep.subr.bf16.mxu0 %v3954
  %4496 = vmatpush1.bf16.msra.mxu0 %v3953
  %4497 = vmatprep.subr.bf16.mxu0 %v3958
  %4498 = vmatpush1.bf16.msra.mxu0 %v3957
  %4499 = vmatprep.subr.bf16.mxu0 %v3962
  %4500 = vmatpush1.bf16.msra.mxu0 %v3961
  %4501 = vmatprep.subr.bf16.mxu0 %v3966
  %4502 = vmatpush1.bf16.msra.mxu0 %v3965
  %4503 = vmatprep.mubr.bf16.mxu0 %v4462
  %4504 = vmatmul.mubr.bf16.gmra.mrb[0].mxu0 %v4461
  %v4505 = vpop.f32.mrb[0].mxu0
  %v4506 = vadd.f32 0.0, %v4505
  %v4507 = vpop.f32.mrb[0].mxu0
  %v4508 = vadd.f32 0.0, %v4507
  %v4509 = vpop.f32.mrb[0].mxu0
  %v4510 = vadd.f32 0.0, %v4509
  %v4511 = vpop.f32.mrb[0].mxu0
  %v4512 = vadd.f32 0.0, %v4511
  %4513 = vdwg.mxu0
  %4514 = vmatprep.subr.bf16.mxu0 %v3908
  %4515 = vmatpush1.bf16.msra.mxu0 %v3907
  %4516 = vmatprep.subr.bf16.mxu0 %v3912
  %4517 = vmatpush1.bf16.msra.mxu0 %v3911
  %4518 = vmatprep.subr.bf16.mxu0 %v3916
  %4519 = vmatpush1.bf16.msra.mxu0 %v3915
  %4520 = vmatprep.subr.bf16.mxu0 %v3920
  %4521 = vmatpush1.bf16.msra.mxu0 %v3919
  %4522 = vmatprep.subr.bf16.mxu0 %v3924
  %4523 = vmatpush1.bf16.msra.mxu0 %v3923
  %4524 = vmatprep.subr.bf16.mxu0 %v3928
  %4525 = vmatpush1.bf16.msra.mxu0 %v3927
  %4526 = vmatprep.subr.bf16.mxu0 %v3932
  %4527 = vmatpush1.bf16.msra.mxu0 %v3931
  %4528 = vmatprep.subr.bf16.mxu0 %v3936
  %4529 = vmatpush1.bf16.msra.mxu0 %v3935
  %4530 = vmatprep.subr.bf16.mxu0 %v3940
  %4531 = vmatpush1.bf16.msra.mxu0 %v3939
  %4532 = vmatprep.subr.bf16.mxu0 %v3944
  %4533 = vmatpush1.bf16.msra.mxu0 %v3943
  %4534 = vmatprep.subr.bf16.mxu0 %v3948
  %4535 = vmatpush1.bf16.msra.mxu0 %v3947
  %4536 = vmatprep.subr.bf16.mxu0 %v3952
  %4537 = vmatpush1.bf16.msra.mxu0 %v3951
  %4538 = vmatprep.subr.bf16.mxu0 %v3956
  %4539 = vmatpush1.bf16.msra.mxu0 %v3955
  %4540 = vmatprep.subr.bf16.mxu0 %v3960
  %4541 = vmatpush1.bf16.msra.mxu0 %v3959
  %4542 = vmatprep.subr.bf16.mxu0 %v3964
  %4543 = vmatpush1.bf16.msra.mxu0 %v3963
  %4544 = vmatprep.subr.bf16.mxu0 %v3968
  %4545 = vmatpush1.bf16.msra.mxu0 %v3967
  %4546 = vmatprep.mubr.bf16.mxu0 %v4462
  %4547 = vmatmul.mubr.bf16.gmra.mrb[0].mxu0 %v4461
  %v4548 = vpop.f32.mrb[0].mxu0
  %v4549 = vadd.f32 0.0, %v4548
  %v4550 = vpop.f32.mrb[0].mxu0
  %v4551 = vadd.f32 0.0, %v4550
  %v4552 = vpop.f32.mrb[0].mxu0
  %v4553 = vadd.f32 0.0, %v4552
  %v4554 = vpop.f32.mrb[0].mxu0
  %v4555 = vadd.f32 0.0, %v4554
  %4556 = vdwg.mxu0
  %v4557 = vadd.f32 %v4463, %v4506
  %v4558 = vadd.f32 %v4464, %v4508
  %v4559 = vadd.f32 %v4465, %v4549
  %v4560 = vadd.f32 %v4466, %v4551
  %v4561 = vadd.f32 %v4467, %v4510
  %v4562 = vadd.f32 %v4468, %v4512
  %v4563 = vadd.f32 %v4469, %v4553
  %v4564 = vadd.f32 %v4470, %v4555
  %v4565 = vmul.f32 %v4557, 0.5
  %v4566 = vmul.f32 %v4561, 0.5
  %v4567 = vtanh.pop %v4565
  %v4568 = vtanh.pop %v4566
  %v4569 = vmul.f32 %v4567, 0.5
  %v4570 = vmul.f32 %v4568, 0.5
  %v4571 = vadd.f32 %v4569, 0.5
  %v4572 = vadd.f32 %v4570, 0.5
  %v4573 = vmul.f32 %v4558, 0.5
  %v4574 = vmul.f32 %v4562, 0.5
  %v4575 = vtanh.pop %v4573
  %v4576 = vtanh.pop %v4574
  %v4577 = vmul.f32 %v4575, 0.5
  %v4578 = vmul.f32 %v4576, 0.5
  %v4579 = vadd.f32 %v4577, 0.5
  %v4580 = vadd.f32 %v4578, 0.5
  %v4581 = vtanh.pop %v4559
  %v4582 = vtanh.pop %v4563
  %v4583 = vmul.f32 %v4560, 0.5
  %v4584 = vmul.f32 %v4564, 0.5
  %v4585 = vtanh.pop %v4583
  %v4586 = vtanh.pop %v4584
  %v4587 = vmul.f32 %v4585, 0.5
  %v4588 = vmul.f32 %v4586, 0.5
  %v4589 = vadd.f32 %v4587, 0.5
  %v4590 = vadd.f32 %v4588, 0.5
  %v4591 = vmul.f32 %v4579, %v4449
  %v4592 = vmul.f32 %v4580, %v4450
  %v4593 = vmul.f32 %v4571, %v4581
  %v4594 = vmul.f32 %v4572, %v4582
  %v4595 = vadd.f32 %v4591, %v4593
  %v4596 = vadd.f32 %v4592, %v4594
  %v4597 = vtanh.pop %v4595
  %v4598 = vtanh.pop %v4596
  %v4599 = vmul.f32 %v4589, %v4597
  %v4600 = vmul.f32 %v4590, %v4598
  %4601 = vst [vmem:[%s1849] sm:$0xff] %v4599
  %4602 = vst [vmem:[%s1851 + $0x8] sm:$0xff] %v4600
  %v4603 = vsel %vm49, %v4599, 0.0
  %v4604 = vsel %vm50, %v4599, 0.0
  %v4605 = vsel %vm51, %v4600, 0.0
  %v4606 = vsel %vm52, %v4600, 0.0
  %v4607 = vpack.c.bf16 %v4605, %v4603
  %v4608 = vpack.c.bf16 %v4606, %v4604
  %v4609 = vld [vmem:[%s838] sm:$0xff]
  %v4610 = vld [vmem:[%s838 + $0x8] sm:$0xff]
  %v4611 = vld [vmem:[%s838 + $0x10] sm:$0xff]
  %v4612 = vld [vmem:[%s838 + $0x18] sm:$0xff]
  %v4613 = vld [vmem:[%s838 + $0x20] sm:$0xff]
  %v4614 = vld [vmem:[%s838 + $0x28] sm:$0xff]
  %v4615 = vld [vmem:[%s838 + $0x30] sm:$0xff]
  %v4616 = vld [vmem:[%s838 + $0x38] sm:$0xff]
  %4617 = vmatprep.subr.bf16.mxu0 %v3906
  %4618 = vmatpush1.bf16.msra.mxu0 %v3905
  %4619 = vmatprep.subr.bf16.mxu0 %v3910
  %4620 = vmatpush1.bf16.msra.mxu0 %v3909
  %4621 = vmatprep.subr.bf16.mxu0 %v3914
  %4622 = vmatpush1.bf16.msra.mxu0 %v3913
  %4623 = vmatprep.subr.bf16.mxu0 %v3918
  %4624 = vmatpush1.bf16.msra.mxu0 %v3917
  %4625 = vmatprep.subr.bf16.mxu0 %v3922
  %4626 = vmatpush1.bf16.msra.mxu0 %v3921
  %4627 = vmatprep.subr.bf16.mxu0 %v3926
  %4628 = vmatpush1.bf16.msra.mxu0 %v3925
  %4629 = vmatprep.subr.bf16.mxu0 %v3930
  %4630 = vmatpush1.bf16.msra.mxu0 %v3929
  %4631 = vmatprep.subr.bf16.mxu0 %v3934
  %4632 = vmatpush1.bf16.msra.mxu0 %v3933
  %4633 = vmatprep.subr.bf16.mxu0 %v3938
  %4634 = vmatpush1.bf16.msra.mxu0 %v3937
  %4635 = vmatprep.subr.bf16.mxu0 %v3942
  %4636 = vmatpush1.bf16.msra.mxu0 %v3941
  %4637 = vmatprep.subr.bf16.mxu0 %v3946
  %4638 = vmatpush1.bf16.msra.mxu0 %v3945
  %4639 = vmatprep.subr.bf16.mxu0 %v3950
  %4640 = vmatpush1.bf16.msra.mxu0 %v3949
  %4641 = vmatprep.subr.bf16.mxu0 %v3954
  %4642 = vmatpush1.bf16.msra.mxu0 %v3953
  %4643 = vmatprep.subr.bf16.mxu0 %v3958
  %4644 = vmatpush1.bf16.msra.mxu0 %v3957
  %4645 = vmatprep.subr.bf16.mxu0 %v3962
  %4646 = vmatpush1.bf16.msra.mxu0 %v3961
  %4647 = vmatprep.subr.bf16.mxu0 %v3966
  %4648 = vmatpush1.bf16.msra.mxu0 %v3965
  %4649 = vmatprep.mubr.bf16.mxu0 %v4608
  %4650 = vmatmul.mubr.bf16.gmra.mrb[0].mxu0 %v4607
  %v4651 = vpop.f32.mrb[0].mxu0
  %v4652 = vadd.f32 0.0, %v4651
  %v4653 = vpop.f32.mrb[0].mxu0
  %v4654 = vadd.f32 0.0, %v4653
  %v4655 = vpop.f32.mrb[0].mxu0
  %v4656 = vadd.f32 0.0, %v4655
  %v4657 = vpop.f32.mrb[0].mxu0
  %v4658 = vadd.f32 0.0, %v4657
  %4659 = vdwg.mxu0
  %4660 = vmatprep.subr.bf16.mxu0 %v3908
  %4661 = vmatpush1.bf16.msra.mxu0 %v3907
  %4662 = vmatprep.subr.bf16.mxu0 %v3912
  %4663 = vmatpush1.bf16.msra.mxu0 %v3911
  %4664 = vmatprep.subr.bf16.mxu0 %v3916
  %4665 = vmatpush1.bf16.msra.mxu0 %v3915
  %4666 = vmatprep.subr.bf16.mxu0 %v3920
  %4667 = vmatpush1.bf16.msra.mxu0 %v3919
  %4668 = vmatprep.subr.bf16.mxu0 %v3924
  %4669 = vmatpush1.bf16.msra.mxu0 %v3923
  %4670 = vmatprep.subr.bf16.mxu0 %v3928
  %4671 = vmatpush1.bf16.msra.mxu0 %v3927
  %4672 = vmatprep.subr.bf16.mxu0 %v3932
  %4673 = vmatpush1.bf16.msra.mxu0 %v3931
  %4674 = vmatprep.subr.bf16.mxu0 %v3936
  %4675 = vmatpush1.bf16.msra.mxu0 %v3935
  %4676 = vmatprep.subr.bf16.mxu0 %v3940
  %4677 = vmatpush1.bf16.msra.mxu0 %v3939
  %4678 = vmatprep.subr.bf16.mxu0 %v3944
  %4679 = vmatpush1.bf16.msra.mxu0 %v3943
  %4680 = vmatprep.subr.bf16.mxu0 %v3948
  %4681 = vmatpush1.bf16.msra.mxu0 %v3947
  %4682 = vmatprep.subr.bf16.mxu0 %v3952
  %4683 = vmatpush1.bf16.msra.mxu0 %v3951
  %4684 = vmatprep.subr.bf16.mxu0 %v3956
  %4685 = vmatpush1.bf16.msra.mxu0 %v3955
  %4686 = vmatprep.subr.bf16.mxu0 %v3960
  %4687 = vmatpush1.bf16.msra.mxu0 %v3959
  %4688 = vmatprep.subr.bf16.mxu0 %v3964
  %4689 = vmatpush1.bf16.msra.mxu0 %v3963
  %4690 = vmatprep.subr.bf16.mxu0 %v3968
  %4691 = vmatpush1.bf16.msra.mxu0 %v3967
  %4692 = vmatprep.mubr.bf16.mxu0 %v4608
  %4693 = vmatmul.mubr.bf16.gmra.mrb[0].mxu0 %v4607
  %v4694 = vpop.f32.mrb[0].mxu0
  %v4695 = vadd.f32 0.0, %v4694
  %v4696 = vpop.f32.mrb[0].mxu0
  %v4697 = vadd.f32 0.0, %v4696
  %v4698 = vpop.f32.mrb[0].mxu0
  %v4699 = vadd.f32 0.0, %v4698
  %v4700 = vpop.f32.mrb[0].mxu0
  %v4701 = vadd.f32 0.0, %v4700
  %4702 = vdwg.mxu0
  %v4703 = vadd.f32 %v4609, %v4652
  %v4704 = vadd.f32 %v4610, %v4654
  %v4705 = vadd.f32 %v4611, %v4695
  %v4706 = vadd.f32 %v4612, %v4697
  %v4707 = vadd.f32 %v4613, %v4656
  %v4708 = vadd.f32 %v4614, %v4658
  %v4709 = vadd.f32 %v4615, %v4699
  %v4710 = vadd.f32 %v4616, %v4701
  %v4711 = vmul.f32 %v4703, 0.5
  %v4712 = vmul.f32 %v4707, 0.5
  %v4713 = vtanh.pop %v4711
  %v4714 = vtanh.pop %v4712
  %v4715 = vmul.f32 %v4713, 0.5
  %v4716 = vmul.f32 %v4714, 0.5
  %v4717 = vadd.f32 %v4715, 0.5
  %v4718 = vadd.f32 %v4716, 0.5
  %v4719 = vmul.f32 %v4704, 0.5
  %v4720 = vmul.f32 %v4708, 0.5
  %v4721 = vtanh.pop %v4719
  %v4722 = vtanh.pop %v4720
  %v4723 = vmul.f32 %v4721, 0.5
  %v4724 = vmul.f32 %v4722, 0.5
  %v4725 = vadd.f32 %v4723, 0.5
  %v4726 = vadd.f32 %v4724, 0.5
  %v4727 = vtanh.pop %v4705
  %v4728 = vtanh.pop %v4709
  %v4729 = vmul.f32 %v4706, 0.5
  %v4730 = vmul.f32 %v4710, 0.5
  %v4731 = vtanh.pop %v4729
  %v4732 = vtanh.pop %v4730
  %v4733 = vmul.f32 %v4731, 0.5
  %v4734 = vmul.f32 %v4732, 0.5
  %v4735 = vadd.f32 %v4733, 0.5
  %v4736 = vadd.f32 %v4734, 0.5
  %v4737 = vmul.f32 %v4725, %v4595
  %v4738 = vmul.f32 %v4726, %v4596
  %v4739 = vmul.f32 %v4717, %v4727
  %v4740 = vmul.f32 %v4718, %v4728
  %v4741 = vadd.f32 %v4737, %v4739
  %v4742 = vadd.f32 %v4738, %v4740
  %v4743 = vtanh.pop %v4741
  %v4744 = vtanh.pop %v4742
  %v4745 = vmul.f32 %v4735, %v4743
  %v4746 = vmul.f32 %v4736, %v4744
  %4747 = vst [vmem:[%s1851] sm:$0xff] %v4745
  %4748 = vst [vmem:[%s1849 + $0x8] sm:$0xff] %v4746
  %v4749 = vsel %vm49, %v4745, 0.0
  %v4750 = vsel %vm50, %v4745, 0.0
  %v4751 = vsel %vm51, %v4746, 0.0
  %v4752 = vsel %vm52, %v4746, 0.0
  %v4753 = vpack.c.bf16 %v4751, %v4749
  %v4754 = vpack.c.bf16 %v4752, %v4750
  %v4755 = vld [vmem:[%s847] sm:$0xff]
  %v4756 = vld [vmem:[%s847 + $0x8] sm:$0xff]
  %v4757 = vld [vmem:[%s847 + $0x10] sm:$0xff]
  %v4758 = vld [vmem:[%s847 + $0x18] sm:$0xff]
  %v4759 = vld [vmem:[%s847 + $0x20] sm:$0xff]
  %v4760 = vld [vmem:[%s847 + $0x28] sm:$0xff]
  %v4761 = vld [vmem:[%s847 + $0x30] sm:$0xff]
  %v4762 = vld [vmem:[%s847 + $0x38] sm:$0xff]
  %4763 = vmatprep.subr.bf16.mxu0 %v3906
  %4764 = vmatpush1.bf16.msra.mxu0 %v3905
  %4765 = vmatprep.subr.bf16.mxu0 %v3910
  %4766 = vmatpush1.bf16.msra.mxu0 %v3909
  %4767 = vmatprep.subr.bf16.mxu0 %v3914
  %4768 = vmatpush1.bf16.msra.mxu0 %v3913
  %4769 = vmatprep.subr.bf16.mxu0 %v3918
  %4770 = vmatpush1.bf16.msra.mxu0 %v3917
  %4771 = vmatprep.subr.bf16.mxu0 %v3922
  %4772 = vmatpush1.bf16.msra.mxu0 %v3921
  %4773 = vmatprep.subr.bf16.mxu0 %v3926
  %4774 = vmatpush1.bf16.msra.mxu0 %v3925
  %4775 = vmatprep.subr.bf16.mxu0 %v3930
  %4776 = vmatpush1.bf16.msra.mxu0 %v3929
  %4777 = vmatprep.subr.bf16.mxu0 %v3934
  %4778 = vmatpush1.bf16.msra.mxu0 %v3933
  %4779 = vmatprep.subr.bf16.mxu0 %v3938
  %4780 = vmatpush1.bf16.msra.mxu0 %v3937
  %4781 = vmatprep.subr.bf16.mxu0 %v3942
  %4782 = vmatpush1.bf16.msra.mxu0 %v3941
  %4783 = vmatprep.subr.bf16.mxu0 %v3946
  %4784 = vmatpush1.bf16.msra.mxu0 %v3945
  %4785 = vmatprep.subr.bf16.mxu0 %v3950
  %4786 = vmatpush1.bf16.msra.mxu0 %v3949
  %4787 = vmatprep.subr.bf16.mxu0 %v3954
  %4788 = vmatpush1.bf16.msra.mxu0 %v3953
  %4789 = vmatprep.subr.bf16.mxu0 %v3958
  %4790 = vmatpush1.bf16.msra.mxu0 %v3957
  %4791 = vmatprep.subr.bf16.mxu0 %v3962
  %4792 = vmatpush1.bf16.msra.mxu0 %v3961
  %4793 = vmatprep.subr.bf16.mxu0 %v3966
  %4794 = vmatpush1.bf16.msra.mxu0 %v3965
  %4795 = vmatprep.mubr.bf16.mxu0 %v4754
  %4796 = vmatmul.mubr.bf16.gmra.mrb[0].mxu0 %v4753
  %v4797 = vpop.f32.mrb[0].mxu0
  %v4798 = vadd.f32 0.0, %v4797
  %v4799 = vpop.f32.mrb[0].mxu0
  %v4800 = vadd.f32 0.0, %v4799
  %v4801 = vpop.f32.mrb[0].mxu0
  %v4802 = vadd.f32 0.0, %v4801
  %v4803 = vpop.f32.mrb[0].mxu0
  %v4804 = vadd.f32 0.0, %v4803
  %4805 = vdwg.mxu0
  %4806 = vmatprep.subr.bf16.mxu0 %v3908
  %4807 = vmatpush1.bf16.msra.mxu0 %v3907
  %4808 = vmatprep.subr.bf16.mxu0 %v3912
  %4809 = vmatpush1.bf16.msra.mxu0 %v3911
  %4810 = vmatprep.subr.bf16.mxu0 %v3916
  %4811 = vmatpush1.bf16.msra.mxu0 %v3915
  %4812 = vmatprep.subr.bf16.mxu0 %v3920
  %4813 = vmatpush1.bf16.msra.mxu0 %v3919
  %4814 = vmatprep.subr.bf16.mxu0 %v3924
  %4815 = vmatpush1.bf16.msra.mxu0 %v3923
  %4816 = vmatprep.subr.bf16.mxu0 %v3928
  %4817 = vmatpush1.bf16.msra.mxu0 %v3927
  %4818 = vmatprep.subr.bf16.mxu0 %v3932
  %4819 = vmatpush1.bf16.msra.mxu0 %v3931
  %4820 = vmatprep.subr.bf16.mxu0 %v3936
  %4821 = vmatpush1.bf16.msra.mxu0 %v3935
  %4822 = vmatprep.subr.bf16.mxu0 %v3940
  %4823 = vmatpush1.bf16.msra.mxu0 %v3939
  %4824 = vmatprep.subr.bf16.mxu0 %v3944
  %4825 = vmatpush1.bf16.msra.mxu0 %v3943
  %4826 = vmatprep.subr.bf16.mxu0 %v3948
  %4827 = vmatpush1.bf16.msra.mxu0 %v3947
  %4828 = vmatprep.subr.bf16.mxu0 %v3952
  %4829 = vmatpush1.bf16.msra.mxu0 %v3951
  %4830 = vmatprep.subr.bf16.mxu0 %v3956
  %4831 = vmatpush1.bf16.msra.mxu0 %v3955
  %4832 = vmatprep.subr.bf16.mxu0 %v3960
  %4833 = vmatpush1.bf16.msra.mxu0 %v3959
  %4834 = vmatprep.subr.bf16.mxu0 %v3964
  %4835 = vmatpush1.bf16.msra.mxu0 %v3963
  %4836 = vmatprep.subr.bf16.mxu0 %v3968
  %4837 = vmatpush1.bf16.msra.mxu0 %v3967
  %4838 = vmatprep.mubr.bf16.mxu0 %v4754
  %4839 = vmatmul.mubr.bf16.gmra.mrb[0].mxu0 %v4753
  %v4840 = vpop.f32.mrb[0].mxu0
  %v4841 = vadd.f32 0.0, %v4840
  %v4842 = vpop.f32.mrb[0].mxu0
  %v4843 = vadd.f32 0.0, %v4842
  %v4844 = vpop.f32.mrb[0].mxu0
  %v4845 = vadd.f32 0.0, %v4844
  %v4846 = vpop.f32.mrb[0].mxu0
  %v4847 = vadd.f32 0.0, %v4846
  %4848 = vdwg.mxu0
  %v4849 = vadd.f32 %v4755, %v4798
  %v4850 = vadd.f32 %v4756, %v4800
  %v4851 = vadd.f32 %v4757, %v4841
  %v4852 = vadd.f32 %v4758, %v4843
  %v4853 = vadd.f32 %v4759, %v4802
  %v4854 = vadd.f32 %v4760, %v4804
  %v4855 = vadd.f32 %v4761, %v4845
  %v4856 = vadd.f32 %v4762, %v4847
  %v4857 = vmul.f32 %v4849, 0.5
  %v4858 = vmul.f32 %v4853, 0.5
  %v4859 = vtanh.pop %v4857
  %v4860 = vtanh.pop %v4858
  %v4861 = vmul.f32 %v4859, 0.5
  %v4862 = vmul.f32 %v4860, 0.5
  %v4863 = vadd.f32 %v4861, 0.5
  %v4864 = vadd.f32 %v4862, 0.5
  %v4865 = vmul.f32 %v4850, 0.5
  %v4866 = vmul.f32 %v4854, 0.5
  %v4867 = vtanh.pop %v4865
  %v4868 = vtanh.pop %v4866
  %v4869 = vmul.f32 %v4867, 0.5
  %v4870 = vmul.f32 %v4868, 0.5
  %v4871 = vadd.f32 %v4869, 0.5
  %v4872 = vadd.f32 %v4870, 0.5
  %v4873 = vtanh.pop %v4851
  %v4874 = vtanh.pop %v4855
  %v4875 = vmul.f32 %v4852, 0.5
  %v4876 = vmul.f32 %v4856, 0.5
  %v4877 = vtanh.pop %v4875
  %v4878 = vtanh.pop %v4876
  %v4879 = vmul.f32 %v4877, 0.5
  %v4880 = vmul.f32 %v4878, 0.5
  %v4881 = vadd.f32 %v4879, 0.5
  %v4882 = vadd.f32 %v4880, 0.5
  %v4883 = vmul.f32 %v4871, %v4741
  %v4884 = vmul.f32 %v4872, %v4742
  %v4885 = vmul.f32 %v4863, %v4873
  %v4886 = vmul.f32 %v4864, %v4874
  %v4887 = vadd.f32 %v4883, %v4885
  %v4888 = vadd.f32 %v4884, %v4886
  %v4889 = vtanh.pop %v4887
  %v4890 = vtanh.pop %v4888
  %v4891 = vmul.f32 %v4881, %v4889
  %v4892 = vmul.f32 %v4882, %v4890
  %4893 = vst [vmem:[%s1703] sm:$0xff] %v4891
  %4894 = vst [vmem:[%s1701 + $0x8] sm:$0xff] %v4892
  %v4895 = vsel %vm49, %v4891, 0.0
  %v4896 = vsel %vm50, %v4891, 0.0
  %v4897 = vsel %vm51, %v4892, 0.0
  %v4898 = vsel %vm52, %v4892, 0.0
  %v4899 = vpack.c.bf16 %v4897, %v4895
  %v4900 = vpack.c.bf16 %v4898, %v4896
  %v4901 = vld [vmem:[%s856] sm:$0xff]
  %v4902 = vld [vmem:[%s856 + $0x8] sm:$0xff]
  %v4903 = vld [vmem:[%s856 + $0x10] sm:$0xff]
  %v4904 = vld [vmem:[%s856 + $0x18] sm:$0xff]
  %v4905 = vld [vmem:[%s856 + $0x20] sm:$0xff]
  %v4906 = vld [vmem:[%s856 + $0x28] sm:$0xff]
  %v4907 = vld [vmem:[%s856 + $0x30] sm:$0xff]
  %v4908 = vld [vmem:[%s856 + $0x38] sm:$0xff]
  %4909 = vmatprep.subr.bf16.mxu0 %v3906
  %4910 = vmatpush1.bf16.msra.mxu0 %v3905
  %4911 = vmatprep.subr.bf16.mxu0 %v3910
  %4912 = vmatpush1.bf16.msra.mxu0 %v3909
  %4913 = vmatprep.subr.bf16.mxu0 %v3914
  %4914 = vmatpush1.bf16.msra.mxu0 %v3913
  %4915 = vmatprep.subr.bf16.mxu0 %v3918
  %4916 = vmatpush1.bf16.msra.mxu0 %v3917
  %4917 = vmatprep.subr.bf16.mxu0 %v3922
  %4918 = vmatpush1.bf16.msra.mxu0 %v3921
  %4919 = vmatprep.subr.bf16.mxu0 %v3926
  %4920 = vmatpush1.bf16.msra.mxu0 %v3925
  %4921 = vmatprep.subr.bf16.mxu0 %v3930
  %4922 = vmatpush1.bf16.msra.mxu0 %v3929
  %4923 = vmatprep.subr.bf16.mxu0 %v3934
  %4924 = vmatpush1.bf16.msra.mxu0 %v3933
  %4925 = vmatprep.subr.bf16.mxu0 %v3938
  %4926 = vmatpush1.bf16.msra.mxu0 %v3937
  %4927 = vmatprep.subr.bf16.mxu0 %v3942
  %4928 = vmatpush1.bf16.msra.mxu0 %v3941
  %4929 = vmatprep.subr.bf16.mxu0 %v3946
  %4930 = vmatpush1.bf16.msra.mxu0 %v3945
  %4931 = vmatprep.subr.bf16.mxu0 %v3950
  %4932 = vmatpush1.bf16.msra.mxu0 %v3949
  %4933 = vmatprep.subr.bf16.mxu0 %v3954
  %4934 = vmatpush1.bf16.msra.mxu0 %v3953
  %4935 = vmatprep.subr.bf16.mxu0 %v3958
  %4936 = vmatpush1.bf16.msra.mxu0 %v3957
  %4937 = vmatprep.subr.bf16.mxu0 %v3962
  %4938 = vmatpush1.bf16.msra.mxu0 %v3961
  %4939 = vmatprep.subr.bf16.mxu0 %v3966
  %4940 = vmatpush1.bf16.msra.mxu0 %v3965
  %4941 = vmatprep.mubr.bf16.mxu0 %v4900
  %4942 = vmatmul.mubr.bf16.gmra.mrb[0].mxu0 %v4899
  %v4943 = vpop.f32.mrb[0].mxu0
  %v4944 = vadd.f32 0.0, %v4943
  %v4945 = vpop.f32.mrb[0].mxu0
  %v4946 = vadd.f32 0.0, %v4945
  %v4947 = vpop.f32.mrb[0].mxu0
  %v4948 = vadd.f32 0.0, %v4947
  %v4949 = vpop.f32.mrb[0].mxu0
  %v4950 = vadd.f32 0.0, %v4949
  %4951 = vdwg.mxu0
  %4952 = vmatprep.subr.bf16.mxu0 %v3908
  %4953 = vmatpush1.bf16.msra.mxu0 %v3907
  %4954 = vmatprep.subr.bf16.mxu0 %v3912
  %4955 = vmatpush1.bf16.msra.mxu0 %v3911
  %4956 = vmatprep.subr.bf16.mxu0 %v3916
  %4957 = vmatpush1.bf16.msra.mxu0 %v3915
  %4958 = vmatprep.subr.bf16.mxu0 %v3920
  %4959 = vmatpush1.bf16.msra.mxu0 %v3919
  %4960 = vmatprep.subr.bf16.mxu0 %v3924
  %4961 = vmatpush1.bf16.msra.mxu0 %v3923
  %4962 = vmatprep.subr.bf16.mxu0 %v3928
  %4963 = vmatpush1.bf16.msra.mxu0 %v3927
  %4964 = vmatprep.subr.bf16.mxu0 %v3932
  %4965 = vmatpush1.bf16.msra.mxu0 %v3931
  %4966 = vmatprep.subr.bf16.mxu0 %v3936
  %4967 = vmatpush1.bf16.msra.mxu0 %v3935
  %4968 = vmatprep.subr.bf16.mxu0 %v3940
  %4969 = vmatpush1.bf16.msra.mxu0 %v3939
  %4970 = vmatprep.subr.bf16.mxu0 %v3944
  %4971 = vmatpush1.bf16.msra.mxu0 %v3943
  %4972 = vmatprep.subr.bf16.mxu0 %v3948
  %4973 = vmatpush1.bf16.msra.mxu0 %v3947
  %4974 = vmatprep.subr.bf16.mxu0 %v3952
  %4975 = vmatpush1.bf16.msra.mxu0 %v3951
  %4976 = vmatprep.subr.bf16.mxu0 %v3956
  %4977 = vmatpush1.bf16.msra.mxu0 %v3955
  %4978 = vmatprep.subr.bf16.mxu0 %v3960
  %4979 = vmatpush1.bf16.msra.mxu0 %v3959
  %4980 = vmatprep.subr.bf16.mxu0 %v3964
  %4981 = vmatpush1.bf16.msra.mxu0 %v3963
  %4982 = vmatprep.subr.bf16.mxu0 %v3968
  %4983 = vmatpush1.bf16.msra.mxu0 %v3967
  %4984 = vmatprep.mubr.bf16.mxu0 %v4900
  %4985 = vmatmul.mubr.bf16.gmra.mrb[0].mxu0 %v4899
  %v4986 = vpop.f32.mrb[0].mxu0
  %v4987 = vadd.f32 0.0, %v4986
  %v4988 = vpop.f32.mrb[0].mxu0
  %v4989 = vadd.f32 0.0, %v4988
  %v4990 = vpop.f32.mrb[0].mxu0
  %v4991 = vadd.f32 0.0, %v4990
  %v4992 = vpop.f32.mrb[0].mxu0
  %v4993 = vadd.f32 0.0, %v4992
  %4994 = vdwg.mxu0
  %v4995 = vadd.f32 %v4901, %v4944
  %v4996 = vadd.f32 %v4902, %v4946
  %v4997 = vadd.f32 %v4903, %v4987
  %v4998 = vadd.f32 %v4904, %v4989
  %v4999 = vadd.f32 %v4905, %v4948
  %v5000 = vadd.f32 %v4906, %v4950
  %v5001 = vadd.f32 %v4907, %v4991
  %v5002 = vadd.f32 %v4908, %v4993
  %v5003 = vmul.f32 %v4995, 0.5
  %v5004 = vmul.f32 %v4999, 0.5
  %v5005 = vtanh.pop %v5003
  %v5006 = vtanh.pop %v5004
  %v5007 = vmul.f32 %v5005, 0.5
  %v5008 = vmul.f32 %v5006, 0.5
  %v5009 = vadd.f32 %v5007, 0.5
  %v5010 = vadd.f32 %v5008, 0.5
  %v5011 = vmul.f32 %v4996, 0.5
  %v5012 = vmul.f32 %v5000, 0.5
  %v5013 = vtanh.pop %v5011
  %v5014 = vtanh.pop %v5012
  %v5015 = vmul.f32 %v5013, 0.5
  %v5016 = vmul.f32 %v5014, 0.5
  %v5017 = vadd.f32 %v5015, 0.5
  %v5018 = vadd.f32 %v5016, 0.5
  %v5019 = vtanh.pop %v4997
  %v5020 = vtanh.pop %v5001
  %v5021 = vmul.f32 %v4998, 0.5
  %v5022 = vmul.f32 %v5002, 0.5
  %v5023 = vtanh.pop %v5021
  %v5024 = vtanh.pop %v5022
  %v5025 = vmul.f32 %v5023, 0.5
  %v5026 = vmul.f32 %v5024, 0.5
  %v5027 = vadd.f32 %v5025, 0.5
  %v5028 = vadd.f32 %v5026, 0.5
  %v5029 = vmul.f32 %v5017, %v4887
  %v5030 = vmul.f32 %v5018, %v4888
  %v5031 = vmul.f32 %v5009, %v5019
  %v5032 = vmul.f32 %v5010, %v5020
  %v5033 = vadd.f32 %v5029, %v5031
  %v5034 = vadd.f32 %v5030, %v5032
  %v5035 = vtanh.pop %v5033
  %v5036 = vtanh.pop %v5034
  %v5037 = vmul.f32 %v5027, %v5035
  %v5038 = vmul.f32 %v5028, %v5036
  %5039 = vst [vmem:[%s1555] sm:$0xff] %v5037
  %5040 = vst [vmem:[%s1553 + $0x8] sm:$0xff] %v5038
  %v5041 = vsel %vm49, %v5037, 0.0
  %v5042 = vsel %vm50, %v5037, 0.0
  %v5043 = vsel %vm51, %v5038, 0.0
  %v5044 = vsel %vm52, %v5038, 0.0
  %v5045 = vpack.c.bf16 %v5043, %v5041
  %v5046 = vpack.c.bf16 %v5044, %v5042
  %v5047 = vld [vmem:[%s865] sm:$0xff]
  %v5048 = vld [vmem:[%s865 + $0x8] sm:$0xff]
  %v5049 = vld [vmem:[%s865 + $0x10] sm:$0xff]
  %v5050 = vld [vmem:[%s865 + $0x18] sm:$0xff]
  %v5051 = vld [vmem:[%s865 + $0x20] sm:$0xff]
  %v5052 = vld [vmem:[%s865 + $0x28] sm:$0xff]
  %v5053 = vld [vmem:[%s865 + $0x30] sm:$0xff]
  %v5054 = vld [vmem:[%s865 + $0x38] sm:$0xff]
  %5055 = vmatprep.subr.bf16.mxu0 %v3906
  %5056 = vmatpush1.bf16.msra.mxu0 %v3905
  %5057 = vmatprep.subr.bf16.mxu0 %v3910
  %5058 = vmatpush1.bf16.msra.mxu0 %v3909
  %5059 = vmatprep.subr.bf16.mxu0 %v3914
  %5060 = vmatpush1.bf16.msra.mxu0 %v3913
  %5061 = vmatprep.subr.bf16.mxu0 %v3918
  %5062 = vmatpush1.bf16.msra.mxu0 %v3917
  %5063 = vmatprep.subr.bf16.mxu0 %v3922
  %5064 = vmatpush1.bf16.msra.mxu0 %v3921
  %5065 = vmatprep.subr.bf16.mxu0 %v3926
  %5066 = vmatpush1.bf16.msra.mxu0 %v3925
  %5067 = vmatprep.subr.bf16.mxu0 %v3930
  %5068 = vmatpush1.bf16.msra.mxu0 %v3929
  %5069 = vmatprep.subr.bf16.mxu0 %v3934
  %5070 = vmatpush1.bf16.msra.mxu0 %v3933
  %5071 = vmatprep.subr.bf16.mxu0 %v3938
  %5072 = vmatpush1.bf16.msra.mxu0 %v3937
  %5073 = vmatprep.subr.bf16.mxu0 %v3942
  %5074 = vmatpush1.bf16.msra.mxu0 %v3941
  %5075 = vmatprep.subr.bf16.mxu0 %v3946
  %5076 = vmatpush1.bf16.msra.mxu0 %v3945
  %5077 = vmatprep.subr.bf16.mxu0 %v3950
  %5078 = vmatpush1.bf16.msra.mxu0 %v3949
  %5079 = vmatprep.subr.bf16.mxu0 %v3954
  %5080 = vmatpush1.bf16.msra.mxu0 %v3953
  %5081 = vmatprep.subr.bf16.mxu0 %v3958
  %5082 = vmatpush1.bf16.msra.mxu0 %v3957
  %5083 = vmatprep.subr.bf16.mxu0 %v3962
  %5084 = vmatpush1.bf16.msra.mxu0 %v3961
  %5085 = vmatprep.subr.bf16.mxu0 %v3966
  %5086 = vmatpush1.bf16.msra.mxu0 %v3965
  %5087 = vmatprep.mubr.bf16.mxu0 %v5046
  %5088 = vmatmul.mubr.bf16.gmra.mrb[0].mxu0 %v5045
  %v5089 = vpop.f32.mrb[0].mxu0
  %v5090 = vadd.f32 0.0, %v5089
  %v5091 = vpop.f32.mrb[0].mxu0
  %v5092 = vadd.f32 0.0, %v5091
  %v5093 = vpop.f32.mrb[0].mxu0
  %v5094 = vadd.f32 0.0, %v5093
  %v5095 = vpop.f32.mrb[0].mxu0
  %v5096 = vadd.f32 0.0, %v5095
  %5097 = vdwg.mxu0
  %5098 = vmatprep.subr.bf16.mxu0 %v3908
  %5099 = vmatpush1.bf16.msra.mxu0 %v3907
  %5100 = vmatprep.subr.bf16.mxu0 %v3912
  %5101 = vmatpush1.bf16.msra.mxu0 %v3911
  %5102 = vmatprep.subr.bf16.mxu0 %v3916
  %5103 = vmatpush1.bf16.msra.mxu0 %v3915
  %5104 = vmatprep.subr.bf16.mxu0 %v3920
  %5105 = vmatpush1.bf16.msra.mxu0 %v3919
  %5106 = vmatprep.subr.bf16.mxu0 %v3924
  %5107 = vmatpush1.bf16.msra.mxu0 %v3923
  %5108 = vmatprep.subr.bf16.mxu0 %v3928
  %5109 = vmatpush1.bf16.msra.mxu0 %v3927
  %5110 = vmatprep.subr.bf16.mxu0 %v3932
  %5111 = vmatpush1.bf16.msra.mxu0 %v3931
  %5112 = vmatprep.subr.bf16.mxu0 %v3936
  %5113 = vmatpush1.bf16.msra.mxu0 %v3935
  %5114 = vmatprep.subr.bf16.mxu0 %v3940
  %5115 = vmatpush1.bf16.msra.mxu0 %v3939
  %5116 = vmatprep.subr.bf16.mxu0 %v3944
  %5117 = vmatpush1.bf16.msra.mxu0 %v3943
  %5118 = vmatprep.subr.bf16.mxu0 %v3948
  %5119 = vmatpush1.bf16.msra.mxu0 %v3947
  %5120 = vmatprep.subr.bf16.mxu0 %v3952
  %5121 = vmatpush1.bf16.msra.mxu0 %v3951
  %5122 = vmatprep.subr.bf16.mxu0 %v3956
  %5123 = vmatpush1.bf16.msra.mxu0 %v3955
  %5124 = vmatprep.subr.bf16.mxu0 %v3960
  %5125 = vmatpush1.bf16.msra.mxu0 %v3959
  %5126 = vmatprep.subr.bf16.mxu0 %v3964
  %5127 = vmatpush1.bf16.msra.mxu0 %v3963
  %5128 = vmatprep.subr.bf16.mxu0 %v3968
  %5129 = vmatpush1.bf16.msra.mxu0 %v3967
  %5130 = vmatprep.mubr.bf16.mxu0 %v5046
  %5131 = vmatmul.mubr.bf16.gmra.mrb[0].mxu0 %v5045
  %v5132 = vpop.f32.mrb[0].mxu0
  %v5133 = vadd.f32 0.0, %v5132
  %v5134 = vpop.f32.mrb[0].mxu0
  %v5135 = vadd.f32 0.0, %v5134
  %v5136 = vpop.f32.mrb[0].mxu0
  %v5137 = vadd.f32 0.0, %v5136
  %v5138 = vpop.f32.mrb[0].mxu0
  %v5139 = vadd.f32 0.0, %v5138
  %5140 = vdwg.mxu0
  %v5141 = vadd.f32 %v5047, %v5090
  %v5142 = vadd.f32 %v5048, %v5092
  %v5143 = vadd.f32 %v5049, %v5133
  %v5144 = vadd.f32 %v5050, %v5135
  %v5145 = vadd.f32 %v5051, %v5094
  %v5146 = vadd.f32 %v5052, %v5096
  %v5147 = vadd.f32 %v5053, %v5137
  %v5148 = vadd.f32 %v5054, %v5139
  %v5149 = vmul.f32 %v5141, 0.5
  %v5150 = vmul.f32 %v5145, 0.5
  %v5151 = vtanh.pop %v5149
  %v5152 = vtanh.pop %v5150
  %v5153 = vmul.f32 %v5151, 0.5
  %v5154 = vmul.f32 %v5152, 0.5
  %v5155 = vadd.f32 %v5153, 0.5
  %v5156 = vadd.f32 %v5154, 0.5
  %v5157 = vmul.f32 %v5142, 0.5
  %v5158 = vmul.f32 %v5146, 0.5
  %v5159 = vtanh.pop %v5157
  %v5160 = vtanh.pop %v5158
  %v5161 = vmul.f32 %v5159, 0.5
  %v5162 = vmul.f32 %v5160, 0.5
  %v5163 = vadd.f32 %v5161, 0.5
  %v5164 = vadd.f32 %v5162, 0.5
  %v5165 = vtanh.pop %v5143
  %v5166 = vtanh.pop %v5147
  %v5167 = vmul.f32 %v5144, 0.5
  %v5168 = vmul.f32 %v5148, 0.5
  %v5169 = vtanh.pop %v5167
  %v5170 = vtanh.pop %v5168
  %v5171 = vmul.f32 %v5169, 0.5
  %v5172 = vmul.f32 %v5170, 0.5
  %v5173 = vadd.f32 %v5171, 0.5
  %v5174 = vadd.f32 %v5172, 0.5
  %v5175 = vmul.f32 %v5163, %v5033
  %v5176 = vmul.f32 %v5164, %v5034
  %v5177 = vmul.f32 %v5155, %v5165
  %v5178 = vmul.f32 %v5156, %v5166
  %v5179 = vadd.f32 %v5175, %v5177
  %v5180 = vadd.f32 %v5176, %v5178
  %v5181 = vtanh.pop %v5179
  %v5182 = vtanh.pop %v5180
  %v5183 = vmul.f32 %v5173, %v5181
  %v5184 = vmul.f32 %v5174, %v5182
  %5185 = vst [vmem:[%s1407] sm:$0xff] %v5183
  %5186 = vst [vmem:[#allocation2 + $0x8] sm:$0xff] %v5184
  %v5187 = vld [vmem:[%s1407] sm:$0xff]
  %v5188 = vld [vmem:[%s1407 + $0x8] sm:$0xff]
  %v5189 = vld [vmem:[%s7] sm:$0x3]
  %v5191 = vlaneseq
  %v5192 = vshrl.u32 %v5191, 7
  %v5193 = vsub.s32 0, %v5192
  %v5194 = vrot.slane %v5189, %v5193
  %v5195 = vlaneseq
  %v5196 = vshrl.u32 %v5195, 7
  %v5197 = vsub.s32 1, %v5196
  %v5198 = vrot.slane %v5189, %v5197
  %v5201 = vmul.f32 %v5187, %v5194
  %v5202 = vmul.f32 %v5188, %v5198
  %v5203 = vadd.f32 %v5201, %v5202
  %5204 = vadd.xlane.f32.xlu0 %v5203
  %v5205 = vpop.xlane.xlu0 %5204
  %v5206 = vld [vmem:[#allocation4] sm:$0x1]
  %v5208 = vlaneseq
  %v5209 = vshrl.u32 %v5208, 7
  %v5210 = vsub.s32 0, %v5209
  %v5211 = vrot.slane %v5206, %v5210
  %v5213 = vadd.f32 %v5205, %v5211
  %v5214 = vtanh.pop %v5213
  %v5215 = vxor.u32 %v5214, 2147483648
  %v5216 = vmul.f32 %v5215, 1.442695
  %v5217 = vpow.pop %v5216
  %v5218 = vadd.f32 %v5217, 1.0
  %v5219 = vrcp.pop %v5218
  %v5220 = vmul.f32 1.0, %v5219
  %vm5221 = vcmask 7168
  %5222 = vst.msk [vmem:[%s9] sm:$0xff] %vm5221, %v5220
  // Predicated region
  $region38: #{bilstm_forward.1} parent=0 // pred_check
    _
  $region39: #{bilstm_forward.1} parent=0 // pred_check_branch
    %5224 = sbr.rel (0) target = $region41
  $region40: #{bilstm_forward.1} parent=0 // pred_region
    _
  $region41: #{bilstm_forward.1} parent=0 // pred_fallthru
    _
  // Predicated region
  $region42: #{bilstm_forward.1} parent=0 // pred_check
    _
  $region43: #{bilstm_forward.1} parent=0 // pred_check_branch
    %5226 = sbr.rel (0) target = $region45
  $region44: #{bilstm_forward.1} parent=0 // pred_region
    _
  $region45: #{bilstm_forward.1} parent=0 // pred_fallthru
    _

</llo_original>
